<compile_context>
chip_gen: v5e
topology: v5e:2x2
jax: 0.10.0
libtpu: 0.0.40
codegen_flags: <defaults>
</compile_context>

<pallas_src>
import numpy as np

import jax
import jax.numpy as jnp
from jax.experimental import pallas as pl
from jax.experimental.pallas import tpu as pltpu


# ----------------------------------------------------------------------------
# Placement (scatter) matrices, built once in numpy.
#   Conv outputs are produced "wide": column j = y*Wp + x (x < Wo valid,
#   x >= Wo garbage).  These 0/1 matrices move the valid (or pooled) columns
#   into the next layer's zero-padded flat layout via a single matmul.
# ----------------------------------------------------------------------------
def _place_valid(hp, wp, q_w, q_len):
    ho, wo = hp - 1, wp - 1
    l = ho * wp - 1
    s = np.zeros((l, q_len), np.float32)
    for y in range(ho):
        for x in range(wo):
            s[y * wp + x, (1 + y) * q_w + (1 + x)] = 1.0
    return s


def _place_pool(hp, wp, q_w, q_len, q_pad):
    ho, wo = hp - 1, wp - 1
    hq, wq = ho // 2, wo // 2
    l = ho * wp - 1 - (wp + 1)
    s = np.zeros((l, q_len), np.float32)
    for yp in range(hq):
        for xp in range(wq):
            s[2 * yp * wp + 2 * xp, (q_pad + yp) * q_w + (q_pad + xp)] = 1.0
    return s


# ----------------------------------------------------------------------------
# The fused kernel (one grid step == one image).
# Static geometry (forced by Linear(24*8*8)): 28 -> 29 -> 30 -pool-> 15 -> 16
# -> 17 -pool-> 8.
# ----------------------------------------------------------------------------
def _mnist_kernel(x_ref,
                  cw1, cb1, cw2, cb2, cw3, cb3, cw4, cb4,
                  s1, s2, s3, s4,
                  f1w, f1b, f2w, f2b, f3w, f3b,
                  out_ref,
                  a2_ref, a3_ref, a4_ref, ow2_ref, ow4_ref):
    f32, bf16 = jnp.float32, jnp.bfloat16

    def conv_taps(a_ref, w_ref, wp, l):
        # a_ref: (Cin, Hp*Wp) bf16 flat padded activation; w_ref: (4, Cout, Cin)
        acc = None
        for t, off in enumerate((0, 1, wp, wp + 1)):
            rhs = a_ref[:, pl.ds(off, l)]                         # (Cin, l) bf16
            term = jnp.dot(w_ref[t], rhs, preferred_element_type=f32)
            acc = term if acc is None else acc + term
        return acc                                                # (Cout, l) f32

    def place(o, b_ref, s_ref):
        # bias + ReLU (f32, VPU), then scatter into next padded flat layout (MXU)
        r = jnp.maximum(o + b_ref[...], 0.0)
        return jnp.dot(r.astype(bf16), s_ref[...], preferred_element_type=f32)

    def pool_place(o, ow_ref, b_ref, s_ref, wp):
        # fused 2x2 maxpool: 4 lane-shifted reads of the wide conv output
        ow_ref[...] = o
        ly = o.shape[1] - (wp + 1)
        wm = jnp.maximum(
            jnp.maximum(ow_ref[:, pl.ds(0, ly)], ow_ref[:, pl.ds(1, ly)]),
            jnp.maximum(ow_ref[:, pl.ds(wp, ly)], ow_ref[:, pl.ds(wp + 1, ly)]))
        return place(wm, b_ref, s_ref)

    # ---- conv1 (Cin=1): tiny, done as f32 broadcast-multiplies on the VPU ----
    row = x_ref[0]                                                # (1, 900) f32
    o1 = None
    for t, off in enumerate((0, 1, 30, 31)):
        term = cw1[t] * row[:, off:off + 869]                     # (8,1)*(1,869)
        o1 = term if o1 is None else o1 + term                    # (8, 869) f32
    a2_ref[...] = place(o1, cb1, s1).astype(bf16)                 # (8, 961)

    # ---- conv2 + ReLU + maxpool ----
    o2 = conv_taps(a2_ref, cw2, 31, 929)                          # (16, 929) f32
    a3_ref[...] = pool_place(o2, ow2_ref, cb2, s2, 31).astype(bf16)   # (16, 289)

    # ---- conv3 + ReLU ----
    o3 = conv_taps(a3_ref, cw3, 17, 271)                          # (20, 271) f32
    a4_ref[...] = place(o3, cb3, s3).astype(bf16)                 # (20, 324)

    # ---- conv4 + ReLU + maxpool -> feature map (24, 64), col = y*8 + x ----
    o4 = conv_taps(a4_ref, cw4, 18, 305)                          # (24, 305) f32
    feat = pool_place(o4, ow4_ref, cb4, s4, 18).astype(bf16)      # (24, 64)

    # ---- Classifier ----
    # TODO(synk): nn.Dropout(0.3) is stochastic in train mode; identity here
    # (eval/inference semantics).
    acc = jnp.zeros((1, 256), f32)
    for ci in range(24):          # contract (channel, pixel) as 24 accumulated dots
        acc = acc + jnp.dot(feat[ci:ci + 1, :], f1w[ci],
                            preferred_element_type=f32)
    h1 = jnp.maximum(acc + f1b[...], 0.0).astype(bf16)            # (1, 256)
    h2 = jnp.maximum(jnp.dot(h1, f2w[...], preferred_element_type=f32) + f2b[...],
                     0.0).astype(bf16)                            # (1, 64)
    o = jnp.dot(h2, f3w[...], preferred_element_type=f32) + f3b[...]  # (1, 10)
    out_ref[...] = o[None].astype(out_ref.dtype)


# ----------------------------------------------------------------------------
# Wrapper: one pallas_call, grid over the batch.
# ----------------------------------------------------------------------------
def _full_spec(shape):
    zeros = (0,) * len(shape)
    return pl.BlockSpec(shape, lambda i, _z=zeros: _z)


_WEIGHT_ORDER = ("cw1", "cb1", "cw2", "cb2", "cw3", "cb3", "cw4", "cb4",
                 "s1", "s2", "s3", "s4",
                 "f1w", "f1b", "f2w", "f2b", "f3w", "f3b")


def mnist_net_forward(x, kp):
    n = x.shape[0]
    # Only non-kernel op: zero-pad the 28x28 input once (the flatten that
    # follows is a free metadata reshape).
    xp = jnp.pad(x[:, 0].astype(jnp.float32), ((0, 0), (1, 1), (1, 1)))
    xflat = xp.reshape(n, 1, 900)

    weights = [kp[k] for k in _WEIGHT_ORDER]
    in_specs = ([pl.BlockSpec((1, 1, 900), lambda i: (i, 0, 0))] +
                [_full_spec(w.shape) for w in weights])

    out = pl.pallas_call(
        _mnist_kernel,
        out_shape=jax.ShapeDtypeStruct((n, 1, 10), jnp.float32),
        grid_spec=pltpu.PrefetchScalarGridSpec(
            num_scalar_prefetch=0,
            grid=(n,),
            in_specs=in_specs,
            out_specs=pl.BlockSpec((1, 1, 10), lambda i: (i, 0, 0)),
            scratch_shapes=[
                pltpu.VMEM((8, 961), jnp.bfloat16),    # padded input of conv2
                pltpu.VMEM((16, 289), jnp.bfloat16),   # padded input of conv3
                pltpu.VMEM((20, 324), jnp.bfloat16),   # padded input of conv4
                pltpu.VMEM((16, 929), jnp.float32),    # conv2 wide output (pool)
                pltpu.VMEM((24, 305), jnp.float32),    # conv4 wide output (pool)
            ]),
        compiler_params=pltpu.CompilerParams(
            dimension_semantics=("parallel",),
            vmem_limit_bytes=32 * 1024 * 1024),
    )(xflat, *weights)
    return out.reshape(n, 10)


# ----------------------------------------------------------------------------
# One-time parameter preparation (outside the jitted forward): tap-major conv
# weights, pre-transposed FC weights, 0/1 placement matrices.
# ----------------------------------------------------------------------------
def prepare_params(p):
    bf16, f32 = jnp.bfloat16, jnp.float32

    def taps(w):  # (Cout, Cin, 2, 2) -> (4, Cout, Cin), tap order (dy, dx)
        return jnp.stack([w[:, :, dy, dx] for dy in range(2) for dx in range(2)], 0)

    return {
        "cw1": taps(p["c1_w"]).astype(f32),          # conv1 runs on the VPU in f32
        "cb1": p["c1_b"].reshape(8, 1).astype(f32),
        "cw2": taps(p["c2_w"]).astype(bf16),
        "cb2": p["c2_b"].reshape(16, 1).astype(f32),
        "cw3": taps(p["c3_w"]).astype(bf16),
        "cb3": p["c3_b"].reshape(20, 1).astype(f32),
        "cw4": taps(p["c4_w"]).astype(bf16),
        "cb4": p["c4_b"].reshape(24, 1).astype(f32),
        # fc1: (256, 1536), input index = c*64 + y*8 + x  ->  (24, 64, 256)
        "f1w": p["fc1_w"].reshape(256, 24, 64).transpose(1, 2, 0).astype(bf16),
        "f1b": p["fc1_b"].reshape(1, 256).astype(f32),
        "f2w": p["fc2_w"].T.astype(bf16),            # (256, 64)
        "f2b": p["fc2_b"].reshape(1, 64).astype(f32),
        "f3w": p["fc3_w"].T.astype(bf16),            # (64, 10)
        "f3b": p["fc3_b"].reshape(1, 10).astype(f32),
        # 0/1 placement matrices (exact in bf16)
        "s1": jnp.asarray(_place_valid(30, 30, q_w=31, q_len=961), bf16),
        "s2": jnp.asarray(_place_pool(31, 31, q_w=17, q_len=289, q_pad=1), bf16),
        "s3": jnp.asarray(_place_valid(17, 17, q_w=18, q_len=324), bf16),
        "s4": jnp.asarray(_place_pool(18, 18, q_w=8, q_len=64, q_pad=0), bf16),
    }


# ----------------------------------------------------------------------------
# Deterministic parameter init (PyTorch layout; shapes from MnistNet.__init__)
# ----------------------------------------------------------------------------
def init_params(key):
    ks = jax.random.split(key, 14)

    def w_init(k, shape, fan_in):
        return (jax.random.normal(k, shape, dtype=jnp.float32)
                / jnp.sqrt(jnp.float32(fan_in)))

    def b_init(k, shape):
        return jax.random.normal(k, shape, dtype=jnp.float32) * 0.01

    return {
        "c1_w": w_init(ks[0], (8, 1, 2, 2), 1 * 4),    "c1_b": b_init(ks[1], (8,)),
        "c2_w": w_init(ks[2], (16, 8, 2, 2), 8 * 4),   "c2_b": b_init(ks[3], (16,)),
        "c3_w": w_init(ks[4], (20, 16, 2, 2), 16 * 4), "c3_b": b_init(ks[5], (20,)),
        "c4_w": w_init(ks[6], (24, 20, 2, 2), 20 * 4), "c4_b": b_init(ks[7], (24,)),
        "fc1_w": w_init(ks[8], (256, 1536), 1536),     "fc1_b": b_init(ks[9], (256,)),
        "fc2_w": w_init(ks[10], (64, 256), 256),       "fc2_b": b_init(ks[11], (64,)),
        "fc3_w": w_init(ks[12], (10, 64), 64),         "fc3_b": b_init(ks[13], (10,)),
    }


# ----------------------------------------------------------------------------
# Pure-JAX reference (f32, HIGHEST precision) for a sanity check
# ----------------------------------------------------------------------------
def ref_forward(x, p):
    def conv(x, w, b):
        y = jax.lax.conv_general_dilated(
            x, w, window_strides=(1, 1), padding=((1, 1), (1, 1)),
            dimension_numbers=("NCHW", "OIHW", "NCHW"),
            precision=jax.lax.Precision.HIGHEST)
        return y + b.reshape(1, -1, 1, 1)

    def pool(x):
        return jax.lax.reduce_window(x, -jnp.inf, jax.lax.max,
                                     (1, 1, 2, 2), (1, 1, 2, 2), "VALID")

    def lin(x, w, b):
        return jnp.dot(x, w.T, precision=jax.lax.Precision.HIGHEST) + b

    h = jax.nn.relu(conv(x, p["c1_w"], p["c1_b"]))
    h = jax.nn.relu(conv(h, p["c2_w"], p["c2_b"]))
    h = pool(h)
    h = jax.nn.relu(conv(h, p["c3_w"], p["c3_b"]))
    h = jax.nn.relu(conv(h, p["c4_w"], p["c4_b"]))
    h = pool(h)
    h = h.reshape(h.shape[0], -1)
    h = jax.nn.relu(lin(h, p["fc1_w"], p["fc1_b"]))
    h = jax.nn.relu(lin(h, p["fc2_w"], p["fc2_b"]))
    return lin(h, p["fc3_w"], p["fc3_b"])


if __name__ == "__main__":
    key = jax.random.PRNGKey(0)
    kx, kparam = jax.random.split(key)
    params = init_params(kparam)
    kernel_params = prepare_params(params)   # one-time layout prep (outside jit)

    # MNIST-shaped input: Linear(24*8*8) forces 28x28 spatial; batch kept small.
    x = jax.random.normal(kx, (2, 1, 28, 28), dtype=jnp.float32)

    fwd = jax.jit(mnist_net_forward)
    out = jax.block_until_ready(fwd(x, kernel_params))
    assert out.shape == (2, 10) and out.dtype == jnp.float32

    ref = jax.block_until_ready(ref_forward(x, params))
    # Kernel uses bf16 MXU operands (per perf review) vs f32 HIGHEST reference,
    # hence the slightly loosened tolerance.
    np.testing.assert_allclose(np.asarray(out), np.asarray(ref),
                               rtol=5e-2, atol=5e-2)

    print("KERNEL_OK")
</pallas_src>

<mosaic_0001>
module attributes {stable_mosaic.version = 11 : i64} {
  func.func @_mnist_kernel(%arg0: i32, %arg1: memref<1x1x900xf32, #tpu.memory_space<vmem>>, %arg2: memref<4x8x1xf32, #tpu.memory_space<vmem>>, %arg3: memref<8x1xf32, #tpu.memory_space<vmem>>, %arg4: memref<4x16x8xbf16, #tpu.memory_space<vmem>>, %arg5: memref<16x1xf32, #tpu.memory_space<vmem>>, %arg6: memref<4x20x16xbf16, #tpu.memory_space<vmem>>, %arg7: memref<20x1xf32, #tpu.memory_space<vmem>>, %arg8: memref<4x24x20xbf16, #tpu.memory_space<vmem>>, %arg9: memref<24x1xf32, #tpu.memory_space<vmem>>, %arg10: memref<869x961xbf16, #tpu.memory_space<vmem>>, %arg11: memref<897x289xbf16, #tpu.memory_space<vmem>>, %arg12: memref<271x324xbf16, #tpu.memory_space<vmem>>, %arg13: memref<286x64xbf16, #tpu.memory_space<vmem>>, %arg14: memref<24x64x256xbf16, #tpu.memory_space<vmem>>, %arg15: memref<1x256xf32, #tpu.memory_space<vmem>>, %arg16: memref<256x64xbf16, #tpu.memory_space<vmem>>, %arg17: memref<1x64xf32, #tpu.memory_space<vmem>>, %arg18: memref<64x10xbf16, #tpu.memory_space<vmem>>, %arg19: memref<1x10xf32, #tpu.memory_space<vmem>>, %arg20: memref<1x1x10xf32, #tpu.memory_space<vmem>>, %arg21: memref<8x961xbf16, #tpu.memory_space<vmem>>, %arg22: memref<16x289xbf16, #tpu.memory_space<vmem>>, %arg23: memref<20x324xbf16, #tpu.memory_space<vmem>>, %arg24: memref<16x929xf32, #tpu.memory_space<vmem>>, %arg25: memref<24x305xf32, #tpu.memory_space<vmem>>) attributes {dimension_semantics = [#tpu.dimension_semantics<parallel>], iteration_bounds = array<i64: 2>, scalar_prefetch = 0 : i64, scratch_operands = 5 : i64, tpu.core_type = #tpu.core_type<tc>, window_params = [{transform_indices = @transform_0, window_bounds = array<i64: 1, 1, 900>}, {pipeline_mode = #tpu.pipeline_mode<synchronous>, transform_indices = @transform_1, window_bounds = array<i64: 4, 8, 1>}, {pipeline_mode = #tpu.pipeline_mode<synchronous>, transform_indices = @transform_2, window_bounds = array<i64: 8, 1>}, {pipeline_mode = #tpu.pipeline_mode<synchronous>, transform_indices = @transform_3, window_bounds = array<i64: 4, 16, 8>}, {pipeline_mode = #tpu.pipeline_mode<synchronous>, transform_indices = @transform_4, window_bounds = array<i64: 16, 1>}, {pipeline_mode = #tpu.pipeline_mode<synchronous>, transform_indices = @transform_5, window_bounds = array<i64: 4, 20, 16>}, {pipeline_mode = #tpu.pipeline_mode<synchronous>, transform_indices = @transform_6, window_bounds = array<i64: 20, 1>}, {pipeline_mode = #tpu.pipeline_mode<synchronous>, transform_indices = @transform_7, window_bounds = array<i64: 4, 24, 20>}, {pipeline_mode = #tpu.pipeline_mode<synchronous>, transform_indices = @transform_8, window_bounds = array<i64: 24, 1>}, {pipeline_mode = #tpu.pipeline_mode<synchronous>, transform_indices = @transform_9, window_bounds = array<i64: 869, 961>}, {pipeline_mode = #tpu.pipeline_mode<synchronous>, transform_indices = @transform_10, window_bounds = array<i64: 897, 289>}, {pipeline_mode = #tpu.pipeline_mode<synchronous>, transform_indices = @transform_11, window_bounds = array<i64: 271, 324>}, {pipeline_mode = #tpu.pipeline_mode<synchronous>, transform_indices = @transform_12, window_bounds = array<i64: 286, 64>}, {pipeline_mode = #tpu.pipeline_mode<synchronous>, transform_indices = @transform_13, window_bounds = array<i64: 24, 64, 256>}, {pipeline_mode = #tpu.pipeline_mode<synchronous>, transform_indices = @transform_14, window_bounds = array<i64: 1, 256>}, {pipeline_mode = #tpu.pipeline_mode<synchronous>, transform_indices = @transform_15, window_bounds = array<i64: 256, 64>}, {pipeline_mode = #tpu.pipeline_mode<synchronous>, transform_indices = @transform_16, window_bounds = array<i64: 1, 64>}, {pipeline_mode = #tpu.pipeline_mode<synchronous>, transform_indices = @transform_17, window_bounds = array<i64: 64, 10>}, {pipeline_mode = #tpu.pipeline_mode<synchronous>, transform_indices = @transform_18, window_bounds = array<i64: 1, 10>}, {transform_indices = @transform_19, window_bounds = array<i64: 1, 1, 10>}]} {
    %c0 = arith.constant 0 : index
    %c0_0 = arith.constant 0 : index
    %c0_1 = arith.constant 0 : index
    %0 = vector.load %arg1[%c0, %c0_0, %c0_1] : memref<1x1x900xf32, #tpu.memory_space<vmem>>, vector<1x1x900xf32>
    %1 = vector.shape_cast %0 : vector<1x1x900xf32> to vector<1x900xf32>
    %c0_2 = arith.constant 0 : index
    %c0_3 = arith.constant 0 : index
    %c0_4 = arith.constant 0 : index
    %2 = vector.load %arg2[%c0_2, %c0_3, %c0_4] : memref<4x8x1xf32, #tpu.memory_space<vmem>>, vector<1x8x1xf32>
    %3 = vector.shape_cast %2 : vector<1x8x1xf32> to vector<8x1xf32>
    %4 = vector.extract_strided_slice %1 {offsets = [0, 0], sizes = [1, 869], strides = [1, 1]} : vector<1x900xf32> to vector<1x869xf32>
    %5 = vector.broadcast %3 : vector<8x1xf32> to vector<8x869xf32>
    %6 = vector.broadcast %4 : vector<1x869xf32> to vector<8x869xf32>
    %7 = arith.mulf %5, %6 : vector<8x869xf32>
    %c1 = arith.constant 1 : index
    %c0_5 = arith.constant 0 : index
    %c0_6 = arith.constant 0 : index
    %8 = vector.load %arg2[%c1, %c0_5, %c0_6] : memref<4x8x1xf32, #tpu.memory_space<vmem>>, vector<1x8x1xf32>
    %9 = vector.shape_cast %8 : vector<1x8x1xf32> to vector<8x1xf32>
    %10 = vector.extract_strided_slice %1 {offsets = [0, 1], sizes = [1, 869], strides = [1, 1]} : vector<1x900xf32> to vector<1x869xf32>
    %11 = vector.broadcast %9 : vector<8x1xf32> to vector<8x869xf32>
    %12 = vector.broadcast %10 : vector<1x869xf32> to vector<8x869xf32>
    %13 = arith.mulf %11, %12 : vector<8x869xf32>
    %14 = arith.addf %7, %13 : vector<8x869xf32>
    %c2 = arith.constant 2 : index
    %c0_7 = arith.constant 0 : index
    %c0_8 = arith.constant 0 : index
    %15 = vector.load %arg2[%c2, %c0_7, %c0_8] : memref<4x8x1xf32, #tpu.memory_space<vmem>>, vector<1x8x1xf32>
    %16 = vector.shape_cast %15 : vector<1x8x1xf32> to vector<8x1xf32>
    %17 = vector.extract_strided_slice %1 {offsets = [0, 30], sizes = [1, 869], strides = [1, 1]} : vector<1x900xf32> to vector<1x869xf32>
    %18 = vector.broadcast %16 : vector<8x1xf32> to vector<8x869xf32>
    %19 = vector.broadcast %17 : vector<1x869xf32> to vector<8x869xf32>
    %20 = arith.mulf %18, %19 : vector<8x869xf32>
    %21 = arith.addf %14, %20 : vector<8x869xf32>
    %c3 = arith.constant 3 : index
    %c0_9 = arith.constant 0 : index
    %c0_10 = arith.constant 0 : index
    %22 = vector.load %arg2[%c3, %c0_9, %c0_10] : memref<4x8x1xf32, #tpu.memory_space<vmem>>, vector<1x8x1xf32>
    %23 = vector.shape_cast %22 : vector<1x8x1xf32> to vector<8x1xf32>
    %24 = vector.extract_strided_slice %1 {offsets = [0, 31], sizes = [1, 869], strides = [1, 1]} : vector<1x900xf32> to vector<1x869xf32>
    %25 = vector.broadcast %23 : vector<8x1xf32> to vector<8x869xf32>
    %26 = vector.broadcast %24 : vector<1x869xf32> to vector<8x869xf32>
    %27 = arith.mulf %25, %26 : vector<8x869xf32>
    %28 = arith.addf %21, %27 : vector<8x869xf32>
    %c0_11 = arith.constant 0 : index
    %c0_12 = arith.constant 0 : index
    %29 = vector.load %arg3[%c0_11, %c0_12] : memref<8x1xf32, #tpu.memory_space<vmem>>, vector<8x1xf32>
    %30 = vector.broadcast %29 : vector<8x1xf32> to vector<8x869xf32>
    %31 = arith.addf %28, %30 : vector<8x869xf32>
    %cst = arith.constant 0.000000e+00 : f32
    %32 = vector.broadcast %cst : f32 to vector<8x869xf32>
    %33 = arith.maximumf %31, %32 : vector<8x869xf32>
    %34 = arith.truncf %33 : vector<8x869xf32> to vector<8x869xbf16>
    %c0_13 = arith.constant 0 : index
    %c0_14 = arith.constant 0 : index
    %35 = vector.load %arg10[%c0_13, %c0_14] : memref<869x961xbf16, #tpu.memory_space<vmem>>, vector<869x961xbf16>
    %cst_15 = arith.constant dense<0.000000e+00> : vector<8x961xf32>
    %36 = tpu.matmul %34, %35, %cst_15 {dimension_numbers = #tpu.dot_dimension_numbers<[1], [0], [0], [1], [0, 0, 1, 1], [], []>} : vector<8x869xbf16>, vector<869x961xbf16>, vector<8x961xf32> -> vector<8x961xf32>
    %37 = arith.truncf %36 : vector<8x961xf32> to vector<8x961xbf16>
    %c0_16 = arith.constant 0 : index
    %c0_17 = arith.constant 0 : index
    %38 = vector.load %arg21[%c0_16, %c0_17] : memref<8x961xbf16, #tpu.memory_space<vmem>>, vector<8x961xbf16>
    tpu.vector_store %arg21[%c0_16, %c0_17], %37 {strides = array<i32>} : memref<8x961xbf16, #tpu.memory_space<vmem>>, vector<8x961xbf16>,
    %c0_18 = arith.constant 0 : index
    %c0_19 = arith.constant 0 : index
    %39 = vector.load %arg21[%c0_18, %c0_19] : memref<8x961xbf16, #tpu.memory_space<vmem>>, vector<8x929xbf16>
    %c0_20 = arith.constant 0 : index
    %c0_21 = arith.constant 0 : index
    %c0_22 = arith.constant 0 : index
    %40 = vector.load %arg4[%c0_20, %c0_21, %c0_22] : memref<4x16x8xbf16, #tpu.memory_space<vmem>>, vector<1x16x8xbf16>
    %41 = vector.shape_cast %40 : vector<1x16x8xbf16> to vector<16x8xbf16>
    %cst_23 = arith.constant dense<0.000000e+00> : vector<16x929xf32>
    %42 = tpu.matmul %41, %39, %cst_23 {dimension_numbers = #tpu.dot_dimension_numbers<[1], [0], [0], [1], [0, 0, 1, 1], [], []>} : vector<16x8xbf16>, vector<8x929xbf16>, vector<16x929xf32> -> vector<16x929xf32>
    %c0_24 = arith.constant 0 : index
    %c1_25 = arith.constant 1 : index
    %43 = vector.load %arg21[%c0_24, %c1_25] : memref<8x961xbf16, #tpu.memory_space<vmem>>, vector<8x929xbf16>
    %c1_26 = arith.constant 1 : index
    %c0_27 = arith.constant 0 : index
    %c0_28 = arith.constant 0 : index
    %44 = vector.load %arg4[%c1_26, %c0_27, %c0_28] : memref<4x16x8xbf16, #tpu.memory_space<vmem>>, vector<1x16x8xbf16>
    %45 = vector.shape_cast %44 : vector<1x16x8xbf16> to vector<16x8xbf16>
    %cst_29 = arith.constant dense<0.000000e+00> : vector<16x929xf32>
    %46 = tpu.matmul %45, %43, %cst_29 {dimension_numbers = #tpu.dot_dimension_numbers<[1], [0], [0], [1], [0, 0, 1, 1], [], []>} : vector<16x8xbf16>, vector<8x929xbf16>, vector<16x929xf32> -> vector<16x929xf32>
    %47 = arith.addf %42, %46 : vector<16x929xf32>
    %c0_30 = arith.constant 0 : index
    %c31 = arith.constant 31 : index
    %48 = vector.load %arg21[%c0_30, %c31] : memref<8x961xbf16, #tpu.memory_space<vmem>>, vector<8x929xbf16>
    %c2_31 = arith.constant 2 : index
    %c0_32 = arith.constant 0 : index
    %c0_33 = arith.constant 0 : index
    %49 = vector.load %arg4[%c2_31, %c0_32, %c0_33] : memref<4x16x8xbf16, #tpu.memory_space<vmem>>, vector<1x16x8xbf16>
    %50 = vector.shape_cast %49 : vector<1x16x8xbf16> to vector<16x8xbf16>
    %cst_34 = arith.constant dense<0.000000e+00> : vector<16x929xf32>
    %51 = tpu.matmul %50, %48, %cst_34 {dimension_numbers = #tpu.dot_dimension_numbers<[1], [0], [0], [1], [0, 0, 1, 1], [], []>} : vector<16x8xbf16>, vector<8x929xbf16>, vector<16x929xf32> -> vector<16x929xf32>
    %52 = arith.addf %47, %51 : vector<16x929xf32>
    %c0_35 = arith.constant 0 : index
    %c32 = arith.constant 32 : index
    %53 = vector.load %arg21[%c0_35, %c32] : memref<8x961xbf16, #tpu.memory_space<vmem>>, vector<8x929xbf16>
    %c3_36 = arith.constant 3 : index
    %c0_37 = arith.constant 0 : index
    %c0_38 = arith.constant 0 : index
    %54 = vector.load %arg4[%c3_36, %c0_37, %c0_38] : memref<4x16x8xbf16, #tpu.memory_space<vmem>>, vector<1x16x8xbf16>
    %55 = vector.shape_cast %54 : vector<1x16x8xbf16> to vector<16x8xbf16>
    %cst_39 = arith.constant dense<0.000000e+00> : vector<16x929xf32>
    %56 = tpu.matmul %55, %53, %cst_39 {dimension_numbers = #tpu.dot_dimension_numbers<[1], [0], [0], [1], [0, 0, 1, 1], [], []>} : vector<16x8xbf16>, vector<8x929xbf16>, vector<16x929xf32> -> vector<16x929xf32>
    %57 = arith.addf %52, %56 : vector<16x929xf32>
    %c0_40 = arith.constant 0 : index
    %c0_41 = arith.constant 0 : index
    %58 = vector.load %arg24[%c0_40, %c0_41] : memref<16x929xf32, #tpu.memory_space<vmem>>, vector<16x929xf32>
    tpu.vector_store %arg24[%c0_40, %c0_41], %57 {strides = array<i32>} : memref<16x929xf32, #tpu.memory_space<vmem>>, vector<16x929xf32>,
    %c0_42 = arith.constant 0 : index
    %c0_43 = arith.constant 0 : index
    %59 = vector.load %arg24[%c0_42, %c0_43] : memref<16x929xf32, #tpu.memory_space<vmem>>, vector<16x897xf32>
    %c0_44 = arith.constant 0 : index
    %c1_45 = arith.constant 1 : index
    %60 = vector.load %arg24[%c0_44, %c1_45] : memref<16x929xf32, #tpu.memory_space<vmem>>, vector<16x897xf32>
    %61 = arith.maximumf %59, %60 : vector<16x897xf32>
    %c0_46 = arith.constant 0 : index
    %c31_47 = arith.constant 31 : index
    %62 = vector.load %arg24[%c0_46, %c31_47] : memref<16x929xf32, #tpu.memory_space<vmem>>, vector<16x897xf32>
    %c0_48 = arith.constant 0 : index
    %c32_49 = arith.constant 32 : index
    %63 = vector.load %arg24[%c0_48, %c32_49] : memref<16x929xf32, #tpu.memory_space<vmem>>, vector<16x897xf32>
    %64 = arith.maximumf %62, %63 : vector<16x897xf32>
    %65 = arith.maximumf %61, %64 : vector<16x897xf32>
    %c0_50 = arith.constant 0 : index
    %c0_51 = arith.constant 0 : index
    %66 = vector.load %arg5[%c0_50, %c0_51] : memref<16x1xf32, #tpu.memory_space<vmem>>, vector<16x1xf32>
    %67 = vector.broadcast %66 : vector<16x1xf32> to vector<16x897xf32>
    %68 = arith.addf %65, %67 : vector<16x897xf32>
    %cst_52 = arith.constant 0.000000e+00 : f32
    %69 = vector.broadcast %cst_52 : f32 to vector<16x897xf32>
    %70 = arith.maximumf %68, %69 : vector<16x897xf32>
    %71 = arith.truncf %70 : vector<16x897xf32> to vector<16x897xbf16>
    %c0_53 = arith.constant 0 : index
    %c0_54 = arith.constant 0 : index
    %72 = vector.load %arg11[%c0_53, %c0_54] : memref<897x289xbf16, #tpu.memory_space<vmem>>, vector<897x289xbf16>
    %cst_55 = arith.constant dense<0.000000e+00> : vector<16x289xf32>
    %73 = tpu.matmul %71, %72, %cst_55 {dimension_numbers = #tpu.dot_dimension_numbers<[1], [0], [0], [1], [0, 0, 1, 1], [], []>} : vector<16x897xbf16>, vector<897x289xbf16>, vector<16x289xf32> -> vector<16x289xf32>
    %74 = arith.truncf %73 : vector<16x289xf32> to vector<16x289xbf16>
    %c0_56 = arith.constant 0 : index
    %c0_57 = arith.constant 0 : index
    %75 = vector.load %arg22[%c0_56, %c0_57] : memref<16x289xbf16, #tpu.memory_space<vmem>>, vector<16x289xbf16>
    tpu.vector_store %arg22[%c0_56, %c0_57], %74 {strides = array<i32>} : memref<16x289xbf16, #tpu.memory_space<vmem>>, vector<16x289xbf16>,
    %c0_58 = arith.constant 0 : index
    %c0_59 = arith.constant 0 : index
    %76 = vector.load %arg22[%c0_58, %c0_59] : memref<16x289xbf16, #tpu.memory_space<vmem>>, vector<16x271xbf16>
    %c0_60 = arith.constant 0 : index
    %c0_61 = arith.constant 0 : index
    %c0_62 = arith.constant 0 : index
    %77 = vector.load %arg6[%c0_60, %c0_61, %c0_62] : memref<4x20x16xbf16, #tpu.memory_space<vmem>>, vector<1x20x16xbf16>
    %78 = vector.shape_cast %77 : vector<1x20x16xbf16> to vector<20x16xbf16>
    %cst_63 = arith.constant dense<0.000000e+00> : vector<20x271xf32>
    %79 = tpu.matmul %78, %76, %cst_63 {dimension_numbers = #tpu.dot_dimension_numbers<[1], [0], [0], [1], [0, 0, 1, 1], [], []>} : vector<20x16xbf16>, vector<16x271xbf16>, vector<20x271xf32> -> vector<20x271xf32>
    %c0_64 = arith.constant 0 : index
    %c1_65 = arith.constant 1 : index
    %80 = vector.load %arg22[%c0_64, %c1_65] : memref<16x289xbf16, #tpu.memory_space<vmem>>, vector<16x271xbf16>
    %c1_66 = arith.constant 1 : index
    %c0_67 = arith.constant 0 : index
    %c0_68 = arith.constant 0 : index
    %81 = vector.load %arg6[%c1_66, %c0_67, %c0_68] : memref<4x20x16xbf16, #tpu.memory_space<vmem>>, vector<1x20x16xbf16>
    %82 = vector.shape_cast %81 : vector<1x20x16xbf16> to vector<20x16xbf16>
    %cst_69 = arith.constant dense<0.000000e+00> : vector<20x271xf32>
    %83 = tpu.matmul %82, %80, %cst_69 {dimension_numbers = #tpu.dot_dimension_numbers<[1], [0], [0], [1], [0, 0, 1, 1], [], []>} : vector<20x16xbf16>, vector<16x271xbf16>, vector<20x271xf32> -> vector<20x271xf32>
    %84 = arith.addf %79, %83 : vector<20x271xf32>
    %c0_70 = arith.constant 0 : index
    %c17 = arith.constant 17 : index
    %85 = vector.load %arg22[%c0_70, %c17] : memref<16x289xbf16, #tpu.memory_space<vmem>>, vector<16x271xbf16>
    %c2_71 = arith.constant 2 : index
    %c0_72 = arith.constant 0 : index
    %c0_73 = arith.constant 0 : index
    %86 = vector.load %arg6[%c2_71, %c0_72, %c0_73] : memref<4x20x16xbf16, #tpu.memory_space<vmem>>, vector<1x20x16xbf16>
    %87 = vector.shape_cast %86 : vector<1x20x16xbf16> to vector<20x16xbf16>
    %cst_74 = arith.constant dense<0.000000e+00> : vector<20x271xf32>
    %88 = tpu.matmul %87, %85, %cst_74 {dimension_numbers = #tpu.dot_dimension_numbers<[1], [0], [0], [1], [0, 0, 1, 1], [], []>} : vector<20x16xbf16>, vector<16x271xbf16>, vector<20x271xf32> -> vector<20x271xf32>
    %89 = arith.addf %84, %88 : vector<20x271xf32>
    %c0_75 = arith.constant 0 : index
    %c18 = arith.constant 18 : index
    %90 = vector.load %arg22[%c0_75, %c18] : memref<16x289xbf16, #tpu.memory_space<vmem>>, vector<16x271xbf16>
    %c3_76 = arith.constant 3 : index
    %c0_77 = arith.constant 0 : index
    %c0_78 = arith.constant 0 : index
    %91 = vector.load %arg6[%c3_76, %c0_77, %c0_78] : memref<4x20x16xbf16, #tpu.memory_space<vmem>>, vector<1x20x16xbf16>
    %92 = vector.shape_cast %91 : vector<1x20x16xbf16> to vector<20x16xbf16>
    %cst_79 = arith.constant dense<0.000000e+00> : vector<20x271xf32>
    %93 = tpu.matmul %92, %90, %cst_79 {dimension_numbers = #tpu.dot_dimension_numbers<[1], [0], [0], [1], [0, 0, 1, 1], [], []>} : vector<20x16xbf16>, vector<16x271xbf16>, vector<20x271xf32> -> vector<20x271xf32>
    %94 = arith.addf %89, %93 : vector<20x271xf32>
    %c0_80 = arith.constant 0 : index
    %c0_81 = arith.constant 0 : index
    %95 = vector.load %arg7[%c0_80, %c0_81] : memref<20x1xf32, #tpu.memory_space<vmem>>, vector<20x1xf32>
    %96 = vector.broadcast %95 : vector<20x1xf32> to vector<20x271xf32>
    %97 = arith.addf %94, %96 : vector<20x271xf32>
    %cst_82 = arith.constant 0.000000e+00 : f32
    %98 = vector.broadcast %cst_82 : f32 to vector<20x271xf32>
    %99 = arith.maximumf %97, %98 : vector<20x271xf32>
    %100 = arith.truncf %99 : vector<20x271xf32> to vector<20x271xbf16>
    %c0_83 = arith.constant 0 : index
    %c0_84 = arith.constant 0 : index
    %101 = vector.load %arg12[%c0_83, %c0_84] : memref<271x324xbf16, #tpu.memory_space<vmem>>, vector<271x324xbf16>
    %cst_85 = arith.constant dense<0.000000e+00> : vector<20x324xf32>
    %102 = tpu.matmul %100, %101, %cst_85 {dimension_numbers = #tpu.dot_dimension_numbers<[1], [0], [0], [1], [0, 0, 1, 1], [], []>} : vector<20x271xbf16>, vector<271x324xbf16>, vector<20x324xf32> -> vector<20x324xf32>
    %103 = arith.truncf %102 : vector<20x324xf32> to vector<20x324xbf16>
    %c0_86 = arith.constant 0 : index
    %c0_87 = arith.constant 0 : index
    %104 = vector.load %arg23[%c0_86, %c0_87] : memref<20x324xbf16, #tpu.memory_space<vmem>>, vector<20x324xbf16>
    tpu.vector_store %arg23[%c0_86, %c0_87], %103 {strides = array<i32>} : memref<20x324xbf16, #tpu.memory_space<vmem>>, vector<20x324xbf16>,
    %c0_88 = arith.constant 0 : index
    %c0_89 = arith.constant 0 : index
    %105 = vector.load %arg23[%c0_88, %c0_89] : memref<20x324xbf16, #tpu.memory_space<vmem>>, vector<20x305xbf16>
    %c0_90 = arith.constant 0 : index
    %c0_91 = arith.constant 0 : index
    %c0_92 = arith.constant 0 : index
    %106 = vector.load %arg8[%c0_90, %c0_91, %c0_92] : memref<4x24x20xbf16, #tpu.memory_space<vmem>>, vector<1x24x20xbf16>
    %107 = vector.shape_cast %106 : vector<1x24x20xbf16> to vector<24x20xbf16>
    %cst_93 = arith.constant dense<0.000000e+00> : vector<24x305xf32>
    %108 = tpu.matmul %107, %105, %cst_93 {dimension_numbers = #tpu.dot_dimension_numbers<[1], [0], [0], [1], [0, 0, 1, 1], [], []>} : vector<24x20xbf16>, vector<20x305xbf16>, vector<24x305xf32> -> vector<24x305xf32>
    %c0_94 = arith.constant 0 : index
    %c1_95 = arith.constant 1 : index
    %109 = vector.load %arg23[%c0_94, %c1_95] : memref<20x324xbf16, #tpu.memory_space<vmem>>, vector<20x305xbf16>
    %c1_96 = arith.constant 1 : index
    %c0_97 = arith.constant 0 : index
    %c0_98 = arith.constant 0 : index
    %110 = vector.load %arg8[%c1_96, %c0_97, %c0_98] : memref<4x24x20xbf16, #tpu.memory_space<vmem>>, vector<1x24x20xbf16>
    %111 = vector.shape_cast %110 : vector<1x24x20xbf16> to vector<24x20xbf16>
    %cst_99 = arith.constant dense<0.000000e+00> : vector<24x305xf32>
    %112 = tpu.matmul %111, %109, %cst_99 {dimension_numbers = #tpu.dot_dimension_numbers<[1], [0], [0], [1], [0, 0, 1, 1], [], []>} : vector<24x20xbf16>, vector<20x305xbf16>, vector<24x305xf32> -> vector<24x305xf32>
    %113 = arith.addf %108, %112 : vector<24x305xf32>
    %c0_100 = arith.constant 0 : index
    %c18_101 = arith.constant 18 : index
    %114 = vector.load %arg23[%c0_100, %c18_101] : memref<20x324xbf16, #tpu.memory_space<vmem>>, vector<20x305xbf16>
    %c2_102 = arith.constant 2 : index
    %c0_103 = arith.constant 0 : index
    %c0_104 = arith.constant 0 : index
    %115 = vector.load %arg8[%c2_102, %c0_103, %c0_104] : memref<4x24x20xbf16, #tpu.memory_space<vmem>>, vector<1x24x20xbf16>
    %116 = vector.shape_cast %115 : vector<1x24x20xbf16> to vector<24x20xbf16>
    %cst_105 = arith.constant dense<0.000000e+00> : vector<24x305xf32>
    %117 = tpu.matmul %116, %114, %cst_105 {dimension_numbers = #tpu.dot_dimension_numbers<[1], [0], [0], [1], [0, 0, 1, 1], [], []>} : vector<24x20xbf16>, vector<20x305xbf16>, vector<24x305xf32> -> vector<24x305xf32>
    %118 = arith.addf %113, %117 : vector<24x305xf32>
    %c0_106 = arith.constant 0 : index
    %c19 = arith.constant 19 : index
    %119 = vector.load %arg23[%c0_106, %c19] : memref<20x324xbf16, #tpu.memory_space<vmem>>, vector<20x305xbf16>
    %c3_107 = arith.constant 3 : index
    %c0_108 = arith.constant 0 : index
    %c0_109 = arith.constant 0 : index
    %120 = vector.load %arg8[%c3_107, %c0_108, %c0_109] : memref<4x24x20xbf16, #tpu.memory_space<vmem>>, vector<1x24x20xbf16>
    %121 = vector.shape_cast %120 : vector<1x24x20xbf16> to vector<24x20xbf16>
    %cst_110 = arith.constant dense<0.000000e+00> : vector<24x305xf32>
    %122 = tpu.matmul %121, %119, %cst_110 {dimension_numbers = #tpu.dot_dimension_numbers<[1], [0], [0], [1], [0, 0, 1, 1], [], []>} : vector<24x20xbf16>, vector<20x305xbf16>, vector<24x305xf32> -> vector<24x305xf32>
    %123 = arith.addf %118, %122 : vector<24x305xf32>
    %c0_111 = arith.constant 0 : index
    %c0_112 = arith.constant 0 : index
    %124 = vector.load %arg25[%c0_111, %c0_112] : memref<24x305xf32, #tpu.memory_space<vmem>>, vector<24x305xf32>
    tpu.vector_store %arg25[%c0_111, %c0_112], %123 {strides = array<i32>} : memref<24x305xf32, #tpu.memory_space<vmem>>, vector<24x305xf32>,
    %c0_113 = arith.constant 0 : index
    %c0_114 = arith.constant 0 : index
    %125 = vector.load %arg25[%c0_113, %c0_114] : memref<24x305xf32, #tpu.memory_space<vmem>>, vector<24x286xf32>
    %c0_115 = arith.constant 0 : index
    %c1_116 = arith.constant 1 : index
    %126 = vector.load %arg25[%c0_115, %c1_116] : memref<24x305xf32, #tpu.memory_space<vmem>>, vector<24x286xf32>
    %127 = arith.maximumf %125, %126 : vector<24x286xf32>
    %c0_117 = arith.constant 0 : index
    %c18_118 = arith.constant 18 : index
    %128 = vector.load %arg25[%c0_117, %c18_118] : memref<24x305xf32, #tpu.memory_space<vmem>>, vector<24x286xf32>
    %c0_119 = arith.constant 0 : index
    %c19_120 = arith.constant 19 : index
    %129 = vector.load %arg25[%c0_119, %c19_120] : memref<24x305xf32, #tpu.memory_space<vmem>>, vector<24x286xf32>
    %130 = arith.maximumf %128, %129 : vector<24x286xf32>
    %131 = arith.maximumf %127, %130 : vector<24x286xf32>
    %c0_121 = arith.constant 0 : index
    %c0_122 = arith.constant 0 : index
    %132 = vector.load %arg9[%c0_121, %c0_122] : memref<24x1xf32, #tpu.memory_space<vmem>>, vector<24x1xf32>
    %133 = vector.broadcast %132 : vector<24x1xf32> to vector<24x286xf32>
    %134 = arith.addf %131, %133 : vector<24x286xf32>
    %cst_123 = arith.constant 0.000000e+00 : f32
    %135 = vector.broadcast %cst_123 : f32 to vector<24x286xf32>
    %136 = arith.maximumf %134, %135 : vector<24x286xf32>
    %137 = arith.truncf %136 : vector<24x286xf32> to vector<24x286xbf16>
    %c0_124 = arith.constant 0 : index
    %c0_125 = arith.constant 0 : index
    %138 = vector.load %arg13[%c0_124, %c0_125] : memref<286x64xbf16, #tpu.memory_space<vmem>>, vector<286x64xbf16>
    %cst_126 = arith.constant dense<0.000000e+00> : vector<24x64xf32>
    %139 = tpu.matmul %137, %138, %cst_126 {dimension_numbers = #tpu.dot_dimension_numbers<[1], [0], [0], [1], [0, 0, 1, 1], [], []>} : vector<24x286xbf16>, vector<286x64xbf16>, vector<24x64xf32> -> vector<24x64xf32>
    %140 = arith.truncf %139 : vector<24x64xf32> to vector<24x64xbf16>
    %cst_127 = arith.constant 0.000000e+00 : f32
    %141 = vector.broadcast %cst_127 : f32 to vector<1x256xf32>
    %142 = vector.extract_strided_slice %140 {offsets = [0, 0], sizes = [1, 64], strides = [1, 1]} : vector<24x64xbf16> to vector<1x64xbf16>
    %c0_128 = arith.constant 0 : index
    %c0_129 = arith.constant 0 : index
    %c0_130 = arith.constant 0 : index
    %143 = vector.load %arg14[%c0_128, %c0_129, %c0_130] : memref<24x64x256xbf16, #tpu.memory_space<vmem>>, vector<1x64x256xbf16>
    %144 = vector.shape_cast %143 : vector<1x64x256xbf16> to vector<64x256xbf16>
    %cst_131 = arith.constant dense<0.000000e+00> : vector<1x256xf32>
    %145 = tpu.matmul %142, %144, %cst_131 {dimension_numbers = #tpu.dot_dimension_numbers<[1], [0], [0], [1], [0, 0, 1, 1], [], []>} : vector<1x64xbf16>, vector<64x256xbf16>, vector<1x256xf32> -> vector<1x256xf32>
    %146 = arith.addf %141, %145 : vector<1x256xf32>
    %147 = vector.extract_strided_slice %140 {offsets = [1, 0], sizes = [1, 64], strides = [1, 1]} : vector<24x64xbf16> to vector<1x64xbf16>
    %c1_132 = arith.constant 1 : index
    %c0_133 = arith.constant 0 : index
    %c0_134 = arith.constant 0 : index
    %148 = vector.load %arg14[%c1_132, %c0_133, %c0_134] : memref<24x64x256xbf16, #tpu.memory_space<vmem>>, vector<1x64x256xbf16>
    %149 = vector.shape_cast %148 : vector<1x64x256xbf16> to vector<64x256xbf16>
    %cst_135 = arith.constant dense<0.000000e+00> : vector<1x256xf32>
    %150 = tpu.matmul %147, %149, %cst_135 {dimension_numbers = #tpu.dot_dimension_numbers<[1], [0], [0], [1], [0, 0, 1, 1], [], []>} : vector<1x64xbf16>, vector<64x256xbf16>, vector<1x256xf32> -> vector<1x256xf32>
    %151 = arith.addf %146, %150 : vector<1x256xf32>
    %152 = vector.extract_strided_slice %140 {offsets = [2, 0], sizes = [1, 64], strides = [1, 1]} : vector<24x64xbf16> to vector<1x64xbf16>
    %c2_136 = arith.constant 2 : index
    %c0_137 = arith.constant 0 : index
    %c0_138 = arith.constant 0 : index
    %153 = vector.load %arg14[%c2_136, %c0_137, %c0_138] : memref<24x64x256xbf16, #tpu.memory_space<vmem>>, vector<1x64x256xbf16>
    %154 = vector.shape_cast %153 : vector<1x64x256xbf16> to vector<64x256xbf16>
    %cst_139 = arith.constant dense<0.000000e+00> : vector<1x256xf32>
    %155 = tpu.matmul %152, %154, %cst_139 {dimension_numbers = #tpu.dot_dimension_numbers<[1], [0], [0], [1], [0, 0, 1, 1], [], []>} : vector<1x64xbf16>, vector<64x256xbf16>, vector<1x256xf32> -> vector<1x256xf32>
    %156 = arith.addf %151, %155 : vector<1x256xf32>
    %157 = vector.extract_strided_slice %140 {offsets = [3, 0], sizes = [1, 64], strides = [1, 1]} : vector<24x64xbf16> to vector<1x64xbf16>
    %c3_140 = arith.constant 3 : index
    %c0_141 = arith.constant 0 : index
    %c0_142 = arith.constant 0 : index
    %158 = vector.load %arg14[%c3_140, %c0_141, %c0_142] : memref<24x64x256xbf16, #tpu.memory_space<vmem>>, vector<1x64x256xbf16>
    %159 = vector.shape_cast %158 : vector<1x64x256xbf16> to vector<64x256xbf16>
    %cst_143 = arith.constant dense<0.000000e+00> : vector<1x256xf32>
    %160 = tpu.matmul %157, %159, %cst_143 {dimension_numbers = #tpu.dot_dimension_numbers<[1], [0], [0], [1], [0, 0, 1, 1], [], []>} : vector<1x64xbf16>, vector<64x256xbf16>, vector<1x256xf32> -> vector<1x256xf32>
    %161 = arith.addf %156, %160 : vector<1x256xf32>
    %162 = vector.extract_strided_slice %140 {offsets = [4, 0], sizes = [1, 64], strides = [1, 1]} : vector<24x64xbf16> to vector<1x64xbf16>
    %c4 = arith.constant 4 : index
    %c0_144 = arith.constant 0 : index
    %c0_145 = arith.constant 0 : index
    %163 = vector.load %arg14[%c4, %c0_144, %c0_145] : memref<24x64x256xbf16, #tpu.memory_space<vmem>>, vector<1x64x256xbf16>
    %164 = vector.shape_cast %163 : vector<1x64x256xbf16> to vector<64x256xbf16>
    %cst_146 = arith.constant dense<0.000000e+00> : vector<1x256xf32>
    %165 = tpu.matmul %162, %164, %cst_146 {dimension_numbers = #tpu.dot_dimension_numbers<[1], [0], [0], [1], [0, 0, 1, 1], [], []>} : vector<1x64xbf16>, vector<64x256xbf16>, vector<1x256xf32> -> vector<1x256xf32>
    %166 = arith.addf %161, %165 : vector<1x256xf32>
    %167 = vector.extract_strided_slice %140 {offsets = [5, 0], sizes = [1, 64], strides = [1, 1]} : vector<24x64xbf16> to vector<1x64xbf16>
    %c5 = arith.constant 5 : index
    %c0_147 = arith.constant 0 : index
    %c0_148 = arith.constant 0 : index
    %168 = vector.load %arg14[%c5, %c0_147, %c0_148] : memref<24x64x256xbf16, #tpu.memory_space<vmem>>, vector<1x64x256xbf16>
    %169 = vector.shape_cast %168 : vector<1x64x256xbf16> to vector<64x256xbf16>
    %cst_149 = arith.constant dense<0.000000e+00> : vector<1x256xf32>
    %170 = tpu.matmul %167, %169, %cst_149 {dimension_numbers = #tpu.dot_dimension_numbers<[1], [0], [0], [1], [0, 0, 1, 1], [], []>} : vector<1x64xbf16>, vector<64x256xbf16>, vector<1x256xf32> -> vector<1x256xf32>
    %171 = arith.addf %166, %170 : vector<1x256xf32>
    %172 = vector.extract_strided_slice %140 {offsets = [6, 0], sizes = [1, 64], strides = [1, 1]} : vector<24x64xbf16> to vector<1x64xbf16>
    %c6 = arith.constant 6 : index
    %c0_150 = arith.constant 0 : index
    %c0_151 = arith.constant 0 : index
    %173 = vector.load %arg14[%c6, %c0_150, %c0_151] : memref<24x64x256xbf16, #tpu.memory_space<vmem>>, vector<1x64x256xbf16>
    %174 = vector.shape_cast %173 : vector<1x64x256xbf16> to vector<64x256xbf16>
    %cst_152 = arith.constant dense<0.000000e+00> : vector<1x256xf32>
    %175 = tpu.matmul %172, %174, %cst_152 {dimension_numbers = #tpu.dot_dimension_numbers<[1], [0], [0], [1], [0, 0, 1, 1], [], []>} : vector<1x64xbf16>, vector<64x256xbf16>, vector<1x256xf32> -> vector<1x256xf32>
    %176 = arith.addf %171, %175 : vector<1x256xf32>
    %177 = vector.extract_strided_slice %140 {offsets = [7, 0], sizes = [1, 64], strides = [1, 1]} : vector<24x64xbf16> to vector<1x64xbf16>
    %c7 = arith.constant 7 : index
    %c0_153 = arith.constant 0 : index
    %c0_154 = arith.constant 0 : index
    %178 = vector.load %arg14[%c7, %c0_153, %c0_154] : memref<24x64x256xbf16, #tpu.memory_space<vmem>>, vector<1x64x256xbf16>
    %179 = vector.shape_cast %178 : vector<1x64x256xbf16> to vector<64x256xbf16>
    %cst_155 = arith.constant dense<0.000000e+00> : vector<1x256xf32>
    %180 = tpu.matmul %177, %179, %cst_155 {dimension_numbers = #tpu.dot_dimension_numbers<[1], [0], [0], [1], [0, 0, 1, 1], [], []>} : vector<1x64xbf16>, vector<64x256xbf16>, vector<1x256xf32> -> vector<1x256xf32>
    %181 = arith.addf %176, %180 : vector<1x256xf32>
    %182 = vector.extract_strided_slice %140 {offsets = [8, 0], sizes = [1, 64], strides = [1, 1]} : vector<24x64xbf16> to vector<1x64xbf16>
    %c8 = arith.constant 8 : index
    %c0_156 = arith.constant 0 : index
    %c0_157 = arith.constant 0 : index
    %183 = vector.load %arg14[%c8, %c0_156, %c0_157] : memref<24x64x256xbf16, #tpu.memory_space<vmem>>, vector<1x64x256xbf16>
    %184 = vector.shape_cast %183 : vector<1x64x256xbf16> to vector<64x256xbf16>
    %cst_158 = arith.constant dense<0.000000e+00> : vector<1x256xf32>
    %185 = tpu.matmul %182, %184, %cst_158 {dimension_numbers = #tpu.dot_dimension_numbers<[1], [0], [0], [1], [0, 0, 1, 1], [], []>} : vector<1x64xbf16>, vector<64x256xbf16>, vector<1x256xf32> -> vector<1x256xf32>
    %186 = arith.addf %181, %185 : vector<1x256xf32>
    %187 = vector.extract_strided_slice %140 {offsets = [9, 0], sizes = [1, 64], strides = [1, 1]} : vector<24x64xbf16> to vector<1x64xbf16>
    %c9 = arith.constant 9 : index
    %c0_159 = arith.constant 0 : index
    %c0_160 = arith.constant 0 : index
    %188 = vector.load %arg14[%c9, %c0_159, %c0_160] : memref<24x64x256xbf16, #tpu.memory_space<vmem>>, vector<1x64x256xbf16>
    %189 = vector.shape_cast %188 : vector<1x64x256xbf16> to vector<64x256xbf16>
    %cst_161 = arith.constant dense<0.000000e+00> : vector<1x256xf32>
    %190 = tpu.matmul %187, %189, %cst_161 {dimension_numbers = #tpu.dot_dimension_numbers<[1], [0], [0], [1], [0, 0, 1, 1], [], []>} : vector<1x64xbf16>, vector<64x256xbf16>, vector<1x256xf32> -> vector<1x256xf32>
    %191 = arith.addf %186, %190 : vector<1x256xf32>
    %192 = vector.extract_strided_slice %140 {offsets = [10, 0], sizes = [1, 64], strides = [1, 1]} : vector<24x64xbf16> to vector<1x64xbf16>
    %c10 = arith.constant 10 : index
    %c0_162 = arith.constant 0 : index
    %c0_163 = arith.constant 0 : index
    %193 = vector.load %arg14[%c10, %c0_162, %c0_163] : memref<24x64x256xbf16, #tpu.memory_space<vmem>>, vector<1x64x256xbf16>
    %194 = vector.shape_cast %193 : vector<1x64x256xbf16> to vector<64x256xbf16>
    %cst_164 = arith.constant dense<0.000000e+00> : vector<1x256xf32>
    %195 = tpu.matmul %192, %194, %cst_164 {dimension_numbers = #tpu.dot_dimension_numbers<[1], [0], [0], [1], [0, 0, 1, 1], [], []>} : vector<1x64xbf16>, vector<64x256xbf16>, vector<1x256xf32> -> vector<1x256xf32>
    %196 = arith.addf %191, %195 : vector<1x256xf32>
    %197 = vector.extract_strided_slice %140 {offsets = [11, 0], sizes = [1, 64], strides = [1, 1]} : vector<24x64xbf16> to vector<1x64xbf16>
    %c11 = arith.constant 11 : index
    %c0_165 = arith.constant 0 : index
    %c0_166 = arith.constant 0 : index
    %198 = vector.load %arg14[%c11, %c0_165, %c0_166] : memref<24x64x256xbf16, #tpu.memory_space<vmem>>, vector<1x64x256xbf16>
    %199 = vector.shape_cast %198 : vector<1x64x256xbf16> to vector<64x256xbf16>
    %cst_167 = arith.constant dense<0.000000e+00> : vector<1x256xf32>
    %200 = tpu.matmul %197, %199, %cst_167 {dimension_numbers = #tpu.dot_dimension_numbers<[1], [0], [0], [1], [0, 0, 1, 1], [], []>} : vector<1x64xbf16>, vector<64x256xbf16>, vector<1x256xf32> -> vector<1x256xf32>
    %201 = arith.addf %196, %200 : vector<1x256xf32>
    %202 = vector.extract_strided_slice %140 {offsets = [12, 0], sizes = [1, 64], strides = [1, 1]} : vector<24x64xbf16> to vector<1x64xbf16>
    %c12 = arith.constant 12 : index
    %c0_168 = arith.constant 0 : index
    %c0_169 = arith.constant 0 : index
    %203 = vector.load %arg14[%c12, %c0_168, %c0_169] : memref<24x64x256xbf16, #tpu.memory_space<vmem>>, vector<1x64x256xbf16>
    %204 = vector.shape_cast %203 : vector<1x64x256xbf16> to vector<64x256xbf16>
    %cst_170 = arith.constant dense<0.000000e+00> : vector<1x256xf32>
    %205 = tpu.matmul %202, %204, %cst_170 {dimension_numbers = #tpu.dot_dimension_numbers<[1], [0], [0], [1], [0, 0, 1, 1], [], []>} : vector<1x64xbf16>, vector<64x256xbf16>, vector<1x256xf32> -> vector<1x256xf32>
    %206 = arith.addf %201, %205 : vector<1x256xf32>
    %207 = vector.extract_strided_slice %140 {offsets = [13, 0], sizes = [1, 64], strides = [1, 1]} : vector<24x64xbf16> to vector<1x64xbf16>
    %c13 = arith.constant 13 : index
    %c0_171 = arith.constant 0 : index
    %c0_172 = arith.constant 0 : index
    %208 = vector.load %arg14[%c13, %c0_171, %c0_172] : memref<24x64x256xbf16, #tpu.memory_space<vmem>>, vector<1x64x256xbf16>
    %209 = vector.shape_cast %208 : vector<1x64x256xbf16> to vector<64x256xbf16>
    %cst_173 = arith.constant dense<0.000000e+00> : vector<1x256xf32>
    %210 = tpu.matmul %207, %209, %cst_173 {dimension_numbers = #tpu.dot_dimension_numbers<[1], [0], [0], [1], [0, 0, 1, 1], [], []>} : vector<1x64xbf16>, vector<64x256xbf16>, vector<1x256xf32> -> vector<1x256xf32>
    %211 = arith.addf %206, %210 : vector<1x256xf32>
    %212 = vector.extract_strided_slice %140 {offsets = [14, 0], sizes = [1, 64], strides = [1, 1]} : vector<24x64xbf16> to vector<1x64xbf16>
    %c14 = arith.constant 14 : index
    %c0_174 = arith.constant 0 : index
    %c0_175 = arith.constant 0 : index
    %213 = vector.load %arg14[%c14, %c0_174, %c0_175] : memref<24x64x256xbf16, #tpu.memory_space<vmem>>, vector<1x64x256xbf16>
    %214 = vector.shape_cast %213 : vector<1x64x256xbf16> to vector<64x256xbf16>
    %cst_176 = arith.constant dense<0.000000e+00> : vector<1x256xf32>
    %215 = tpu.matmul %212, %214, %cst_176 {dimension_numbers = #tpu.dot_dimension_numbers<[1], [0], [0], [1], [0, 0, 1, 1], [], []>} : vector<1x64xbf16>, vector<64x256xbf16>, vector<1x256xf32> -> vector<1x256xf32>
    %216 = arith.addf %211, %215 : vector<1x256xf32>
    %217 = vector.extract_strided_slice %140 {offsets = [15, 0], sizes = [1, 64], strides = [1, 1]} : vector<24x64xbf16> to vector<1x64xbf16>
    %c15 = arith.constant 15 : index
    %c0_177 = arith.constant 0 : index
    %c0_178 = arith.constant 0 : index
    %218 = vector.load %arg14[%c15, %c0_177, %c0_178] : memref<24x64x256xbf16, #tpu.memory_space<vmem>>, vector<1x64x256xbf16>
    %219 = vector.shape_cast %218 : vector<1x64x256xbf16> to vector<64x256xbf16>
    %cst_179 = arith.constant dense<0.000000e+00> : vector<1x256xf32>
    %220 = tpu.matmul %217, %219, %cst_179 {dimension_numbers = #tpu.dot_dimension_numbers<[1], [0], [0], [1], [0, 0, 1, 1], [], []>} : vector<1x64xbf16>, vector<64x256xbf16>, vector<1x256xf32> -> vector<1x256xf32>
    %221 = arith.addf %216, %220 : vector<1x256xf32>
    %222 = vector.extract_strided_slice %140 {offsets = [16, 0], sizes = [1, 64], strides = [1, 1]} : vector<24x64xbf16> to vector<1x64xbf16>
    %c16 = arith.constant 16 : index
    %c0_180 = arith.constant 0 : index
    %c0_181 = arith.constant 0 : index
    %223 = vector.load %arg14[%c16, %c0_180, %c0_181] : memref<24x64x256xbf16, #tpu.memory_space<vmem>>, vector<1x64x256xbf16>
    %224 = vector.shape_cast %223 : vector<1x64x256xbf16> to vector<64x256xbf16>
    %cst_182 = arith.constant dense<0.000000e+00> : vector<1x256xf32>
    %225 = tpu.matmul %222, %224, %cst_182 {dimension_numbers = #tpu.dot_dimension_numbers<[1], [0], [0], [1], [0, 0, 1, 1], [], []>} : vector<1x64xbf16>, vector<64x256xbf16>, vector<1x256xf32> -> vector<1x256xf32>
    %226 = arith.addf %221, %225 : vector<1x256xf32>
    %227 = vector.extract_strided_slice %140 {offsets = [17, 0], sizes = [1, 64], strides = [1, 1]} : vector<24x64xbf16> to vector<1x64xbf16>
    %c17_183 = arith.constant 17 : index
    %c0_184 = arith.constant 0 : index
    %c0_185 = arith.constant 0 : index
    %228 = vector.load %arg14[%c17_183, %c0_184, %c0_185] : memref<24x64x256xbf16, #tpu.memory_space<vmem>>, vector<1x64x256xbf16>
    %229 = vector.shape_cast %228 : vector<1x64x256xbf16> to vector<64x256xbf16>
    %cst_186 = arith.constant dense<0.000000e+00> : vector<1x256xf32>
    %230 = tpu.matmul %227, %229, %cst_186 {dimension_numbers = #tpu.dot_dimension_numbers<[1], [0], [0], [1], [0, 0, 1, 1], [], []>} : vector<1x64xbf16>, vector<64x256xbf16>, vector<1x256xf32> -> vector<1x256xf32>
    %231 = arith.addf %226, %230 : vector<1x256xf32>
    %232 = vector.extract_strided_slice %140 {offsets = [18, 0], sizes = [1, 64], strides = [1, 1]} : vector<24x64xbf16> to vector<1x64xbf16>
    %c18_187 = arith.constant 18 : index
    %c0_188 = arith.constant 0 : index
    %c0_189 = arith.constant 0 : index
    %233 = vector.load %arg14[%c18_187, %c0_188, %c0_189] : memref<24x64x256xbf16, #tpu.memory_space<vmem>>, vector<1x64x256xbf16>
    %234 = vector.shape_cast %233 : vector<1x64x256xbf16> to vector<64x256xbf16>
    %cst_190 = arith.constant dense<0.000000e+00> : vector<1x256xf32>
    %235 = tpu.matmul %232, %234, %cst_190 {dimension_numbers = #tpu.dot_dimension_numbers<[1], [0], [0], [1], [0, 0, 1, 1], [], []>} : vector<1x64xbf16>, vector<64x256xbf16>, vector<1x256xf32> -> vector<1x256xf32>
    %236 = arith.addf %231, %235 : vector<1x256xf32>
    %237 = vector.extract_strided_slice %140 {offsets = [19, 0], sizes = [1, 64], strides = [1, 1]} : vector<24x64xbf16> to vector<1x64xbf16>
    %c19_191 = arith.constant 19 : index
    %c0_192 = arith.constant 0 : index
    %c0_193 = arith.constant 0 : index
    %238 = vector.load %arg14[%c19_191, %c0_192, %c0_193] : memref<24x64x256xbf16, #tpu.memory_space<vmem>>, vector<1x64x256xbf16>
    %239 = vector.shape_cast %238 : vector<1x64x256xbf16> to vector<64x256xbf16>
    %cst_194 = arith.constant dense<0.000000e+00> : vector<1x256xf32>
    %240 = tpu.matmul %237, %239, %cst_194 {dimension_numbers = #tpu.dot_dimension_numbers<[1], [0], [0], [1], [0, 0, 1, 1], [], []>} : vector<1x64xbf16>, vector<64x256xbf16>, vector<1x256xf32> -> vector<1x256xf32>
    %241 = arith.addf %236, %240 : vector<1x256xf32>
    %242 = vector.extract_strided_slice %140 {offsets = [20, 0], sizes = [1, 64], strides = [1, 1]} : vector<24x64xbf16> to vector<1x64xbf16>
    %c20 = arith.constant 20 : index
    %c0_195 = arith.constant 0 : index
    %c0_196 = arith.constant 0 : index
    %243 = vector.load %arg14[%c20, %c0_195, %c0_196] : memref<24x64x256xbf16, #tpu.memory_space<vmem>>, vector<1x64x256xbf16>
    %244 = vector.shape_cast %243 : vector<1x64x256xbf16> to vector<64x256xbf16>
    %cst_197 = arith.constant dense<0.000000e+00> : vector<1x256xf32>
    %245 = tpu.matmul %242, %244, %cst_197 {dimension_numbers = #tpu.dot_dimension_numbers<[1], [0], [0], [1], [0, 0, 1, 1], [], []>} : vector<1x64xbf16>, vector<64x256xbf16>, vector<1x256xf32> -> vector<1x256xf32>
    %246 = arith.addf %241, %245 : vector<1x256xf32>
    %247 = vector.extract_strided_slice %140 {offsets = [21, 0], sizes = [1, 64], strides = [1, 1]} : vector<24x64xbf16> to vector<1x64xbf16>
    %c21 = arith.constant 21 : index
    %c0_198 = arith.constant 0 : index
    %c0_199 = arith.constant 0 : index
    %248 = vector.load %arg14[%c21, %c0_198, %c0_199] : memref<24x64x256xbf16, #tpu.memory_space<vmem>>, vector<1x64x256xbf16>
    %249 = vector.shape_cast %248 : vector<1x64x256xbf16> to vector<64x256xbf16>
    %cst_200 = arith.constant dense<0.000000e+00> : vector<1x256xf32>
    %250 = tpu.matmul %247, %249, %cst_200 {dimension_numbers = #tpu.dot_dimension_numbers<[1], [0], [0], [1], [0, 0, 1, 1], [], []>} : vector<1x64xbf16>, vector<64x256xbf16>, vector<1x256xf32> -> vector<1x256xf32>
    %251 = arith.addf %246, %250 : vector<1x256xf32>
    %252 = vector.extract_strided_slice %140 {offsets = [22, 0], sizes = [1, 64], strides = [1, 1]} : vector<24x64xbf16> to vector<1x64xbf16>
    %c22 = arith.constant 22 : index
    %c0_201 = arith.constant 0 : index
    %c0_202 = arith.constant 0 : index
    %253 = vector.load %arg14[%c22, %c0_201, %c0_202] : memref<24x64x256xbf16, #tpu.memory_space<vmem>>, vector<1x64x256xbf16>
    %254 = vector.shape_cast %253 : vector<1x64x256xbf16> to vector<64x256xbf16>
    %cst_203 = arith.constant dense<0.000000e+00> : vector<1x256xf32>
    %255 = tpu.matmul %252, %254, %cst_203 {dimension_numbers = #tpu.dot_dimension_numbers<[1], [0], [0], [1], [0, 0, 1, 1], [], []>} : vector<1x64xbf16>, vector<64x256xbf16>, vector<1x256xf32> -> vector<1x256xf32>
    %256 = arith.addf %251, %255 : vector<1x256xf32>
    %257 = vector.extract_strided_slice %140 {offsets = [23, 0], sizes = [1, 64], strides = [1, 1]} : vector<24x64xbf16> to vector<1x64xbf16>
    %c23 = arith.constant 23 : index
    %c0_204 = arith.constant 0 : index
    %c0_205 = arith.constant 0 : index
    %258 = vector.load %arg14[%c23, %c0_204, %c0_205] : memref<24x64x256xbf16, #tpu.memory_space<vmem>>, vector<1x64x256xbf16>
    %259 = vector.shape_cast %258 : vector<1x64x256xbf16> to vector<64x256xbf16>
    %cst_206 = arith.constant dense<0.000000e+00> : vector<1x256xf32>
    %260 = tpu.matmul %257, %259, %cst_206 {dimension_numbers = #tpu.dot_dimension_numbers<[1], [0], [0], [1], [0, 0, 1, 1], [], []>} : vector<1x64xbf16>, vector<64x256xbf16>, vector<1x256xf32> -> vector<1x256xf32>
    %261 = arith.addf %256, %260 : vector<1x256xf32>
    %c0_207 = arith.constant 0 : index
    %c0_208 = arith.constant 0 : index
    %262 = vector.load %arg15[%c0_207, %c0_208] : memref<1x256xf32, #tpu.memory_space<vmem>>, vector<1x256xf32>
    %263 = arith.addf %261, %262 : vector<1x256xf32>
    %cst_209 = arith.constant 0.000000e+00 : f32
    %264 = vector.broadcast %cst_209 : f32 to vector<1x256xf32>
    %265 = arith.maximumf %263, %264 : vector<1x256xf32>
    %266 = arith.truncf %265 : vector<1x256xf32> to vector<1x256xbf16>
    %c0_210 = arith.constant 0 : index
    %c0_211 = arith.constant 0 : index
    %267 = vector.load %arg16[%c0_210, %c0_211] : memref<256x64xbf16, #tpu.memory_space<vmem>>, vector<256x64xbf16>
    %cst_212 = arith.constant dense<0.000000e+00> : vector<1x64xf32>
    %268 = tpu.matmul %266, %267, %cst_212 {dimension_numbers = #tpu.dot_dimension_numbers<[1], [0], [0], [1], [0, 0, 1, 1], [], []>} : vector<1x256xbf16>, vector<256x64xbf16>, vector<1x64xf32> -> vector<1x64xf32>
    %c0_213 = arith.constant 0 : index
    %c0_214 = arith.constant 0 : index
    %269 = vector.load %arg17[%c0_213, %c0_214] : memref<1x64xf32, #tpu.memory_space<vmem>>, vector<1x64xf32>
    %270 = arith.addf %268, %269 : vector<1x64xf32>
    %cst_215 = arith.constant 0.000000e+00 : f32
    %271 = vector.broadcast %cst_215 : f32 to vector<1x64xf32>
    %272 = arith.maximumf %270, %271 : vector<1x64xf32>
    %273 = arith.truncf %272 : vector<1x64xf32> to vector<1x64xbf16>
    %c0_216 = arith.constant 0 : index
    %c0_217 = arith.constant 0 : index
    %274 = vector.load %arg18[%c0_216, %c0_217] : memref<64x10xbf16, #tpu.memory_space<vmem>>, vector<64x10xbf16>
    %cst_218 = arith.constant dense<0.000000e+00> : vector<1x10xf32>
    %275 = tpu.matmul %273, %274, %cst_218 {dimension_numbers = #tpu.dot_dimension_numbers<[1], [0], [0], [1], [0, 0, 1, 1], [], []>} : vector<1x64xbf16>, vector<64x10xbf16>, vector<1x10xf32> -> vector<1x10xf32>
    %c0_219 = arith.constant 0 : index
    %c0_220 = arith.constant 0 : index
    %276 = vector.load %arg19[%c0_219, %c0_220] : memref<1x10xf32, #tpu.memory_space<vmem>>, vector<1x10xf32>
    %277 = arith.addf %275, %276 : vector<1x10xf32>
    %278 = vector.shape_cast %277 : vector<1x10xf32> to vector<1x1x10xf32>
    %c0_221 = arith.constant 0 : index
    %c0_222 = arith.constant 0 : index
    %c0_223 = arith.constant 0 : index
    %279 = vector.load %arg20[%c0_221, %c0_222, %c0_223] : memref<1x1x10xf32, #tpu.memory_space<vmem>>, vector<1x1x10xf32>
    tpu.vector_store %arg20[%c0_221, %c0_222, %c0_223], %278 {strides = array<i32>} : memref<1x1x10xf32, #tpu.memory_space<vmem>>, vector<1x1x10xf32>,
    return
  }
  func.func @transform_0(%arg0: i32) -> (i32, i32, i32) {
    %c0_i32 = arith.constant 0 : i32
    %c0_i32_0 = arith.constant 0 : i32
    %c0_i32_1 = arith.constant 0 : i32
    return %arg0, %c0_i32, %c0_i32_0 : i32, i32, i32
  }
  func.func @transform_1(%arg0: i32) -> (i32, i32, i32) {
    %c0_i32 = arith.constant 0 : i32
    %c0_i32_0 = arith.constant 0 : i32
    %c0_i32_1 = arith.constant 0 : i32
    %c0_i32_2 = arith.constant 0 : i32
    return %c0_i32, %c0_i32_0, %c0_i32_1 : i32, i32, i32
  }
  func.func @transform_2(%arg0: i32) -> (i32, i32) {
    %c0_i32 = arith.constant 0 : i32
    %c0_i32_0 = arith.constant 0 : i32
    %c0_i32_1 = arith.constant 0 : i32
    return %c0_i32, %c0_i32_0 : i32, i32
  }
  func.func @transform_3(%arg0: i32) -> (i32, i32, i32) {
    %c0_i32 = arith.constant 0 : i32
    %c0_i32_0 = arith.constant 0 : i32
    %c0_i32_1 = arith.constant 0 : i32
    %c0_i32_2 = arith.constant 0 : i32
    return %c0_i32, %c0_i32_0, %c0_i32_1 : i32, i32, i32
  }
  func.func @transform_4(%arg0: i32) -> (i32, i32) {
    %c0_i32 = arith.constant 0 : i32
    %c0_i32_0 = arith.constant 0 : i32
    %c0_i32_1 = arith.constant 0 : i32
    return %c0_i32, %c0_i32_0 : i32, i32
  }
  func.func @transform_5(%arg0: i32) -> (i32, i32, i32) {
    %c0_i32 = arith.constant 0 : i32
    %c0_i32_0 = arith.constant 0 : i32
    %c0_i32_1 = arith.constant 0 : i32
    %c0_i32_2 = arith.constant 0 : i32
    return %c0_i32, %c0_i32_0, %c0_i32_1 : i32, i32, i32
  }
  func.func @transform_6(%arg0: i32) -> (i32, i32) {
    %c0_i32 = arith.constant 0 : i32
    %c0_i32_0 = arith.constant 0 : i32
    %c0_i32_1 = arith.constant 0 : i32
    return %c0_i32, %c0_i32_0 : i32, i32
  }
  func.func @transform_7(%arg0: i32) -> (i32, i32, i32) {
    %c0_i32 = arith.constant 0 : i32
    %c0_i32_0 = arith.constant 0 : i32
    %c0_i32_1 = arith.constant 0 : i32
    %c0_i32_2 = arith.constant 0 : i32
    return %c0_i32, %c0_i32_0, %c0_i32_1 : i32, i32, i32
  }
  func.func @transform_8(%arg0: i32) -> (i32, i32) {
    %c0_i32 = arith.constant 0 : i32
    %c0_i32_0 = arith.constant 0 : i32
    %c0_i32_1 = arith.constant 0 : i32
    return %c0_i32, %c0_i32_0 : i32, i32
  }
  func.func @transform_9(%arg0: i32) -> (i32, i32) {
    %c0_i32 = arith.constant 0 : i32
    %c0_i32_0 = arith.constant 0 : i32
    %c0_i32_1 = arith.constant 0 : i32
    return %c0_i32, %c0_i32_0 : i32, i32
  }
  func.func @transform_10(%arg0: i32) -> (i32, i32) {
    %c0_i32 = arith.constant 0 : i32
    %c0_i32_0 = arith.constant 0 : i32
    %c0_i32_1 = arith.constant 0 : i32
    return %c0_i32, %c0_i32_0 : i32, i32
  }
  func.func @transform_11(%arg0: i32) -> (i32, i32) {
    %c0_i32 = arith.constant 0 : i32
    %c0_i32_0 = arith.constant 0 : i32
    %c0_i32_1 = arith.constant 0 : i32
    return %c0_i32, %c0_i32_0 : i32, i32
  }
  func.func @transform_12(%arg0: i32) -> (i32, i32) {
    %c0_i32 = arith.constant 0 : i32
    %c0_i32_0 = arith.constant 0 : i32
    %c0_i32_1 = arith.constant 0 : i32
    return %c0_i32, %c0_i32_0 : i32, i32
  }
  func.func @transform_13(%arg0: i32) -> (i32, i32, i32) {
    %c0_i32 = arith.constant 0 : i32
    %c0_i32_0 = arith.constant 0 : i32
    %c0_i32_1 = arith.constant 0 : i32
    %c0_i32_2 = arith.constant 0 : i32
    return %c0_i32, %c0_i32_0, %c0_i32_1 : i32, i32, i32
  }
  func.func @transform_14(%arg0: i32) -> (i32, i32) {
    %c0_i32 = arith.constant 0 : i32
    %c0_i32_0 = arith.constant 0 : i32
    %c0_i32_1 = arith.constant 0 : i32
    return %c0_i32, %c0_i32_0 : i32, i32
  }
  func.func @transform_15(%arg0: i32) -> (i32, i32) {
    %c0_i32 = arith.constant 0 : i32
    %c0_i32_0 = arith.constant 0 : i32
    %c0_i32_1 = arith.constant 0 : i32
    return %c0_i32, %c0_i32_0 : i32, i32
  }
  func.func @transform_16(%arg0: i32) -> (i32, i32) {
    %c0_i32 = arith.constant 0 : i32
    %c0_i32_0 = arith.constant 0 : i32
    %c0_i32_1 = arith.constant 0 : i32
    return %c0_i32, %c0_i32_0 : i32, i32
  }
  func.func @transform_17(%arg0: i32) -> (i32, i32) {
    %c0_i32 = arith.constant 0 : i32
    %c0_i32_0 = arith.constant 0 : i32
    %c0_i32_1 = arith.constant 0 : i32
    return %c0_i32, %c0_i32_0 : i32, i32
  }
  func.func @transform_18(%arg0: i32) -> (i32, i32) {
    %c0_i32 = arith.constant 0 : i32
    %c0_i32_0 = arith.constant 0 : i32
    %c0_i32_1 = arith.constant 0 : i32
    return %c0_i32, %c0_i32_0 : i32, i32
  }
  func.func @transform_19(%arg0: i32) -> (i32, i32, i32) {
    %c0_i32 = arith.constant 0 : i32
    %c0_i32_0 = arith.constant 0 : i32
    %c0_i32_1 = arith.constant 0 : i32
    return %arg0, %c0_i32, %c0_i32_0 : i32, i32, i32
  }
}

</mosaic_0001>

<llo_original>
// kernel: mnist_net_forward.1
$region0: #{mnist_net_forward.1}
  #allocation0 [shape = 'u32[]', space=smem, size = 0x4, offset = 0x4, fixed_abs, tag = 'smem constant byte address 0x4 - core index']
  #allocation1 [shape = 'u32[72,128]{1,0:T(1,128)}', space=vmem, size = 0x9000, scoped, tag = 'internal scratch']
  #allocation2 [shape = 'bf16[8,961]{1,0:T(8,128)(2,1)}', space=vmem, size = 0x4000, scoped, tag = 'scratch operand']
  #allocation3 [shape = 'bf16[16,289]{1,0:T(8,128)(2,1)}', space=vmem, size = 0x3000, scoped, tag = 'scratch operand']
  #allocation4 [shape = 'bf16[20,324]{1,0:T(8,128)(2,1)}', space=vmem, size = 0x4800, scoped, tag = 'scratch operand']
  #allocation5 [shape = 'f32[16,929]{1,0:T(8,128)}', space=vmem, size = 0x10000, scoped, tag = 'scratch operand']
  #allocation6 [shape = 'f32[24,305]{1,0:T(8,128)}', space=vmem, size = 0x9000, scoped, tag = 'scratch operand']
  %s0 = inlined_call_operand.vmem [shape: f32[2,1,900], index: 0, kind: input, shape index: {}]
  %s1 = inlined_call_operand.vmem [shape: f32[4,8,1], index: 1, kind: input, shape index: {}]
  %s2 = inlined_call_operand.vmem [shape: f32[8,1], index: 2, kind: input, shape index: {}]
  %s3 = inlined_call_operand.vmem [shape: bf16[4,16,8], index: 3, kind: input, shape index: {}]
  %s4 = inlined_call_operand.vmem [shape: f32[16,1], index: 4, kind: input, shape index: {}]
  %s5 = inlined_call_operand.vmem [shape: bf16[4,20,16], index: 5, kind: input, shape index: {}]
  %s6 = inlined_call_operand.vmem [shape: f32[20,1], index: 6, kind: input, shape index: {}]
  %s7 = inlined_call_operand.vmem [shape: bf16[4,24,20], index: 7, kind: input, shape index: {}]
  %s8 = inlined_call_operand.vmem [shape: f32[24,1], index: 8, kind: input, shape index: {}]
  %s9 = inlined_call_operand.vmem [shape: bf16[869,961], index: 9, kind: input, shape index: {}]
  %s10 = inlined_call_operand.vmem [shape: bf16[897,289], index: 10, kind: input, shape index: {}]
  %s11 = inlined_call_operand.vmem [shape: bf16[271,324], index: 11, kind: input, shape index: {}]
  %s12 = inlined_call_operand.vmem [shape: bf16[286,64], index: 12, kind: input, shape index: {}]
  %s13 = inlined_call_operand.vmem [shape: bf16[24,64,256], index: 13, kind: input, shape index: {}]
  %s14 = inlined_call_operand.vmem [shape: f32[1,256], index: 14, kind: input, shape index: {}]
  %s15 = inlined_call_operand.vmem [shape: bf16[256,64], index: 15, kind: input, shape index: {}]
  %s16 = inlined_call_operand.vmem [shape: f32[1,64], index: 16, kind: input, shape index: {}]
  %s17 = inlined_call_operand.vmem [shape: bf16[64,10], index: 17, kind: input, shape index: {}]
  %s18 = inlined_call_operand.vmem [shape: f32[1,10], index: 18, kind: input, shape index: {}]
  %s19 = inlined_call_operand.hbm [shape: f32[2,1,10], index: 19, kind: output, shape index: {}]
  %s20 = sld [smem:[#allocation0]]
  $region109: #{mnist_net_forward.1} parent=0
    _
  %s22 = ssub.s32 1, %s20
  %s23 = scalar_select 0, %s22, %s20
  $region1: #{mnist_net_forward.1} parent=0
    #allocation7 [shape = 'u8[1024]{0}', space=vmem, size = 0x400, scoped, tag = 'output window, operand 0']
    #allocation8 [shape = 's32[2]{0}', space=sflag, size = 0x8, scoped, tag = 'scoped memory for mnist_net_forward.1']
    %24 = vsyncpa [#allocation8], 0
    %s25 = scalar_lea.sflag [#allocation8], 1
    %26 = vsyncpa %s25, 0
    loop: start=0, step=1, limit=4
    $region2: #{mnist_net_forward.1} parent=1 // loop_pre_header
      _
    $region3: #{mnist_net_forward.1} parent=1 // loop_header
      %s28 = sphi 0, %s32
      %p29 = scmp.ge.s32.totalorder %s28, 4
      %s38 = sphi 0, %s40
      %s41 = sphi 0, %s38
      %s42 = sphi 0, %s41
      %s58 = sphi 0, %s42
      %s62 = sphi 0, %s62
      %s64 = sphi 0, %s62
      %s65 = sphi 0, %s64
      %s79 = sphi 0, %s65
      %s83 = sphi 0, %s83
      %s85 = sphi 0, %s83
      %s86 = sphi 0, %s85
      %s100 = sphi 0, %s86
      %s104 = sphi 0, %s104
      %s106 = sphi 0, %s104
      %s107 = sphi 0, %s106
      %s121 = sphi 0, %s107
      %s125 = sphi 0, %s125
      %s127 = sphi 0, %s125
      %s128 = sphi 0, %s127
      %s142 = sphi 0, %s128
      %s146 = sphi 0, %s146
      %s148 = sphi 0, %s146
      %s149 = sphi 0, %s148
      %s163 = sphi 0, %s149
      %s167 = sphi 0, %s167
      %s169 = sphi 0, %s167
      %s170 = sphi 0, %s169
      %s184 = sphi 0, %s170
      %s188 = sphi 0, %s188
      %s190 = sphi 0, %s188
      %s191 = sphi 0, %s190
      %s205 = sphi 0, %s191
      %s209 = sphi 0, %s209
      %s211 = sphi 0, %s209
      %s212 = sphi 0, %s211
      %s226 = sphi 0, %s212
      %s230 = sphi 0, %s230
      %s232 = sphi 0, %s230
      %s233 = sphi 0, %s232
      %s247 = sphi 0, %s233
      %s251 = sphi 0, %s251
      %s253 = sphi 0, %s251
      %s254 = sphi 0, %s253
      %s268 = sphi 0, %s254
      %s272 = sphi 0, %s272
      %s274 = sphi 0, %s272
      %s275 = sphi 0, %s274
      %s289 = sphi 0, %s275
      %s293 = sphi 0, %s293
      %s295 = sphi 0, %s293
      %s296 = sphi 0, %s295
      %s310 = sphi 0, %s296
      %s314 = sphi 0, %s314
      %s316 = sphi 0, %s314
      %s317 = sphi 0, %s316
      %s331 = sphi 0, %s317
      %s335 = sphi 0, %s335
      %s337 = sphi 0, %s335
      %s338 = sphi 0, %s337
      %s352 = sphi 0, %s338
      %s356 = sphi 0, %s356
      %s358 = sphi 0, %s356
      %s359 = sphi 0, %s358
      %s373 = sphi 0, %s359
      %s377 = sphi 0, %s377
      %s379 = sphi 0, %s377
      %s380 = sphi 0, %s379
      %s394 = sphi 0, %s380
      %s398 = sphi 0, %s398
      %s400 = sphi 0, %s398
      %s401 = sphi 0, %s400
      %s415 = sphi 0, %s401
      %s419 = sphi 0, %s419
      %s421 = sphi 0, %s419
      %s422 = sphi 0, %s421
      %s436 = sphi 0, %s422
      %s442 = sphi 0, %s444
      %s445 = sphi 0, %s442
      %s446 = sphi 0, %s445
      %s462 = sphi 0, %s446
    $region4: #{mnist_net_forward.1} parent=1 // loop_header_branch
      %31 = sbr.rel (%p29) target = $region8
    $region5: #{mnist_net_forward.1} parent=1 // loop_body
      %s33 = ssub.s32 %s28, 1
      %s34 = ssub.s32 %s28, 2
      %s35 = sadd.s32 %s28, 1
      %s36 = ssub.s32 %s28, %s35
      %p37 = scmp.eq.s32.totalorder %s36, 0
      %s39 = sadd.s32 %s38, 1
      %s40 = scalar_select %p37, %s38, %s39
      %p43 = pneg %p37
      %p44 = scmp.eq.s32.totalorder %s28, 1
      %p45 = por %p43, %p44
      %p46 = scmp.ne.s32.totalorder %s38, %s41
      %p47 = scmp.eq.s32.totalorder %s28, 0
      %p48 = por %p46, %p47
      %p49 = scmp.ne.s32.totalorder %s38, %s41
      %p50 = scmp.eq.s32.totalorder %s33, 1
      %p51 = por %p49, %p50
      %p52 = scmp.ne.s32.totalorder %s41, %s42
      %p53 = scmp.eq.s32.totalorder %s33, 0
      %p54 = por %p52, %p53
      %p55 = scmp.ne.s32.totalorder %s41, %s42
      %p56 = scmp.eq.s32.totalorder %s34, 1
      %p57 = por %p55, %p56
      %p59 = scmp.ne.s32.totalorder %s42, %s58
      %p60 = scmp.eq.s32.totalorder %s34, 0
      %p61 = por %p59, %p60
      %s63 = sadd.s32 %s62, 1
      %p66 = scmp.eq.s32.totalorder %s28, 1
      %p67 = scmp.ne.s32.totalorder %s62, %s64
      %p68 = scmp.eq.s32.totalorder %s28, 0
      %p69 = por %p67, %p68
      %p70 = scmp.ne.s32.totalorder %s62, %s64
      %p71 = scmp.eq.s32.totalorder %s33, 1
      %p72 = por %p70, %p71
      %p73 = scmp.ne.s32.totalorder %s64, %s65
      %p74 = scmp.eq.s32.totalorder %s33, 0
      %p75 = por %p73, %p74
      %p76 = scmp.ne.s32.totalorder %s64, %s65
      %p77 = scmp.eq.s32.totalorder %s34, 1
      %p78 = por %p76, %p77
      %p80 = scmp.ne.s32.totalorder %s65, %s79
      %p81 = scmp.eq.s32.totalorder %s34, 0
      %p82 = por %p80, %p81
      %s84 = sadd.s32 %s83, 1
      %p87 = scmp.eq.s32.totalorder %s28, 1
      %p88 = scmp.ne.s32.totalorder %s83, %s85
      %p89 = scmp.eq.s32.totalorder %s28, 0
      %p90 = por %p88, %p89
      %p91 = scmp.ne.s32.totalorder %s83, %s85
      %p92 = scmp.eq.s32.totalorder %s33, 1
      %p93 = por %p91, %p92
      %p94 = scmp.ne.s32.totalorder %s85, %s86
      %p95 = scmp.eq.s32.totalorder %s33, 0
      %p96 = por %p94, %p95
      %p97 = scmp.ne.s32.totalorder %s85, %s86
      %p98 = scmp.eq.s32.totalorder %s34, 1
      %p99 = por %p97, %p98
      %p101 = scmp.ne.s32.totalorder %s86, %s100
      %p102 = scmp.eq.s32.totalorder %s34, 0
      %p103 = por %p101, %p102
      %s105 = sadd.s32 %s104, 1
      %p108 = scmp.eq.s32.totalorder %s28, 1
      %p109 = scmp.ne.s32.totalorder %s104, %s106
      %p110 = scmp.eq.s32.totalorder %s28, 0
      %p111 = por %p109, %p110
      %p112 = scmp.ne.s32.totalorder %s104, %s106
      %p113 = scmp.eq.s32.totalorder %s33, 1
      %p114 = por %p112, %p113
      %p115 = scmp.ne.s32.totalorder %s106, %s107
      %p116 = scmp.eq.s32.totalorder %s33, 0
      %p117 = por %p115, %p116
      %p118 = scmp.ne.s32.totalorder %s106, %s107
      %p119 = scmp.eq.s32.totalorder %s34, 1
      %p120 = por %p118, %p119
      %p122 = scmp.ne.s32.totalorder %s107, %s121
      %p123 = scmp.eq.s32.totalorder %s34, 0
      %p124 = por %p122, %p123
      %s126 = sadd.s32 %s125, 1
      %p129 = scmp.eq.s32.totalorder %s28, 1
      %p130 = scmp.ne.s32.totalorder %s125, %s127
      %p131 = scmp.eq.s32.totalorder %s28, 0
      %p132 = por %p130, %p131
      %p133 = scmp.ne.s32.totalorder %s125, %s127
      %p134 = scmp.eq.s32.totalorder %s33, 1
      %p135 = por %p133, %p134
      %p136 = scmp.ne.s32.totalorder %s127, %s128
      %p137 = scmp.eq.s32.totalorder %s33, 0
      %p138 = por %p136, %p137
      %p139 = scmp.ne.s32.totalorder %s127, %s128
      %p140 = scmp.eq.s32.totalorder %s34, 1
      %p141 = por %p139, %p140
      %p143 = scmp.ne.s32.totalorder %s128, %s142
      %p144 = scmp.eq.s32.totalorder %s34, 0
      %p145 = por %p143, %p144
      %s147 = sadd.s32 %s146, 1
      %p150 = scmp.eq.s32.totalorder %s28, 1
      %p151 = scmp.ne.s32.totalorder %s146, %s148
      %p152 = scmp.eq.s32.totalorder %s28, 0
      %p153 = por %p151, %p152
      %p154 = scmp.ne.s32.totalorder %s146, %s148
      %p155 = scmp.eq.s32.totalorder %s33, 1
      %p156 = por %p154, %p155
      %p157 = scmp.ne.s32.totalorder %s148, %s149
      %p158 = scmp.eq.s32.totalorder %s33, 0
      %p159 = por %p157, %p158
      %p160 = scmp.ne.s32.totalorder %s148, %s149
      %p161 = scmp.eq.s32.totalorder %s34, 1
      %p162 = por %p160, %p161
      %p164 = scmp.ne.s32.totalorder %s149, %s163
      %p165 = scmp.eq.s32.totalorder %s34, 0
      %p166 = por %p164, %p165
      %s168 = sadd.s32 %s167, 1
      %p171 = scmp.eq.s32.totalorder %s28, 1
      %p172 = scmp.ne.s32.totalorder %s167, %s169
      %p173 = scmp.eq.s32.totalorder %s28, 0
      %p174 = por %p172, %p173
      %p175 = scmp.ne.s32.totalorder %s167, %s169
      %p176 = scmp.eq.s32.totalorder %s33, 1
      %p177 = por %p175, %p176
      %p178 = scmp.ne.s32.totalorder %s169, %s170
      %p179 = scmp.eq.s32.totalorder %s33, 0
      %p180 = por %p178, %p179
      %p181 = scmp.ne.s32.totalorder %s169, %s170
      %p182 = scmp.eq.s32.totalorder %s34, 1
      %p183 = por %p181, %p182
      %p185 = scmp.ne.s32.totalorder %s170, %s184
      %p186 = scmp.eq.s32.totalorder %s34, 0
      %p187 = por %p185, %p186
      %s189 = sadd.s32 %s188, 1
      %p192 = scmp.eq.s32.totalorder %s28, 1
      %p193 = scmp.ne.s32.totalorder %s188, %s190
      %p194 = scmp.eq.s32.totalorder %s28, 0
      %p195 = por %p193, %p194
      %p196 = scmp.ne.s32.totalorder %s188, %s190
      %p197 = scmp.eq.s32.totalorder %s33, 1
      %p198 = por %p196, %p197
      %p199 = scmp.ne.s32.totalorder %s190, %s191
      %p200 = scmp.eq.s32.totalorder %s33, 0
      %p201 = por %p199, %p200
      %p202 = scmp.ne.s32.totalorder %s190, %s191
      %p203 = scmp.eq.s32.totalorder %s34, 1
      %p204 = por %p202, %p203
      %p206 = scmp.ne.s32.totalorder %s191, %s205
      %p207 = scmp.eq.s32.totalorder %s34, 0
      %p208 = por %p206, %p207
      %s210 = sadd.s32 %s209, 1
      %p213 = scmp.eq.s32.totalorder %s28, 1
      %p214 = scmp.ne.s32.totalorder %s209, %s211
      %p215 = scmp.eq.s32.totalorder %s28, 0
      %p216 = por %p214, %p215
      %p217 = scmp.ne.s32.totalorder %s209, %s211
      %p218 = scmp.eq.s32.totalorder %s33, 1
      %p219 = por %p217, %p218
      %p220 = scmp.ne.s32.totalorder %s211, %s212
      %p221 = scmp.eq.s32.totalorder %s33, 0
      %p222 = por %p220, %p221
      %p223 = scmp.ne.s32.totalorder %s211, %s212
      %p224 = scmp.eq.s32.totalorder %s34, 1
      %p225 = por %p223, %p224
      %p227 = scmp.ne.s32.totalorder %s212, %s226
      %p228 = scmp.eq.s32.totalorder %s34, 0
      %p229 = por %p227, %p228
      %s231 = sadd.s32 %s230, 1
      %p234 = scmp.eq.s32.totalorder %s28, 1
      %p235 = scmp.ne.s32.totalorder %s230, %s232
      %p236 = scmp.eq.s32.totalorder %s28, 0
      %p237 = por %p235, %p236
      %p238 = scmp.ne.s32.totalorder %s230, %s232
      %p239 = scmp.eq.s32.totalorder %s33, 1
      %p240 = por %p238, %p239
      %p241 = scmp.ne.s32.totalorder %s232, %s233
      %p242 = scmp.eq.s32.totalorder %s33, 0
      %p243 = por %p241, %p242
      %p244 = scmp.ne.s32.totalorder %s232, %s233
      %p245 = scmp.eq.s32.totalorder %s34, 1
      %p246 = por %p244, %p245
      %p248 = scmp.ne.s32.totalorder %s233, %s247
      %p249 = scmp.eq.s32.totalorder %s34, 0
      %p250 = por %p248, %p249
      %s252 = sadd.s32 %s251, 1
      %p255 = scmp.eq.s32.totalorder %s28, 1
      %p256 = scmp.ne.s32.totalorder %s251, %s253
      %p257 = scmp.eq.s32.totalorder %s28, 0
      %p258 = por %p256, %p257
      %p259 = scmp.ne.s32.totalorder %s251, %s253
      %p260 = scmp.eq.s32.totalorder %s33, 1
      %p261 = por %p259, %p260
      %p262 = scmp.ne.s32.totalorder %s253, %s254
      %p263 = scmp.eq.s32.totalorder %s33, 0
      %p264 = por %p262, %p263
      %p265 = scmp.ne.s32.totalorder %s253, %s254
      %p266 = scmp.eq.s32.totalorder %s34, 1
      %p267 = por %p265, %p266
      %p269 = scmp.ne.s32.totalorder %s254, %s268
      %p270 = scmp.eq.s32.totalorder %s34, 0
      %p271 = por %p269, %p270
      %s273 = sadd.s32 %s272, 1
      %p276 = scmp.eq.s32.totalorder %s28, 1
      %p277 = scmp.ne.s32.totalorder %s272, %s274
      %p278 = scmp.eq.s32.totalorder %s28, 0
      %p279 = por %p277, %p278
      %p280 = scmp.ne.s32.totalorder %s272, %s274
      %p281 = scmp.eq.s32.totalorder %s33, 1
      %p282 = por %p280, %p281
      %p283 = scmp.ne.s32.totalorder %s274, %s275
      %p284 = scmp.eq.s32.totalorder %s33, 0
      %p285 = por %p283, %p284
      %p286 = scmp.ne.s32.totalorder %s274, %s275
      %p287 = scmp.eq.s32.totalorder %s34, 1
      %p288 = por %p286, %p287
      %p290 = scmp.ne.s32.totalorder %s275, %s289
      %p291 = scmp.eq.s32.totalorder %s34, 0
      %p292 = por %p290, %p291
      %s294 = sadd.s32 %s293, 1
      %p297 = scmp.eq.s32.totalorder %s28, 1
      %p298 = scmp.ne.s32.totalorder %s293, %s295
      %p299 = scmp.eq.s32.totalorder %s28, 0
      %p300 = por %p298, %p299
      %p301 = scmp.ne.s32.totalorder %s293, %s295
      %p302 = scmp.eq.s32.totalorder %s33, 1
      %p303 = por %p301, %p302
      %p304 = scmp.ne.s32.totalorder %s295, %s296
      %p305 = scmp.eq.s32.totalorder %s33, 0
      %p306 = por %p304, %p305
      %p307 = scmp.ne.s32.totalorder %s295, %s296
      %p308 = scmp.eq.s32.totalorder %s34, 1
      %p309 = por %p307, %p308
      %p311 = scmp.ne.s32.totalorder %s296, %s310
      %p312 = scmp.eq.s32.totalorder %s34, 0
      %p313 = por %p311, %p312
      %s315 = sadd.s32 %s314, 1
      %p318 = scmp.eq.s32.totalorder %s28, 1
      %p319 = scmp.ne.s32.totalorder %s314, %s316
      %p320 = scmp.eq.s32.totalorder %s28, 0
      %p321 = por %p319, %p320
      %p322 = scmp.ne.s32.totalorder %s314, %s316
      %p323 = scmp.eq.s32.totalorder %s33, 1
      %p324 = por %p322, %p323
      %p325 = scmp.ne.s32.totalorder %s316, %s317
      %p326 = scmp.eq.s32.totalorder %s33, 0
      %p327 = por %p325, %p326
      %p328 = scmp.ne.s32.totalorder %s316, %s317
      %p329 = scmp.eq.s32.totalorder %s34, 1
      %p330 = por %p328, %p329
      %p332 = scmp.ne.s32.totalorder %s317, %s331
      %p333 = scmp.eq.s32.totalorder %s34, 0
      %p334 = por %p332, %p333
      %s336 = sadd.s32 %s335, 1
      %p339 = scmp.eq.s32.totalorder %s28, 1
      %p340 = scmp.ne.s32.totalorder %s335, %s337
      %p341 = scmp.eq.s32.totalorder %s28, 0
      %p342 = por %p340, %p341
      %p343 = scmp.ne.s32.totalorder %s335, %s337
      %p344 = scmp.eq.s32.totalorder %s33, 1
      %p345 = por %p343, %p344
      %p346 = scmp.ne.s32.totalorder %s337, %s338
      %p347 = scmp.eq.s32.totalorder %s33, 0
      %p348 = por %p346, %p347
      %p349 = scmp.ne.s32.totalorder %s337, %s338
      %p350 = scmp.eq.s32.totalorder %s34, 1
      %p351 = por %p349, %p350
      %p353 = scmp.ne.s32.totalorder %s338, %s352
      %p354 = scmp.eq.s32.totalorder %s34, 0
      %p355 = por %p353, %p354
      %s357 = sadd.s32 %s356, 1
      %p360 = scmp.eq.s32.totalorder %s28, 1
      %p361 = scmp.ne.s32.totalorder %s356, %s358
      %p362 = scmp.eq.s32.totalorder %s28, 0
      %p363 = por %p361, %p362
      %p364 = scmp.ne.s32.totalorder %s356, %s358
      %p365 = scmp.eq.s32.totalorder %s33, 1
      %p366 = por %p364, %p365
      %p367 = scmp.ne.s32.totalorder %s358, %s359
      %p368 = scmp.eq.s32.totalorder %s33, 0
      %p369 = por %p367, %p368
      %p370 = scmp.ne.s32.totalorder %s358, %s359
      %p371 = scmp.eq.s32.totalorder %s34, 1
      %p372 = por %p370, %p371
      %p374 = scmp.ne.s32.totalorder %s359, %s373
      %p375 = scmp.eq.s32.totalorder %s34, 0
      %p376 = por %p374, %p375
      %s378 = sadd.s32 %s377, 1
      %p381 = scmp.eq.s32.totalorder %s28, 1
      %p382 = scmp.ne.s32.totalorder %s377, %s379
      %p383 = scmp.eq.s32.totalorder %s28, 0
      %p384 = por %p382, %p383
      %p385 = scmp.ne.s32.totalorder %s377, %s379
      %p386 = scmp.eq.s32.totalorder %s33, 1
      %p387 = por %p385, %p386
      %p388 = scmp.ne.s32.totalorder %s379, %s380
      %p389 = scmp.eq.s32.totalorder %s33, 0
      %p390 = por %p388, %p389
      %p391 = scmp.ne.s32.totalorder %s379, %s380
      %p392 = scmp.eq.s32.totalorder %s34, 1
      %p393 = por %p391, %p392
      %p395 = scmp.ne.s32.totalorder %s380, %s394
      %p396 = scmp.eq.s32.totalorder %s34, 0
      %p397 = por %p395, %p396
      %s399 = sadd.s32 %s398, 1
      %p402 = scmp.eq.s32.totalorder %s28, 1
      %p403 = scmp.ne.s32.totalorder %s398, %s400
      %p404 = scmp.eq.s32.totalorder %s28, 0
      %p405 = por %p403, %p404
      %p406 = scmp.ne.s32.totalorder %s398, %s400
      %p407 = scmp.eq.s32.totalorder %s33, 1
      %p408 = por %p406, %p407
      %p409 = scmp.ne.s32.totalorder %s400, %s401
      %p410 = scmp.eq.s32.totalorder %s33, 0
      %p411 = por %p409, %p410
      %p412 = scmp.ne.s32.totalorder %s400, %s401
      %p413 = scmp.eq.s32.totalorder %s34, 1
      %p414 = por %p412, %p413
      %p416 = scmp.ne.s32.totalorder %s401, %s415
      %p417 = scmp.eq.s32.totalorder %s34, 0
      %p418 = por %p416, %p417
      %s420 = sadd.s32 %s419, 1
      %p423 = scmp.eq.s32.totalorder %s28, 1
      %p424 = scmp.ne.s32.totalorder %s419, %s421
      %p425 = scmp.eq.s32.totalorder %s28, 0
      %p426 = por %p424, %p425
      %p427 = scmp.ne.s32.totalorder %s419, %s421
      %p428 = scmp.eq.s32.totalorder %s33, 1
      %p429 = por %p427, %p428
      %p430 = scmp.ne.s32.totalorder %s421, %s422
      %p431 = scmp.eq.s32.totalorder %s33, 0
      %p432 = por %p430, %p431
      %p433 = scmp.ne.s32.totalorder %s421, %s422
      %p434 = scmp.eq.s32.totalorder %s34, 1
      %p435 = por %p433, %p434
      %p437 = scmp.ne.s32.totalorder %s422, %s436
      %p438 = scmp.eq.s32.totalorder %s34, 0
      %p439 = por %p437, %p438
      %s440 = ssub.s32 %s28, %s35
      %p441 = scmp.eq.s32.totalorder %s440, 0
      %s443 = sadd.s32 %s442, 1
      %s444 = scalar_select %p441, %s442, %s443
      %p447 = pneg %p441
      %p448 = scmp.eq.s32.totalorder %s28, 1
      %p449 = por %p447, %p448
      %p450 = scmp.ne.s32.totalorder %s442, %s445
      %p451 = scmp.eq.s32.totalorder %s28, 0
      %p452 = por %p450, %p451
      %p453 = scmp.ne.s32.totalorder %s442, %s445
      %p454 = scmp.eq.s32.totalorder %s33, 1
      %p455 = por %p453, %p454
      %p456 = scmp.ne.s32.totalorder %s445, %s446
      %p457 = scmp.eq.s32.totalorder %s33, 0
      %p458 = por %p456, %p457
      %p459 = scmp.ne.s32.totalorder %s445, %s446
      %p460 = scmp.eq.s32.totalorder %s34, 1
      %p461 = por %p459, %p460
      %p463 = scmp.ne.s32.totalorder %s446, %s462
      %p464 = scmp.eq.s32.totalorder %s34, 0
      %p465 = por %p463, %p464
      %p466 = scmp.le.s32.totalorder 1, %s28
      %p467 = scmp.lt.s32.totalorder %s28, 3
      %p468 = pnand %p466, %p467
      %p469 = pneg %p468
      // Predicated region
      $region9: #{mnist_net_forward.1} parent=5 // pred_check
        _
      $region10: #{mnist_net_forward.1} parent=5 // pred_check_branch
        %471 = sbr.rel (%p468) target = $region12
      $region11: #{mnist_net_forward.1} parent=5 // pred_region
        %s472 = ssub.s32 %s28, 1
        // Predicated region
        $region13: #{mnist_net_forward.1} parent=11 // pred_check
          %p473 = pneg %p75
        $region14: #{mnist_net_forward.1} parent=11 // pred_check_branch
          %475 = sbr.rel (%p473) target = $region16
        $region15: #{mnist_net_forward.1} parent=11 // pred_region
          _
        $region16: #{mnist_net_forward.1} parent=11 // pred_fallthru
          _
        // Predicated region
        $region17: #{mnist_net_forward.1} parent=11 // pred_check
          %p476 = pneg %p96
        $region18: #{mnist_net_forward.1} parent=11 // pred_check_branch
          %478 = sbr.rel (%p476) target = $region20
        $region19: #{mnist_net_forward.1} parent=11 // pred_region
          _
        $region20: #{mnist_net_forward.1} parent=11 // pred_fallthru
          _
        // Predicated region
        $region21: #{mnist_net_forward.1} parent=11 // pred_check
          %p479 = pneg %p117
        $region22: #{mnist_net_forward.1} parent=11 // pred_check_branch
          %481 = sbr.rel (%p479) target = $region24
        $region23: #{mnist_net_forward.1} parent=11 // pred_region
          _
        $region24: #{mnist_net_forward.1} parent=11 // pred_fallthru
          _
        // Predicated region
        $region25: #{mnist_net_forward.1} parent=11 // pred_check
          %p482 = pneg %p138
        $region26: #{mnist_net_forward.1} parent=11 // pred_check_branch
          %484 = sbr.rel (%p482) target = $region28
        $region27: #{mnist_net_forward.1} parent=11 // pred_region
          _
        $region28: #{mnist_net_forward.1} parent=11 // pred_fallthru
          _
        // Predicated region
        $region29: #{mnist_net_forward.1} parent=11 // pred_check
          %p485 = pneg %p159
        $region30: #{mnist_net_forward.1} parent=11 // pred_check_branch
          %487 = sbr.rel (%p485) target = $region32
        $region31: #{mnist_net_forward.1} parent=11 // pred_region
          _
        $region32: #{mnist_net_forward.1} parent=11 // pred_fallthru
          _
        // Predicated region
        $region33: #{mnist_net_forward.1} parent=11 // pred_check
          %p488 = pneg %p180
        $region34: #{mnist_net_forward.1} parent=11 // pred_check_branch
          %490 = sbr.rel (%p488) target = $region36
        $region35: #{mnist_net_forward.1} parent=11 // pred_region
          _
        $region36: #{mnist_net_forward.1} parent=11 // pred_fallthru
          _
        // Predicated region
        $region37: #{mnist_net_forward.1} parent=11 // pred_check
          %p491 = pneg %p201
        $region38: #{mnist_net_forward.1} parent=11 // pred_check_branch
          %493 = sbr.rel (%p491) target = $region40
        $region39: #{mnist_net_forward.1} parent=11 // pred_region
          _
        $region40: #{mnist_net_forward.1} parent=11 // pred_fallthru
          _
        // Predicated region
        $region41: #{mnist_net_forward.1} parent=11 // pred_check
          %p494 = pneg %p222
        $region42: #{mnist_net_forward.1} parent=11 // pred_check_branch
          %496 = sbr.rel (%p494) target = $region44
        $region43: #{mnist_net_forward.1} parent=11 // pred_region
          _
        $region44: #{mnist_net_forward.1} parent=11 // pred_fallthru
          _
        // Predicated region
        $region45: #{mnist_net_forward.1} parent=11 // pred_check
          %p497 = pneg %p243
        $region46: #{mnist_net_forward.1} parent=11 // pred_check_branch
          %499 = sbr.rel (%p497) target = $region48
        $region47: #{mnist_net_forward.1} parent=11 // pred_region
          _
        $region48: #{mnist_net_forward.1} parent=11 // pred_fallthru
          _
        // Predicated region
        $region49: #{mnist_net_forward.1} parent=11 // pred_check
          %p500 = pneg %p264
        $region50: #{mnist_net_forward.1} parent=11 // pred_check_branch
          %502 = sbr.rel (%p500) target = $region52
        $region51: #{mnist_net_forward.1} parent=11 // pred_region
          _
        $region52: #{mnist_net_forward.1} parent=11 // pred_fallthru
          _
        // Predicated region
        $region53: #{mnist_net_forward.1} parent=11 // pred_check
          %p503 = pneg %p285
        $region54: #{mnist_net_forward.1} parent=11 // pred_check_branch
          %505 = sbr.rel (%p503) target = $region56
        $region55: #{mnist_net_forward.1} parent=11 // pred_region
          _
        $region56: #{mnist_net_forward.1} parent=11 // pred_fallthru
          _
        // Predicated region
        $region57: #{mnist_net_forward.1} parent=11 // pred_check
          %p506 = pneg %p306
        $region58: #{mnist_net_forward.1} parent=11 // pred_check_branch
          %508 = sbr.rel (%p506) target = $region60
        $region59: #{mnist_net_forward.1} parent=11 // pred_region
          _
        $region60: #{mnist_net_forward.1} parent=11 // pred_fallthru
          _
        // Predicated region
        $region61: #{mnist_net_forward.1} parent=11 // pred_check
          %p509 = pneg %p327
        $region62: #{mnist_net_forward.1} parent=11 // pred_check_branch
          %511 = sbr.rel (%p509) target = $region64
        $region63: #{mnist_net_forward.1} parent=11 // pred_region
          _
        $region64: #{mnist_net_forward.1} parent=11 // pred_fallthru
          _
        // Predicated region
        $region65: #{mnist_net_forward.1} parent=11 // pred_check
          %p512 = pneg %p348
        $region66: #{mnist_net_forward.1} parent=11 // pred_check_branch
          %514 = sbr.rel (%p512) target = $region68
        $region67: #{mnist_net_forward.1} parent=11 // pred_region
          _
        $region68: #{mnist_net_forward.1} parent=11 // pred_fallthru
          _
        // Predicated region
        $region69: #{mnist_net_forward.1} parent=11 // pred_check
          %p515 = pneg %p369
        $region70: #{mnist_net_forward.1} parent=11 // pred_check_branch
          %517 = sbr.rel (%p515) target = $region72
        $region71: #{mnist_net_forward.1} parent=11 // pred_region
          _
        $region72: #{mnist_net_forward.1} parent=11 // pred_fallthru
          _
        // Predicated region
        $region73: #{mnist_net_forward.1} parent=11 // pred_check
          %p518 = pneg %p390
        $region74: #{mnist_net_forward.1} parent=11 // pred_check_branch
          %520 = sbr.rel (%p518) target = $region76
        $region75: #{mnist_net_forward.1} parent=11 // pred_region
          _
        $region76: #{mnist_net_forward.1} parent=11 // pred_fallthru
          _
        // Predicated region
        $region77: #{mnist_net_forward.1} parent=11 // pred_check
          %p521 = pneg %p411
        $region78: #{mnist_net_forward.1} parent=11 // pred_check_branch
          %523 = sbr.rel (%p521) target = $region80
        $region79: #{mnist_net_forward.1} parent=11 // pred_region
          _
        $region80: #{mnist_net_forward.1} parent=11 // pred_fallthru
          _
        // Predicated region
        $region81: #{mnist_net_forward.1} parent=11 // pred_check
          %p524 = pneg %p432
        $region82: #{mnist_net_forward.1} parent=11 // pred_check_branch
          %526 = sbr.rel (%p524) target = $region84
        $region83: #{mnist_net_forward.1} parent=11 // pred_region
          _
        $region84: #{mnist_net_forward.1} parent=11 // pred_fallthru
          _
      $region12: #{mnist_net_forward.1} parent=5 // pred_fallthru
        _
      %p527 = scmp.lt.s32.totalorder %s28, 2
      // Predicated region
      $region85: #{mnist_net_forward.1} parent=5 // pred_check
        %p528 = pneg %p527
      $region86: #{mnist_net_forward.1} parent=5 // pred_check_branch
        %530 = sbr.rel (%p528) target = $region88
      $region87: #{mnist_net_forward.1} parent=5 // pred_region
        // Predicated region
        $region89: #{mnist_net_forward.1} parent=87 // pred_check
          %p531 = pneg %p48
        $region90: #{mnist_net_forward.1} parent=87 // pred_check_branch
          %533 = sbr.rel (%p531) target = $region92
        $region91: #{mnist_net_forward.1} parent=87 // pred_region
          %p534 = scmp.lt.s32.totalorder %s28, 1
          %s535 = scalar_select %p534, %s28, 1
          %s536 = smul.addr %s535, 8
          %s537 = scalar_lea.vmem %s0, %s536
        $region92: #{mnist_net_forward.1} parent=87 // pred_fallthru
          _
      $region88: #{mnist_net_forward.1} parent=5 // pred_fallthru
        _
      %p538 = scmp.le.s32.totalorder 1, %s28
      %p539 = scmp.lt.s32.totalorder %s28, 3
      %p540 = pnand %p538, %p539
      %p541 = pneg %p540
      // Predicated region
      $region93: #{mnist_net_forward.1} parent=5 // pred_check
        _
      $region94: #{mnist_net_forward.1} parent=5 // pred_check_branch
        %543 = sbr.rel (%p540) target = $region96
      $region95: #{mnist_net_forward.1} parent=5 // pred_region
        %s544 = ssub.s32 %s28, 1
        %p545 = scmp.lt.s32.totalorder %s33, 1
        %s546 = scalar_select %p545, %s33, 1
        %s547 = smul.addr %s546, 8
        %s548 = scalar_lea.vmem %s0, %s547
        %p549 = pneg %p54
        %p550 = pneg %p51
        %p551 = pneg %p75
        %p552 = pneg %p72
        %p553 = pneg %p96
        %p554 = pneg %p93
        %p555 = pneg %p117
        %p556 = pneg %p114
        %p557 = pneg %p138
        %p558 = pneg %p135
        %p559 = pneg %p159
        %p560 = pneg %p156
        %p561 = pneg %p180
        %p562 = pneg %p177
        %p563 = pneg %p201
        %p564 = pneg %p198
        %p565 = pneg %p222
        %p566 = pneg %p219
        %p567 = pneg %p243
        %p568 = pneg %p240
        %p569 = pneg %p264
        %p570 = pneg %p261
        %p571 = pneg %p285
        %p572 = pneg %p282
        %p573 = pneg %p306
        %p574 = pneg %p303
        %p575 = pneg %p327
        %p576 = pneg %p324
        %p577 = pneg %p348
        %p578 = pneg %p345
        %p579 = pneg %p369
        %p580 = pneg %p366
        %p581 = pneg %p390
        %p582 = pneg %p387
        %p583 = pneg %p411
        %p584 = pneg %p408
        %p585 = pneg %p432
        %p586 = pneg %p429
        %p587 = pneg %p458
        %p588 = pneg %p455
        %s589 = sand.u32 %s445, 1
        %s590 = scalar_lea.sflag [#allocation8], %s589
        %s591 = sand.u32 %s445, 1
        %s592 = scalar_lea.vmem [#allocation7], %s591
        %p593 = scmp.lt.s32.totalorder %s33, 1
        %s594 = scalar_select %p593, %s33, 1
        %s595 = smul.addr %s594, 8
        %s596 = scalar_lea.vmem %s0, %s595
        %v598 = vld [vmem:[%s596] sm:$0xff]
        %v599 = vld [vmem:[%s1] sm:$0xff]
        %601 = vset.pattern.permute.xlu0 0
        %602 = vperm.xlu0 %601, %v599
        %v603 = vpop.permute.xlu0 %602
        %v606 = vperm.slane %v598, 0
        %v607 = vperm.slane %v598, 1
        %v608 = vperm.slane %v598, 2
        %v609 = vperm.slane %v598, 3
        %v610 = vperm.slane %v598, 4
        %v611 = vperm.slane %v598, 5
        %v612 = vperm.slane %v598, 6
        %v620 = vmul.f32 %v603, %v606
        %v621 = vmul.f32 %v603, %v607
        %v622 = vmul.f32 %v603, %v608
        %v623 = vmul.f32 %v603, %v609
        %v624 = vmul.f32 %v603, %v610
        %v625 = vmul.f32 %v603, %v611
        %v626 = vmul.f32 %v603, %v612
        %s627 = scalar_lea.vmem %s1, 8
        %v628 = vld [vmem:[%s627] sm:$0xff]
        %630 = vset.pattern.permute.xlu0 0
        %631 = vperm.xlu0 %630, %v628
        %v632 = vpop.permute.xlu0 %631
        %v634 = vmul.f32 %v632, %v606
        %v635 = vmul.f32 %v632, %v607
        %v636 = vmul.f32 %v632, %v608
        %v637 = vmul.f32 %v632, %v609
        %v638 = vmul.f32 %v632, %v610
        %v639 = vmul.f32 %v632, %v611
        %v640 = vmul.f32 %v632, %v612
        %648 = vrot.lane.b32.xlu0 %v634, 127
        %v649 = vpop.permute.xlu0 %648
        %650 = vrot.lane.b32.xlu0 %v635, 127
        %v651 = vpop.permute.xlu0 %650
        %652 = vrot.lane.b32.xlu0 %v636, 127
        %v653 = vpop.permute.xlu0 %652
        %654 = vrot.lane.b32.xlu0 %v637, 127
        %v655 = vpop.permute.xlu0 %654
        %656 = vrot.lane.b32.xlu0 %v638, 127
        %v657 = vpop.permute.xlu0 %656
        %658 = vrot.lane.b32.xlu0 %v639, 127
        %v659 = vpop.permute.xlu0 %658
        %660 = vrot.lane.b32.xlu0 %v640, 127
        %v661 = vpop.permute.xlu0 %660
        %vm662 = vcmask 1039360
        %v663 = vsel %vm662, %v649, %v651
        %v664 = vsel %vm662, %v651, %v653
        %v665 = vsel %vm662, %v653, %v655
        %v666 = vsel %vm662, %v655, %v657
        %v667 = vsel %vm662, %v657, %v659
        %v668 = vsel %vm662, %v659, %v661
        %v676 = vadd.f32 %v620, %v663
        %v677 = vadd.f32 %v621, %v664
        %v678 = vadd.f32 %v622, %v665
        %v679 = vadd.f32 %v623, %v666
        %v680 = vadd.f32 %v624, %v667
        %v681 = vadd.f32 %v625, %v668
        %v682 = vadd.f32 %v626, %v661
        %s683 = scalar_lea.vmem %s1, 16
        %v684 = vld [vmem:[%s683] sm:$0xff]
        %686 = vset.pattern.permute.xlu0 0
        %687 = vperm.xlu0 %686, %v684
        %v688 = vpop.permute.xlu0 %687
        %v690 = vperm.slane %v598, 7
        %v692 = vmul.f32 %v688, %v606
        %v693 = vmul.f32 %v688, %v607
        %v694 = vmul.f32 %v688, %v608
        %v695 = vmul.f32 %v688, %v609
        %v696 = vmul.f32 %v688, %v610
        %v697 = vmul.f32 %v688, %v611
        %v698 = vmul.f32 %v688, %v612
        %v699 = vmul.f32 %v688, %v690
        %708 = vrot.lane.b32.xlu0 %v692, 98
        %v709 = vpop.permute.xlu0 %708
        %710 = vrot.lane.b32.xlu0 %v693, 98
        %v711 = vpop.permute.xlu0 %710
        %712 = vrot.lane.b32.xlu0 %v694, 98
        %v713 = vpop.permute.xlu0 %712
        %714 = vrot.lane.b32.xlu0 %v695, 98
        %v715 = vpop.permute.xlu0 %714
        %716 = vrot.lane.b32.xlu0 %v696, 98
        %v717 = vpop.permute.xlu0 %716
        %718 = vrot.lane.b32.xlu0 %v697, 98
        %v719 = vpop.permute.xlu0 %718
        %720 = vrot.lane.b32.xlu0 %v698, 98
        %v721 = vpop.permute.xlu0 %720
        %722 = vrot.lane.b32.xlu0 %v699, 98
        %v723 = vpop.permute.xlu0 %722
        %vm724 = vcmask 801792
        %v725 = vsel %vm724, %v709, %v711
        %v726 = vsel %vm724, %v711, %v713
        %v727 = vsel %vm724, %v713, %v715
        %v728 = vsel %vm724, %v715, %v717
        %v729 = vsel %vm724, %v717, %v719
        %v730 = vsel %vm724, %v719, %v721
        %v731 = vsel %vm724, %v721, %v723
        %v739 = vadd.f32 %v676, %v725
        %v740 = vadd.f32 %v677, %v726
        %v741 = vadd.f32 %v678, %v727
        %v742 = vadd.f32 %v679, %v728
        %v743 = vadd.f32 %v680, %v729
        %v744 = vadd.f32 %v681, %v730
        %v745 = vadd.f32 %v682, %v731
        %s746 = scalar_lea.vmem %s1, 24
        %v747 = vld [vmem:[%s746] sm:$0xff]
        %749 = vset.pattern.permute.xlu0 0
        %750 = vperm.xlu0 %749, %v747
        %v751 = vpop.permute.xlu0 %750
        %v753 = vmul.f32 %v751, %v606
        %v754 = vmul.f32 %v751, %v607
        %v755 = vmul.f32 %v751, %v608
        %v756 = vmul.f32 %v751, %v609
        %v757 = vmul.f32 %v751, %v610
        %v758 = vmul.f32 %v751, %v611
        %v759 = vmul.f32 %v751, %v612
        %v760 = vmul.f32 %v751, %v690
        %769 = vrot.lane.b32.xlu0 %v753, 97
        %v770 = vpop.permute.xlu0 %769
        %771 = vrot.lane.b32.xlu0 %v754, 97
        %v772 = vpop.permute.xlu0 %771
        %773 = vrot.lane.b32.xlu0 %v755, 97
        %v774 = vpop.permute.xlu0 %773
        %775 = vrot.lane.b32.xlu0 %v756, 97
        %v776 = vpop.permute.xlu0 %775
        %777 = vrot.lane.b32.xlu0 %v757, 97
        %v778 = vpop.permute.xlu0 %777
        %779 = vrot.lane.b32.xlu0 %v758, 97
        %v780 = vpop.permute.xlu0 %779
        %781 = vrot.lane.b32.xlu0 %v759, 97
        %v782 = vpop.permute.xlu0 %781
        %783 = vrot.lane.b32.xlu0 %v760, 97
        %v784 = vpop.permute.xlu0 %783
        %vm785 = vcmask 793600
        %v786 = vsel %vm785, %v770, %v772
        %v787 = vsel %vm785, %v772, %v774
        %v788 = vsel %vm785, %v774, %v776
        %v789 = vsel %vm785, %v776, %v778
        %v790 = vsel %vm785, %v778, %v780
        %v791 = vsel %vm785, %v780, %v782
        %v792 = vsel %vm785, %v782, %v784
        %v800 = vadd.f32 %v739, %v786
        %v801 = vadd.f32 %v740, %v787
        %v802 = vadd.f32 %v741, %v788
        %v803 = vadd.f32 %v742, %v789
        %v804 = vadd.f32 %v743, %v790
        %v805 = vadd.f32 %v744, %v791
        %v806 = vadd.f32 %v745, %v792
        %v807 = vld [vmem:[%s2] sm:$0xff]
        %809 = vset.pattern.permute.xlu0 0
        %810 = vperm.xlu0 %809, %v807
        %v811 = vpop.permute.xlu0 %810
        %v813 = vadd.f32 %v800, %v811
        %v814 = vadd.f32 %v801, %v811
        %v815 = vadd.f32 %v802, %v811
        %v816 = vadd.f32 %v803, %v811
        %v817 = vadd.f32 %v804, %v811
        %v818 = vadd.f32 %v805, %v811
        %v819 = vadd.f32 %v806, %v811
        %v820 = vmax.f32 %v813, 0.0
        %v821 = vmax.f32 %v814, 0.0
        %v822 = vmax.f32 %v815, 0.0
        %v823 = vmax.f32 %v816, 0.0
        %v824 = vmax.f32 %v817, 0.0
        %v825 = vmax.f32 %v818, 0.0
        %v826 = vmax.f32 %v819, 0.0
        %v827 = vpack.c.bf16 %v820, %v820
        %v828 = vpack.c.bf16 %v821, %v821
        %v829 = vpack.c.bf16 %v822, %v822
        %v830 = vpack.c.bf16 %v823, %v823
        %v831 = vpack.c.bf16 %v824, %v824
        %v832 = vpack.c.bf16 %v825, %v825
        %v833 = vpack.c.bf16 %v826, %v826
        %v834 = vld [vmem:[%s9] sm:$0xff]
        %v835 = vld [vmem:[%s9 + $0x8] sm:$0xff]
        %v836 = vld [vmem:[%s9 + $0x10] sm:$0xff]
        %v837 = vld [vmem:[%s9 + $0x18] sm:$0xff]
        %v838 = vld [vmem:[%s9 + $0x20] sm:$0xff]
        %v839 = vld [vmem:[%s9 + $0x28] sm:$0xff]
        %v840 = vld [vmem:[%s9 + $0x30] sm:$0xff]
        %v841 = vld [vmem:[%s9 + $0x38] sm:$0xff]
        %v842 = vld [vmem:[%s9 + $0x40] sm:$0xff]
        %v843 = vld [vmem:[%s9 + $0x48] sm:$0xff]
        %v844 = vld [vmem:[%s9 + $0x50] sm:$0xff]
        %v845 = vld [vmem:[%s9 + $0x58] sm:$0xff]
        %v846 = vld [vmem:[%s9 + $0x60] sm:$0xff]
        %v847 = vld [vmem:[%s9 + $0x68] sm:$0xff]
        %v848 = vld [vmem:[%s9 + $0x70] sm:$0xff]
        %v849 = vld [vmem:[%s9 + $0x78] sm:$0xff]
        %v850 = vld [vmem:[%s9 + $0x80] sm:$0xff]
        %v851 = vld [vmem:[%s9 + $0x88] sm:$0xff]
        %v852 = vld [vmem:[%s9 + $0x90] sm:$0xff]
        %v853 = vld [vmem:[%s9 + $0x98] sm:$0xff]
        %v854 = vld [vmem:[%s9 + $0xa0] sm:$0xff]
        %v855 = vld [vmem:[%s9 + $0xa8] sm:$0xff]
        %v856 = vld [vmem:[%s9 + $0xb0] sm:$0xff]
        %v857 = vld [vmem:[%s9 + $0xb8] sm:$0xff]
        %v858 = vld [vmem:[%s9 + $0xc0] sm:$0xff]
        %v859 = vld [vmem:[%s9 + $0xc8] sm:$0xff]
        %v860 = vld [vmem:[%s9 + $0xd0] sm:$0xff]
        %v861 = vld [vmem:[%s9 + $0xd8] sm:$0xff]
        %v862 = vld [vmem:[%s9 + $0xe0] sm:$0xff]
        %v863 = vld [vmem:[%s9 + $0xe8] sm:$0xff]
        %v864 = vld [vmem:[%s9 + $0xf0] sm:$0xff]
        %v865 = vld [vmem:[%s9 + $0xf8] sm:$0xff]
        %v866 = vld [vmem:[%s9 + $0x100] sm:$0xff]
        %v867 = vld [vmem:[%s9 + $0x108] sm:$0xff]
        %v868 = vld [vmem:[%s9 + $0x110] sm:$0xff]
        %v869 = vld [vmem:[%s9 + $0x118] sm:$0xff]
        %v870 = vld [vmem:[%s9 + $0x120] sm:$0xff]
        %v871 = vld [vmem:[%s9 + $0x128] sm:$0xff]
        %v872 = vld [vmem:[%s9 + $0x130] sm:$0xff]
        %v873 = vld [vmem:[%s9 + $0x138] sm:$0xff]
        %v874 = vld [vmem:[%s9 + $0x140] sm:$0xff]
        %v875 = vld [vmem:[%s9 + $0x148] sm:$0xff]
        %v876 = vld [vmem:[%s9 + $0x150] sm:$0xff]
        %v877 = vld [vmem:[%s9 + $0x158] sm:$0xff]
        %v878 = vld [vmem:[%s9 + $0x160] sm:$0xff]
        %v879 = vld [vmem:[%s9 + $0x168] sm:$0xff]
        %v880 = vld [vmem:[%s9 + $0x170] sm:$0xff]
        %v881 = vld [vmem:[%s9 + $0x178] sm:$0xff]
        %v882 = vld [vmem:[%s9 + $0x180] sm:$0xff]
        %v883 = vld [vmem:[%s9 + $0x188] sm:$0xff]
        %v884 = vld [vmem:[%s9 + $0x190] sm:$0xff]
        %v885 = vld [vmem:[%s9 + $0x198] sm:$0xff]
        %v886 = vld [vmem:[%s9 + $0x1a0] sm:$0xff]
        %v887 = vld [vmem:[%s9 + $0x1a8] sm:$0xff]
        %v888 = vld [vmem:[%s9 + $0x1b0] sm:$0xff]
        %v889 = vld [vmem:[%s9 + $0x1b8] sm:$0xff]
        %v890 = vld [vmem:[%s9 + $0x1c0] sm:$0xff]
        %v891 = vld [vmem:[%s9 + $0x1c8] sm:$0xff]
        %v892 = vld [vmem:[%s9 + $0x1d0] sm:$0xff]
        %v893 = vld [vmem:[%s9 + $0x1d8] sm:$0xff]
        %v894 = vld [vmem:[%s9 + $0x1e0] sm:$0xff]
        %v895 = vld [vmem:[%s9 + $0x1e8] sm:$0xff]
        %v896 = vld [vmem:[%s9 + $0x1f0] sm:$0xff]
        %v897 = vld [vmem:[%s9 + $0x1f8] sm:$0xff]
        %v898 = vld [vmem:[%s9 + $0x200] sm:$0xff]
        %v899 = vld [vmem:[%s9 + $0x208] sm:$0xff]
        %v900 = vld [vmem:[%s9 + $0x210] sm:$0xff]
        %v901 = vld [vmem:[%s9 + $0x218] sm:$0xff]
        %v902 = vld [vmem:[%s9 + $0x220] sm:$0xff]
        %v903 = vld [vmem:[%s9 + $0x228] sm:$0xff]
        %v904 = vld [vmem:[%s9 + $0x230] sm:$0xff]
        %v905 = vld [vmem:[%s9 + $0x238] sm:$0xff]
        %v906 = vld [vmem:[%s9 + $0x240] sm:$0xff]
        %v907 = vld [vmem:[%s9 + $0x248] sm:$0xff]
        %v908 = vld [vmem:[%s9 + $0x250] sm:$0xff]
        %v909 = vld [vmem:[%s9 + $0x258] sm:$0xff]
        %v910 = vld [vmem:[%s9 + $0x260] sm:$0xff]
        %v911 = vld [vmem:[%s9 + $0x268] sm:$0xff]
        %v912 = vld [vmem:[%s9 + $0x270] sm:$0xff]
        %v913 = vld [vmem:[%s9 + $0x278] sm:$0xff]
        %v914 = vld [vmem:[%s9 + $0x280] sm:$0xff]
        %v915 = vld [vmem:[%s9 + $0x288] sm:$0xff]
        %v916 = vld [vmem:[%s9 + $0x290] sm:$0xff]
        %v917 = vld [vmem:[%s9 + $0x298] sm:$0xff]
        %v918 = vld [vmem:[%s9 + $0x2a0] sm:$0xff]
        %v919 = vld [vmem:[%s9 + $0x2a8] sm:$0xff]
        %v920 = vld [vmem:[%s9 + $0x2b0] sm:$0xff]
        %v921 = vld [vmem:[%s9 + $0x2b8] sm:$0xff]
        %v922 = vld [vmem:[%s9 + $0x2c0] sm:$0xff]
        %v923 = vld [vmem:[%s9 + $0x2c8] sm:$0xff]
        %v924 = vld [vmem:[%s9 + $0x2d0] sm:$0xff]
        %v925 = vld [vmem:[%s9 + $0x2d8] sm:$0xff]
        %v926 = vld [vmem:[%s9 + $0x2e0] sm:$0xff]
        %v927 = vld [vmem:[%s9 + $0x2e8] sm:$0xff]
        %v928 = vld [vmem:[%s9 + $0x2f0] sm:$0xff]
        %v929 = vld [vmem:[%s9 + $0x2f8] sm:$0xff]
        %v930 = vld [vmem:[%s9 + $0x300] sm:$0xff]
        %v931 = vld [vmem:[%s9 + $0x308] sm:$0xff]
        %v932 = vld [vmem:[%s9 + $0x310] sm:$0xff]
        %v933 = vld [vmem:[%s9 + $0x318] sm:$0xff]
        %v934 = vld [vmem:[%s9 + $0x320] sm:$0xff]
        %v935 = vld [vmem:[%s9 + $0x328] sm:$0xff]
        %v936 = vld [vmem:[%s9 + $0x330] sm:$0xff]
        %v937 = vld [vmem:[%s9 + $0x338] sm:$0xff]
        %v938 = vld [vmem:[%s9 + $0x340] sm:$0xff]
        %v939 = vld [vmem:[%s9 + $0x348] sm:$0xff]
        %v940 = vld [vmem:[%s9 + $0x350] sm:$0xff]
        %v941 = vld [vmem:[%s9 + $0x358] sm:$0xff]
        %v942 = vld [vmem:[%s9 + $0x360] sm:$0xff]
        %v943 = vld [vmem:[%s9 + $0x368] sm:$0xff]
        %v944 = vld [vmem:[%s9 + $0x370] sm:$0xff]
        %v945 = vld [vmem:[%s9 + $0x378] sm:$0xff]
        %v946 = vld [vmem:[%s9 + $0x380] sm:$0xff]
        %v947 = vld [vmem:[%s9 + $0x388] sm:$0xff]
        %v948 = vld [vmem:[%s9 + $0x390] sm:$0xff]
        %v949 = vld [vmem:[%s9 + $0x398] sm:$0xff]
        %v950 = vld [vmem:[%s9 + $0x3a0] sm:$0xff]
        %v951 = vld [vmem:[%s9 + $0x3a8] sm:$0xff]
        %v952 = vld [vmem:[%s9 + $0x3b0] sm:$0xff]
        %v953 = vld [vmem:[%s9 + $0x3b8] sm:$0xff]
        %v954 = vld [vmem:[%s9 + $0x3c0] sm:$0xff]
        %v955 = vld [vmem:[%s9 + $0x3c8] sm:$0xff]
        %v956 = vld [vmem:[%s9 + $0x3d0] sm:$0xff]
        %v957 = vld [vmem:[%s9 + $0x3d8] sm:$0xff]
        %v958 = vld [vmem:[%s9 + $0x3e0] sm:$0xff]
        %v959 = vld [vmem:[%s9 + $0x3e8] sm:$0xff]
        %v960 = vld [vmem:[%s9 + $0x3f0] sm:$0xff]
        %v961 = vld [vmem:[%s9 + $0x3f8] sm:$0xff]
        %v962 = vld [vmem:[%s9 + $0x400] sm:$0xff]
        %v963 = vld [vmem:[%s9 + $0x408] sm:$0xff]
        %v964 = vld [vmem:[%s9 + $0x410] sm:$0xff]
        %v965 = vld [vmem:[%s9 + $0x418] sm:$0xff]
        %v966 = vld [vmem:[%s9 + $0x420] sm:$0xff]
        %v967 = vld [vmem:[%s9 + $0x428] sm:$0xff]
        %v968 = vld [vmem:[%s9 + $0x430] sm:$0xff]
        %v969 = vld [vmem:[%s9 + $0x438] sm:$0xff]
        %v970 = vld [vmem:[%s9 + $0x440] sm:$0xff]
        %v971 = vld [vmem:[%s9 + $0x448] sm:$0xff]
        %v972 = vld [vmem:[%s9 + $0x450] sm:$0xff]
        %v973 = vld [vmem:[%s9 + $0x458] sm:$0xff]
        %v974 = vld [vmem:[%s9 + $0x460] sm:$0xff]
        %v975 = vld [vmem:[%s9 + $0x468] sm:$0xff]
        %v976 = vld [vmem:[%s9 + $0x470] sm:$0xff]
        %v977 = vld [vmem:[%s9 + $0x478] sm:$0xff]
        %v978 = vld [vmem:[%s9 + $0x480] sm:$0xff]
        %v979 = vld [vmem:[%s9 + $0x488] sm:$0xff]
        %v980 = vld [vmem:[%s9 + $0x490] sm:$0xff]
        %v981 = vld [vmem:[%s9 + $0x498] sm:$0xff]
        %v982 = vld [vmem:[%s9 + $0x4a0] sm:$0xff]
        %v983 = vld [vmem:[%s9 + $0x4a8] sm:$0xff]
        %v984 = vld [vmem:[%s9 + $0x4b0] sm:$0xff]
        %v985 = vld [vmem:[%s9 + $0x4b8] sm:$0xff]
        %v986 = vld [vmem:[%s9 + $0x4c0] sm:$0xff]
        %v987 = vld [vmem:[%s9 + $0x4c8] sm:$0xff]
        %v988 = vld [vmem:[%s9 + $0x4d0] sm:$0xff]
        %v989 = vld [vmem:[%s9 + $0x4d8] sm:$0xff]
        %v990 = vld [vmem:[%s9 + $0x4e0] sm:$0xff]
        %v991 = vld [vmem:[%s9 + $0x4e8] sm:$0xff]
        %v992 = vld [vmem:[%s9 + $0x4f0] sm:$0xff]
        %v993 = vld [vmem:[%s9 + $0x4f8] sm:$0xff]
        %v994 = vld [vmem:[%s9 + $0x500] sm:$0xff]
        %v995 = vld [vmem:[%s9 + $0x508] sm:$0xff]
        %v996 = vld [vmem:[%s9 + $0x510] sm:$0xff]
        %v997 = vld [vmem:[%s9 + $0x518] sm:$0xff]
        %v998 = vld [vmem:[%s9 + $0x520] sm:$0xff]
        %v999 = vld [vmem:[%s9 + $0x528] sm:$0xff]
        %v1000 = vld [vmem:[%s9 + $0x530] sm:$0xff]
        %v1001 = vld [vmem:[%s9 + $0x538] sm:$0xff]
        %v1002 = vld [vmem:[%s9 + $0x540] sm:$0xff]
        %v1003 = vld [vmem:[%s9 + $0x548] sm:$0xff]
        %v1004 = vld [vmem:[%s9 + $0x550] sm:$0xff]
        %v1005 = vld [vmem:[%s9 + $0x558] sm:$0xff]
        %v1006 = vld [vmem:[%s9 + $0x560] sm:$0xff]
        %v1007 = vld [vmem:[%s9 + $0x568] sm:$0xff]
        %v1008 = vld [vmem:[%s9 + $0x570] sm:$0xff]
        %v1009 = vld [vmem:[%s9 + $0x578] sm:$0xff]
        %v1010 = vld [vmem:[%s9 + $0x580] sm:$0xff]
        %v1011 = vld [vmem:[%s9 + $0x588] sm:$0xff]
        %v1012 = vld [vmem:[%s9 + $0x590] sm:$0xff]
        %v1013 = vld [vmem:[%s9 + $0x598] sm:$0xff]
        %v1014 = vld [vmem:[%s9 + $0x5a0] sm:$0xff]
        %v1015 = vld [vmem:[%s9 + $0x5a8] sm:$0xff]
        %v1016 = vld [vmem:[%s9 + $0x5b0] sm:$0xff]
        %v1017 = vld [vmem:[%s9 + $0x5b8] sm:$0xff]
        %v1018 = vld [vmem:[%s9 + $0x5c0] sm:$0xff]
        %v1019 = vld [vmem:[%s9 + $0x5c8] sm:$0xff]
        %v1020 = vld [vmem:[%s9 + $0x5d0] sm:$0xff]
        %v1021 = vld [vmem:[%s9 + $0x5d8] sm:$0xff]
        %v1022 = vld [vmem:[%s9 + $0x5e0] sm:$0xff]
        %v1023 = vld [vmem:[%s9 + $0x5e8] sm:$0xff]
        %v1024 = vld [vmem:[%s9 + $0x5f0] sm:$0xff]
        %v1025 = vld [vmem:[%s9 + $0x5f8] sm:$0xff]
        %v1026 = vld [vmem:[%s9 + $0x600] sm:$0xff]
        %v1027 = vld [vmem:[%s9 + $0x608] sm:$0xff]
        %v1028 = vld [vmem:[%s9 + $0x610] sm:$0xff]
        %v1029 = vld [vmem:[%s9 + $0x618] sm:$0xff]
        %v1030 = vld [vmem:[%s9 + $0x620] sm:$0xff]
        %v1031 = vld [vmem:[%s9 + $0x628] sm:$0xff]
        %v1032 = vld [vmem:[%s9 + $0x630] sm:$0xff]
        %v1033 = vld [vmem:[%s9 + $0x638] sm:$0xff]
        %v1034 = vld [vmem:[%s9 + $0x640] sm:$0xff]
        %v1035 = vld [vmem:[%s9 + $0x648] sm:$0xff]
        %v1036 = vld [vmem:[%s9 + $0x650] sm:$0xff]
        %v1037 = vld [vmem:[%s9 + $0x658] sm:$0xff]
        %v1038 = vld [vmem:[%s9 + $0x660] sm:$0xff]
        %v1039 = vld [vmem:[%s9 + $0x668] sm:$0xff]
        %v1040 = vld [vmem:[%s9 + $0x670] sm:$0xff]
        %v1041 = vld [vmem:[%s9 + $0x678] sm:$0xff]
        %v1042 = vld [vmem:[%s9 + $0x680] sm:$0xff]
        %v1043 = vld [vmem:[%s9 + $0x688] sm:$0xff]
        %v1044 = vld [vmem:[%s9 + $0x690] sm:$0xff]
        %v1045 = vld [vmem:[%s9 + $0x698] sm:$0xff]
        %v1046 = vld [vmem:[%s9 + $0x6a0] sm:$0xff]
        %v1047 = vld [vmem:[%s9 + $0x6a8] sm:$0xff]
        %v1048 = vld [vmem:[%s9 + $0x6b0] sm:$0xff]
        %v1049 = vld [vmem:[%s9 + $0x6b8] sm:$0xff]
        %v1050 = vld [vmem:[%s9 + $0x6c0] sm:$0xff]
        %v1051 = vld [vmem:[%s9 + $0x6c8] sm:$0xff]
        %v1052 = vld [vmem:[%s9 + $0x6d0] sm:$0xff]
        %v1053 = vld [vmem:[%s9 + $0x6d8] sm:$0xff]
        %v1054 = vld [vmem:[%s9 + $0x6e0] sm:$0xff]
        %v1055 = vld [vmem:[%s9 + $0x6e8] sm:$0xff]
        %v1056 = vld [vmem:[%s9 + $0x6f0] sm:$0xff]
        %v1057 = vld [vmem:[%s9 + $0x6f8] sm:$0xff]
        %v1058 = vld [vmem:[%s9 + $0x700] sm:$0xff]
        %v1059 = vld [vmem:[%s9 + $0x708] sm:$0xff]
        %v1060 = vld [vmem:[%s9 + $0x710] sm:$0xff]
        %v1061 = vld [vmem:[%s9 + $0x718] sm:$0xff]
        %v1062 = vld [vmem:[%s9 + $0x720] sm:$0xff]
        %v1063 = vld [vmem:[%s9 + $0x728] sm:$0xff]
        %v1064 = vld [vmem:[%s9 + $0x730] sm:$0xff]
        %v1065 = vld [vmem:[%s9 + $0x738] sm:$0xff]
        %v1066 = vld [vmem:[%s9 + $0x740] sm:$0xff]
        %v1067 = vld [vmem:[%s9 + $0x748] sm:$0xff]
        %v1068 = vld [vmem:[%s9 + $0x750] sm:$0xff]
        %v1069 = vld [vmem:[%s9 + $0x758] sm:$0xff]
        %v1070 = vld [vmem:[%s9 + $0x760] sm:$0xff]
        %v1071 = vld [vmem:[%s9 + $0x768] sm:$0xff]
        %v1072 = vld [vmem:[%s9 + $0x770] sm:$0xff]
        %v1073 = vld [vmem:[%s9 + $0x778] sm:$0xff]
        %v1074 = vld [vmem:[%s9 + $0x780] sm:$0xff]
        %v1075 = vld [vmem:[%s9 + $0x788] sm:$0xff]
        %v1076 = vld [vmem:[%s9 + $0x790] sm:$0xff]
        %v1077 = vld [vmem:[%s9 + $0x798] sm:$0xff]
        %v1078 = vld [vmem:[%s9 + $0x7a0] sm:$0xff]
        %v1079 = vld [vmem:[%s9 + $0x7a8] sm:$0xff]
        %v1080 = vld [vmem:[%s9 + $0x7b0] sm:$0xff]
        %v1081 = vld [vmem:[%s9 + $0x7b8] sm:$0xff]
        %v1082 = vld [vmem:[%s9 + $0x7c0] sm:$0xff]
        %v1083 = vld [vmem:[%s9 + $0x7c8] sm:$0xff]
        %v1084 = vld [vmem:[%s9 + $0x7d0] sm:$0xff]
        %v1085 = vld [vmem:[%s9 + $0x7d8] sm:$0xff]
        %v1086 = vld [vmem:[%s9 + $0x7e0] sm:$0xff]
        %v1087 = vld [vmem:[%s9 + $0x7e8] sm:$0xff]
        %v1088 = vld [vmem:[%s9 + $0x7f0] sm:$0xff]
        %v1089 = vld [vmem:[%s9 + $0x7f8] sm:$0xff]
        %v1090 = vld [vmem:[%s9 + $0x800] sm:$0xff]
        %v1091 = vld [vmem:[%s9 + $0x808] sm:$0xff]
        %v1092 = vld [vmem:[%s9 + $0x810] sm:$0xff]
        %v1093 = vld [vmem:[%s9 + $0x818] sm:$0xff]
        %v1094 = vld [vmem:[%s9 + $0x820] sm:$0xff]
        %v1095 = vld [vmem:[%s9 + $0x828] sm:$0xff]
        %v1096 = vld [vmem:[%s9 + $0x830] sm:$0xff]
        %v1097 = vld [vmem:[%s9 + $0x838] sm:$0xff]
        %v1098 = vld [vmem:[%s9 + $0x840] sm:$0xff]
        %v1099 = vld [vmem:[%s9 + $0x848] sm:$0xff]
        %v1100 = vld [vmem:[%s9 + $0x850] sm:$0xff]
        %v1101 = vld [vmem:[%s9 + $0x858] sm:$0xff]
        %v1102 = vld [vmem:[%s9 + $0x860] sm:$0xff]
        %v1103 = vld [vmem:[%s9 + $0x868] sm:$0xff]
        %v1104 = vld [vmem:[%s9 + $0x870] sm:$0xff]
        %v1105 = vld [vmem:[%s9 + $0x878] sm:$0xff]
        %v1106 = vld [vmem:[%s9 + $0x880] sm:$0xff]
        %v1107 = vld [vmem:[%s9 + $0x888] sm:$0xff]
        %v1108 = vld [vmem:[%s9 + $0x890] sm:$0xff]
        %v1109 = vld [vmem:[%s9 + $0x898] sm:$0xff]
        %v1110 = vld [vmem:[%s9 + $0x8a0] sm:$0xff]
        %v1111 = vld [vmem:[%s9 + $0x8a8] sm:$0xff]
        %v1112 = vld [vmem:[%s9 + $0x8b0] sm:$0xff]
        %v1113 = vld [vmem:[%s9 + $0x8b8] sm:$0xff]
        %v1114 = vld [vmem:[%s9 + $0x8c0] sm:$0xff]
        %v1115 = vld [vmem:[%s9 + $0x8c8] sm:$0xff]
        %v1116 = vld [vmem:[%s9 + $0x8d0] sm:$0xff]
        %v1117 = vld [vmem:[%s9 + $0x8d8] sm:$0xff]
        %v1118 = vld [vmem:[%s9 + $0x8e0] sm:$0xff]
        %v1119 = vld [vmem:[%s9 + $0x8e8] sm:$0xff]
        %v1120 = vld [vmem:[%s9 + $0x8f0] sm:$0xff]
        %v1121 = vld [vmem:[%s9 + $0x8f8] sm:$0xff]
        %v1122 = vld [vmem:[%s9 + $0x900] sm:$0xff]
        %v1123 = vld [vmem:[%s9 + $0x908] sm:$0xff]
        %v1124 = vld [vmem:[%s9 + $0x910] sm:$0xff]
        %v1125 = vld [vmem:[%s9 + $0x918] sm:$0xff]
        %v1126 = vld [vmem:[%s9 + $0x920] sm:$0xff]
        %v1127 = vld [vmem:[%s9 + $0x928] sm:$0xff]
        %v1128 = vld [vmem:[%s9 + $0x930] sm:$0xff]
        %v1129 = vld [vmem:[%s9 + $0x938] sm:$0xff]
        %v1130 = vld [vmem:[%s9 + $0x940] sm:$0xff]
        %v1131 = vld [vmem:[%s9 + $0x948] sm:$0xff]
        %v1132 = vld [vmem:[%s9 + $0x950] sm:$0xff]
        %v1133 = vld [vmem:[%s9 + $0x958] sm:$0xff]
        %v1134 = vld [vmem:[%s9 + $0x960] sm:$0xff]
        %v1135 = vld [vmem:[%s9 + $0x968] sm:$0xff]
        %v1136 = vld [vmem:[%s9 + $0x970] sm:$0xff]
        %v1137 = vld [vmem:[%s9 + $0x978] sm:$0xff]
        %v1138 = vld [vmem:[%s9 + $0x980] sm:$0xff]
        %v1139 = vld [vmem:[%s9 + $0x988] sm:$0xff]
        %v1140 = vld [vmem:[%s9 + $0x990] sm:$0xff]
        %v1141 = vld [vmem:[%s9 + $0x998] sm:$0xff]
        %v1142 = vld [vmem:[%s9 + $0x9a0] sm:$0xff]
        %v1143 = vld [vmem:[%s9 + $0x9a8] sm:$0xff]
        %v1144 = vld [vmem:[%s9 + $0x9b0] sm:$0xff]
        %v1145 = vld [vmem:[%s9 + $0x9b8] sm:$0xff]
        %v1146 = vld [vmem:[%s9 + $0x9c0] sm:$0xff]
        %v1147 = vld [vmem:[%s9 + $0x9c8] sm:$0xff]
        %v1148 = vld [vmem:[%s9 + $0x9d0] sm:$0xff]
        %v1149 = vld [vmem:[%s9 + $0x9d8] sm:$0xff]
        %v1150 = vld [vmem:[%s9 + $0x9e0] sm:$0xff]
        %v1151 = vld [vmem:[%s9 + $0x9e8] sm:$0xff]
        %v1152 = vld [vmem:[%s9 + $0x9f0] sm:$0xff]
        %v1153 = vld [vmem:[%s9 + $0x9f8] sm:$0xff]
        %v1154 = vld [vmem:[%s9 + $0xa00] sm:$0xff]
        %v1155 = vld [vmem:[%s9 + $0xa08] sm:$0xff]
        %v1156 = vld [vmem:[%s9 + $0xa10] sm:$0xff]
        %v1157 = vld [vmem:[%s9 + $0xa18] sm:$0xff]
        %v1158 = vld [vmem:[%s9 + $0xa20] sm:$0xff]
        %v1159 = vld [vmem:[%s9 + $0xa28] sm:$0xff]
        %v1160 = vld [vmem:[%s9 + $0xa30] sm:$0xff]
        %v1161 = vld [vmem:[%s9 + $0xa38] sm:$0xff]
        %v1162 = vld [vmem:[%s9 + $0xa40] sm:$0xff]
        %v1163 = vld [vmem:[%s9 + $0xa48] sm:$0xff]
        %v1164 = vld [vmem:[%s9 + $0xa50] sm:$0xff]
        %v1165 = vld [vmem:[%s9 + $0xa58] sm:$0xff]
        %v1166 = vld [vmem:[%s9 + $0xa60] sm:$0xff]
        %v1167 = vld [vmem:[%s9 + $0xa68] sm:$0xff]
        %v1168 = vld [vmem:[%s9 + $0xa70] sm:$0xff]
        %v1169 = vld [vmem:[%s9 + $0xa78] sm:$0xff]
        %v1170 = vld [vmem:[%s9 + $0xa80] sm:$0xff]
        %v1171 = vld [vmem:[%s9 + $0xa88] sm:$0xff]
        %v1172 = vld [vmem:[%s9 + $0xa90] sm:$0xff]
        %v1173 = vld [vmem:[%s9 + $0xa98] sm:$0xff]
        %v1174 = vld [vmem:[%s9 + $0xaa0] sm:$0xff]
        %v1175 = vld [vmem:[%s9 + $0xaa8] sm:$0xff]
        %v1176 = vld [vmem:[%s9 + $0xab0] sm:$0xff]
        %v1177 = vld [vmem:[%s9 + $0xab8] sm:$0xff]
        %v1178 = vld [vmem:[%s9 + $0xac0] sm:$0xff]
        %v1179 = vld [vmem:[%s9 + $0xac8] sm:$0xff]
        %v1180 = vld [vmem:[%s9 + $0xad0] sm:$0xff]
        %v1181 = vld [vmem:[%s9 + $0xad8] sm:$0xff]
        %v1182 = vld [vmem:[%s9 + $0xae0] sm:$0xff]
        %v1183 = vld [vmem:[%s9 + $0xae8] sm:$0xff]
        %v1184 = vld [vmem:[%s9 + $0xaf0] sm:$0xff]
        %v1185 = vld [vmem:[%s9 + $0xaf8] sm:$0xff]
        %v1186 = vld [vmem:[%s9 + $0xb00] sm:$0xff]
        %v1187 = vld [vmem:[%s9 + $0xb08] sm:$0xff]
        %v1188 = vld [vmem:[%s9 + $0xb10] sm:$0xff]
        %v1189 = vld [vmem:[%s9 + $0xb18] sm:$0xff]
        %v1190 = vld [vmem:[%s9 + $0xb20] sm:$0xff]
        %v1191 = vld [vmem:[%s9 + $0xb28] sm:$0xff]
        %v1192 = vld [vmem:[%s9 + $0xb30] sm:$0xff]
        %v1193 = vld [vmem:[%s9 + $0xb38] sm:$0xff]
        %v1194 = vld [vmem:[%s9 + $0xb40] sm:$0xff]
        %v1195 = vld [vmem:[%s9 + $0xb48] sm:$0xff]
        %v1196 = vld [vmem:[%s9 + $0xb50] sm:$0xff]
        %v1197 = vld [vmem:[%s9 + $0xb58] sm:$0xff]
        %v1198 = vld [vmem:[%s9 + $0xb60] sm:$0xff]
        %v1199 = vld [vmem:[%s9 + $0xb68] sm:$0xff]
        %v1200 = vld [vmem:[%s9 + $0xb70] sm:$0xff]
        %v1201 = vld [vmem:[%s9 + $0xb78] sm:$0xff]
        %v1202 = vld [vmem:[%s9 + $0xb80] sm:$0xff]
        %v1203 = vld [vmem:[%s9 + $0xb88] sm:$0xff]
        %v1204 = vld [vmem:[%s9 + $0xb90] sm:$0xff]
        %v1205 = vld [vmem:[%s9 + $0xb98] sm:$0xff]
        %v1206 = vld [vmem:[%s9 + $0xba0] sm:$0xff]
        %v1207 = vld [vmem:[%s9 + $0xba8] sm:$0xff]
        %v1208 = vld [vmem:[%s9 + $0xbb0] sm:$0xff]
        %v1209 = vld [vmem:[%s9 + $0xbb8] sm:$0xff]
        %v1210 = vld [vmem:[%s9 + $0xbc0] sm:$0xff]
        %v1211 = vld [vmem:[%s9 + $0xbc8] sm:$0xff]
        %v1212 = vld [vmem:[%s9 + $0xbd0] sm:$0xff]
        %v1213 = vld [vmem:[%s9 + $0xbd8] sm:$0xff]
        %v1214 = vld [vmem:[%s9 + $0xbe0] sm:$0xff]
        %v1215 = vld [vmem:[%s9 + $0xbe8] sm:$0xff]
        %v1216 = vld [vmem:[%s9 + $0xbf0] sm:$0xff]
        %v1217 = vld [vmem:[%s9 + $0xbf8] sm:$0xff]
        %v1218 = vld [vmem:[%s9 + $0xc00] sm:$0xff]
        %v1219 = vld [vmem:[%s9 + $0xc08] sm:$0xff]
        %v1220 = vld [vmem:[%s9 + $0xc10] sm:$0xff]
        %v1221 = vld [vmem:[%s9 + $0xc18] sm:$0xff]
        %v1222 = vld [vmem:[%s9 + $0xc20] sm:$0xff]
        %v1223 = vld [vmem:[%s9 + $0xc28] sm:$0xff]
        %v1224 = vld [vmem:[%s9 + $0xc30] sm:$0xff]
        %v1225 = vld [vmem:[%s9 + $0xc38] sm:$0xff]
        %v1226 = vld [vmem:[%s9 + $0xc40] sm:$0xff]
        %v1227 = vld [vmem:[%s9 + $0xc48] sm:$0xff]
        %v1228 = vld [vmem:[%s9 + $0xc50] sm:$0xff]
        %v1229 = vld [vmem:[%s9 + $0xc58] sm:$0xff]
        %v1230 = vld [vmem:[%s9 + $0xc60] sm:$0xff]
        %v1231 = vld [vmem:[%s9 + $0xc68] sm:$0xff]
        %v1232 = vld [vmem:[%s9 + $0xc70] sm:$0xff]
        %v1233 = vld [vmem:[%s9 + $0xc78] sm:$0xff]
        %v1234 = vld [vmem:[%s9 + $0xc80] sm:$0xff]
        %v1235 = vld [vmem:[%s9 + $0xc88] sm:$0xff]
        %v1236 = vld [vmem:[%s9 + $0xc90] sm:$0xff]
        %v1237 = vld [vmem:[%s9 + $0xc98] sm:$0xff]
        %v1238 = vld [vmem:[%s9 + $0xca0] sm:$0xff]
        %v1239 = vld [vmem:[%s9 + $0xca8] sm:$0xff]
        %v1240 = vld [vmem:[%s9 + $0xcb0] sm:$0xff]
        %v1241 = vld [vmem:[%s9 + $0xcb8] sm:$0xff]
        %v1242 = vld [vmem:[%s9 + $0xcc0] sm:$0xff]
        %v1243 = vld [vmem:[%s9 + $0xcc8] sm:$0xff]
        %v1244 = vld [vmem:[%s9 + $0xcd0] sm:$0xff]
        %v1245 = vld [vmem:[%s9 + $0xcd8] sm:$0xff]
        %v1246 = vld [vmem:[%s9 + $0xce0] sm:$0xff]
        %v1247 = vld [vmem:[%s9 + $0xce8] sm:$0xff]
        %v1248 = vld [vmem:[%s9 + $0xcf0] sm:$0xff]
        %v1249 = vld [vmem:[%s9 + $0xcf8] sm:$0xff]
        %v1250 = vld [vmem:[%s9 + $0xd00] sm:$0xff]
        %v1251 = vld [vmem:[%s9 + $0xd08] sm:$0xff]
        %v1252 = vld [vmem:[%s9 + $0xd10] sm:$0xff]
        %v1253 = vld [vmem:[%s9 + $0xd18] sm:$0xff]
        %v1254 = vld [vmem:[%s9 + $0xd20] sm:$0xff]
        %v1255 = vld [vmem:[%s9 + $0xd28] sm:$0xff]
        %v1256 = vld [vmem:[%s9 + $0xd30] sm:$0xff]
        %v1257 = vld [vmem:[%s9 + $0xd38] sm:$0xff]
        %v1258 = vld [vmem:[%s9 + $0xd40] sm:$0xff]
        %v1259 = vld [vmem:[%s9 + $0xd48] sm:$0xff]
        %v1260 = vld [vmem:[%s9 + $0xd50] sm:$0xff]
        %v1261 = vld [vmem:[%s9 + $0xd58] sm:$0xff]
        %v1262 = vld [vmem:[%s9 + $0xd60] sm:$0xff]
        %v1263 = vld [vmem:[%s9 + $0xd68] sm:$0xff]
        %v1264 = vld [vmem:[%s9 + $0xd70] sm:$0xff]
        %v1265 = vld [vmem:[%s9 + $0xd78] sm:$0xff]
        %v1266 = vld [vmem:[%s9 + $0xd80] sm:$0x77]
        %v1267 = vld [vmem:[%s9 + $0xd88] sm:$0x77]
        %v1268 = vld [vmem:[%s9 + $0xd90] sm:$0x77]
        %v1269 = vld [vmem:[%s9 + $0xd98] sm:$0x77]
        %v1706 = vunpack.c.l.b16 %v834
        %v1707 = vunpack.c.h.b16 %v834
        %v1708 = vunpack.c.l.b16 %v835
        %v1709 = vunpack.c.h.b16 %v835
        %v1710 = vunpack.c.l.b16 %v836
        %v1711 = vunpack.c.h.b16 %v836
        %v1712 = vunpack.c.l.b16 %v837
        %v1713 = vunpack.c.h.b16 %v837
        %v1714 = vunpack.c.l.b16 %v838
        %v1715 = vunpack.c.h.b16 %v838
        %v1716 = vunpack.c.l.b16 %v839
        %v1717 = vunpack.c.h.b16 %v839
        %v1718 = vunpack.c.l.b16 %v840
        %v1719 = vunpack.c.h.b16 %v840
        %v1720 = vunpack.c.l.b16 %v841
        %v1721 = vunpack.c.h.b16 %v841
        %v1722 = vunpack.c.l.b16 %v842
        %v1723 = vunpack.c.h.b16 %v842
        %v1724 = vunpack.c.l.b16 %v843
        %v1725 = vunpack.c.h.b16 %v843
        %v1726 = vunpack.c.l.b16 %v844
        %v1727 = vunpack.c.h.b16 %v844
        %v1728 = vunpack.c.l.b16 %v845
        %v1729 = vunpack.c.h.b16 %v845
        %v1730 = vunpack.c.l.b16 %v846
        %v1731 = vunpack.c.h.b16 %v846
        %v1732 = vunpack.c.l.b16 %v847
        %v1733 = vunpack.c.h.b16 %v847
        %v1734 = vunpack.c.l.b16 %v848
        %v1735 = vunpack.c.h.b16 %v848
        %v1736 = vunpack.c.l.b16 %v849
        %v1737 = vunpack.c.h.b16 %v849
        %v1738 = vunpack.c.l.b16 %v850
        %v1739 = vunpack.c.h.b16 %v850
        %v1740 = vunpack.c.l.b16 %v851
        %v1741 = vunpack.c.h.b16 %v851
        %v1742 = vunpack.c.l.b16 %v852
        %v1743 = vunpack.c.h.b16 %v852
        %v1744 = vunpack.c.l.b16 %v853
        %v1745 = vunpack.c.h.b16 %v853
        %v1746 = vunpack.c.l.b16 %v854
        %v1747 = vunpack.c.h.b16 %v854
        %v1748 = vunpack.c.l.b16 %v855
        %v1749 = vunpack.c.h.b16 %v855
        %v1750 = vunpack.c.l.b16 %v856
        %v1751 = vunpack.c.h.b16 %v856
        %v1752 = vunpack.c.l.b16 %v857
        %v1753 = vunpack.c.h.b16 %v857
        %v1754 = vunpack.c.l.b16 %v858
        %v1755 = vunpack.c.h.b16 %v858
        %v1756 = vunpack.c.l.b16 %v859
        %v1757 = vunpack.c.h.b16 %v859
        %v1758 = vunpack.c.l.b16 %v860
        %v1759 = vunpack.c.h.b16 %v860
        %v1760 = vunpack.c.l.b16 %v861
        %v1761 = vunpack.c.h.b16 %v861
        %v1762 = vunpack.c.l.b16 %v862
        %v1763 = vunpack.c.h.b16 %v862
        %v1764 = vunpack.c.l.b16 %v863
        %v1765 = vunpack.c.h.b16 %v863
        %v1766 = vunpack.c.l.b16 %v864
        %v1767 = vunpack.c.h.b16 %v864
        %v1768 = vunpack.c.l.b16 %v865
        %v1769 = vunpack.c.h.b16 %v865
        %v1770 = vunpack.c.l.b16 %v866
        %v1771 = vunpack.c.h.b16 %v866
        %v1772 = vunpack.c.l.b16 %v867
        %v1773 = vunpack.c.h.b16 %v867
        %v1774 = vunpack.c.l.b16 %v868
        %v1775 = vunpack.c.h.b16 %v868
        %v1776 = vunpack.c.l.b16 %v869
        %v1777 = vunpack.c.h.b16 %v869
        %v1778 = vunpack.c.l.b16 %v870
        %v1779 = vunpack.c.h.b16 %v870
        %v1780 = vunpack.c.l.b16 %v871
        %v1781 = vunpack.c.h.b16 %v871
        %v1782 = vunpack.c.l.b16 %v872
        %v1783 = vunpack.c.h.b16 %v872
        %v1784 = vunpack.c.l.b16 %v873
        %v1785 = vunpack.c.h.b16 %v873
        %v1786 = vunpack.c.l.b16 %v874
        %v1787 = vunpack.c.h.b16 %v874
        %v1788 = vunpack.c.l.b16 %v875
        %v1789 = vunpack.c.h.b16 %v875
        %v1790 = vunpack.c.l.b16 %v876
        %v1791 = vunpack.c.h.b16 %v876
        %v1792 = vunpack.c.l.b16 %v877
        %v1793 = vunpack.c.h.b16 %v877
        %v1794 = vunpack.c.l.b16 %v878
        %v1795 = vunpack.c.h.b16 %v878
        %v1796 = vunpack.c.l.b16 %v879
        %v1797 = vunpack.c.h.b16 %v879
        %v1798 = vunpack.c.l.b16 %v880
        %v1799 = vunpack.c.h.b16 %v880
        %v1800 = vunpack.c.l.b16 %v881
        %v1801 = vunpack.c.h.b16 %v881
        %v1802 = vunpack.c.l.b16 %v882
        %v1803 = vunpack.c.h.b16 %v882
        %v1804 = vunpack.c.l.b16 %v883
        %v1805 = vunpack.c.h.b16 %v883
        %v1806 = vunpack.c.l.b16 %v884
        %v1807 = vunpack.c.h.b16 %v884
        %v1808 = vunpack.c.l.b16 %v885
        %v1809 = vunpack.c.h.b16 %v885
        %v1810 = vunpack.c.l.b16 %v886
        %v1811 = vunpack.c.h.b16 %v886
        %v1812 = vunpack.c.l.b16 %v887
        %v1813 = vunpack.c.h.b16 %v887
        %v1814 = vunpack.c.l.b16 %v888
        %v1815 = vunpack.c.h.b16 %v888
        %v1816 = vunpack.c.l.b16 %v889
        %v1817 = vunpack.c.h.b16 %v889
        %v1818 = vunpack.c.l.b16 %v890
        %v1819 = vunpack.c.h.b16 %v890
        %v1820 = vunpack.c.l.b16 %v891
        %v1821 = vunpack.c.h.b16 %v891
        %v1822 = vunpack.c.l.b16 %v892
        %v1823 = vunpack.c.h.b16 %v892
        %v1824 = vunpack.c.l.b16 %v893
        %v1825 = vunpack.c.h.b16 %v893
        %v1826 = vunpack.c.l.b16 %v894
        %v1827 = vunpack.c.h.b16 %v894
        %v1828 = vunpack.c.l.b16 %v895
        %v1829 = vunpack.c.h.b16 %v895
        %v1830 = vunpack.c.l.b16 %v896
        %v1831 = vunpack.c.h.b16 %v896
        %v1832 = vunpack.c.l.b16 %v897
        %v1833 = vunpack.c.h.b16 %v897
        %v1834 = vunpack.c.l.b16 %v898
        %v1835 = vunpack.c.h.b16 %v898
        %v1836 = vunpack.c.l.b16 %v899
        %v1837 = vunpack.c.h.b16 %v899
        %v1838 = vunpack.c.l.b16 %v900
        %v1839 = vunpack.c.h.b16 %v900
        %v1840 = vunpack.c.l.b16 %v901
        %v1841 = vunpack.c.h.b16 %v901
        %v1842 = vunpack.c.l.b16 %v902
        %v1843 = vunpack.c.h.b16 %v902
        %v1844 = vunpack.c.l.b16 %v903
        %v1845 = vunpack.c.h.b16 %v903
        %v1846 = vunpack.c.l.b16 %v904
        %v1847 = vunpack.c.h.b16 %v904
        %v1848 = vunpack.c.l.b16 %v905
        %v1849 = vunpack.c.h.b16 %v905
        %v1850 = vunpack.c.l.b16 %v906
        %v1851 = vunpack.c.h.b16 %v906
        %v1852 = vunpack.c.l.b16 %v907
        %v1853 = vunpack.c.h.b16 %v907
        %v1854 = vunpack.c.l.b16 %v908
        %v1855 = vunpack.c.h.b16 %v908
        %v1856 = vunpack.c.l.b16 %v909
        %v1857 = vunpack.c.h.b16 %v909
        %v1858 = vunpack.c.l.b16 %v910
        %v1859 = vunpack.c.h.b16 %v910
        %v1860 = vunpack.c.l.b16 %v911
        %v1861 = vunpack.c.h.b16 %v911
        %v1862 = vunpack.c.l.b16 %v912
        %v1863 = vunpack.c.h.b16 %v912
        %v1864 = vunpack.c.l.b16 %v913
        %v1865 = vunpack.c.h.b16 %v913
        %v1866 = vunpack.c.l.b16 %v914
        %v1867 = vunpack.c.h.b16 %v914
        %v1868 = vunpack.c.l.b16 %v915
        %v1869 = vunpack.c.h.b16 %v915
        %v1870 = vunpack.c.l.b16 %v916
        %v1871 = vunpack.c.h.b16 %v916
        %v1872 = vunpack.c.l.b16 %v917
        %v1873 = vunpack.c.h.b16 %v917
        %v1874 = vunpack.c.l.b16 %v918
        %v1875 = vunpack.c.h.b16 %v918
        %v1876 = vunpack.c.l.b16 %v919
        %v1877 = vunpack.c.h.b16 %v919
        %v1878 = vunpack.c.l.b16 %v920
        %v1879 = vunpack.c.h.b16 %v920
        %v1880 = vunpack.c.l.b16 %v921
        %v1881 = vunpack.c.h.b16 %v921
        %v1882 = vunpack.c.l.b16 %v922
        %v1883 = vunpack.c.h.b16 %v922
        %v1884 = vunpack.c.l.b16 %v923
        %v1885 = vunpack.c.h.b16 %v923
        %v1886 = vunpack.c.l.b16 %v924
        %v1887 = vunpack.c.h.b16 %v924
        %v1888 = vunpack.c.l.b16 %v925
        %v1889 = vunpack.c.h.b16 %v925
        %v1890 = vunpack.c.l.b16 %v926
        %v1891 = vunpack.c.h.b16 %v926
        %v1892 = vunpack.c.l.b16 %v927
        %v1893 = vunpack.c.h.b16 %v927
        %v1894 = vunpack.c.l.b16 %v928
        %v1895 = vunpack.c.h.b16 %v928
        %v1896 = vunpack.c.l.b16 %v929
        %v1897 = vunpack.c.h.b16 %v929
        %v1898 = vunpack.c.l.b16 %v930
        %v1899 = vunpack.c.h.b16 %v930
        %v1900 = vunpack.c.l.b16 %v931
        %v1901 = vunpack.c.h.b16 %v931
        %v1902 = vunpack.c.l.b16 %v932
        %v1903 = vunpack.c.h.b16 %v932
        %v1904 = vunpack.c.l.b16 %v933
        %v1905 = vunpack.c.h.b16 %v933
        %v1906 = vunpack.c.l.b16 %v934
        %v1907 = vunpack.c.h.b16 %v934
        %v1908 = vunpack.c.l.b16 %v935
        %v1909 = vunpack.c.h.b16 %v935
        %v1910 = vunpack.c.l.b16 %v936
        %v1911 = vunpack.c.h.b16 %v936
        %v1912 = vunpack.c.l.b16 %v937
        %v1913 = vunpack.c.h.b16 %v937
        %v1914 = vunpack.c.l.b16 %v938
        %v1915 = vunpack.c.h.b16 %v938
        %v1916 = vunpack.c.l.b16 %v939
        %v1917 = vunpack.c.h.b16 %v939
        %v1918 = vunpack.c.l.b16 %v940
        %v1919 = vunpack.c.h.b16 %v940
        %v1920 = vunpack.c.l.b16 %v941
        %v1921 = vunpack.c.h.b16 %v941
        %v1922 = vunpack.c.l.b16 %v942
        %v1923 = vunpack.c.h.b16 %v942
        %v1924 = vunpack.c.l.b16 %v943
        %v1925 = vunpack.c.h.b16 %v943
        %v1926 = vunpack.c.l.b16 %v944
        %v1927 = vunpack.c.h.b16 %v944
        %v1928 = vunpack.c.l.b16 %v945
        %v1929 = vunpack.c.h.b16 %v945
        %v1930 = vunpack.c.l.b16 %v946
        %v1931 = vunpack.c.h.b16 %v946
        %v1932 = vunpack.c.l.b16 %v947
        %v1933 = vunpack.c.h.b16 %v947
        %v1934 = vunpack.c.l.b16 %v948
        %v1935 = vunpack.c.h.b16 %v948
        %v1936 = vunpack.c.l.b16 %v949
        %v1937 = vunpack.c.h.b16 %v949
        %v1938 = vunpack.c.l.b16 %v950
        %v1939 = vunpack.c.h.b16 %v950
        %v1940 = vunpack.c.l.b16 %v951
        %v1941 = vunpack.c.h.b16 %v951
        %v1942 = vunpack.c.l.b16 %v952
        %v1943 = vunpack.c.h.b16 %v952
        %v1944 = vunpack.c.l.b16 %v953
        %v1945 = vunpack.c.h.b16 %v953
        %v1946 = vunpack.c.l.b16 %v954
        %v1947 = vunpack.c.h.b16 %v954
        %v1948 = vunpack.c.l.b16 %v955
        %v1949 = vunpack.c.h.b16 %v955
        %v1950 = vunpack.c.l.b16 %v956
        %v1951 = vunpack.c.h.b16 %v956
        %v1952 = vunpack.c.l.b16 %v957
        %v1953 = vunpack.c.h.b16 %v957
        %v1954 = vunpack.c.l.b16 %v958
        %v1955 = vunpack.c.h.b16 %v958
        %v1956 = vunpack.c.l.b16 %v959
        %v1957 = vunpack.c.h.b16 %v959
        %v1958 = vunpack.c.l.b16 %v960
        %v1959 = vunpack.c.h.b16 %v960
        %v1960 = vunpack.c.l.b16 %v961
        %v1961 = vunpack.c.h.b16 %v961
        %v1962 = vunpack.c.l.b16 %v962
        %v1963 = vunpack.c.h.b16 %v962
        %v1964 = vunpack.c.l.b16 %v963
        %v1965 = vunpack.c.h.b16 %v963
        %v1966 = vunpack.c.l.b16 %v964
        %v1967 = vunpack.c.h.b16 %v964
        %v1968 = vunpack.c.l.b16 %v965
        %v1969 = vunpack.c.h.b16 %v965
        %v1970 = vunpack.c.l.b16 %v966
        %v1971 = vunpack.c.h.b16 %v966
        %v1972 = vunpack.c.l.b16 %v967
        %v1973 = vunpack.c.h.b16 %v967
        %v1974 = vunpack.c.l.b16 %v968
        %v1975 = vunpack.c.h.b16 %v968
        %v1976 = vunpack.c.l.b16 %v969
        %v1977 = vunpack.c.h.b16 %v969
        %v1978 = vunpack.c.l.b16 %v970
        %v1979 = vunpack.c.h.b16 %v970
        %v1980 = vunpack.c.l.b16 %v971
        %v1981 = vunpack.c.h.b16 %v971
        %v1982 = vunpack.c.l.b16 %v972
        %v1983 = vunpack.c.h.b16 %v972
        %v1984 = vunpack.c.l.b16 %v973
        %v1985 = vunpack.c.h.b16 %v973
        %v1986 = vunpack.c.l.b16 %v974
        %v1987 = vunpack.c.h.b16 %v974
        %v1988 = vunpack.c.l.b16 %v975
        %v1989 = vunpack.c.h.b16 %v975
        %v1990 = vunpack.c.l.b16 %v976
        %v1991 = vunpack.c.h.b16 %v976
        %v1992 = vunpack.c.l.b16 %v977
        %v1993 = vunpack.c.h.b16 %v977
        %v1994 = vunpack.c.l.b16 %v978
        %v1995 = vunpack.c.h.b16 %v978
        %v1996 = vunpack.c.l.b16 %v979
        %v1997 = vunpack.c.h.b16 %v979
        %v1998 = vunpack.c.l.b16 %v980
        %v1999 = vunpack.c.h.b16 %v980
        %v2000 = vunpack.c.l.b16 %v981
        %v2001 = vunpack.c.h.b16 %v981
        %v2002 = vunpack.c.l.b16 %v982
        %v2003 = vunpack.c.h.b16 %v982
        %v2004 = vunpack.c.l.b16 %v983
        %v2005 = vunpack.c.h.b16 %v983
        %v2006 = vunpack.c.l.b16 %v984
        %v2007 = vunpack.c.h.b16 %v984
        %v2008 = vunpack.c.l.b16 %v985
        %v2009 = vunpack.c.h.b16 %v985
        %v2010 = vunpack.c.l.b16 %v986
        %v2011 = vunpack.c.h.b16 %v986
        %v2012 = vunpack.c.l.b16 %v987
        %v2013 = vunpack.c.h.b16 %v987
        %v2014 = vunpack.c.l.b16 %v988
        %v2015 = vunpack.c.h.b16 %v988
        %v2016 = vunpack.c.l.b16 %v989
        %v2017 = vunpack.c.h.b16 %v989
        %v2018 = vunpack.c.l.b16 %v990
        %v2019 = vunpack.c.h.b16 %v990
        %v2020 = vunpack.c.l.b16 %v991
        %v2021 = vunpack.c.h.b16 %v991
        %v2022 = vunpack.c.l.b16 %v992
        %v2023 = vunpack.c.h.b16 %v992
        %v2024 = vunpack.c.l.b16 %v993
        %v2025 = vunpack.c.h.b16 %v993
        %v2026 = vunpack.c.l.b16 %v994
        %v2027 = vunpack.c.h.b16 %v994
        %v2028 = vunpack.c.l.b16 %v995
        %v2029 = vunpack.c.h.b16 %v995
        %v2030 = vunpack.c.l.b16 %v996
        %v2031 = vunpack.c.h.b16 %v996
        %v2032 = vunpack.c.l.b16 %v997
        %v2033 = vunpack.c.h.b16 %v997
        %v2034 = vunpack.c.l.b16 %v998
        %v2035 = vunpack.c.h.b16 %v998
        %v2036 = vunpack.c.l.b16 %v999
        %v2037 = vunpack.c.h.b16 %v999
        %v2038 = vunpack.c.l.b16 %v1000
        %v2039 = vunpack.c.h.b16 %v1000
        %v2040 = vunpack.c.l.b16 %v1001
        %v2041 = vunpack.c.h.b16 %v1001
        %v2042 = vunpack.c.l.b16 %v1002
        %v2043 = vunpack.c.h.b16 %v1002
        %v2044 = vunpack.c.l.b16 %v1003
        %v2045 = vunpack.c.h.b16 %v1003
        %v2046 = vunpack.c.l.b16 %v1004
        %v2047 = vunpack.c.h.b16 %v1004
        %v2048 = vunpack.c.l.b16 %v1005
        %v2049 = vunpack.c.h.b16 %v1005
        %v2050 = vunpack.c.l.b16 %v1006
        %v2051 = vunpack.c.h.b16 %v1006
        %v2052 = vunpack.c.l.b16 %v1007
        %v2053 = vunpack.c.h.b16 %v1007
        %v2054 = vunpack.c.l.b16 %v1008
        %v2055 = vunpack.c.h.b16 %v1008
        %v2056 = vunpack.c.l.b16 %v1009
        %v2057 = vunpack.c.h.b16 %v1009
        %v2058 = vunpack.c.l.b16 %v1010
        %v2059 = vunpack.c.h.b16 %v1010
        %v2060 = vunpack.c.l.b16 %v1011
        %v2061 = vunpack.c.h.b16 %v1011
        %v2062 = vunpack.c.l.b16 %v1012
        %v2063 = vunpack.c.h.b16 %v1012
        %v2064 = vunpack.c.l.b16 %v1013
        %v2065 = vunpack.c.h.b16 %v1013
        %v2066 = vunpack.c.l.b16 %v1014
        %v2067 = vunpack.c.h.b16 %v1014
        %v2068 = vunpack.c.l.b16 %v1015
        %v2069 = vunpack.c.h.b16 %v1015
        %v2070 = vunpack.c.l.b16 %v1016
        %v2071 = vunpack.c.h.b16 %v1016
        %v2072 = vunpack.c.l.b16 %v1017
        %v2073 = vunpack.c.h.b16 %v1017
        %v2074 = vunpack.c.l.b16 %v1018
        %v2075 = vunpack.c.h.b16 %v1018
        %v2076 = vunpack.c.l.b16 %v1019
        %v2077 = vunpack.c.h.b16 %v1019
        %v2078 = vunpack.c.l.b16 %v1020
        %v2079 = vunpack.c.h.b16 %v1020
        %v2080 = vunpack.c.l.b16 %v1021
        %v2081 = vunpack.c.h.b16 %v1021
        %v2082 = vunpack.c.l.b16 %v1022
        %v2083 = vunpack.c.h.b16 %v1022
        %v2084 = vunpack.c.l.b16 %v1023
        %v2085 = vunpack.c.h.b16 %v1023
        %v2086 = vunpack.c.l.b16 %v1024
        %v2087 = vunpack.c.h.b16 %v1024
        %v2088 = vunpack.c.l.b16 %v1025
        %v2089 = vunpack.c.h.b16 %v1025
        %v2090 = vunpack.c.l.b16 %v1026
        %v2091 = vunpack.c.h.b16 %v1026
        %v2092 = vunpack.c.l.b16 %v1027
        %v2093 = vunpack.c.h.b16 %v1027
        %v2094 = vunpack.c.l.b16 %v1028
        %v2095 = vunpack.c.h.b16 %v1028
        %v2096 = vunpack.c.l.b16 %v1029
        %v2097 = vunpack.c.h.b16 %v1029
        %v2098 = vunpack.c.l.b16 %v1030
        %v2099 = vunpack.c.h.b16 %v1030
        %v2100 = vunpack.c.l.b16 %v1031
        %v2101 = vunpack.c.h.b16 %v1031
        %v2102 = vunpack.c.l.b16 %v1032
        %v2103 = vunpack.c.h.b16 %v1032
        %v2104 = vunpack.c.l.b16 %v1033
        %v2105 = vunpack.c.h.b16 %v1033
        %v2106 = vunpack.c.l.b16 %v1034
        %v2107 = vunpack.c.h.b16 %v1034
        %v2108 = vunpack.c.l.b16 %v1035
        %v2109 = vunpack.c.h.b16 %v1035
        %v2110 = vunpack.c.l.b16 %v1036
        %v2111 = vunpack.c.h.b16 %v1036
        %v2112 = vunpack.c.l.b16 %v1037
        %v2113 = vunpack.c.h.b16 %v1037
        %v2114 = vunpack.c.l.b16 %v1038
        %v2115 = vunpack.c.h.b16 %v1038
        %v2116 = vunpack.c.l.b16 %v1039
        %v2117 = vunpack.c.h.b16 %v1039
        %v2118 = vunpack.c.l.b16 %v1040
        %v2119 = vunpack.c.h.b16 %v1040
        %v2120 = vunpack.c.l.b16 %v1041
        %v2121 = vunpack.c.h.b16 %v1041
        %v2122 = vunpack.c.l.b16 %v1042
        %v2123 = vunpack.c.h.b16 %v1042
        %v2124 = vunpack.c.l.b16 %v1043
        %v2125 = vunpack.c.h.b16 %v1043
        %v2126 = vunpack.c.l.b16 %v1044
        %v2127 = vunpack.c.h.b16 %v1044
        %v2128 = vunpack.c.l.b16 %v1045
        %v2129 = vunpack.c.h.b16 %v1045
        %v2130 = vunpack.c.l.b16 %v1046
        %v2131 = vunpack.c.h.b16 %v1046
        %v2132 = vunpack.c.l.b16 %v1047
        %v2133 = vunpack.c.h.b16 %v1047
        %v2134 = vunpack.c.l.b16 %v1048
        %v2135 = vunpack.c.h.b16 %v1048
        %v2136 = vunpack.c.l.b16 %v1049
        %v2137 = vunpack.c.h.b16 %v1049
        %v2138 = vunpack.c.l.b16 %v1050
        %v2139 = vunpack.c.h.b16 %v1050
        %v2140 = vunpack.c.l.b16 %v1051
        %v2141 = vunpack.c.h.b16 %v1051
        %v2142 = vunpack.c.l.b16 %v1052
        %v2143 = vunpack.c.h.b16 %v1052
        %v2144 = vunpack.c.l.b16 %v1053
        %v2145 = vunpack.c.h.b16 %v1053
        %v2146 = vunpack.c.l.b16 %v1054
        %v2147 = vunpack.c.h.b16 %v1054
        %v2148 = vunpack.c.l.b16 %v1055
        %v2149 = vunpack.c.h.b16 %v1055
        %v2150 = vunpack.c.l.b16 %v1056
        %v2151 = vunpack.c.h.b16 %v1056
        %v2152 = vunpack.c.l.b16 %v1057
        %v2153 = vunpack.c.h.b16 %v1057
        %v2154 = vunpack.c.l.b16 %v1058
        %v2155 = vunpack.c.h.b16 %v1058
        %v2156 = vunpack.c.l.b16 %v1059
        %v2157 = vunpack.c.h.b16 %v1059
        %v2158 = vunpack.c.l.b16 %v1060
        %v2159 = vunpack.c.h.b16 %v1060
        %v2160 = vunpack.c.l.b16 %v1061
        %v2161 = vunpack.c.h.b16 %v1061
        %v2162 = vunpack.c.l.b16 %v1062
        %v2163 = vunpack.c.h.b16 %v1062
        %v2164 = vunpack.c.l.b16 %v1063
        %v2165 = vunpack.c.h.b16 %v1063
        %v2166 = vunpack.c.l.b16 %v1064
        %v2167 = vunpack.c.h.b16 %v1064
        %v2168 = vunpack.c.l.b16 %v1065
        %v2169 = vunpack.c.h.b16 %v1065
        %v2170 = vunpack.c.l.b16 %v1066
        %v2171 = vunpack.c.h.b16 %v1066
        %v2172 = vunpack.c.l.b16 %v1067
        %v2173 = vunpack.c.h.b16 %v1067
        %v2174 = vunpack.c.l.b16 %v1068
        %v2175 = vunpack.c.h.b16 %v1068
        %v2176 = vunpack.c.l.b16 %v1069
        %v2177 = vunpack.c.h.b16 %v1069
        %v2178 = vunpack.c.l.b16 %v1070
        %v2179 = vunpack.c.h.b16 %v1070
        %v2180 = vunpack.c.l.b16 %v1071
        %v2181 = vunpack.c.h.b16 %v1071
        %v2182 = vunpack.c.l.b16 %v1072
        %v2183 = vunpack.c.h.b16 %v1072
        %v2184 = vunpack.c.l.b16 %v1073
        %v2185 = vunpack.c.h.b16 %v1073
        %v2186 = vunpack.c.l.b16 %v1074
        %v2187 = vunpack.c.h.b16 %v1074
        %v2188 = vunpack.c.l.b16 %v1075
        %v2189 = vunpack.c.h.b16 %v1075
        %v2190 = vunpack.c.l.b16 %v1076
        %v2191 = vunpack.c.h.b16 %v1076
        %v2192 = vunpack.c.l.b16 %v1077
        %v2193 = vunpack.c.h.b16 %v1077
        %v2194 = vunpack.c.l.b16 %v1078
        %v2195 = vunpack.c.h.b16 %v1078
        %v2196 = vunpack.c.l.b16 %v1079
        %v2197 = vunpack.c.h.b16 %v1079
        %v2198 = vunpack.c.l.b16 %v1080
        %v2199 = vunpack.c.h.b16 %v1080
        %v2200 = vunpack.c.l.b16 %v1081
        %v2201 = vunpack.c.h.b16 %v1081
        %v2202 = vunpack.c.l.b16 %v1082
        %v2203 = vunpack.c.h.b16 %v1082
        %v2204 = vunpack.c.l.b16 %v1083
        %v2205 = vunpack.c.h.b16 %v1083
        %v2206 = vunpack.c.l.b16 %v1084
        %v2207 = vunpack.c.h.b16 %v1084
        %v2208 = vunpack.c.l.b16 %v1085
        %v2209 = vunpack.c.h.b16 %v1085
        %v2210 = vunpack.c.l.b16 %v1086
        %v2211 = vunpack.c.h.b16 %v1086
        %v2212 = vunpack.c.l.b16 %v1087
        %v2213 = vunpack.c.h.b16 %v1087
        %v2214 = vunpack.c.l.b16 %v1088
        %v2215 = vunpack.c.h.b16 %v1088
        %v2216 = vunpack.c.l.b16 %v1089
        %v2217 = vunpack.c.h.b16 %v1089
        %v2218 = vunpack.c.l.b16 %v1090
        %v2219 = vunpack.c.h.b16 %v1090
        %v2220 = vunpack.c.l.b16 %v1091
        %v2221 = vunpack.c.h.b16 %v1091
        %v2222 = vunpack.c.l.b16 %v1092
        %v2223 = vunpack.c.h.b16 %v1092
        %v2224 = vunpack.c.l.b16 %v1093
        %v2225 = vunpack.c.h.b16 %v1093
        %v2226 = vunpack.c.l.b16 %v1094
        %v2227 = vunpack.c.h.b16 %v1094
        %v2228 = vunpack.c.l.b16 %v1095
        %v2229 = vunpack.c.h.b16 %v1095
        %v2230 = vunpack.c.l.b16 %v1096
        %v2231 = vunpack.c.h.b16 %v1096
        %v2232 = vunpack.c.l.b16 %v1097
        %v2233 = vunpack.c.h.b16 %v1097
        %v2234 = vunpack.c.l.b16 %v1098
        %v2235 = vunpack.c.h.b16 %v1098
        %v2236 = vunpack.c.l.b16 %v1099
        %v2237 = vunpack.c.h.b16 %v1099
        %v2238 = vunpack.c.l.b16 %v1100
        %v2239 = vunpack.c.h.b16 %v1100
        %v2240 = vunpack.c.l.b16 %v1101
        %v2241 = vunpack.c.h.b16 %v1101
        %v2242 = vunpack.c.l.b16 %v1102
        %v2243 = vunpack.c.h.b16 %v1102
        %v2244 = vunpack.c.l.b16 %v1103
        %v2245 = vunpack.c.h.b16 %v1103
        %v2246 = vunpack.c.l.b16 %v1104
        %v2247 = vunpack.c.h.b16 %v1104
        %v2248 = vunpack.c.l.b16 %v1105
        %v2249 = vunpack.c.h.b16 %v1105
        %v2250 = vunpack.c.l.b16 %v1106
        %v2251 = vunpack.c.h.b16 %v1106
        %v2252 = vunpack.c.l.b16 %v1107
        %v2253 = vunpack.c.h.b16 %v1107
        %v2254 = vunpack.c.l.b16 %v1108
        %v2255 = vunpack.c.h.b16 %v1108
        %v2256 = vunpack.c.l.b16 %v1109
        %v2257 = vunpack.c.h.b16 %v1109
        %v2258 = vunpack.c.l.b16 %v1110
        %v2259 = vunpack.c.h.b16 %v1110
        %v2260 = vunpack.c.l.b16 %v1111
        %v2261 = vunpack.c.h.b16 %v1111
        %v2262 = vunpack.c.l.b16 %v1112
        %v2263 = vunpack.c.h.b16 %v1112
        %v2264 = vunpack.c.l.b16 %v1113
        %v2265 = vunpack.c.h.b16 %v1113
        %v2266 = vunpack.c.l.b16 %v1114
        %v2267 = vunpack.c.h.b16 %v1114
        %v2268 = vunpack.c.l.b16 %v1115
        %v2269 = vunpack.c.h.b16 %v1115
        %v2270 = vunpack.c.l.b16 %v1116
        %v2271 = vunpack.c.h.b16 %v1116
        %v2272 = vunpack.c.l.b16 %v1117
        %v2273 = vunpack.c.h.b16 %v1117
        %v2274 = vunpack.c.l.b16 %v1118
        %v2275 = vunpack.c.h.b16 %v1118
        %v2276 = vunpack.c.l.b16 %v1119
        %v2277 = vunpack.c.h.b16 %v1119
        %v2278 = vunpack.c.l.b16 %v1120
        %v2279 = vunpack.c.h.b16 %v1120
        %v2280 = vunpack.c.l.b16 %v1121
        %v2281 = vunpack.c.h.b16 %v1121
        %v2282 = vunpack.c.l.b16 %v1122
        %v2283 = vunpack.c.h.b16 %v1122
        %v2284 = vunpack.c.l.b16 %v1123
        %v2285 = vunpack.c.h.b16 %v1123
        %v2286 = vunpack.c.l.b16 %v1124
        %v2287 = vunpack.c.h.b16 %v1124
        %v2288 = vunpack.c.l.b16 %v1125
        %v2289 = vunpack.c.h.b16 %v1125
        %v2290 = vunpack.c.l.b16 %v1126
        %v2291 = vunpack.c.h.b16 %v1126
        %v2292 = vunpack.c.l.b16 %v1127
        %v2293 = vunpack.c.h.b16 %v1127
        %v2294 = vunpack.c.l.b16 %v1128
        %v2295 = vunpack.c.h.b16 %v1128
        %v2296 = vunpack.c.l.b16 %v1129
        %v2297 = vunpack.c.h.b16 %v1129
        %v2298 = vunpack.c.l.b16 %v1130
        %v2299 = vunpack.c.h.b16 %v1130
        %v2300 = vunpack.c.l.b16 %v1131
        %v2301 = vunpack.c.h.b16 %v1131
        %v2302 = vunpack.c.l.b16 %v1132
        %v2303 = vunpack.c.h.b16 %v1132
        %v2304 = vunpack.c.l.b16 %v1133
        %v2305 = vunpack.c.h.b16 %v1133
        %v2306 = vunpack.c.l.b16 %v1134
        %v2307 = vunpack.c.h.b16 %v1134
        %v2308 = vunpack.c.l.b16 %v1135
        %v2309 = vunpack.c.h.b16 %v1135
        %v2310 = vunpack.c.l.b16 %v1136
        %v2311 = vunpack.c.h.b16 %v1136
        %v2312 = vunpack.c.l.b16 %v1137
        %v2313 = vunpack.c.h.b16 %v1137
        %v2314 = vunpack.c.l.b16 %v1138
        %v2315 = vunpack.c.h.b16 %v1138
        %v2316 = vunpack.c.l.b16 %v1139
        %v2317 = vunpack.c.h.b16 %v1139
        %v2318 = vunpack.c.l.b16 %v1140
        %v2319 = vunpack.c.h.b16 %v1140
        %v2320 = vunpack.c.l.b16 %v1141
        %v2321 = vunpack.c.h.b16 %v1141
        %v2322 = vunpack.c.l.b16 %v1142
        %v2323 = vunpack.c.h.b16 %v1142
        %v2324 = vunpack.c.l.b16 %v1143
        %v2325 = vunpack.c.h.b16 %v1143
        %v2326 = vunpack.c.l.b16 %v1144
        %v2327 = vunpack.c.h.b16 %v1144
        %v2328 = vunpack.c.l.b16 %v1145
        %v2329 = vunpack.c.h.b16 %v1145
        %v2330 = vunpack.c.l.b16 %v1146
        %v2331 = vunpack.c.h.b16 %v1146
        %v2332 = vunpack.c.l.b16 %v1147
        %v2333 = vunpack.c.h.b16 %v1147
        %v2334 = vunpack.c.l.b16 %v1148
        %v2335 = vunpack.c.h.b16 %v1148
        %v2336 = vunpack.c.l.b16 %v1149
        %v2337 = vunpack.c.h.b16 %v1149
        %v2338 = vunpack.c.l.b16 %v1150
        %v2339 = vunpack.c.h.b16 %v1150
        %v2340 = vunpack.c.l.b16 %v1151
        %v2341 = vunpack.c.h.b16 %v1151
        %v2342 = vunpack.c.l.b16 %v1152
        %v2343 = vunpack.c.h.b16 %v1152
        %v2344 = vunpack.c.l.b16 %v1153
        %v2345 = vunpack.c.h.b16 %v1153
        %v2346 = vunpack.c.l.b16 %v1154
        %v2347 = vunpack.c.h.b16 %v1154
        %v2348 = vunpack.c.l.b16 %v1155
        %v2349 = vunpack.c.h.b16 %v1155
        %v2350 = vunpack.c.l.b16 %v1156
        %v2351 = vunpack.c.h.b16 %v1156
        %v2352 = vunpack.c.l.b16 %v1157
        %v2353 = vunpack.c.h.b16 %v1157
        %v2354 = vunpack.c.l.b16 %v1158
        %v2355 = vunpack.c.h.b16 %v1158
        %v2356 = vunpack.c.l.b16 %v1159
        %v2357 = vunpack.c.h.b16 %v1159
        %v2358 = vunpack.c.l.b16 %v1160
        %v2359 = vunpack.c.h.b16 %v1160
        %v2360 = vunpack.c.l.b16 %v1161
        %v2361 = vunpack.c.h.b16 %v1161
        %v2362 = vunpack.c.l.b16 %v1162
        %v2363 = vunpack.c.h.b16 %v1162
        %v2364 = vunpack.c.l.b16 %v1163
        %v2365 = vunpack.c.h.b16 %v1163
        %v2366 = vunpack.c.l.b16 %v1164
        %v2367 = vunpack.c.h.b16 %v1164
        %v2368 = vunpack.c.l.b16 %v1165
        %v2369 = vunpack.c.h.b16 %v1165
        %v2370 = vunpack.c.l.b16 %v1166
        %v2371 = vunpack.c.h.b16 %v1166
        %v2372 = vunpack.c.l.b16 %v1167
        %v2373 = vunpack.c.h.b16 %v1167
        %v2374 = vunpack.c.l.b16 %v1168
        %v2375 = vunpack.c.h.b16 %v1168
        %v2376 = vunpack.c.l.b16 %v1169
        %v2377 = vunpack.c.h.b16 %v1169
        %v2378 = vunpack.c.l.b16 %v1170
        %v2379 = vunpack.c.h.b16 %v1170
        %v2380 = vunpack.c.l.b16 %v1171
        %v2381 = vunpack.c.h.b16 %v1171
        %v2382 = vunpack.c.l.b16 %v1172
        %v2383 = vunpack.c.h.b16 %v1172
        %v2384 = vunpack.c.l.b16 %v1173
        %v2385 = vunpack.c.h.b16 %v1173
        %v2386 = vunpack.c.l.b16 %v1174
        %v2387 = vunpack.c.h.b16 %v1174
        %v2388 = vunpack.c.l.b16 %v1175
        %v2389 = vunpack.c.h.b16 %v1175
        %v2390 = vunpack.c.l.b16 %v1176
        %v2391 = vunpack.c.h.b16 %v1176
        %v2392 = vunpack.c.l.b16 %v1177
        %v2393 = vunpack.c.h.b16 %v1177
        %v2394 = vunpack.c.l.b16 %v1178
        %v2395 = vunpack.c.h.b16 %v1178
        %v2396 = vunpack.c.l.b16 %v1179
        %v2397 = vunpack.c.h.b16 %v1179
        %v2398 = vunpack.c.l.b16 %v1180
        %v2399 = vunpack.c.h.b16 %v1180
        %v2400 = vunpack.c.l.b16 %v1181
        %v2401 = vunpack.c.h.b16 %v1181
        %v2402 = vunpack.c.l.b16 %v1182
        %v2403 = vunpack.c.h.b16 %v1182
        %v2404 = vunpack.c.l.b16 %v1183
        %v2405 = vunpack.c.h.b16 %v1183
        %v2406 = vunpack.c.l.b16 %v1184
        %v2407 = vunpack.c.h.b16 %v1184
        %v2408 = vunpack.c.l.b16 %v1185
        %v2409 = vunpack.c.h.b16 %v1185
        %v2410 = vunpack.c.l.b16 %v1186
        %v2411 = vunpack.c.h.b16 %v1186
        %v2412 = vunpack.c.l.b16 %v1187
        %v2413 = vunpack.c.h.b16 %v1187
        %v2414 = vunpack.c.l.b16 %v1188
        %v2415 = vunpack.c.h.b16 %v1188
        %v2416 = vunpack.c.l.b16 %v1189
        %v2417 = vunpack.c.h.b16 %v1189
        %v2418 = vunpack.c.l.b16 %v1190
        %v2419 = vunpack.c.h.b16 %v1190
        %v2420 = vunpack.c.l.b16 %v1191
        %v2421 = vunpack.c.h.b16 %v1191
        %v2422 = vunpack.c.l.b16 %v1192
        %v2423 = vunpack.c.h.b16 %v1192
        %v2424 = vunpack.c.l.b16 %v1193
        %v2425 = vunpack.c.h.b16 %v1193
        %v2426 = vunpack.c.l.b16 %v1194
        %v2427 = vunpack.c.h.b16 %v1194
        %v2428 = vunpack.c.l.b16 %v1195
        %v2429 = vunpack.c.h.b16 %v1195
        %v2430 = vunpack.c.l.b16 %v1196
        %v2431 = vunpack.c.h.b16 %v1196
        %v2432 = vunpack.c.l.b16 %v1197
        %v2433 = vunpack.c.h.b16 %v1197
        %v2434 = vunpack.c.l.b16 %v1198
        %v2435 = vunpack.c.h.b16 %v1198
        %v2436 = vunpack.c.l.b16 %v1199
        %v2437 = vunpack.c.h.b16 %v1199
        %v2438 = vunpack.c.l.b16 %v1200
        %v2439 = vunpack.c.h.b16 %v1200
        %v2440 = vunpack.c.l.b16 %v1201
        %v2441 = vunpack.c.h.b16 %v1201
        %v2442 = vunpack.c.l.b16 %v1202
        %v2443 = vunpack.c.h.b16 %v1202
        %v2444 = vunpack.c.l.b16 %v1203
        %v2445 = vunpack.c.h.b16 %v1203
        %v2446 = vunpack.c.l.b16 %v1204
        %v2447 = vunpack.c.h.b16 %v1204
        %v2448 = vunpack.c.l.b16 %v1205
        %v2449 = vunpack.c.h.b16 %v1205
        %v2450 = vunpack.c.l.b16 %v1206
        %v2451 = vunpack.c.h.b16 %v1206
        %v2452 = vunpack.c.l.b16 %v1207
        %v2453 = vunpack.c.h.b16 %v1207
        %v2454 = vunpack.c.l.b16 %v1208
        %v2455 = vunpack.c.h.b16 %v1208
        %v2456 = vunpack.c.l.b16 %v1209
        %v2457 = vunpack.c.h.b16 %v1209
        %v2458 = vunpack.c.l.b16 %v1210
        %v2459 = vunpack.c.h.b16 %v1210
        %v2460 = vunpack.c.l.b16 %v1211
        %v2461 = vunpack.c.h.b16 %v1211
        %v2462 = vunpack.c.l.b16 %v1212
        %v2463 = vunpack.c.h.b16 %v1212
        %v2464 = vunpack.c.l.b16 %v1213
        %v2465 = vunpack.c.h.b16 %v1213
        %v2466 = vunpack.c.l.b16 %v1214
        %v2467 = vunpack.c.h.b16 %v1214
        %v2468 = vunpack.c.l.b16 %v1215
        %v2469 = vunpack.c.h.b16 %v1215
        %v2470 = vunpack.c.l.b16 %v1216
        %v2471 = vunpack.c.h.b16 %v1216
        %v2472 = vunpack.c.l.b16 %v1217
        %v2473 = vunpack.c.h.b16 %v1217
        %v2474 = vunpack.c.l.b16 %v1218
        %v2475 = vunpack.c.h.b16 %v1218
        %v2476 = vunpack.c.l.b16 %v1219
        %v2477 = vunpack.c.h.b16 %v1219
        %v2478 = vunpack.c.l.b16 %v1220
        %v2479 = vunpack.c.h.b16 %v1220
        %v2480 = vunpack.c.l.b16 %v1221
        %v2481 = vunpack.c.h.b16 %v1221
        %v2482 = vunpack.c.l.b16 %v1222
        %v2483 = vunpack.c.h.b16 %v1222
        %v2484 = vunpack.c.l.b16 %v1223
        %v2485 = vunpack.c.h.b16 %v1223
        %v2486 = vunpack.c.l.b16 %v1224
        %v2487 = vunpack.c.h.b16 %v1224
        %v2488 = vunpack.c.l.b16 %v1225
        %v2489 = vunpack.c.h.b16 %v1225
        %v2490 = vunpack.c.l.b16 %v1226
        %v2491 = vunpack.c.h.b16 %v1226
        %v2492 = vunpack.c.l.b16 %v1227
        %v2493 = vunpack.c.h.b16 %v1227
        %v2494 = vunpack.c.l.b16 %v1228
        %v2495 = vunpack.c.h.b16 %v1228
        %v2496 = vunpack.c.l.b16 %v1229
        %v2497 = vunpack.c.h.b16 %v1229
        %v2498 = vunpack.c.l.b16 %v1230
        %v2499 = vunpack.c.h.b16 %v1230
        %v2500 = vunpack.c.l.b16 %v1231
        %v2501 = vunpack.c.h.b16 %v1231
        %v2502 = vunpack.c.l.b16 %v1232
        %v2503 = vunpack.c.h.b16 %v1232
        %v2504 = vunpack.c.l.b16 %v1233
        %v2505 = vunpack.c.h.b16 %v1233
        %v2506 = vunpack.c.l.b16 %v1234
        %v2507 = vunpack.c.h.b16 %v1234
        %v2508 = vunpack.c.l.b16 %v1235
        %v2509 = vunpack.c.h.b16 %v1235
        %v2510 = vunpack.c.l.b16 %v1236
        %v2511 = vunpack.c.h.b16 %v1236
        %v2512 = vunpack.c.l.b16 %v1237
        %v2513 = vunpack.c.h.b16 %v1237
        %v2514 = vunpack.c.l.b16 %v1238
        %v2515 = vunpack.c.h.b16 %v1238
        %v2516 = vunpack.c.l.b16 %v1239
        %v2517 = vunpack.c.h.b16 %v1239
        %v2518 = vunpack.c.l.b16 %v1240
        %v2519 = vunpack.c.h.b16 %v1240
        %v2520 = vunpack.c.l.b16 %v1241
        %v2521 = vunpack.c.h.b16 %v1241
        %v2522 = vunpack.c.l.b16 %v1242
        %v2523 = vunpack.c.h.b16 %v1242
        %v2524 = vunpack.c.l.b16 %v1243
        %v2525 = vunpack.c.h.b16 %v1243
        %v2526 = vunpack.c.l.b16 %v1244
        %v2527 = vunpack.c.h.b16 %v1244
        %v2528 = vunpack.c.l.b16 %v1245
        %v2529 = vunpack.c.h.b16 %v1245
        %v2530 = vunpack.c.l.b16 %v1246
        %v2531 = vunpack.c.h.b16 %v1246
        %v2532 = vunpack.c.l.b16 %v1247
        %v2533 = vunpack.c.h.b16 %v1247
        %v2534 = vunpack.c.l.b16 %v1248
        %v2535 = vunpack.c.h.b16 %v1248
        %v2536 = vunpack.c.l.b16 %v1249
        %v2537 = vunpack.c.h.b16 %v1249
        %v2538 = vunpack.c.l.b16 %v1250
        %v2539 = vunpack.c.h.b16 %v1250
        %v2540 = vunpack.c.l.b16 %v1251
        %v2541 = vunpack.c.h.b16 %v1251
        %v2542 = vunpack.c.l.b16 %v1252
        %v2543 = vunpack.c.h.b16 %v1252
        %v2544 = vunpack.c.l.b16 %v1253
        %v2545 = vunpack.c.h.b16 %v1253
        %v2546 = vunpack.c.l.b16 %v1254
        %v2547 = vunpack.c.h.b16 %v1254
        %v2548 = vunpack.c.l.b16 %v1255
        %v2549 = vunpack.c.h.b16 %v1255
        %v2550 = vunpack.c.l.b16 %v1256
        %v2551 = vunpack.c.h.b16 %v1256
        %v2552 = vunpack.c.l.b16 %v1257
        %v2553 = vunpack.c.h.b16 %v1257
        %v2554 = vunpack.c.l.b16 %v1258
        %v2555 = vunpack.c.h.b16 %v1258
        %v2556 = vunpack.c.l.b16 %v1259
        %v2557 = vunpack.c.h.b16 %v1259
        %v2558 = vunpack.c.l.b16 %v1260
        %v2559 = vunpack.c.h.b16 %v1260
        %v2560 = vunpack.c.l.b16 %v1261
        %v2561 = vunpack.c.h.b16 %v1261
        %v2562 = vunpack.c.l.b16 %v1262
        %v2563 = vunpack.c.h.b16 %v1262
        %v2564 = vunpack.c.l.b16 %v1263
        %v2565 = vunpack.c.h.b16 %v1263
        %v2566 = vunpack.c.l.b16 %v1264
        %v2567 = vunpack.c.h.b16 %v1264
        %v2568 = vunpack.c.l.b16 %v1265
        %v2569 = vunpack.c.h.b16 %v1265
        %v2570 = vunpack.c.l.b16 %v1266
        %v2571 = vunpack.c.h.b16 %v1266
        %v2572 = vunpack.c.l.b16 %v1267
        %v2573 = vunpack.c.h.b16 %v1267
        %v2574 = vunpack.c.l.b16 %v1268
        %v2575 = vunpack.c.h.b16 %v1268
        %v2576 = vunpack.c.l.b16 %v1269
        %v2577 = vunpack.c.h.b16 %v1269
        %v2578 = vpack.c.b16 %v1714, %v1706
        %v2579 = vpack.c.b16 %v1715, %v1707
        %v2580 = vpack.c.b16 %v1716, %v1708
        %v2581 = vpack.c.b16 %v1717, %v1709
        %v2582 = vpack.c.b16 %v1718, %v1710
        %v2583 = vpack.c.b16 %v1719, %v1711
        %v2584 = vpack.c.b16 %v1720, %v1712
        %v2585 = vpack.c.b16 %v1721, %v1713
        %v2586 = vpack.c.b16 %v1730, %v1722
        %v2587 = vpack.c.b16 %v1731, %v1723
        %v2588 = vpack.c.b16 %v1732, %v1724
        %v2589 = vpack.c.b16 %v1733, %v1725
        %v2590 = vpack.c.b16 %v1734, %v1726
        %v2591 = vpack.c.b16 %v1735, %v1727
        %v2592 = vpack.c.b16 %v1736, %v1728
        %v2593 = vpack.c.b16 %v1737, %v1729
        %v2594 = vpack.c.b16 %v1746, %v1738
        %v2595 = vpack.c.b16 %v1747, %v1739
        %v2596 = vpack.c.b16 %v1748, %v1740
        %v2597 = vpack.c.b16 %v1749, %v1741
        %v2598 = vpack.c.b16 %v1750, %v1742
        %v2599 = vpack.c.b16 %v1751, %v1743
        %v2600 = vpack.c.b16 %v1752, %v1744
        %v2601 = vpack.c.b16 %v1753, %v1745
        %v2602 = vpack.c.b16 %v1762, %v1754
        %v2603 = vpack.c.b16 %v1763, %v1755
        %v2604 = vpack.c.b16 %v1764, %v1756
        %v2605 = vpack.c.b16 %v1765, %v1757
        %v2606 = vpack.c.b16 %v1766, %v1758
        %v2607 = vpack.c.b16 %v1767, %v1759
        %v2608 = vpack.c.b16 %v1768, %v1760
        %v2609 = vpack.c.b16 %v1769, %v1761
        %v2610 = vpack.c.b16 %v1778, %v1770
        %v2611 = vpack.c.b16 %v1779, %v1771
        %v2612 = vpack.c.b16 %v1780, %v1772
        %v2613 = vpack.c.b16 %v1781, %v1773
        %v2614 = vpack.c.b16 %v1782, %v1774
        %v2615 = vpack.c.b16 %v1783, %v1775
        %v2616 = vpack.c.b16 %v1784, %v1776
        %v2617 = vpack.c.b16 %v1785, %v1777
        %v2618 = vpack.c.b16 %v1794, %v1786
        %v2619 = vpack.c.b16 %v1795, %v1787
        %v2620 = vpack.c.b16 %v1796, %v1788
        %v2621 = vpack.c.b16 %v1797, %v1789
        %v2622 = vpack.c.b16 %v1798, %v1790
        %v2623 = vpack.c.b16 %v1799, %v1791
        %v2624 = vpack.c.b16 %v1800, %v1792
        %v2625 = vpack.c.b16 %v1801, %v1793
        %v2626 = vpack.c.b16 %v1810, %v1802
        %v2627 = vpack.c.b16 %v1811, %v1803
        %v2628 = vpack.c.b16 %v1812, %v1804
        %v2629 = vpack.c.b16 %v1813, %v1805
        %v2630 = vpack.c.b16 %v1814, %v1806
        %v2631 = vpack.c.b16 %v1815, %v1807
        %v2632 = vpack.c.b16 %v1816, %v1808
        %v2633 = vpack.c.b16 %v1817, %v1809
        %v2634 = vpack.c.b16 %v1826, %v1818
        %v2635 = vpack.c.b16 %v1827, %v1819
        %v2636 = vpack.c.b16 %v1828, %v1820
        %v2637 = vpack.c.b16 %v1829, %v1821
        %v2638 = vpack.c.b16 %v1830, %v1822
        %v2639 = vpack.c.b16 %v1831, %v1823
        %v2640 = vpack.c.b16 %v1832, %v1824
        %v2641 = vpack.c.b16 %v1833, %v1825
        %v2642 = vpack.c.b16 %v1842, %v1834
        %v2643 = vpack.c.b16 %v1843, %v1835
        %v2644 = vpack.c.b16 %v1844, %v1836
        %v2645 = vpack.c.b16 %v1845, %v1837
        %v2646 = vpack.c.b16 %v1846, %v1838
        %v2647 = vpack.c.b16 %v1847, %v1839
        %v2648 = vpack.c.b16 %v1848, %v1840
        %v2649 = vpack.c.b16 %v1849, %v1841
        %v2650 = vpack.c.b16 %v1858, %v1850
        %v2651 = vpack.c.b16 %v1859, %v1851
        %v2652 = vpack.c.b16 %v1860, %v1852
        %v2653 = vpack.c.b16 %v1861, %v1853
        %v2654 = vpack.c.b16 %v1862, %v1854
        %v2655 = vpack.c.b16 %v1863, %v1855
        %v2656 = vpack.c.b16 %v1864, %v1856
        %v2657 = vpack.c.b16 %v1865, %v1857
        %v2658 = vpack.c.b16 %v1874, %v1866
        %v2659 = vpack.c.b16 %v1875, %v1867
        %v2660 = vpack.c.b16 %v1876, %v1868
        %v2661 = vpack.c.b16 %v1877, %v1869
        %v2662 = vpack.c.b16 %v1878, %v1870
        %v2663 = vpack.c.b16 %v1879, %v1871
        %v2664 = vpack.c.b16 %v1880, %v1872
        %v2665 = vpack.c.b16 %v1881, %v1873
        %v2666 = vpack.c.b16 %v1890, %v1882
        %v2667 = vpack.c.b16 %v1891, %v1883
        %v2668 = vpack.c.b16 %v1892, %v1884
        %v2669 = vpack.c.b16 %v1893, %v1885
        %v2670 = vpack.c.b16 %v1894, %v1886
        %v2671 = vpack.c.b16 %v1895, %v1887
        %v2672 = vpack.c.b16 %v1896, %v1888
        %v2673 = vpack.c.b16 %v1897, %v1889
        %v2674 = vpack.c.b16 %v1906, %v1898
        %v2675 = vpack.c.b16 %v1907, %v1899
        %v2676 = vpack.c.b16 %v1908, %v1900
        %v2677 = vpack.c.b16 %v1909, %v1901
        %v2678 = vpack.c.b16 %v1910, %v1902
        %v2679 = vpack.c.b16 %v1911, %v1903
        %v2680 = vpack.c.b16 %v1912, %v1904
        %v2681 = vpack.c.b16 %v1913, %v1905
        %v2682 = vpack.c.b16 %v1922, %v1914
        %v2683 = vpack.c.b16 %v1923, %v1915
        %v2684 = vpack.c.b16 %v1924, %v1916
        %v2685 = vpack.c.b16 %v1925, %v1917
        %v2686 = vpack.c.b16 %v1926, %v1918
        %v2687 = vpack.c.b16 %v1927, %v1919
        %v2688 = vpack.c.b16 %v1928, %v1920
        %v2689 = vpack.c.b16 %v1929, %v1921
        %v2690 = vpack.c.b16 %v1938, %v1930
        %v2691 = vpack.c.b16 %v1939, %v1931
        %v2692 = vpack.c.b16 %v1940, %v1932
        %v2693 = vpack.c.b16 %v1941, %v1933
        %v2694 = vpack.c.b16 %v1942, %v1934
        %v2695 = vpack.c.b16 %v1943, %v1935
        %v2696 = vpack.c.b16 %v1944, %v1936
        %v2697 = vpack.c.b16 %v1945, %v1937
        %v2698 = vpack.c.b16 %v1954, %v1946
        %v2699 = vpack.c.b16 %v1955, %v1947
        %v2700 = vpack.c.b16 %v1956, %v1948
        %v2701 = vpack.c.b16 %v1957, %v1949
        %v2702 = vpack.c.b16 %v1958, %v1950
        %v2703 = vpack.c.b16 %v1959, %v1951
        %v2704 = vpack.c.b16 %v1960, %v1952
        %v2705 = vpack.c.b16 %v1961, %v1953
        %v2706 = vpack.c.b16 %v1970, %v1962
        %v2707 = vpack.c.b16 %v1971, %v1963
        %v2708 = vpack.c.b16 %v1972, %v1964
        %v2709 = vpack.c.b16 %v1973, %v1965
        %v2710 = vpack.c.b16 %v1974, %v1966
        %v2711 = vpack.c.b16 %v1975, %v1967
        %v2712 = vpack.c.b16 %v1976, %v1968
        %v2713 = vpack.c.b16 %v1977, %v1969
        %v2714 = vpack.c.b16 %v1986, %v1978
        %v2715 = vpack.c.b16 %v1987, %v1979
        %v2716 = vpack.c.b16 %v1988, %v1980
        %v2717 = vpack.c.b16 %v1989, %v1981
        %v2718 = vpack.c.b16 %v1990, %v1982
        %v2719 = vpack.c.b16 %v1991, %v1983
        %v2720 = vpack.c.b16 %v1992, %v1984
        %v2721 = vpack.c.b16 %v1993, %v1985
        %v2722 = vpack.c.b16 %v2002, %v1994
        %v2723 = vpack.c.b16 %v2003, %v1995
        %v2724 = vpack.c.b16 %v2004, %v1996
        %v2725 = vpack.c.b16 %v2005, %v1997
        %v2726 = vpack.c.b16 %v2006, %v1998
        %v2727 = vpack.c.b16 %v2007, %v1999
        %v2728 = vpack.c.b16 %v2008, %v2000
        %v2729 = vpack.c.b16 %v2009, %v2001
        %v2730 = vpack.c.b16 %v2018, %v2010
        %v2731 = vpack.c.b16 %v2019, %v2011
        %v2732 = vpack.c.b16 %v2020, %v2012
        %v2733 = vpack.c.b16 %v2021, %v2013
        %v2734 = vpack.c.b16 %v2022, %v2014
        %v2735 = vpack.c.b16 %v2023, %v2015
        %v2736 = vpack.c.b16 %v2024, %v2016
        %v2737 = vpack.c.b16 %v2025, %v2017
        %v2738 = vpack.c.b16 %v2034, %v2026
        %v2739 = vpack.c.b16 %v2035, %v2027
        %v2740 = vpack.c.b16 %v2036, %v2028
        %v2741 = vpack.c.b16 %v2037, %v2029
        %v2742 = vpack.c.b16 %v2038, %v2030
        %v2743 = vpack.c.b16 %v2039, %v2031
        %v2744 = vpack.c.b16 %v2040, %v2032
        %v2745 = vpack.c.b16 %v2041, %v2033
        %v2746 = vpack.c.b16 %v2050, %v2042
        %v2747 = vpack.c.b16 %v2051, %v2043
        %v2748 = vpack.c.b16 %v2052, %v2044
        %v2749 = vpack.c.b16 %v2053, %v2045
        %v2750 = vpack.c.b16 %v2054, %v2046
        %v2751 = vpack.c.b16 %v2055, %v2047
        %v2752 = vpack.c.b16 %v2056, %v2048
        %v2753 = vpack.c.b16 %v2057, %v2049
        %v2754 = vpack.c.b16 %v2066, %v2058
        %v2755 = vpack.c.b16 %v2067, %v2059
        %v2756 = vpack.c.b16 %v2068, %v2060
        %v2757 = vpack.c.b16 %v2069, %v2061
        %v2758 = vpack.c.b16 %v2070, %v2062
        %v2759 = vpack.c.b16 %v2071, %v2063
        %v2760 = vpack.c.b16 %v2072, %v2064
        %v2761 = vpack.c.b16 %v2073, %v2065
        %v2762 = vpack.c.b16 %v2082, %v2074
        %v2763 = vpack.c.b16 %v2083, %v2075
        %v2764 = vpack.c.b16 %v2084, %v2076
        %v2765 = vpack.c.b16 %v2085, %v2077
        %v2766 = vpack.c.b16 %v2086, %v2078
        %v2767 = vpack.c.b16 %v2087, %v2079
        %v2768 = vpack.c.b16 %v2088, %v2080
        %v2769 = vpack.c.b16 %v2089, %v2081
        %v2770 = vpack.c.b16 %v2098, %v2090
        %v2771 = vpack.c.b16 %v2099, %v2091
        %v2772 = vpack.c.b16 %v2100, %v2092
        %v2773 = vpack.c.b16 %v2101, %v2093
        %v2774 = vpack.c.b16 %v2102, %v2094
        %v2775 = vpack.c.b16 %v2103, %v2095
        %v2776 = vpack.c.b16 %v2104, %v2096
        %v2777 = vpack.c.b16 %v2105, %v2097
        %v2778 = vpack.c.b16 %v2114, %v2106
        %v2779 = vpack.c.b16 %v2115, %v2107
        %v2780 = vpack.c.b16 %v2116, %v2108
        %v2781 = vpack.c.b16 %v2117, %v2109
        %v2782 = vpack.c.b16 %v2118, %v2110
        %v2783 = vpack.c.b16 %v2119, %v2111
        %v2784 = vpack.c.b16 %v2120, %v2112
        %v2785 = vpack.c.b16 %v2121, %v2113
        %v2786 = vpack.c.b16 %v2130, %v2122
        %v2787 = vpack.c.b16 %v2131, %v2123
        %v2788 = vpack.c.b16 %v2132, %v2124
        %v2789 = vpack.c.b16 %v2133, %v2125
        %v2790 = vpack.c.b16 %v2134, %v2126
        %v2791 = vpack.c.b16 %v2135, %v2127
        %v2792 = vpack.c.b16 %v2136, %v2128
        %v2793 = vpack.c.b16 %v2137, %v2129
        %v2794 = vpack.c.b16 %v2146, %v2138
        %v2795 = vpack.c.b16 %v2147, %v2139
        %v2796 = vpack.c.b16 %v2148, %v2140
        %v2797 = vpack.c.b16 %v2149, %v2141
        %v2798 = vpack.c.b16 %v2150, %v2142
        %v2799 = vpack.c.b16 %v2151, %v2143
        %v2800 = vpack.c.b16 %v2152, %v2144
        %v2801 = vpack.c.b16 %v2153, %v2145
        %v2802 = vpack.c.b16 %v2162, %v2154
        %v2803 = vpack.c.b16 %v2163, %v2155
        %v2804 = vpack.c.b16 %v2164, %v2156
        %v2805 = vpack.c.b16 %v2165, %v2157
        %v2806 = vpack.c.b16 %v2166, %v2158
        %v2807 = vpack.c.b16 %v2167, %v2159
        %v2808 = vpack.c.b16 %v2168, %v2160
        %v2809 = vpack.c.b16 %v2169, %v2161
        %v2810 = vpack.c.b16 %v2178, %v2170
        %v2811 = vpack.c.b16 %v2179, %v2171
        %v2812 = vpack.c.b16 %v2180, %v2172
        %v2813 = vpack.c.b16 %v2181, %v2173
        %v2814 = vpack.c.b16 %v2182, %v2174
        %v2815 = vpack.c.b16 %v2183, %v2175
        %v2816 = vpack.c.b16 %v2184, %v2176
        %v2817 = vpack.c.b16 %v2185, %v2177
        %v2818 = vpack.c.b16 %v2194, %v2186
        %v2819 = vpack.c.b16 %v2195, %v2187
        %v2820 = vpack.c.b16 %v2196, %v2188
        %v2821 = vpack.c.b16 %v2197, %v2189
        %v2822 = vpack.c.b16 %v2198, %v2190
        %v2823 = vpack.c.b16 %v2199, %v2191
        %v2824 = vpack.c.b16 %v2200, %v2192
        %v2825 = vpack.c.b16 %v2201, %v2193
        %v2826 = vpack.c.b16 %v2210, %v2202
        %v2827 = vpack.c.b16 %v2211, %v2203
        %v2828 = vpack.c.b16 %v2212, %v2204
        %v2829 = vpack.c.b16 %v2213, %v2205
        %v2830 = vpack.c.b16 %v2214, %v2206
        %v2831 = vpack.c.b16 %v2215, %v2207
        %v2832 = vpack.c.b16 %v2216, %v2208
        %v2833 = vpack.c.b16 %v2217, %v2209
        %v2834 = vpack.c.b16 %v2226, %v2218
        %v2835 = vpack.c.b16 %v2227, %v2219
        %v2836 = vpack.c.b16 %v2228, %v2220
        %v2837 = vpack.c.b16 %v2229, %v2221
        %v2838 = vpack.c.b16 %v2230, %v2222
        %v2839 = vpack.c.b16 %v2231, %v2223
        %v2840 = vpack.c.b16 %v2232, %v2224
        %v2841 = vpack.c.b16 %v2233, %v2225
        %v2842 = vpack.c.b16 %v2242, %v2234
        %v2843 = vpack.c.b16 %v2243, %v2235
        %v2844 = vpack.c.b16 %v2244, %v2236
        %v2845 = vpack.c.b16 %v2245, %v2237
        %v2846 = vpack.c.b16 %v2246, %v2238
        %v2847 = vpack.c.b16 %v2247, %v2239
        %v2848 = vpack.c.b16 %v2248, %v2240
        %v2849 = vpack.c.b16 %v2249, %v2241
        %v2850 = vpack.c.b16 %v2258, %v2250
        %v2851 = vpack.c.b16 %v2259, %v2251
        %v2852 = vpack.c.b16 %v2260, %v2252
        %v2853 = vpack.c.b16 %v2261, %v2253
        %v2854 = vpack.c.b16 %v2262, %v2254
        %v2855 = vpack.c.b16 %v2263, %v2255
        %v2856 = vpack.c.b16 %v2264, %v2256
        %v2857 = vpack.c.b16 %v2265, %v2257
        %v2858 = vpack.c.b16 %v2274, %v2266
        %v2859 = vpack.c.b16 %v2275, %v2267
        %v2860 = vpack.c.b16 %v2276, %v2268
        %v2861 = vpack.c.b16 %v2277, %v2269
        %v2862 = vpack.c.b16 %v2278, %v2270
        %v2863 = vpack.c.b16 %v2279, %v2271
        %v2864 = vpack.c.b16 %v2280, %v2272
        %v2865 = vpack.c.b16 %v2281, %v2273
        %v2866 = vpack.c.b16 %v2290, %v2282
        %v2867 = vpack.c.b16 %v2291, %v2283
        %v2868 = vpack.c.b16 %v2292, %v2284
        %v2869 = vpack.c.b16 %v2293, %v2285
        %v2870 = vpack.c.b16 %v2294, %v2286
        %v2871 = vpack.c.b16 %v2295, %v2287
        %v2872 = vpack.c.b16 %v2296, %v2288
        %v2873 = vpack.c.b16 %v2297, %v2289
        %v2874 = vpack.c.b16 %v2306, %v2298
        %v2875 = vpack.c.b16 %v2307, %v2299
        %v2876 = vpack.c.b16 %v2308, %v2300
        %v2877 = vpack.c.b16 %v2309, %v2301
        %v2878 = vpack.c.b16 %v2310, %v2302
        %v2879 = vpack.c.b16 %v2311, %v2303
        %v2880 = vpack.c.b16 %v2312, %v2304
        %v2881 = vpack.c.b16 %v2313, %v2305
        %v2882 = vpack.c.b16 %v2322, %v2314
        %v2883 = vpack.c.b16 %v2323, %v2315
        %v2884 = vpack.c.b16 %v2324, %v2316
        %v2885 = vpack.c.b16 %v2325, %v2317
        %v2886 = vpack.c.b16 %v2326, %v2318
        %v2887 = vpack.c.b16 %v2327, %v2319
        %v2888 = vpack.c.b16 %v2328, %v2320
        %v2889 = vpack.c.b16 %v2329, %v2321
        %v2890 = vpack.c.b16 %v2338, %v2330
        %v2891 = vpack.c.b16 %v2339, %v2331
        %v2892 = vpack.c.b16 %v2340, %v2332
        %v2893 = vpack.c.b16 %v2341, %v2333
        %v2894 = vpack.c.b16 %v2342, %v2334
        %v2895 = vpack.c.b16 %v2343, %v2335
        %v2896 = vpack.c.b16 %v2344, %v2336
        %v2897 = vpack.c.b16 %v2345, %v2337
        %v2898 = vpack.c.b16 %v2354, %v2346
        %v2899 = vpack.c.b16 %v2355, %v2347
        %v2900 = vpack.c.b16 %v2356, %v2348
        %v2901 = vpack.c.b16 %v2357, %v2349
        %v2902 = vpack.c.b16 %v2358, %v2350
        %v2903 = vpack.c.b16 %v2359, %v2351
        %v2904 = vpack.c.b16 %v2360, %v2352
        %v2905 = vpack.c.b16 %v2361, %v2353
        %v2906 = vpack.c.b16 %v2370, %v2362
        %v2907 = vpack.c.b16 %v2371, %v2363
        %v2908 = vpack.c.b16 %v2372, %v2364
        %v2909 = vpack.c.b16 %v2373, %v2365
        %v2910 = vpack.c.b16 %v2374, %v2366
        %v2911 = vpack.c.b16 %v2375, %v2367
        %v2912 = vpack.c.b16 %v2376, %v2368
        %v2913 = vpack.c.b16 %v2377, %v2369
        %v2914 = vpack.c.b16 %v2386, %v2378
        %v2915 = vpack.c.b16 %v2387, %v2379
        %v2916 = vpack.c.b16 %v2388, %v2380
        %v2917 = vpack.c.b16 %v2389, %v2381
        %v2918 = vpack.c.b16 %v2390, %v2382
        %v2919 = vpack.c.b16 %v2391, %v2383
        %v2920 = vpack.c.b16 %v2392, %v2384
        %v2921 = vpack.c.b16 %v2393, %v2385
        %v2922 = vpack.c.b16 %v2402, %v2394
        %v2923 = vpack.c.b16 %v2403, %v2395
        %v2924 = vpack.c.b16 %v2404, %v2396
        %v2925 = vpack.c.b16 %v2405, %v2397
        %v2926 = vpack.c.b16 %v2406, %v2398
        %v2927 = vpack.c.b16 %v2407, %v2399
        %v2928 = vpack.c.b16 %v2408, %v2400
        %v2929 = vpack.c.b16 %v2409, %v2401
        %v2930 = vpack.c.b16 %v2418, %v2410
        %v2931 = vpack.c.b16 %v2419, %v2411
        %v2932 = vpack.c.b16 %v2420, %v2412
        %v2933 = vpack.c.b16 %v2421, %v2413
        %v2934 = vpack.c.b16 %v2422, %v2414
        %v2935 = vpack.c.b16 %v2423, %v2415
        %v2936 = vpack.c.b16 %v2424, %v2416
        %v2937 = vpack.c.b16 %v2425, %v2417
        %v2938 = vpack.c.b16 %v2434, %v2426
        %v2939 = vpack.c.b16 %v2435, %v2427
        %v2940 = vpack.c.b16 %v2436, %v2428
        %v2941 = vpack.c.b16 %v2437, %v2429
        %v2942 = vpack.c.b16 %v2438, %v2430
        %v2943 = vpack.c.b16 %v2439, %v2431
        %v2944 = vpack.c.b16 %v2440, %v2432
        %v2945 = vpack.c.b16 %v2441, %v2433
        %v2946 = vpack.c.b16 %v2450, %v2442
        %v2947 = vpack.c.b16 %v2451, %v2443
        %v2948 = vpack.c.b16 %v2452, %v2444
        %v2949 = vpack.c.b16 %v2453, %v2445
        %v2950 = vpack.c.b16 %v2454, %v2446
        %v2951 = vpack.c.b16 %v2455, %v2447
        %v2952 = vpack.c.b16 %v2456, %v2448
        %v2953 = vpack.c.b16 %v2457, %v2449
        %v2954 = vpack.c.b16 %v2466, %v2458
        %v2955 = vpack.c.b16 %v2467, %v2459
        %v2956 = vpack.c.b16 %v2468, %v2460
        %v2957 = vpack.c.b16 %v2469, %v2461
        %v2958 = vpack.c.b16 %v2470, %v2462
        %v2959 = vpack.c.b16 %v2471, %v2463
        %v2960 = vpack.c.b16 %v2472, %v2464
        %v2961 = vpack.c.b16 %v2473, %v2465
        %v2962 = vpack.c.b16 %v2482, %v2474
        %v2963 = vpack.c.b16 %v2483, %v2475
        %v2964 = vpack.c.b16 %v2484, %v2476
        %v2965 = vpack.c.b16 %v2485, %v2477
        %v2966 = vpack.c.b16 %v2486, %v2478
        %v2967 = vpack.c.b16 %v2487, %v2479
        %v2968 = vpack.c.b16 %v2488, %v2480
        %v2969 = vpack.c.b16 %v2489, %v2481
        %v2970 = vpack.c.b16 %v2498, %v2490
        %v2971 = vpack.c.b16 %v2499, %v2491
        %v2972 = vpack.c.b16 %v2500, %v2492
        %v2973 = vpack.c.b16 %v2501, %v2493
        %v2974 = vpack.c.b16 %v2502, %v2494
        %v2975 = vpack.c.b16 %v2503, %v2495
        %v2976 = vpack.c.b16 %v2504, %v2496
        %v2977 = vpack.c.b16 %v2505, %v2497
        %v2978 = vpack.c.b16 %v2514, %v2506
        %v2979 = vpack.c.b16 %v2515, %v2507
        %v2980 = vpack.c.b16 %v2516, %v2508
        %v2981 = vpack.c.b16 %v2517, %v2509
        %v2982 = vpack.c.b16 %v2518, %v2510
        %v2983 = vpack.c.b16 %v2519, %v2511
        %v2984 = vpack.c.b16 %v2520, %v2512
        %v2985 = vpack.c.b16 %v2521, %v2513
        %v2986 = vpack.c.b16 %v2530, %v2522
        %v2987 = vpack.c.b16 %v2531, %v2523
        %v2988 = vpack.c.b16 %v2532, %v2524
        %v2989 = vpack.c.b16 %v2533, %v2525
        %v2990 = vpack.c.b16 %v2534, %v2526
        %v2991 = vpack.c.b16 %v2535, %v2527
        %v2992 = vpack.c.b16 %v2536, %v2528
        %v2993 = vpack.c.b16 %v2537, %v2529
        %v2994 = vpack.c.b16 %v2546, %v2538
        %v2995 = vpack.c.b16 %v2547, %v2539
        %v2996 = vpack.c.b16 %v2548, %v2540
        %v2997 = vpack.c.b16 %v2549, %v2541
        %v2998 = vpack.c.b16 %v2550, %v2542
        %v2999 = vpack.c.b16 %v2551, %v2543
        %v3000 = vpack.c.b16 %v2552, %v2544
        %v3001 = vpack.c.b16 %v2553, %v2545
        %v3002 = vpack.c.b16 %v2562, %v2554
        %v3003 = vpack.c.b16 %v2563, %v2555
        %v3004 = vpack.c.b16 %v2564, %v2556
        %v3005 = vpack.c.b16 %v2565, %v2557
        %v3006 = vpack.c.b16 %v2566, %v2558
        %v3007 = vpack.c.b16 %v2567, %v2559
        %v3008 = vpack.c.b16 %v2568, %v2560
        %v3009 = vpack.c.b16 %v2569, %v2561
        %v3010 = vpack.c.b16 %v2570, %v2570
        %v3011 = vpack.c.b16 %v2571, %v2571
        %v3012 = vpack.c.b16 %v2572, %v2572
        %v3013 = vpack.c.b16 %v2573, %v2573
        %v3014 = vpack.c.b16 %v2574, %v2574
        %v3015 = vpack.c.b16 %v2575, %v2575
        %v3016 = vpack.c.b16 %v2576, %v2576
        %v3017 = vpack.c.b16 %v2577, %v2577
        %vm3450 = vcmask 826368
        %v3452 = vsel %vm3450, %v833, 0
        %vm3454 = vcmask 1041408
        %vm3455 = vcmask 1042432
        %v3456 = vsel %vm3454, 4294967295, 65535
        %v3457 = vsel %vm3455, %v3456, 0
        %v3459 = vand.u32 %v3010, %v3457
        %v3462 = vand.u32 %v3011, %v3457
        %v3465 = vand.u32 %v3012, %v3457
        %v3468 = vand.u32 %v3013, %v3457
        %v3471 = vand.u32 %v3014, %v3457
        %v3474 = vand.u32 %v3015, %v3457
        %v3477 = vand.u32 %v3016, %v3457
        %v3480 = vand.u32 %v3017, %v3457
        %3482 = vmatpush.bf16.msra.mxu0 %v2634
        %3483 = vmatpush.bf16.msra.mxu0 %v2626
        %3484 = vmatpush.bf16.msra.mxu0 %v2618
        %3485 = vmatpush.bf16.msra.mxu0 %v2610
        %3486 = vmatpush.bf16.msra.mxu0 %v2602
        %3487 = vmatpush.bf16.msra.mxu0 %v2594
        %3488 = vmatpush.bf16.msra.mxu0 %v2586
        %3489 = vmatpush.bf16.msra.mxu0 %v2578
        %3490 = vmatmul.bf16.gmra.mxu0 %v827
        %v3491 = vpop.f32.mrf.mxu0
        %v3492 = vadd.f32 0.0, %v3491
        %v3493 = vpop.f32.mrf.mxu0
        %3494 = vdwg.mxu0
        %3495 = vmatpush.bf16.msra.mxu0 %v2698
        %3496 = vmatpush.bf16.msra.mxu0 %v2690
        %3497 = vmatpush.bf16.msra.mxu0 %v2682
        %3498 = vmatpush.bf16.msra.mxu0 %v2674
        %3499 = vmatpush.bf16.msra.mxu0 %v2666
        %3500 = vmatpush.bf16.msra.mxu0 %v2658
        %3501 = vmatpush.bf16.msra.mxu0 %v2650
        %3502 = vmatpush.bf16.msra.mxu0 %v2642
        %3503 = vmatmul.bf16.gmra.mxu0 %v828
        %v3504 = vpop.f32.mrf.mxu0
        %v3505 = vadd.f32 %v3492, %v3504
        %v3506 = vpop.f32.mrf.mxu0
        %3507 = vdwg.mxu0
        %3508 = vmatpush.bf16.msra.mxu0 %v2762
        %3509 = vmatpush.bf16.msra.mxu0 %v2754
        %3510 = vmatpush.bf16.msra.mxu0 %v2746
        %3511 = vmatpush.bf16.msra.mxu0 %v2738
        %3512 = vmatpush.bf16.msra.mxu0 %v2730
        %3513 = vmatpush.bf16.msra.mxu0 %v2722
        %3514 = vmatpush.bf16.msra.mxu0 %v2714
        %3515 = vmatpush.bf16.msra.mxu0 %v2706
        %3516 = vmatmul.bf16.gmra.mxu0 %v829
        %v3517 = vpop.f32.mrf.mxu0
        %v3518 = vadd.f32 %v3505, %v3517
        %v3519 = vpop.f32.mrf.mxu0
        %3520 = vdwg.mxu0
        %3521 = vmatpush.bf16.msra.mxu0 %v2826
        %3522 = vmatpush.bf16.msra.mxu0 %v2818
        %3523 = vmatpush.bf16.msra.mxu0 %v2810
        %3524 = vmatpush.bf16.msra.mxu0 %v2802
        %3525 = vmatpush.bf16.msra.mxu0 %v2794
        %3526 = vmatpush.bf16.msra.mxu0 %v2786
        %3527 = vmatpush.bf16.msra.mxu0 %v2778
        %3528 = vmatpush.bf16.msra.mxu0 %v2770
        %3529 = vmatmul.bf16.gmra.mxu0 %v830
        %v3530 = vpop.f32.mrf.mxu0
        %v3531 = vadd.f32 %v3518, %v3530
        %v3532 = vpop.f32.mrf.mxu0
        %3533 = vdwg.mxu0
        %3534 = vmatpush.bf16.msra.mxu0 %v2890
        %3535 = vmatpush.bf16.msra.mxu0 %v2882
        %3536 = vmatpush.bf16.msra.mxu0 %v2874
        %3537 = vmatpush.bf16.msra.mxu0 %v2866
        %3538 = vmatpush.bf16.msra.mxu0 %v2858
        %3539 = vmatpush.bf16.msra.mxu0 %v2850
        %3540 = vmatpush.bf16.msra.mxu0 %v2842
        %3541 = vmatpush.bf16.msra.mxu0 %v2834
        %3542 = vmatmul.bf16.gmra.mxu0 %v831
        %v3543 = vpop.f32.mrf.mxu0
        %v3544 = vadd.f32 %v3531, %v3543
        %v3545 = vpop.f32.mrf.mxu0
        %3546 = vdwg.mxu0
        %3547 = vmatpush.bf16.msra.mxu0 %v2954
        %3548 = vmatpush.bf16.msra.mxu0 %v2946
        %3549 = vmatpush.bf16.msra.mxu0 %v2938
        %3550 = vmatpush.bf16.msra.mxu0 %v2930
        %3551 = vmatpush.bf16.msra.mxu0 %v2922
        %3552 = vmatpush.bf16.msra.mxu0 %v2914
        %3553 = vmatpush.bf16.msra.mxu0 %v2906
        %3554 = vmatpush.bf16.msra.mxu0 %v2898
        %3555 = vmatmul.bf16.gmra.mxu0 %v832
        %v3556 = vpop.f32.mrf.mxu0
        %v3557 = vadd.f32 %v3544, %v3556
        %v3558 = vpop.f32.mrf.mxu0
        %3559 = vdwg.mxu0
        %3560 = vmatpush.bf16.msra.mxu0 0
        %3561 = vmatpush.bf16.msra.mxu0 %v3459
        %3562 = vmatpush.bf16.msra.mxu0 %v3002
        %3563 = vmatpush.bf16.msra.mxu0 %v2994
        %3564 = vmatpush.bf16.msra.mxu0 %v2986
        %3565 = vmatpush.bf16.msra.mxu0 %v2978
        %3566 = vmatpush.bf16.msra.mxu0 %v2970
        %3567 = vmatpush.bf16.msra.mxu0 %v2962
        %3568 = vmatmul.bf16.gmra.mxu0 %v3452
        %v3569 = vpop.f32.mrf.mxu0
        %v3570 = vadd.f32 %v3557, %v3569
        %v3571 = vpop.f32.mrf.mxu0
        %3572 = vdwg.mxu0
        %3573 = vmatpush.bf16.msra.mxu0 %v2635
        %3574 = vmatpush.bf16.msra.mxu0 %v2627
        %3575 = vmatpush.bf16.msra.mxu0 %v2619
        %3576 = vmatpush.bf16.msra.mxu0 %v2611
        %3577 = vmatpush.bf16.msra.mxu0 %v2603
        %3578 = vmatpush.bf16.msra.mxu0 %v2595
        %3579 = vmatpush.bf16.msra.mxu0 %v2587
        %3580 = vmatpush.bf16.msra.mxu0 %v2579
        %3581 = vmatmul.bf16.gmra.mxu0 %v827
        %v3582 = vpop.f32.mrf.mxu0
        %v3583 = vadd.f32 0.0, %v3582
        %v3584 = vpop.f32.mrf.mxu0
        %3585 = vdwg.mxu0
        %3586 = vmatpush.bf16.msra.mxu0 %v2699
        %3587 = vmatpush.bf16.msra.mxu0 %v2691
        %3588 = vmatpush.bf16.msra.mxu0 %v2683
        %3589 = vmatpush.bf16.msra.mxu0 %v2675
        %3590 = vmatpush.bf16.msra.mxu0 %v2667
        %3591 = vmatpush.bf16.msra.mxu0 %v2659
        %3592 = vmatpush.bf16.msra.mxu0 %v2651
        %3593 = vmatpush.bf16.msra.mxu0 %v2643
        %3594 = vmatmul.bf16.gmra.mxu0 %v828
        %v3595 = vpop.f32.mrf.mxu0
        %v3596 = vadd.f32 %v3583, %v3595
        %v3597 = vpop.f32.mrf.mxu0
        %3598 = vdwg.mxu0
        %3599 = vmatpush.bf16.msra.mxu0 %v2763
        %3600 = vmatpush.bf16.msra.mxu0 %v2755
        %3601 = vmatpush.bf16.msra.mxu0 %v2747
        %3602 = vmatpush.bf16.msra.mxu0 %v2739
        %3603 = vmatpush.bf16.msra.mxu0 %v2731
        %3604 = vmatpush.bf16.msra.mxu0 %v2723
        %3605 = vmatpush.bf16.msra.mxu0 %v2715
        %3606 = vmatpush.bf16.msra.mxu0 %v2707
        %3607 = vmatmul.bf16.gmra.mxu0 %v829
        %v3608 = vpop.f32.mrf.mxu0
        %v3609 = vadd.f32 %v3596, %v3608
        %v3610 = vpop.f32.mrf.mxu0
        %3611 = vdwg.mxu0
        %3612 = vmatpush.bf16.msra.mxu0 %v2827
        %3613 = vmatpush.bf16.msra.mxu0 %v2819
        %3614 = vmatpush.bf16.msra.mxu0 %v2811
        %3615 = vmatpush.bf16.msra.mxu0 %v2803
        %3616 = vmatpush.bf16.msra.mxu0 %v2795
        %3617 = vmatpush.bf16.msra.mxu0 %v2787
        %3618 = vmatpush.bf16.msra.mxu0 %v2779
        %3619 = vmatpush.bf16.msra.mxu0 %v2771
        %3620 = vmatmul.bf16.gmra.mxu0 %v830
        %v3621 = vpop.f32.mrf.mxu0
        %v3622 = vadd.f32 %v3609, %v3621
        %v3623 = vpop.f32.mrf.mxu0
        %3624 = vdwg.mxu0
        %3625 = vmatpush.bf16.msra.mxu0 %v2891
        %3626 = vmatpush.bf16.msra.mxu0 %v2883
        %3627 = vmatpush.bf16.msra.mxu0 %v2875
        %3628 = vmatpush.bf16.msra.mxu0 %v2867
        %3629 = vmatpush.bf16.msra.mxu0 %v2859
        %3630 = vmatpush.bf16.msra.mxu0 %v2851
        %3631 = vmatpush.bf16.msra.mxu0 %v2843
        %3632 = vmatpush.bf16.msra.mxu0 %v2835
        %3633 = vmatmul.bf16.gmra.mxu0 %v831
        %v3634 = vpop.f32.mrf.mxu0
        %v3635 = vadd.f32 %v3622, %v3634
        %v3636 = vpop.f32.mrf.mxu0
        %3637 = vdwg.mxu0
        %3638 = vmatpush.bf16.msra.mxu0 %v2955
        %3639 = vmatpush.bf16.msra.mxu0 %v2947
        %3640 = vmatpush.bf16.msra.mxu0 %v2939
        %3641 = vmatpush.bf16.msra.mxu0 %v2931
        %3642 = vmatpush.bf16.msra.mxu0 %v2923
        %3643 = vmatpush.bf16.msra.mxu0 %v2915
        %3644 = vmatpush.bf16.msra.mxu0 %v2907
        %3645 = vmatpush.bf16.msra.mxu0 %v2899
        %3646 = vmatmul.bf16.gmra.mxu0 %v832
        %v3647 = vpop.f32.mrf.mxu0
        %v3648 = vadd.f32 %v3635, %v3647
        %v3649 = vpop.f32.mrf.mxu0
        %3650 = vdwg.mxu0
        %3651 = vmatpush.bf16.msra.mxu0 0
        %3652 = vmatpush.bf16.msra.mxu0 %v3462
        %3653 = vmatpush.bf16.msra.mxu0 %v3003
        %3654 = vmatpush.bf16.msra.mxu0 %v2995
        %3655 = vmatpush.bf16.msra.mxu0 %v2987
        %3656 = vmatpush.bf16.msra.mxu0 %v2979
        %3657 = vmatpush.bf16.msra.mxu0 %v2971
        %3658 = vmatpush.bf16.msra.mxu0 %v2963
        %3659 = vmatmul.bf16.gmra.mxu0 %v3452
        %v3660 = vpop.f32.mrf.mxu0
        %v3661 = vadd.f32 %v3648, %v3660
        %v3662 = vpop.f32.mrf.mxu0
        %3663 = vdwg.mxu0
        %3664 = vmatpush.bf16.msra.mxu0 %v2636
        %3665 = vmatpush.bf16.msra.mxu0 %v2628
        %3666 = vmatpush.bf16.msra.mxu0 %v2620
        %3667 = vmatpush.bf16.msra.mxu0 %v2612
        %3668 = vmatpush.bf16.msra.mxu0 %v2604
        %3669 = vmatpush.bf16.msra.mxu0 %v2596
        %3670 = vmatpush.bf16.msra.mxu0 %v2588
        %3671 = vmatpush.bf16.msra.mxu0 %v2580
        %3672 = vmatmul.bf16.gmra.mxu0 %v827
        %v3673 = vpop.f32.mrf.mxu0
        %v3674 = vadd.f32 0.0, %v3673
        %v3675 = vpop.f32.mrf.mxu0
        %3676 = vdwg.mxu0
        %3677 = vmatpush.bf16.msra.mxu0 %v2700
        %3678 = vmatpush.bf16.msra.mxu0 %v2692
        %3679 = vmatpush.bf16.msra.mxu0 %v2684
        %3680 = vmatpush.bf16.msra.mxu0 %v2676
        %3681 = vmatpush.bf16.msra.mxu0 %v2668
        %3682 = vmatpush.bf16.msra.mxu0 %v2660
        %3683 = vmatpush.bf16.msra.mxu0 %v2652
        %3684 = vmatpush.bf16.msra.mxu0 %v2644
        %3685 = vmatmul.bf16.gmra.mxu0 %v828
        %v3686 = vpop.f32.mrf.mxu0
        %v3687 = vadd.f32 %v3674, %v3686
        %v3688 = vpop.f32.mrf.mxu0
        %3689 = vdwg.mxu0
        %3690 = vmatpush.bf16.msra.mxu0 %v2764
        %3691 = vmatpush.bf16.msra.mxu0 %v2756
        %3692 = vmatpush.bf16.msra.mxu0 %v2748
        %3693 = vmatpush.bf16.msra.mxu0 %v2740
        %3694 = vmatpush.bf16.msra.mxu0 %v2732
        %3695 = vmatpush.bf16.msra.mxu0 %v2724
        %3696 = vmatpush.bf16.msra.mxu0 %v2716
        %3697 = vmatpush.bf16.msra.mxu0 %v2708
        %3698 = vmatmul.bf16.gmra.mxu0 %v829
        %v3699 = vpop.f32.mrf.mxu0
        %v3700 = vadd.f32 %v3687, %v3699
        %v3701 = vpop.f32.mrf.mxu0
        %3702 = vdwg.mxu0
        %3703 = vmatpush.bf16.msra.mxu0 %v2828
        %3704 = vmatpush.bf16.msra.mxu0 %v2820
        %3705 = vmatpush.bf16.msra.mxu0 %v2812
        %3706 = vmatpush.bf16.msra.mxu0 %v2804
        %3707 = vmatpush.bf16.msra.mxu0 %v2796
        %3708 = vmatpush.bf16.msra.mxu0 %v2788
        %3709 = vmatpush.bf16.msra.mxu0 %v2780
        %3710 = vmatpush.bf16.msra.mxu0 %v2772
        %3711 = vmatmul.bf16.gmra.mxu0 %v830
        %v3712 = vpop.f32.mrf.mxu0
        %v3713 = vadd.f32 %v3700, %v3712
        %v3714 = vpop.f32.mrf.mxu0
        %3715 = vdwg.mxu0
        %3716 = vmatpush.bf16.msra.mxu0 %v2892
        %3717 = vmatpush.bf16.msra.mxu0 %v2884
        %3718 = vmatpush.bf16.msra.mxu0 %v2876
        %3719 = vmatpush.bf16.msra.mxu0 %v2868
        %3720 = vmatpush.bf16.msra.mxu0 %v2860
        %3721 = vmatpush.bf16.msra.mxu0 %v2852
        %3722 = vmatpush.bf16.msra.mxu0 %v2844
        %3723 = vmatpush.bf16.msra.mxu0 %v2836
        %3724 = vmatmul.bf16.gmra.mxu0 %v831
        %v3725 = vpop.f32.mrf.mxu0
        %v3726 = vadd.f32 %v3713, %v3725
        %v3727 = vpop.f32.mrf.mxu0
        %3728 = vdwg.mxu0
        %3729 = vmatpush.bf16.msra.mxu0 %v2956
        %3730 = vmatpush.bf16.msra.mxu0 %v2948
        %3731 = vmatpush.bf16.msra.mxu0 %v2940
        %3732 = vmatpush.bf16.msra.mxu0 %v2932
        %3733 = vmatpush.bf16.msra.mxu0 %v2924
        %3734 = vmatpush.bf16.msra.mxu0 %v2916
        %3735 = vmatpush.bf16.msra.mxu0 %v2908
        %3736 = vmatpush.bf16.msra.mxu0 %v2900
        %3737 = vmatmul.bf16.gmra.mxu0 %v832
        %v3738 = vpop.f32.mrf.mxu0
        %v3739 = vadd.f32 %v3726, %v3738
        %v3740 = vpop.f32.mrf.mxu0
        %3741 = vdwg.mxu0
        %3742 = vmatpush.bf16.msra.mxu0 0
        %3743 = vmatpush.bf16.msra.mxu0 %v3465
        %3744 = vmatpush.bf16.msra.mxu0 %v3004
        %3745 = vmatpush.bf16.msra.mxu0 %v2996
        %3746 = vmatpush.bf16.msra.mxu0 %v2988
        %3747 = vmatpush.bf16.msra.mxu0 %v2980
        %3748 = vmatpush.bf16.msra.mxu0 %v2972
        %3749 = vmatpush.bf16.msra.mxu0 %v2964
        %3750 = vmatmul.bf16.gmra.mxu0 %v3452
        %v3751 = vpop.f32.mrf.mxu0
        %v3752 = vadd.f32 %v3739, %v3751
        %v3753 = vpop.f32.mrf.mxu0
        %3754 = vdwg.mxu0
        %3755 = vmatpush.bf16.msra.mxu0 %v2637
        %3756 = vmatpush.bf16.msra.mxu0 %v2629
        %3757 = vmatpush.bf16.msra.mxu0 %v2621
        %3758 = vmatpush.bf16.msra.mxu0 %v2613
        %3759 = vmatpush.bf16.msra.mxu0 %v2605
        %3760 = vmatpush.bf16.msra.mxu0 %v2597
        %3761 = vmatpush.bf16.msra.mxu0 %v2589
        %3762 = vmatpush.bf16.msra.mxu0 %v2581
        %3763 = vmatmul.bf16.gmra.mxu0 %v827
        %v3764 = vpop.f32.mrf.mxu0
        %v3765 = vadd.f32 0.0, %v3764
        %v3766 = vpop.f32.mrf.mxu0
        %3767 = vdwg.mxu0
        %3768 = vmatpush.bf16.msra.mxu0 %v2701
        %3769 = vmatpush.bf16.msra.mxu0 %v2693
        %3770 = vmatpush.bf16.msra.mxu0 %v2685
        %3771 = vmatpush.bf16.msra.mxu0 %v2677
        %3772 = vmatpush.bf16.msra.mxu0 %v2669
        %3773 = vmatpush.bf16.msra.mxu0 %v2661
        %3774 = vmatpush.bf16.msra.mxu0 %v2653
        %3775 = vmatpush.bf16.msra.mxu0 %v2645
        %3776 = vmatmul.bf16.gmra.mxu0 %v828
        %v3777 = vpop.f32.mrf.mxu0
        %v3778 = vadd.f32 %v3765, %v3777
        %v3779 = vpop.f32.mrf.mxu0
        %3780 = vdwg.mxu0
        %3781 = vmatpush.bf16.msra.mxu0 %v2765
        %3782 = vmatpush.bf16.msra.mxu0 %v2757
        %3783 = vmatpush.bf16.msra.mxu0 %v2749
        %3784 = vmatpush.bf16.msra.mxu0 %v2741
        %3785 = vmatpush.bf16.msra.mxu0 %v2733
        %3786 = vmatpush.bf16.msra.mxu0 %v2725
        %3787 = vmatpush.bf16.msra.mxu0 %v2717
        %3788 = vmatpush.bf16.msra.mxu0 %v2709
        %3789 = vmatmul.bf16.gmra.mxu0 %v829
        %v3790 = vpop.f32.mrf.mxu0
        %v3791 = vadd.f32 %v3778, %v3790
        %v3792 = vpop.f32.mrf.mxu0
        %3793 = vdwg.mxu0
        %3794 = vmatpush.bf16.msra.mxu0 %v2829
        %3795 = vmatpush.bf16.msra.mxu0 %v2821
        %3796 = vmatpush.bf16.msra.mxu0 %v2813
        %3797 = vmatpush.bf16.msra.mxu0 %v2805
        %3798 = vmatpush.bf16.msra.mxu0 %v2797
        %3799 = vmatpush.bf16.msra.mxu0 %v2789
        %3800 = vmatpush.bf16.msra.mxu0 %v2781
        %3801 = vmatpush.bf16.msra.mxu0 %v2773
        %3802 = vmatmul.bf16.gmra.mxu0 %v830
        %v3803 = vpop.f32.mrf.mxu0
        %v3804 = vadd.f32 %v3791, %v3803
        %v3805 = vpop.f32.mrf.mxu0
        %3806 = vdwg.mxu0
        %3807 = vmatpush.bf16.msra.mxu0 %v2893
        %3808 = vmatpush.bf16.msra.mxu0 %v2885
        %3809 = vmatpush.bf16.msra.mxu0 %v2877
        %3810 = vmatpush.bf16.msra.mxu0 %v2869
        %3811 = vmatpush.bf16.msra.mxu0 %v2861
        %3812 = vmatpush.bf16.msra.mxu0 %v2853
        %3813 = vmatpush.bf16.msra.mxu0 %v2845
        %3814 = vmatpush.bf16.msra.mxu0 %v2837
        %3815 = vmatmul.bf16.gmra.mxu0 %v831
        %v3816 = vpop.f32.mrf.mxu0
        %v3817 = vadd.f32 %v3804, %v3816
        %v3818 = vpop.f32.mrf.mxu0
        %3819 = vdwg.mxu0
        %3820 = vmatpush.bf16.msra.mxu0 %v2957
        %3821 = vmatpush.bf16.msra.mxu0 %v2949
        %3822 = vmatpush.bf16.msra.mxu0 %v2941
        %3823 = vmatpush.bf16.msra.mxu0 %v2933
        %3824 = vmatpush.bf16.msra.mxu0 %v2925
        %3825 = vmatpush.bf16.msra.mxu0 %v2917
        %3826 = vmatpush.bf16.msra.mxu0 %v2909
        %3827 = vmatpush.bf16.msra.mxu0 %v2901
        %3828 = vmatmul.bf16.gmra.mxu0 %v832
        %v3829 = vpop.f32.mrf.mxu0
        %v3830 = vadd.f32 %v3817, %v3829
        %v3831 = vpop.f32.mrf.mxu0
        %3832 = vdwg.mxu0
        %3833 = vmatpush.bf16.msra.mxu0 0
        %3834 = vmatpush.bf16.msra.mxu0 %v3468
        %3835 = vmatpush.bf16.msra.mxu0 %v3005
        %3836 = vmatpush.bf16.msra.mxu0 %v2997
        %3837 = vmatpush.bf16.msra.mxu0 %v2989
        %3838 = vmatpush.bf16.msra.mxu0 %v2981
        %3839 = vmatpush.bf16.msra.mxu0 %v2973
        %3840 = vmatpush.bf16.msra.mxu0 %v2965
        %3841 = vmatmul.bf16.gmra.mxu0 %v3452
        %v3842 = vpop.f32.mrf.mxu0
        %v3843 = vadd.f32 %v3830, %v3842
        %v3844 = vpop.f32.mrf.mxu0
        %3845 = vdwg.mxu0
        %3846 = vmatpush.bf16.msra.mxu0 %v2638
        %3847 = vmatpush.bf16.msra.mxu0 %v2630
        %3848 = vmatpush.bf16.msra.mxu0 %v2622
        %3849 = vmatpush.bf16.msra.mxu0 %v2614
        %3850 = vmatpush.bf16.msra.mxu0 %v2606
        %3851 = vmatpush.bf16.msra.mxu0 %v2598
        %3852 = vmatpush.bf16.msra.mxu0 %v2590
        %3853 = vmatpush.bf16.msra.mxu0 %v2582
        %3854 = vmatmul.bf16.gmra.mxu0 %v827
        %v3855 = vpop.f32.mrf.mxu0
        %v3856 = vadd.f32 0.0, %v3855
        %v3857 = vpop.f32.mrf.mxu0
        %3858 = vdwg.mxu0
        %3859 = vmatpush.bf16.msra.mxu0 %v2702
        %3860 = vmatpush.bf16.msra.mxu0 %v2694
        %3861 = vmatpush.bf16.msra.mxu0 %v2686
        %3862 = vmatpush.bf16.msra.mxu0 %v2678
        %3863 = vmatpush.bf16.msra.mxu0 %v2670
        %3864 = vmatpush.bf16.msra.mxu0 %v2662
        %3865 = vmatpush.bf16.msra.mxu0 %v2654
        %3866 = vmatpush.bf16.msra.mxu0 %v2646
        %3867 = vmatmul.bf16.gmra.mxu0 %v828
        %v3868 = vpop.f32.mrf.mxu0
        %v3869 = vadd.f32 %v3856, %v3868
        %v3870 = vpop.f32.mrf.mxu0
        %3871 = vdwg.mxu0
        %3872 = vmatpush.bf16.msra.mxu0 %v2766
        %3873 = vmatpush.bf16.msra.mxu0 %v2758
        %3874 = vmatpush.bf16.msra.mxu0 %v2750
        %3875 = vmatpush.bf16.msra.mxu0 %v2742
        %3876 = vmatpush.bf16.msra.mxu0 %v2734
        %3877 = vmatpush.bf16.msra.mxu0 %v2726
        %3878 = vmatpush.bf16.msra.mxu0 %v2718
        %3879 = vmatpush.bf16.msra.mxu0 %v2710
        %3880 = vmatmul.bf16.gmra.mxu0 %v829
        %v3881 = vpop.f32.mrf.mxu0
        %v3882 = vadd.f32 %v3869, %v3881
        %v3883 = vpop.f32.mrf.mxu0
        %3884 = vdwg.mxu0
        %3885 = vmatpush.bf16.msra.mxu0 %v2830
        %3886 = vmatpush.bf16.msra.mxu0 %v2822
        %3887 = vmatpush.bf16.msra.mxu0 %v2814
        %3888 = vmatpush.bf16.msra.mxu0 %v2806
        %3889 = vmatpush.bf16.msra.mxu0 %v2798
        %3890 = vmatpush.bf16.msra.mxu0 %v2790
        %3891 = vmatpush.bf16.msra.mxu0 %v2782
        %3892 = vmatpush.bf16.msra.mxu0 %v2774
        %3893 = vmatmul.bf16.gmra.mxu0 %v830
        %v3894 = vpop.f32.mrf.mxu0
        %v3895 = vadd.f32 %v3882, %v3894
        %v3896 = vpop.f32.mrf.mxu0
        %3897 = vdwg.mxu0
        %3898 = vmatpush.bf16.msra.mxu0 %v2894
        %3899 = vmatpush.bf16.msra.mxu0 %v2886
        %3900 = vmatpush.bf16.msra.mxu0 %v2878
        %3901 = vmatpush.bf16.msra.mxu0 %v2870
        %3902 = vmatpush.bf16.msra.mxu0 %v2862
        %3903 = vmatpush.bf16.msra.mxu0 %v2854
        %3904 = vmatpush.bf16.msra.mxu0 %v2846
        %3905 = vmatpush.bf16.msra.mxu0 %v2838
        %3906 = vmatmul.bf16.gmra.mxu0 %v831
        %v3907 = vpop.f32.mrf.mxu0
        %v3908 = vadd.f32 %v3895, %v3907
        %v3909 = vpop.f32.mrf.mxu0
        %3910 = vdwg.mxu0
        %3911 = vmatpush.bf16.msra.mxu0 %v2958
        %3912 = vmatpush.bf16.msra.mxu0 %v2950
        %3913 = vmatpush.bf16.msra.mxu0 %v2942
        %3914 = vmatpush.bf16.msra.mxu0 %v2934
        %3915 = vmatpush.bf16.msra.mxu0 %v2926
        %3916 = vmatpush.bf16.msra.mxu0 %v2918
        %3917 = vmatpush.bf16.msra.mxu0 %v2910
        %3918 = vmatpush.bf16.msra.mxu0 %v2902
        %3919 = vmatmul.bf16.gmra.mxu0 %v832
        %v3920 = vpop.f32.mrf.mxu0
        %v3921 = vadd.f32 %v3908, %v3920
        %v3922 = vpop.f32.mrf.mxu0
        %3923 = vdwg.mxu0
        %3924 = vmatpush.bf16.msra.mxu0 0
        %3925 = vmatpush.bf16.msra.mxu0 %v3471
        %3926 = vmatpush.bf16.msra.mxu0 %v3006
        %3927 = vmatpush.bf16.msra.mxu0 %v2998
        %3928 = vmatpush.bf16.msra.mxu0 %v2990
        %3929 = vmatpush.bf16.msra.mxu0 %v2982
        %3930 = vmatpush.bf16.msra.mxu0 %v2974
        %3931 = vmatpush.bf16.msra.mxu0 %v2966
        %3932 = vmatmul.bf16.gmra.mxu0 %v3452
        %v3933 = vpop.f32.mrf.mxu0
        %v3934 = vadd.f32 %v3921, %v3933
        %v3935 = vpop.f32.mrf.mxu0
        %3936 = vdwg.mxu0
        %3937 = vmatpush.bf16.msra.mxu0 %v2639
        %3938 = vmatpush.bf16.msra.mxu0 %v2631
        %3939 = vmatpush.bf16.msra.mxu0 %v2623
        %3940 = vmatpush.bf16.msra.mxu0 %v2615
        %3941 = vmatpush.bf16.msra.mxu0 %v2607
        %3942 = vmatpush.bf16.msra.mxu0 %v2599
        %3943 = vmatpush.bf16.msra.mxu0 %v2591
        %3944 = vmatpush.bf16.msra.mxu0 %v2583
        %3945 = vmatmul.bf16.gmra.mxu0 %v827
        %v3946 = vpop.f32.mrf.mxu0
        %v3947 = vadd.f32 0.0, %v3946
        %v3948 = vpop.f32.mrf.mxu0
        %3949 = vdwg.mxu0
        %3950 = vmatpush.bf16.msra.mxu0 %v2703
        %3951 = vmatpush.bf16.msra.mxu0 %v2695
        %3952 = vmatpush.bf16.msra.mxu0 %v2687
        %3953 = vmatpush.bf16.msra.mxu0 %v2679
        %3954 = vmatpush.bf16.msra.mxu0 %v2671
        %3955 = vmatpush.bf16.msra.mxu0 %v2663
        %3956 = vmatpush.bf16.msra.mxu0 %v2655
        %3957 = vmatpush.bf16.msra.mxu0 %v2647
        %3958 = vmatmul.bf16.gmra.mxu0 %v828
        %v3959 = vpop.f32.mrf.mxu0
        %v3960 = vadd.f32 %v3947, %v3959
        %v3961 = vpop.f32.mrf.mxu0
        %3962 = vdwg.mxu0
        %3963 = vmatpush.bf16.msra.mxu0 %v2767
        %3964 = vmatpush.bf16.msra.mxu0 %v2759
        %3965 = vmatpush.bf16.msra.mxu0 %v2751
        %3966 = vmatpush.bf16.msra.mxu0 %v2743
        %3967 = vmatpush.bf16.msra.mxu0 %v2735
        %3968 = vmatpush.bf16.msra.mxu0 %v2727
        %3969 = vmatpush.bf16.msra.mxu0 %v2719
        %3970 = vmatpush.bf16.msra.mxu0 %v2711
        %3971 = vmatmul.bf16.gmra.mxu0 %v829
        %v3972 = vpop.f32.mrf.mxu0
        %v3973 = vadd.f32 %v3960, %v3972
        %v3974 = vpop.f32.mrf.mxu0
        %3975 = vdwg.mxu0
        %3976 = vmatpush.bf16.msra.mxu0 %v2831
        %3977 = vmatpush.bf16.msra.mxu0 %v2823
        %3978 = vmatpush.bf16.msra.mxu0 %v2815
        %3979 = vmatpush.bf16.msra.mxu0 %v2807
        %3980 = vmatpush.bf16.msra.mxu0 %v2799
        %3981 = vmatpush.bf16.msra.mxu0 %v2791
        %3982 = vmatpush.bf16.msra.mxu0 %v2783
        %3983 = vmatpush.bf16.msra.mxu0 %v2775
        %3984 = vmatmul.bf16.gmra.mxu0 %v830
        %v3985 = vpop.f32.mrf.mxu0
        %v3986 = vadd.f32 %v3973, %v3985
        %v3987 = vpop.f32.mrf.mxu0
        %3988 = vdwg.mxu0
        %3989 = vmatpush.bf16.msra.mxu0 %v2895
        %3990 = vmatpush.bf16.msra.mxu0 %v2887
        %3991 = vmatpush.bf16.msra.mxu0 %v2879
        %3992 = vmatpush.bf16.msra.mxu0 %v2871
        %3993 = vmatpush.bf16.msra.mxu0 %v2863
        %3994 = vmatpush.bf16.msra.mxu0 %v2855
        %3995 = vmatpush.bf16.msra.mxu0 %v2847
        %3996 = vmatpush.bf16.msra.mxu0 %v2839
        %3997 = vmatmul.bf16.gmra.mxu0 %v831
        %v3998 = vpop.f32.mrf.mxu0
        %v3999 = vadd.f32 %v3986, %v3998
        %v4000 = vpop.f32.mrf.mxu0
        %4001 = vdwg.mxu0
        %4002 = vmatpush.bf16.msra.mxu0 %v2959
        %4003 = vmatpush.bf16.msra.mxu0 %v2951
        %4004 = vmatpush.bf16.msra.mxu0 %v2943
        %4005 = vmatpush.bf16.msra.mxu0 %v2935
        %4006 = vmatpush.bf16.msra.mxu0 %v2927
        %4007 = vmatpush.bf16.msra.mxu0 %v2919
        %4008 = vmatpush.bf16.msra.mxu0 %v2911
        %4009 = vmatpush.bf16.msra.mxu0 %v2903
        %4010 = vmatmul.bf16.gmra.mxu0 %v832
        %v4011 = vpop.f32.mrf.mxu0
        %v4012 = vadd.f32 %v3999, %v4011
        %v4013 = vpop.f32.mrf.mxu0
        %4014 = vdwg.mxu0
        %4015 = vmatpush.bf16.msra.mxu0 0
        %4016 = vmatpush.bf16.msra.mxu0 %v3474
        %4017 = vmatpush.bf16.msra.mxu0 %v3007
        %4018 = vmatpush.bf16.msra.mxu0 %v2999
        %4019 = vmatpush.bf16.msra.mxu0 %v2991
        %4020 = vmatpush.bf16.msra.mxu0 %v2983
        %4021 = vmatpush.bf16.msra.mxu0 %v2975
        %4022 = vmatpush.bf16.msra.mxu0 %v2967
        %4023 = vmatmul.bf16.gmra.mxu0 %v3452
        %v4024 = vpop.f32.mrf.mxu0
        %v4025 = vadd.f32 %v4012, %v4024
        %v4026 = vpop.f32.mrf.mxu0
        %4027 = vdwg.mxu0
        %4028 = vmatpush.bf16.msra.mxu0 %v2640
        %4029 = vmatpush.bf16.msra.mxu0 %v2632
        %4030 = vmatpush.bf16.msra.mxu0 %v2624
        %4031 = vmatpush.bf16.msra.mxu0 %v2616
        %4032 = vmatpush.bf16.msra.mxu0 %v2608
        %4033 = vmatpush.bf16.msra.mxu0 %v2600
        %4034 = vmatpush.bf16.msra.mxu0 %v2592
        %4035 = vmatpush.bf16.msra.mxu0 %v2584
        %4036 = vmatmul.bf16.gmra.mxu0 %v827
        %v4037 = vpop.f32.mrf.mxu0
        %v4038 = vadd.f32 0.0, %v4037
        %v4039 = vpop.f32.mrf.mxu0
        %4040 = vdwg.mxu0
        %4041 = vmatpush.bf16.msra.mxu0 %v2704
        %4042 = vmatpush.bf16.msra.mxu0 %v2696
        %4043 = vmatpush.bf16.msra.mxu0 %v2688
        %4044 = vmatpush.bf16.msra.mxu0 %v2680
        %4045 = vmatpush.bf16.msra.mxu0 %v2672
        %4046 = vmatpush.bf16.msra.mxu0 %v2664
        %4047 = vmatpush.bf16.msra.mxu0 %v2656
        %4048 = vmatpush.bf16.msra.mxu0 %v2648
        %4049 = vmatmul.bf16.gmra.mxu0 %v828
        %v4050 = vpop.f32.mrf.mxu0
        %v4051 = vadd.f32 %v4038, %v4050
        %v4052 = vpop.f32.mrf.mxu0
        %4053 = vdwg.mxu0
        %4054 = vmatpush.bf16.msra.mxu0 %v2768
        %4055 = vmatpush.bf16.msra.mxu0 %v2760
        %4056 = vmatpush.bf16.msra.mxu0 %v2752
        %4057 = vmatpush.bf16.msra.mxu0 %v2744
        %4058 = vmatpush.bf16.msra.mxu0 %v2736
        %4059 = vmatpush.bf16.msra.mxu0 %v2728
        %4060 = vmatpush.bf16.msra.mxu0 %v2720
        %4061 = vmatpush.bf16.msra.mxu0 %v2712
        %4062 = vmatmul.bf16.gmra.mxu0 %v829
        %v4063 = vpop.f32.mrf.mxu0
        %v4064 = vadd.f32 %v4051, %v4063
        %v4065 = vpop.f32.mrf.mxu0
        %4066 = vdwg.mxu0
        %4067 = vmatpush.bf16.msra.mxu0 %v2832
        %4068 = vmatpush.bf16.msra.mxu0 %v2824
        %4069 = vmatpush.bf16.msra.mxu0 %v2816
        %4070 = vmatpush.bf16.msra.mxu0 %v2808
        %4071 = vmatpush.bf16.msra.mxu0 %v2800
        %4072 = vmatpush.bf16.msra.mxu0 %v2792
        %4073 = vmatpush.bf16.msra.mxu0 %v2784
        %4074 = vmatpush.bf16.msra.mxu0 %v2776
        %4075 = vmatmul.bf16.gmra.mxu0 %v830
        %v4076 = vpop.f32.mrf.mxu0
        %v4077 = vadd.f32 %v4064, %v4076
        %v4078 = vpop.f32.mrf.mxu0
        %4079 = vdwg.mxu0
        %4080 = vmatpush.bf16.msra.mxu0 %v2896
        %4081 = vmatpush.bf16.msra.mxu0 %v2888
        %4082 = vmatpush.bf16.msra.mxu0 %v2880
        %4083 = vmatpush.bf16.msra.mxu0 %v2872
        %4084 = vmatpush.bf16.msra.mxu0 %v2864
        %4085 = vmatpush.bf16.msra.mxu0 %v2856
        %4086 = vmatpush.bf16.msra.mxu0 %v2848
        %4087 = vmatpush.bf16.msra.mxu0 %v2840
        %4088 = vmatmul.bf16.gmra.mxu0 %v831
        %v4089 = vpop.f32.mrf.mxu0
        %v4090 = vadd.f32 %v4077, %v4089
        %v4091 = vpop.f32.mrf.mxu0
        %4092 = vdwg.mxu0
        %4093 = vmatpush.bf16.msra.mxu0 %v2960
        %4094 = vmatpush.bf16.msra.mxu0 %v2952
        %4095 = vmatpush.bf16.msra.mxu0 %v2944
        %4096 = vmatpush.bf16.msra.mxu0 %v2936
        %4097 = vmatpush.bf16.msra.mxu0 %v2928
        %4098 = vmatpush.bf16.msra.mxu0 %v2920
        %4099 = vmatpush.bf16.msra.mxu0 %v2912
        %4100 = vmatpush.bf16.msra.mxu0 %v2904
        %4101 = vmatmul.bf16.gmra.mxu0 %v832
        %v4102 = vpop.f32.mrf.mxu0
        %v4103 = vadd.f32 %v4090, %v4102
        %v4104 = vpop.f32.mrf.mxu0
        %4105 = vdwg.mxu0
        %4106 = vmatpush.bf16.msra.mxu0 0
        %4107 = vmatpush.bf16.msra.mxu0 %v3477
        %4108 = vmatpush.bf16.msra.mxu0 %v3008
        %4109 = vmatpush.bf16.msra.mxu0 %v3000
        %4110 = vmatpush.bf16.msra.mxu0 %v2992
        %4111 = vmatpush.bf16.msra.mxu0 %v2984
        %4112 = vmatpush.bf16.msra.mxu0 %v2976
        %4113 = vmatpush.bf16.msra.mxu0 %v2968
        %4114 = vmatmul.bf16.gmra.mxu0 %v3452
        %v4115 = vpop.f32.mrf.mxu0
        %v4116 = vadd.f32 %v4103, %v4115
        %v4117 = vpop.f32.mrf.mxu0
        %4118 = vdwg.mxu0
        %4119 = vmatpush.bf16.msra.mxu0 %v2641
        %4120 = vmatpush.bf16.msra.mxu0 %v2633
        %4121 = vmatpush.bf16.msra.mxu0 %v2625
        %4122 = vmatpush.bf16.msra.mxu0 %v2617
        %4123 = vmatpush.bf16.msra.mxu0 %v2609
        %4124 = vmatpush.bf16.msra.mxu0 %v2601
        %4125 = vmatpush.bf16.msra.mxu0 %v2593
        %4126 = vmatpush.bf16.msra.mxu0 %v2585
        %4127 = vmatmul.bf16.gmra.mxu0 %v827
        %v4128 = vpop.f32.mrf.mxu0
        %v4129 = vadd.f32 0.0, %v4128
        %v4130 = vpop.f32.mrf.mxu0
        %4131 = vdwg.mxu0
        %4132 = vmatpush.bf16.msra.mxu0 %v2705
        %4133 = vmatpush.bf16.msra.mxu0 %v2697
        %4134 = vmatpush.bf16.msra.mxu0 %v2689
        %4135 = vmatpush.bf16.msra.mxu0 %v2681
        %4136 = vmatpush.bf16.msra.mxu0 %v2673
        %4137 = vmatpush.bf16.msra.mxu0 %v2665
        %4138 = vmatpush.bf16.msra.mxu0 %v2657
        %4139 = vmatpush.bf16.msra.mxu0 %v2649
        %4140 = vmatmul.bf16.gmra.mxu0 %v828
        %v4141 = vpop.f32.mrf.mxu0
        %v4142 = vadd.f32 %v4129, %v4141
        %v4143 = vpop.f32.mrf.mxu0
        %4144 = vdwg.mxu0
        %4145 = vmatpush.bf16.msra.mxu0 %v2769
        %4146 = vmatpush.bf16.msra.mxu0 %v2761
        %4147 = vmatpush.bf16.msra.mxu0 %v2753
        %4148 = vmatpush.bf16.msra.mxu0 %v2745
        %4149 = vmatpush.bf16.msra.mxu0 %v2737
        %4150 = vmatpush.bf16.msra.mxu0 %v2729
        %4151 = vmatpush.bf16.msra.mxu0 %v2721
        %4152 = vmatpush.bf16.msra.mxu0 %v2713
        %4153 = vmatmul.bf16.gmra.mxu0 %v829
        %v4154 = vpop.f32.mrf.mxu0
        %v4155 = vadd.f32 %v4142, %v4154
        %v4156 = vpop.f32.mrf.mxu0
        %4157 = vdwg.mxu0
        %4158 = vmatpush.bf16.msra.mxu0 %v2833
        %4159 = vmatpush.bf16.msra.mxu0 %v2825
        %4160 = vmatpush.bf16.msra.mxu0 %v2817
        %4161 = vmatpush.bf16.msra.mxu0 %v2809
        %4162 = vmatpush.bf16.msra.mxu0 %v2801
        %4163 = vmatpush.bf16.msra.mxu0 %v2793
        %4164 = vmatpush.bf16.msra.mxu0 %v2785
        %4165 = vmatpush.bf16.msra.mxu0 %v2777
        %4166 = vmatmul.bf16.gmra.mxu0 %v830
        %v4167 = vpop.f32.mrf.mxu0
        %v4168 = vadd.f32 %v4155, %v4167
        %v4169 = vpop.f32.mrf.mxu0
        %4170 = vdwg.mxu0
        %4171 = vmatpush.bf16.msra.mxu0 %v2897
        %4172 = vmatpush.bf16.msra.mxu0 %v2889
        %4173 = vmatpush.bf16.msra.mxu0 %v2881
        %4174 = vmatpush.bf16.msra.mxu0 %v2873
        %4175 = vmatpush.bf16.msra.mxu0 %v2865
        %4176 = vmatpush.bf16.msra.mxu0 %v2857
        %4177 = vmatpush.bf16.msra.mxu0 %v2849
        %4178 = vmatpush.bf16.msra.mxu0 %v2841
        %4179 = vmatmul.bf16.gmra.mxu0 %v831
        %v4180 = vpop.f32.mrf.mxu0
        %v4181 = vadd.f32 %v4168, %v4180
        %v4182 = vpop.f32.mrf.mxu0
        %4183 = vdwg.mxu0
        %4184 = vmatpush.bf16.msra.mxu0 %v2961
        %4185 = vmatpush.bf16.msra.mxu0 %v2953
        %4186 = vmatpush.bf16.msra.mxu0 %v2945
        %4187 = vmatpush.bf16.msra.mxu0 %v2937
        %4188 = vmatpush.bf16.msra.mxu0 %v2929
        %4189 = vmatpush.bf16.msra.mxu0 %v2921
        %4190 = vmatpush.bf16.msra.mxu0 %v2913
        %4191 = vmatpush.bf16.msra.mxu0 %v2905
        %4192 = vmatmul.bf16.gmra.mxu0 %v832
        %v4193 = vpop.f32.mrf.mxu0
        %v4194 = vadd.f32 %v4181, %v4193
        %v4195 = vpop.f32.mrf.mxu0
        %4196 = vdwg.mxu0
        %4197 = vmatpush.bf16.msra.mxu0 0
        %4198 = vmatpush.bf16.msra.mxu0 %v3480
        %4199 = vmatpush.bf16.msra.mxu0 %v3009
        %4200 = vmatpush.bf16.msra.mxu0 %v3001
        %4201 = vmatpush.bf16.msra.mxu0 %v2993
        %4202 = vmatpush.bf16.msra.mxu0 %v2985
        %4203 = vmatpush.bf16.msra.mxu0 %v2977
        %4204 = vmatpush.bf16.msra.mxu0 %v2969
        %4205 = vmatmul.bf16.gmra.mxu0 %v3452
        %v4206 = vpop.f32.mrf.mxu0
        %v4207 = vadd.f32 %v4194, %v4206
        %v4208 = vpop.f32.mrf.mxu0
        %4209 = vdwg.mxu0
        %v4210 = vpack.c.bf16 %v3661, %v3570
        %v4211 = vpack.c.bf16 %v3843, %v3752
        %v4212 = vpack.c.bf16 %v4025, %v3934
        %v4213 = vpack.c.bf16 %v4207, %v4116
        %4214 = vst [vmem:[#allocation2] sm:$0xff] %v4210
        %4215 = vst [vmem:[#allocation2 + $0x8] sm:$0xff] %v4211
        %4216 = vst [vmem:[#allocation2 + $0x10] sm:$0xff] %v4212
        %vm4217 = vcmask 1043456
        %vm4218 = vcmask 531460
        %vm4219 = vmor %vm4218, %vm4217
        %4220 = vst.msk [vmem:[#allocation2 + $0x18] sm:$0xff] %vm4219, %v4213
        %v4221 = vld [vmem:[#allocation2] sm:$0xff]
        %v4222 = vld [vmem:[#allocation2 + $0x8] sm:$0xff]
        %v4223 = vld [vmem:[#allocation2 + $0x10] sm:$0xff]
        %v4224 = vld [vmem:[#allocation2 + $0x18] sm:$0xff]
        %v4225 = vld [vmem:[%s3] sm:$0xf]
        %v4226 = vld [vmem:[%s3 + $0x4] sm:$0xf]
        %s4227 = scalar_lea.vmem %s3, 8
        %v4228 = vld [vmem:[%s4227] sm:$0xf]
        %v4229 = vld [vmem:[%s4227 + $0x4] sm:$0xf]
        %v4232 = vunpack.c.l.b16 %v4228
        %v4233 = vunpack.c.l.b16 %v4229
        %v4234 = vpack.c.b16 %v4233, %v4232
        %v4239 = vunpack.c.l.b16 %v4221
        %v4240 = vunpack.c.h.b16 %v4221
        %v4241 = vunpack.c.l.b16 %v4222
        %v4242 = vunpack.c.h.b16 %v4222
        %v4243 = vunpack.c.l.b16 %v4223
        %v4244 = vunpack.c.h.b16 %v4223
        %v4245 = vunpack.c.l.b16 %v4224
        %v4246 = vunpack.c.h.b16 %v4224
        %v4247 = vpack.c.b16 %v4239, %v4239
        %v4248 = vpack.c.b16 %v4240, %v4240
        %v4249 = vpack.c.b16 %v4241, %v4241
        %v4250 = vpack.c.b16 %v4242, %v4242
        %v4251 = vpack.c.b16 %v4243, %v4243
        %v4252 = vpack.c.b16 %v4244, %v4244
        %v4253 = vpack.c.b16 %v4245, %v4245
        %v4254 = vpack.c.b16 %v4246, %v4246
        %4255 = vrot.lane.b32.xlu0 %v4247, 127
        %v4256 = vpop.permute.xlu0 %4255
        %4257 = vrot.lane.b32.xlu0 %v4248, 127
        %v4258 = vpop.permute.xlu0 %4257
        %4259 = vrot.lane.b32.xlu0 %v4249, 127
        %v4260 = vpop.permute.xlu0 %4259
        %4261 = vrot.lane.b32.xlu0 %v4250, 127
        %v4262 = vpop.permute.xlu0 %4261
        %4263 = vrot.lane.b32.xlu0 %v4251, 127
        %v4264 = vpop.permute.xlu0 %4263
        %4265 = vrot.lane.b32.xlu0 %v4252, 127
        %v4266 = vpop.permute.xlu0 %4265
        %4267 = vrot.lane.b32.xlu0 %v4253, 127
        %v4268 = vpop.permute.xlu0 %4267
        %4269 = vrot.lane.b32.xlu0 %v4254, 127
        %v4270 = vpop.permute.xlu0 %4269
        %vm4271 = vcmask 1039360
        %v4272 = vsel %vm4271, %v4256, %v4258
        %v4273 = vsel %vm4271, %v4258, %v4260
        %v4274 = vsel %vm4271, %v4260, %v4262
        %v4275 = vsel %vm4271, %v4262, %v4264
        %v4276 = vsel %vm4271, %v4264, %v4266
        %v4277 = vsel %vm4271, %v4266, %v4268
        %v4278 = vsel %vm4271, %v4268, %v4270
        %vm4279 = vcmask 64512
        %v4281 = vsel %vm4279, %v4234, 0
        %v4284 = vsel %vm4217, %v4272, 0
        %v4287 = vsel %vm4217, %v4273, 0
        %v4290 = vsel %vm4217, %v4274, 0
        %v4293 = vsel %vm4217, %v4275, 0
        %v4296 = vsel %vm4217, %v4276, 0
        %v4299 = vsel %vm4217, %v4277, 0
        %v4302 = vsel %vm4217, %v4278, 0
        %v4305 = vsel %vm4217, %v4270, 0
        %4307 = vmatpush.bf16.msra.mxu0 0
        %4308 = vmatpush.bf16.msra.mxu0 0
        %4309 = vmatpush.bf16.msra.mxu0 0
        %4310 = vmatpush.bf16.msra.mxu0 0
        %4311 = vmatpush.bf16.msra.mxu0 0
        %4312 = vmatpush.bf16.msra.mxu0 0
        %4313 = vmatpush.bf16.msra.mxu0 0
        %4314 = vmatpush.bf16.msra.mxu0 %v4284
        %4315 = vmatmul.bf16.gmra.mxu0 %v4281
        %v4316 = vpop.f32.mrf.mxu0
        %v4317 = vadd.f32 0.0, %v4316
        %v4318 = vpop.f32.mrf.mxu0
        %v4319 = vadd.f32 0.0, %v4318
        %4320 = vdwg.mxu0
        %4321 = vmatpush.bf16.msra.mxu0 0
        %4322 = vmatpush.bf16.msra.mxu0 0
        %4323 = vmatpush.bf16.msra.mxu0 0
        %4324 = vmatpush.bf16.msra.mxu0 0
        %4325 = vmatpush.bf16.msra.mxu0 0
        %4326 = vmatpush.bf16.msra.mxu0 0
        %4327 = vmatpush.bf16.msra.mxu0 0
        %4328 = vmatpush.bf16.msra.mxu0 %v4287
        %4329 = vmatmul.bf16.gmra.mxu0 %v4281
        %v4330 = vpop.f32.mrf.mxu0
        %v4331 = vadd.f32 0.0, %v4330
        %v4332 = vpop.f32.mrf.mxu0
        %v4333 = vadd.f32 0.0, %v4332
        %4334 = vdwg.mxu0
        %4335 = vmatpush.bf16.msra.mxu0 0
        %4336 = vmatpush.bf16.msra.mxu0 0
        %4337 = vmatpush.bf16.msra.mxu0 0
        %4338 = vmatpush.bf16.msra.mxu0 0
        %4339 = vmatpush.bf16.msra.mxu0 0
        %4340 = vmatpush.bf16.msra.mxu0 0
        %4341 = vmatpush.bf16.msra.mxu0 0
        %4342 = vmatpush.bf16.msra.mxu0 %v4290
        %4343 = vmatmul.bf16.gmra.mxu0 %v4281
        %v4344 = vpop.f32.mrf.mxu0
        %v4345 = vadd.f32 0.0, %v4344
        %v4346 = vpop.f32.mrf.mxu0
        %v4347 = vadd.f32 0.0, %v4346
        %4348 = vdwg.mxu0
        %4349 = vmatpush.bf16.msra.mxu0 0
        %4350 = vmatpush.bf16.msra.mxu0 0
        %4351 = vmatpush.bf16.msra.mxu0 0
        %4352 = vmatpush.bf16.msra.mxu0 0
        %4353 = vmatpush.bf16.msra.mxu0 0
        %4354 = vmatpush.bf16.msra.mxu0 0
        %4355 = vmatpush.bf16.msra.mxu0 0
        %4356 = vmatpush.bf16.msra.mxu0 %v4293
        %4357 = vmatmul.bf16.gmra.mxu0 %v4281
        %v4358 = vpop.f32.mrf.mxu0
        %v4359 = vadd.f32 0.0, %v4358
        %v4360 = vpop.f32.mrf.mxu0
        %v4361 = vadd.f32 0.0, %v4360
        %4362 = vdwg.mxu0
        %4363 = vmatpush.bf16.msra.mxu0 0
        %4364 = vmatpush.bf16.msra.mxu0 0
        %4365 = vmatpush.bf16.msra.mxu0 0
        %4366 = vmatpush.bf16.msra.mxu0 0
        %4367 = vmatpush.bf16.msra.mxu0 0
        %4368 = vmatpush.bf16.msra.mxu0 0
        %4369 = vmatpush.bf16.msra.mxu0 0
        %4370 = vmatpush.bf16.msra.mxu0 %v4296
        %4371 = vmatmul.bf16.gmra.mxu0 %v4281
        %v4372 = vpop.f32.mrf.mxu0
        %v4373 = vadd.f32 0.0, %v4372
        %v4374 = vpop.f32.mrf.mxu0
        %v4375 = vadd.f32 0.0, %v4374
        %4376 = vdwg.mxu0
        %4377 = vmatpush.bf16.msra.mxu0 0
        %4378 = vmatpush.bf16.msra.mxu0 0
        %4379 = vmatpush.bf16.msra.mxu0 0
        %4380 = vmatpush.bf16.msra.mxu0 0
        %4381 = vmatpush.bf16.msra.mxu0 0
        %4382 = vmatpush.bf16.msra.mxu0 0
        %4383 = vmatpush.bf16.msra.mxu0 0
        %4384 = vmatpush.bf16.msra.mxu0 %v4299
        %4385 = vmatmul.bf16.gmra.mxu0 %v4281
        %v4386 = vpop.f32.mrf.mxu0
        %v4387 = vadd.f32 0.0, %v4386
        %v4388 = vpop.f32.mrf.mxu0
        %v4389 = vadd.f32 0.0, %v4388
        %4390 = vdwg.mxu0
        %4391 = vmatpush.bf16.msra.mxu0 0
        %4392 = vmatpush.bf16.msra.mxu0 0
        %4393 = vmatpush.bf16.msra.mxu0 0
        %4394 = vmatpush.bf16.msra.mxu0 0
        %4395 = vmatpush.bf16.msra.mxu0 0
        %4396 = vmatpush.bf16.msra.mxu0 0
        %4397 = vmatpush.bf16.msra.mxu0 0
        %4398 = vmatpush.bf16.msra.mxu0 %v4302
        %4399 = vmatmul.bf16.gmra.mxu0 %v4281
        %v4400 = vpop.f32.mrf.mxu0
        %v4401 = vadd.f32 0.0, %v4400
        %v4402 = vpop.f32.mrf.mxu0
        %v4403 = vadd.f32 0.0, %v4402
        %4404 = vdwg.mxu0
        %4405 = vmatpush.bf16.msra.mxu0 0
        %4406 = vmatpush.bf16.msra.mxu0 0
        %4407 = vmatpush.bf16.msra.mxu0 0
        %4408 = vmatpush.bf16.msra.mxu0 0
        %4409 = vmatpush.bf16.msra.mxu0 0
        %4410 = vmatpush.bf16.msra.mxu0 0
        %4411 = vmatpush.bf16.msra.mxu0 0
        %4412 = vmatpush.bf16.msra.mxu0 %v4305
        %4413 = vmatmul.bf16.gmra.mxu0 %v4281
        %v4414 = vpop.f32.mrf.mxu0
        %v4415 = vadd.f32 0.0, %v4414
        %v4416 = vpop.f32.mrf.mxu0
        %v4417 = vadd.f32 0.0, %v4416
        %4418 = vdwg.mxu0
        %v4421 = vunpack.c.l.b16 %v4225
        %v4422 = vunpack.c.l.b16 %v4226
        %v4423 = vpack.c.b16 %v4422, %v4421
        %v4425 = vsel %vm4279, %v4423, 0
        %v4428 = vsel %vm4217, %v4247, 0
        %v4431 = vsel %vm4217, %v4248, 0
        %v4434 = vsel %vm4217, %v4249, 0
        %v4437 = vsel %vm4217, %v4250, 0
        %v4440 = vsel %vm4217, %v4251, 0
        %v4443 = vsel %vm4217, %v4252, 0
        %v4446 = vsel %vm4217, %v4253, 0
        %v4449 = vsel %vm4217, %v4254, 0
        %4451 = vmatpush.bf16.msra.mxu0 0
        %4452 = vmatpush.bf16.msra.mxu0 0
        %4453 = vmatpush.bf16.msra.mxu0 0
        %4454 = vmatpush.bf16.msra.mxu0 0
        %4455 = vmatpush.bf16.msra.mxu0 0
        %4456 = vmatpush.bf16.msra.mxu0 0
        %4457 = vmatpush.bf16.msra.mxu0 0
        %4458 = vmatpush.bf16.msra.mxu0 %v4428
        %4459 = vmatmul.bf16.gmra.mxu0 %v4425
        %v4460 = vpop.f32.mrf.mxu0
        %v4461 = vadd.f32 %v4317, %v4460
        %v4462 = vpop.f32.mrf.mxu0
        %v4463 = vadd.f32 %v4319, %v4462
        %4464 = vdwg.mxu0
        %4465 = vmatpush.bf16.msra.mxu0 0
        %4466 = vmatpush.bf16.msra.mxu0 0
        %4467 = vmatpush.bf16.msra.mxu0 0
        %4468 = vmatpush.bf16.msra.mxu0 0
        %4469 = vmatpush.bf16.msra.mxu0 0
        %4470 = vmatpush.bf16.msra.mxu0 0
        %4471 = vmatpush.bf16.msra.mxu0 0
        %4472 = vmatpush.bf16.msra.mxu0 %v4431
        %4473 = vmatmul.bf16.gmra.mxu0 %v4425
        %v4474 = vpop.f32.mrf.mxu0
        %v4475 = vadd.f32 %v4331, %v4474
        %v4476 = vpop.f32.mrf.mxu0
        %v4477 = vadd.f32 %v4333, %v4476
        %4478 = vdwg.mxu0
        %4479 = vmatpush.bf16.msra.mxu0 0
        %4480 = vmatpush.bf16.msra.mxu0 0
        %4481 = vmatpush.bf16.msra.mxu0 0
        %4482 = vmatpush.bf16.msra.mxu0 0
        %4483 = vmatpush.bf16.msra.mxu0 0
        %4484 = vmatpush.bf16.msra.mxu0 0
        %4485 = vmatpush.bf16.msra.mxu0 0
        %4486 = vmatpush.bf16.msra.mxu0 %v4434
        %4487 = vmatmul.bf16.gmra.mxu0 %v4425
        %v4488 = vpop.f32.mrf.mxu0
        %v4489 = vadd.f32 %v4345, %v4488
        %v4490 = vpop.f32.mrf.mxu0
        %v4491 = vadd.f32 %v4347, %v4490
        %4492 = vdwg.mxu0
        %4493 = vmatpush.bf16.msra.mxu0 0
        %4494 = vmatpush.bf16.msra.mxu0 0
        %4495 = vmatpush.bf16.msra.mxu0 0
        %4496 = vmatpush.bf16.msra.mxu0 0
        %4497 = vmatpush.bf16.msra.mxu0 0
        %4498 = vmatpush.bf16.msra.mxu0 0
        %4499 = vmatpush.bf16.msra.mxu0 0
        %4500 = vmatpush.bf16.msra.mxu0 %v4437
        %4501 = vmatmul.bf16.gmra.mxu0 %v4425
        %v4502 = vpop.f32.mrf.mxu0
        %v4503 = vadd.f32 %v4359, %v4502
        %v4504 = vpop.f32.mrf.mxu0
        %v4505 = vadd.f32 %v4361, %v4504
        %4506 = vdwg.mxu0
        %4507 = vmatpush.bf16.msra.mxu0 0
        %4508 = vmatpush.bf16.msra.mxu0 0
        %4509 = vmatpush.bf16.msra.mxu0 0
        %4510 = vmatpush.bf16.msra.mxu0 0
        %4511 = vmatpush.bf16.msra.mxu0 0
        %4512 = vmatpush.bf16.msra.mxu0 0
        %4513 = vmatpush.bf16.msra.mxu0 0
        %4514 = vmatpush.bf16.msra.mxu0 %v4440
        %4515 = vmatmul.bf16.gmra.mxu0 %v4425
        %v4516 = vpop.f32.mrf.mxu0
        %v4517 = vadd.f32 %v4373, %v4516
        %v4518 = vpop.f32.mrf.mxu0
        %v4519 = vadd.f32 %v4375, %v4518
        %4520 = vdwg.mxu0
        %4521 = vmatpush.bf16.msra.mxu0 0
        %4522 = vmatpush.bf16.msra.mxu0 0
        %4523 = vmatpush.bf16.msra.mxu0 0
        %4524 = vmatpush.bf16.msra.mxu0 0
        %4525 = vmatpush.bf16.msra.mxu0 0
        %4526 = vmatpush.bf16.msra.mxu0 0
        %4527 = vmatpush.bf16.msra.mxu0 0
        %4528 = vmatpush.bf16.msra.mxu0 %v4443
        %4529 = vmatmul.bf16.gmra.mxu0 %v4425
        %v4530 = vpop.f32.mrf.mxu0
        %v4531 = vadd.f32 %v4387, %v4530
        %v4532 = vpop.f32.mrf.mxu0
        %v4533 = vadd.f32 %v4389, %v4532
        %4534 = vdwg.mxu0
        %4535 = vmatpush.bf16.msra.mxu0 0
        %4536 = vmatpush.bf16.msra.mxu0 0
        %4537 = vmatpush.bf16.msra.mxu0 0
        %4538 = vmatpush.bf16.msra.mxu0 0
        %4539 = vmatpush.bf16.msra.mxu0 0
        %4540 = vmatpush.bf16.msra.mxu0 0
        %4541 = vmatpush.bf16.msra.mxu0 0
        %4542 = vmatpush.bf16.msra.mxu0 %v4446
        %4543 = vmatmul.bf16.gmra.mxu0 %v4425
        %v4544 = vpop.f32.mrf.mxu0
        %v4545 = vadd.f32 %v4401, %v4544
        %v4546 = vpop.f32.mrf.mxu0
        %v4547 = vadd.f32 %v4403, %v4546
        %4548 = vdwg.mxu0
        %4549 = vmatpush.bf16.msra.mxu0 0
        %4550 = vmatpush.bf16.msra.mxu0 0
        %4551 = vmatpush.bf16.msra.mxu0 0
        %4552 = vmatpush.bf16.msra.mxu0 0
        %4553 = vmatpush.bf16.msra.mxu0 0
        %4554 = vmatpush.bf16.msra.mxu0 0
        %4555 = vmatpush.bf16.msra.mxu0 0
        %4556 = vmatpush.bf16.msra.mxu0 %v4449
        %4557 = vmatmul.bf16.gmra.mxu0 %v4425
        %v4558 = vpop.f32.mrf.mxu0
        %v4559 = vadd.f32 %v4415, %v4558
        %v4560 = vpop.f32.mrf.mxu0
        %v4561 = vadd.f32 %v4417, %v4560
        %4562 = vdwg.mxu0
        %s4563 = scalar_lea.vmem %s3, 16
        %v4564 = vld [vmem:[%s4563] sm:$0xf]
        %v4565 = vld [vmem:[%s4563 + $0x4] sm:$0xf]
        %v4568 = vunpack.c.l.b16 %v4564
        %v4569 = vunpack.c.l.b16 %v4565
        %v4570 = vpack.c.b16 %v4569, %v4568
        %4571 = vrot.lane.b32.xlu0 %v4247, 97
        %v4572 = vpop.permute.xlu0 %4571
        %4573 = vrot.lane.b32.xlu0 %v4248, 97
        %v4574 = vpop.permute.xlu0 %4573
        %4575 = vrot.lane.b32.xlu0 %v4249, 97
        %v4576 = vpop.permute.xlu0 %4575
        %4577 = vrot.lane.b32.xlu0 %v4250, 97
        %v4578 = vpop.permute.xlu0 %4577
        %4579 = vrot.lane.b32.xlu0 %v4251, 97
        %v4580 = vpop.permute.xlu0 %4579
        %4581 = vrot.lane.b32.xlu0 %v4252, 97
        %v4582 = vpop.permute.xlu0 %4581
        %4583 = vrot.lane.b32.xlu0 %v4253, 97
        %v4584 = vpop.permute.xlu0 %4583
        %4585 = vrot.lane.b32.xlu0 %v4254, 97
        %v4586 = vpop.permute.xlu0 %4585
        %vm4587 = vcmask 793600
        %v4588 = vsel %vm4587, %v4572, %v4574
        %v4589 = vsel %vm4587, %v4574, %v4576
        %v4590 = vsel %vm4587, %v4576, %v4578
        %v4591 = vsel %vm4587, %v4578, %v4580
        %v4592 = vsel %vm4587, %v4580, %v4582
        %v4593 = vsel %vm4587, %v4582, %v4584
        %v4594 = vsel %vm4587, %v4584, %v4586
        %v4596 = vsel %vm4279, %v4570, 0
        %v4599 = vsel %vm4217, %v4588, 0
        %v4602 = vsel %vm4217, %v4589, 0
        %v4605 = vsel %vm4217, %v4590, 0
        %v4608 = vsel %vm4217, %v4591, 0
        %v4611 = vsel %vm4217, %v4592, 0
        %v4614 = vsel %vm4217, %v4593, 0
        %v4617 = vsel %vm4217, %v4594, 0
        %v4620 = vsel %vm4217, %v4586, 0
        %4622 = vmatpush.bf16.msra.mxu0 0
        %4623 = vmatpush.bf16.msra.mxu0 0
        %4624 = vmatpush.bf16.msra.mxu0 0
        %4625 = vmatpush.bf16.msra.mxu0 0
        %4626 = vmatpush.bf16.msra.mxu0 0
        %4627 = vmatpush.bf16.msra.mxu0 0
        %4628 = vmatpush.bf16.msra.mxu0 0
        %4629 = vmatpush.bf16.msra.mxu0 %v4599
        %4630 = vmatmul.bf16.gmra.mxu0 %v4596
        %v4631 = vpop.f32.mrf.mxu0
        %v4632 = vadd.f32 0.0, %v4631
        %v4633 = vpop.f32.mrf.mxu0
        %v4634 = vadd.f32 0.0, %v4633
        %4635 = vdwg.mxu0
        %4636 = vmatpush.bf16.msra.mxu0 0
        %4637 = vmatpush.bf16.msra.mxu0 0
        %4638 = vmatpush.bf16.msra.mxu0 0
        %4639 = vmatpush.bf16.msra.mxu0 0
        %4640 = vmatpush.bf16.msra.mxu0 0
        %4641 = vmatpush.bf16.msra.mxu0 0
        %4642 = vmatpush.bf16.msra.mxu0 0
        %4643 = vmatpush.bf16.msra.mxu0 %v4602
        %4644 = vmatmul.bf16.gmra.mxu0 %v4596
        %v4645 = vpop.f32.mrf.mxu0
        %v4646 = vadd.f32 0.0, %v4645
        %v4647 = vpop.f32.mrf.mxu0
        %v4648 = vadd.f32 0.0, %v4647
        %4649 = vdwg.mxu0
        %4650 = vmatpush.bf16.msra.mxu0 0
        %4651 = vmatpush.bf16.msra.mxu0 0
        %4652 = vmatpush.bf16.msra.mxu0 0
        %4653 = vmatpush.bf16.msra.mxu0 0
        %4654 = vmatpush.bf16.msra.mxu0 0
        %4655 = vmatpush.bf16.msra.mxu0 0
        %4656 = vmatpush.bf16.msra.mxu0 0
        %4657 = vmatpush.bf16.msra.mxu0 %v4605
        %4658 = vmatmul.bf16.gmra.mxu0 %v4596
        %v4659 = vpop.f32.mrf.mxu0
        %v4660 = vadd.f32 0.0, %v4659
        %v4661 = vpop.f32.mrf.mxu0
        %v4662 = vadd.f32 0.0, %v4661
        %4663 = vdwg.mxu0
        %4664 = vmatpush.bf16.msra.mxu0 0
        %4665 = vmatpush.bf16.msra.mxu0 0
        %4666 = vmatpush.bf16.msra.mxu0 0
        %4667 = vmatpush.bf16.msra.mxu0 0
        %4668 = vmatpush.bf16.msra.mxu0 0
        %4669 = vmatpush.bf16.msra.mxu0 0
        %4670 = vmatpush.bf16.msra.mxu0 0
        %4671 = vmatpush.bf16.msra.mxu0 %v4608
        %4672 = vmatmul.bf16.gmra.mxu0 %v4596
        %v4673 = vpop.f32.mrf.mxu0
        %v4674 = vadd.f32 0.0, %v4673
        %v4675 = vpop.f32.mrf.mxu0
        %v4676 = vadd.f32 0.0, %v4675
        %4677 = vdwg.mxu0
        %4678 = vmatpush.bf16.msra.mxu0 0
        %4679 = vmatpush.bf16.msra.mxu0 0
        %4680 = vmatpush.bf16.msra.mxu0 0
        %4681 = vmatpush.bf16.msra.mxu0 0
        %4682 = vmatpush.bf16.msra.mxu0 0
        %4683 = vmatpush.bf16.msra.mxu0 0
        %4684 = vmatpush.bf16.msra.mxu0 0
        %4685 = vmatpush.bf16.msra.mxu0 %v4611
        %4686 = vmatmul.bf16.gmra.mxu0 %v4596
        %v4687 = vpop.f32.mrf.mxu0
        %v4688 = vadd.f32 0.0, %v4687
        %v4689 = vpop.f32.mrf.mxu0
        %v4690 = vadd.f32 0.0, %v4689
        %4691 = vdwg.mxu0
        %4692 = vmatpush.bf16.msra.mxu0 0
        %4693 = vmatpush.bf16.msra.mxu0 0
        %4694 = vmatpush.bf16.msra.mxu0 0
        %4695 = vmatpush.bf16.msra.mxu0 0
        %4696 = vmatpush.bf16.msra.mxu0 0
        %4697 = vmatpush.bf16.msra.mxu0 0
        %4698 = vmatpush.bf16.msra.mxu0 0
        %4699 = vmatpush.bf16.msra.mxu0 %v4614
        %4700 = vmatmul.bf16.gmra.mxu0 %v4596
        %v4701 = vpop.f32.mrf.mxu0
        %v4702 = vadd.f32 0.0, %v4701
        %v4703 = vpop.f32.mrf.mxu0
        %v4704 = vadd.f32 0.0, %v4703
        %4705 = vdwg.mxu0
        %4706 = vmatpush.bf16.msra.mxu0 0
        %4707 = vmatpush.bf16.msra.mxu0 0
        %4708 = vmatpush.bf16.msra.mxu0 0
        %4709 = vmatpush.bf16.msra.mxu0 0
        %4710 = vmatpush.bf16.msra.mxu0 0
        %4711 = vmatpush.bf16.msra.mxu0 0
        %4712 = vmatpush.bf16.msra.mxu0 0
        %4713 = vmatpush.bf16.msra.mxu0 %v4617
        %4714 = vmatmul.bf16.gmra.mxu0 %v4596
        %v4715 = vpop.f32.mrf.mxu0
        %v4716 = vadd.f32 0.0, %v4715
        %v4717 = vpop.f32.mrf.mxu0
        %v4718 = vadd.f32 0.0, %v4717
        %4719 = vdwg.mxu0
        %4720 = vmatpush.bf16.msra.mxu0 0
        %4721 = vmatpush.bf16.msra.mxu0 0
        %4722 = vmatpush.bf16.msra.mxu0 0
        %4723 = vmatpush.bf16.msra.mxu0 0
        %4724 = vmatpush.bf16.msra.mxu0 0
        %4725 = vmatpush.bf16.msra.mxu0 0
        %4726 = vmatpush.bf16.msra.mxu0 0
        %4727 = vmatpush.bf16.msra.mxu0 %v4620
        %4728 = vmatmul.bf16.gmra.mxu0 %v4596
        %v4729 = vpop.f32.mrf.mxu0
        %v4730 = vadd.f32 0.0, %v4729
        %v4731 = vpop.f32.mrf.mxu0
        %v4732 = vadd.f32 0.0, %v4731
        %4733 = vdwg.mxu0
        %v4734 = vadd.f32 %v4461, %v4632
        %v4735 = vadd.f32 %v4475, %v4646
        %v4736 = vadd.f32 %v4489, %v4660
        %v4737 = vadd.f32 %v4503, %v4674
        %v4738 = vadd.f32 %v4517, %v4688
        %v4739 = vadd.f32 %v4531, %v4702
        %v4740 = vadd.f32 %v4545, %v4716
        %v4741 = vadd.f32 %v4559, %v4730
        %v4742 = vadd.f32 %v4463, %v4634
        %v4743 = vadd.f32 %v4477, %v4648
        %v4744 = vadd.f32 %v4491, %v4662
        %v4745 = vadd.f32 %v4505, %v4676
        %v4746 = vadd.f32 %v4519, %v4690
        %v4747 = vadd.f32 %v4533, %v4704
        %v4748 = vadd.f32 %v4547, %v4718
        %v4749 = vadd.f32 %v4561, %v4732
        %s4750 = scalar_lea.vmem %s3, 24
        %v4751 = vld [vmem:[%s4750] sm:$0xf]
        %v4752 = vld [vmem:[%s4750 + $0x4] sm:$0xf]
        %v4755 = vunpack.c.l.b16 %v4751
        %v4756 = vunpack.c.l.b16 %v4752
        %v4757 = vpack.c.b16 %v4756, %v4755
        %4758 = vrot.lane.b32.xlu0 %v4247, 96
        %v4759 = vpop.permute.xlu0 %4758
        %4760 = vrot.lane.b32.xlu0 %v4248, 96
        %v4761 = vpop.permute.xlu0 %4760
        %4762 = vrot.lane.b32.xlu0 %v4249, 96
        %v4763 = vpop.permute.xlu0 %4762
        %4764 = vrot.lane.b32.xlu0 %v4250, 96
        %v4765 = vpop.permute.xlu0 %4764
        %4766 = vrot.lane.b32.xlu0 %v4251, 96
        %v4767 = vpop.permute.xlu0 %4766
        %4768 = vrot.lane.b32.xlu0 %v4252, 96
        %v4769 = vpop.permute.xlu0 %4768
        %4770 = vrot.lane.b32.xlu0 %v4253, 96
        %v4771 = vpop.permute.xlu0 %4770
        %4772 = vrot.lane.b32.xlu0 %v4254, 96
        %v4773 = vpop.permute.xlu0 %4772
        %vm4774 = vcmask 785408
        %v4775 = vsel %vm4774, %v4759, %v4761
        %v4776 = vsel %vm4774, %v4761, %v4763
        %v4777 = vsel %vm4774, %v4763, %v4765
        %v4778 = vsel %vm4774, %v4765, %v4767
        %v4779 = vsel %vm4774, %v4767, %v4769
        %v4780 = vsel %vm4774, %v4769, %v4771
        %v4781 = vsel %vm4774, %v4771, %v4773
        %v4783 = vsel %vm4279, %v4757, 0
        %v4786 = vsel %vm4217, %v4775, 0
        %v4789 = vsel %vm4217, %v4776, 0
        %v4792 = vsel %vm4217, %v4777, 0
        %v4795 = vsel %vm4217, %v4778, 0
        %v4798 = vsel %vm4217, %v4779, 0
        %v4801 = vsel %vm4217, %v4780, 0
        %v4804 = vsel %vm4217, %v4781, 0
        %v4807 = vsel %vm4217, %v4773, 0
        %4809 = vmatpush.bf16.msra.mxu0 0
        %4810 = vmatpush.bf16.msra.mxu0 0
        %4811 = vmatpush.bf16.msra.mxu0 0
        %4812 = vmatpush.bf16.msra.mxu0 0
        %4813 = vmatpush.bf16.msra.mxu0 0
        %4814 = vmatpush.bf16.msra.mxu0 0
        %4815 = vmatpush.bf16.msra.mxu0 0
        %4816 = vmatpush.bf16.msra.mxu0 %v4786
        %4817 = vmatmul.bf16.gmra.mxu0 %v4783
        %v4818 = vpop.f32.mrf.mxu0
        %v4819 = vadd.f32 0.0, %v4818
        %v4820 = vpop.f32.mrf.mxu0
        %v4821 = vadd.f32 0.0, %v4820
        %4822 = vdwg.mxu0
        %4823 = vmatpush.bf16.msra.mxu0 0
        %4824 = vmatpush.bf16.msra.mxu0 0
        %4825 = vmatpush.bf16.msra.mxu0 0
        %4826 = vmatpush.bf16.msra.mxu0 0
        %4827 = vmatpush.bf16.msra.mxu0 0
        %4828 = vmatpush.bf16.msra.mxu0 0
        %4829 = vmatpush.bf16.msra.mxu0 0
        %4830 = vmatpush.bf16.msra.mxu0 %v4789
        %4831 = vmatmul.bf16.gmra.mxu0 %v4783
        %v4832 = vpop.f32.mrf.mxu0
        %v4833 = vadd.f32 0.0, %v4832
        %v4834 = vpop.f32.mrf.mxu0
        %v4835 = vadd.f32 0.0, %v4834
        %4836 = vdwg.mxu0
        %4837 = vmatpush.bf16.msra.mxu0 0
        %4838 = vmatpush.bf16.msra.mxu0 0
        %4839 = vmatpush.bf16.msra.mxu0 0
        %4840 = vmatpush.bf16.msra.mxu0 0
        %4841 = vmatpush.bf16.msra.mxu0 0
        %4842 = vmatpush.bf16.msra.mxu0 0
        %4843 = vmatpush.bf16.msra.mxu0 0
        %4844 = vmatpush.bf16.msra.mxu0 %v4792
        %4845 = vmatmul.bf16.gmra.mxu0 %v4783
        %v4846 = vpop.f32.mrf.mxu0
        %v4847 = vadd.f32 0.0, %v4846
        %v4848 = vpop.f32.mrf.mxu0
        %v4849 = vadd.f32 0.0, %v4848
        %4850 = vdwg.mxu0
        %4851 = vmatpush.bf16.msra.mxu0 0
        %4852 = vmatpush.bf16.msra.mxu0 0
        %4853 = vmatpush.bf16.msra.mxu0 0
        %4854 = vmatpush.bf16.msra.mxu0 0
        %4855 = vmatpush.bf16.msra.mxu0 0
        %4856 = vmatpush.bf16.msra.mxu0 0
        %4857 = vmatpush.bf16.msra.mxu0 0
        %4858 = vmatpush.bf16.msra.mxu0 %v4795
        %4859 = vmatmul.bf16.gmra.mxu0 %v4783
        %v4860 = vpop.f32.mrf.mxu0
        %v4861 = vadd.f32 0.0, %v4860
        %v4862 = vpop.f32.mrf.mxu0
        %v4863 = vadd.f32 0.0, %v4862
        %4864 = vdwg.mxu0
        %4865 = vmatpush.bf16.msra.mxu0 0
        %4866 = vmatpush.bf16.msra.mxu0 0
        %4867 = vmatpush.bf16.msra.mxu0 0
        %4868 = vmatpush.bf16.msra.mxu0 0
        %4869 = vmatpush.bf16.msra.mxu0 0
        %4870 = vmatpush.bf16.msra.mxu0 0
        %4871 = vmatpush.bf16.msra.mxu0 0
        %4872 = vmatpush.bf16.msra.mxu0 %v4798
        %4873 = vmatmul.bf16.gmra.mxu0 %v4783
        %v4874 = vpop.f32.mrf.mxu0
        %v4875 = vadd.f32 0.0, %v4874
        %v4876 = vpop.f32.mrf.mxu0
        %v4877 = vadd.f32 0.0, %v4876
        %4878 = vdwg.mxu0
        %4879 = vmatpush.bf16.msra.mxu0 0
        %4880 = vmatpush.bf16.msra.mxu0 0
        %4881 = vmatpush.bf16.msra.mxu0 0
        %4882 = vmatpush.bf16.msra.mxu0 0
        %4883 = vmatpush.bf16.msra.mxu0 0
        %4884 = vmatpush.bf16.msra.mxu0 0
        %4885 = vmatpush.bf16.msra.mxu0 0
        %4886 = vmatpush.bf16.msra.mxu0 %v4801
        %4887 = vmatmul.bf16.gmra.mxu0 %v4783
        %v4888 = vpop.f32.mrf.mxu0
        %v4889 = vadd.f32 0.0, %v4888
        %v4890 = vpop.f32.mrf.mxu0
        %v4891 = vadd.f32 0.0, %v4890
        %4892 = vdwg.mxu0
        %4893 = vmatpush.bf16.msra.mxu0 0
        %4894 = vmatpush.bf16.msra.mxu0 0
        %4895 = vmatpush.bf16.msra.mxu0 0
        %4896 = vmatpush.bf16.msra.mxu0 0
        %4897 = vmatpush.bf16.msra.mxu0 0
        %4898 = vmatpush.bf16.msra.mxu0 0
        %4899 = vmatpush.bf16.msra.mxu0 0
        %4900 = vmatpush.bf16.msra.mxu0 %v4804
        %4901 = vmatmul.bf16.gmra.mxu0 %v4783
        %v4902 = vpop.f32.mrf.mxu0
        %v4903 = vadd.f32 0.0, %v4902
        %v4904 = vpop.f32.mrf.mxu0
        %v4905 = vadd.f32 0.0, %v4904
        %4906 = vdwg.mxu0
        %4907 = vmatpush.bf16.msra.mxu0 0
        %4908 = vmatpush.bf16.msra.mxu0 0
        %4909 = vmatpush.bf16.msra.mxu0 0
        %4910 = vmatpush.bf16.msra.mxu0 0
        %4911 = vmatpush.bf16.msra.mxu0 0
        %4912 = vmatpush.bf16.msra.mxu0 0
        %4913 = vmatpush.bf16.msra.mxu0 0
        %4914 = vmatpush.bf16.msra.mxu0 %v4807
        %4915 = vmatmul.bf16.gmra.mxu0 %v4783
        %v4916 = vpop.f32.mrf.mxu0
        %v4917 = vadd.f32 0.0, %v4916
        %v4918 = vpop.f32.mrf.mxu0
        %v4919 = vadd.f32 0.0, %v4918
        %4920 = vdwg.mxu0
        %v4921 = vadd.f32 %v4734, %v4819
        %v4922 = vadd.f32 %v4735, %v4833
        %v4923 = vadd.f32 %v4736, %v4847
        %v4924 = vadd.f32 %v4737, %v4861
        %v4925 = vadd.f32 %v4738, %v4875
        %v4926 = vadd.f32 %v4739, %v4889
        %v4927 = vadd.f32 %v4740, %v4903
        %v4928 = vadd.f32 %v4741, %v4917
        %v4929 = vadd.f32 %v4742, %v4821
        %v4930 = vadd.f32 %v4743, %v4835
        %v4931 = vadd.f32 %v4744, %v4849
        %v4932 = vadd.f32 %v4745, %v4863
        %v4933 = vadd.f32 %v4746, %v4877
        %v4934 = vadd.f32 %v4747, %v4891
        %v4935 = vadd.f32 %v4748, %v4905
        %v4936 = vadd.f32 %v4749, %v4919
        %4937 = vst [vmem:[#allocation5] sm:$0xff] %v4921
        %4938 = vst [vmem:[#allocation5 + $0x8] sm:$0xff] %v4922
        %4939 = vst [vmem:[#allocation5 + $0x10] sm:$0xff] %v4923
        %4940 = vst [vmem:[#allocation5 + $0x18] sm:$0xff] %v4924
        %4941 = vst [vmem:[#allocation5 + $0x20] sm:$0xff] %v4925
        %4942 = vst [vmem:[#allocation5 + $0x28] sm:$0xff] %v4926
        %4943 = vst [vmem:[#allocation5 + $0x30] sm:$0xff] %v4927
        %vm4944 = vcmask 269312
        %4945 = vst.msk [vmem:[#allocation5 + $0x38] sm:$0xff] %vm4944, %v4928
        %4946 = vst [vmem:[#allocation5 + $0x40] sm:$0xff] %v4929
        %4947 = vst [vmem:[#allocation5 + $0x48] sm:$0xff] %v4930
        %4948 = vst [vmem:[#allocation5 + $0x50] sm:$0xff] %v4931
        %4949 = vst [vmem:[#allocation5 + $0x58] sm:$0xff] %v4932
        %4950 = vst [vmem:[#allocation5 + $0x60] sm:$0xff] %v4933
        %4951 = vst [vmem:[#allocation5 + $0x68] sm:$0xff] %v4934
        %4952 = vst [vmem:[#allocation5 + $0x70] sm:$0xff] %v4935
        %4953 = vst.msk [vmem:[#allocation5 + $0x78] sm:$0xff] %vm4944, %v4936
        %v4954 = vld [vmem:[#allocation5] sm:$0xff]
        %v4955 = vld [vmem:[#allocation5 + $0x8] sm:$0xff]
        %v4956 = vld [vmem:[#allocation5 + $0x10] sm:$0xff]
        %v4957 = vld [vmem:[#allocation5 + $0x18] sm:$0xff]
        %v4958 = vld [vmem:[#allocation5 + $0x20] sm:$0xff]
        %v4959 = vld [vmem:[#allocation5 + $0x28] sm:$0xff]
        %v4960 = vld [vmem:[#allocation5 + $0x30] sm:$0xff]
        %v4961 = vld [vmem:[#allocation5 + $0x38] sm:$0xff]
        %v4962 = vld [vmem:[#allocation5 + $0x40] sm:$0xff]
        %v4963 = vld [vmem:[#allocation5 + $0x48] sm:$0xff]
        %v4964 = vld [vmem:[#allocation5 + $0x50] sm:$0xff]
        %v4965 = vld [vmem:[#allocation5 + $0x58] sm:$0xff]
        %v4966 = vld [vmem:[#allocation5 + $0x60] sm:$0xff]
        %v4967 = vld [vmem:[#allocation5 + $0x68] sm:$0xff]
        %v4968 = vld [vmem:[#allocation5 + $0x70] sm:$0xff]
        %v4969 = vld [vmem:[#allocation5 + $0x78] sm:$0xff]
        %4986 = vrot.lane.b32.xlu0 %v4954, 127
        %v4987 = vpop.permute.xlu0 %4986
        %4988 = vrot.lane.b32.xlu0 %v4955, 127
        %v4989 = vpop.permute.xlu0 %4988
        %4990 = vrot.lane.b32.xlu0 %v4956, 127
        %v4991 = vpop.permute.xlu0 %4990
        %4992 = vrot.lane.b32.xlu0 %v4957, 127
        %v4993 = vpop.permute.xlu0 %4992
        %4994 = vrot.lane.b32.xlu0 %v4958, 127
        %v4995 = vpop.permute.xlu0 %4994
        %4996 = vrot.lane.b32.xlu0 %v4959, 127
        %v4997 = vpop.permute.xlu0 %4996
        %4998 = vrot.lane.b32.xlu0 %v4960, 127
        %v4999 = vpop.permute.xlu0 %4998
        %5000 = vrot.lane.b32.xlu0 %v4961, 127
        %v5001 = vpop.permute.xlu0 %5000
        %5002 = vrot.lane.b32.xlu0 %v4962, 127
        %v5003 = vpop.permute.xlu0 %5002
        %5004 = vrot.lane.b32.xlu0 %v4963, 127
        %v5005 = vpop.permute.xlu0 %5004
        %5006 = vrot.lane.b32.xlu0 %v4964, 127
        %v5007 = vpop.permute.xlu0 %5006
        %5008 = vrot.lane.b32.xlu0 %v4965, 127
        %v5009 = vpop.permute.xlu0 %5008
        %5010 = vrot.lane.b32.xlu0 %v4966, 127
        %v5011 = vpop.permute.xlu0 %5010
        %5012 = vrot.lane.b32.xlu0 %v4967, 127
        %v5013 = vpop.permute.xlu0 %5012
        %5014 = vrot.lane.b32.xlu0 %v4968, 127
        %v5015 = vpop.permute.xlu0 %5014
        %5016 = vrot.lane.b32.xlu0 %v4969, 127
        %v5017 = vpop.permute.xlu0 %5016
        %v5018 = vsel %vm662, %v4987, %v4989
        %v5019 = vsel %vm662, %v4989, %v4991
        %v5020 = vsel %vm662, %v4991, %v4993
        %v5021 = vsel %vm662, %v4993, %v4995
        %v5022 = vsel %vm662, %v4995, %v4997
        %v5023 = vsel %vm662, %v4997, %v4999
        %v5024 = vsel %vm662, %v4999, %v5001
        %v5025 = vsel %vm662, %v5003, %v5005
        %v5026 = vsel %vm662, %v5005, %v5007
        %v5027 = vsel %vm662, %v5007, %v5009
        %v5028 = vsel %vm662, %v5009, %v5011
        %v5029 = vsel %vm662, %v5011, %v5013
        %v5030 = vsel %vm662, %v5013, %v5015
        %v5031 = vsel %vm662, %v5015, %v5017
        %v5048 = vmax.f32 %v4954, %v5018
        %v5049 = vmax.f32 %v4955, %v5019
        %v5050 = vmax.f32 %v4956, %v5020
        %v5051 = vmax.f32 %v4957, %v5021
        %v5052 = vmax.f32 %v4958, %v5022
        %v5053 = vmax.f32 %v4959, %v5023
        %v5054 = vmax.f32 %v4960, %v5024
        %v5055 = vmax.f32 %v4961, %v5001
        %v5056 = vmax.f32 %v4962, %v5025
        %v5057 = vmax.f32 %v4963, %v5026
        %v5058 = vmax.f32 %v4964, %v5027
        %v5059 = vmax.f32 %v4965, %v5028
        %v5060 = vmax.f32 %v4966, %v5029
        %v5061 = vmax.f32 %v4967, %v5030
        %v5062 = vmax.f32 %v4968, %v5031
        %v5063 = vmax.f32 %v4969, %v5017
        %5080 = vrot.lane.b32.xlu0 %v5048, 97
        %v5081 = vpop.permute.xlu0 %5080
        %5082 = vrot.lane.b32.xlu0 %v5049, 97
        %v5083 = vpop.permute.xlu0 %5082
        %5084 = vrot.lane.b32.xlu0 %v5050, 97
        %v5085 = vpop.permute.xlu0 %5084
        %5086 = vrot.lane.b32.xlu0 %v5051, 97
        %v5087 = vpop.permute.xlu0 %5086
        %5088 = vrot.lane.b32.xlu0 %v5052, 97
        %v5089 = vpop.permute.xlu0 %5088
        %5090 = vrot.lane.b32.xlu0 %v5053, 97
        %v5091 = vpop.permute.xlu0 %5090
        %5092 = vrot.lane.b32.xlu0 %v5054, 97
        %v5093 = vpop.permute.xlu0 %5092
        %5094 = vrot.lane.b32.xlu0 %v5055, 97
        %v5095 = vpop.permute.xlu0 %5094
        %5096 = vrot.lane.b32.xlu0 %v5056, 97
        %v5097 = vpop.permute.xlu0 %5096
        %5098 = vrot.lane.b32.xlu0 %v5057, 97
        %v5099 = vpop.permute.xlu0 %5098
        %5100 = vrot.lane.b32.xlu0 %v5058, 97
        %v5101 = vpop.permute.xlu0 %5100
        %5102 = vrot.lane.b32.xlu0 %v5059, 97
        %v5103 = vpop.permute.xlu0 %5102
        %5104 = vrot.lane.b32.xlu0 %v5060, 97
        %v5105 = vpop.permute.xlu0 %5104
        %5106 = vrot.lane.b32.xlu0 %v5061, 97
        %v5107 = vpop.permute.xlu0 %5106
        %5108 = vrot.lane.b32.xlu0 %v5062, 97
        %v5109 = vpop.permute.xlu0 %5108
        %5110 = vrot.lane.b32.xlu0 %v5063, 97
        %v5111 = vpop.permute.xlu0 %5110
        %v5112 = vsel %vm785, %v5081, %v5083
        %v5113 = vsel %vm785, %v5083, %v5085
        %v5114 = vsel %vm785, %v5085, %v5087
        %v5115 = vsel %vm785, %v5087, %v5089
        %v5116 = vsel %vm785, %v5089, %v5091
        %v5117 = vsel %vm785, %v5091, %v5093
        %v5118 = vsel %vm785, %v5093, %v5095
        %v5119 = vsel %vm785, %v5097, %v5099
        %v5120 = vsel %vm785, %v5099, %v5101
        %v5121 = vsel %vm785, %v5101, %v5103
        %v5122 = vsel %vm785, %v5103, %v5105
        %v5123 = vsel %vm785, %v5105, %v5107
        %v5124 = vsel %vm785, %v5107, %v5109
        %v5125 = vsel %vm785, %v5109, %v5111
        %v5142 = vmax.f32 %v5048, %v5112
        %v5143 = vmax.f32 %v5049, %v5113
        %v5144 = vmax.f32 %v5050, %v5114
        %v5145 = vmax.f32 %v5051, %v5115
        %v5146 = vmax.f32 %v5052, %v5116
        %v5147 = vmax.f32 %v5053, %v5117
        %v5148 = vmax.f32 %v5054, %v5118
        %v5149 = vmax.f32 %v5055, %v5095
        %v5150 = vmax.f32 %v5056, %v5119
        %v5151 = vmax.f32 %v5057, %v5120
        %v5152 = vmax.f32 %v5058, %v5121
        %v5153 = vmax.f32 %v5059, %v5122
        %v5154 = vmax.f32 %v5060, %v5123
        %v5155 = vmax.f32 %v5061, %v5124
        %v5156 = vmax.f32 %v5062, %v5125
        %v5157 = vmax.f32 %v5063, %v5111
        %v5158 = vld [vmem:[%s4] sm:$0xff]
        %v5159 = vld [vmem:[%s4 + $0x8] sm:$0xff]
        %5161 = vset.pattern.permute.xlu0 0
        %5162 = vperm.xlu0 %5161, %v5158
        %v5163 = vpop.permute.xlu0 %5162
        %5166 = vset.pattern.permute.xlu0 0
        %5167 = vperm.xlu0 %5166, %v5159
        %v5168 = vpop.permute.xlu0 %5167
        %v5170 = vadd.f32 %v5142, %v5163
        %v5171 = vadd.f32 %v5143, %v5163
        %v5172 = vadd.f32 %v5144, %v5163
        %v5173 = vadd.f32 %v5145, %v5163
        %v5174 = vadd.f32 %v5146, %v5163
        %v5175 = vadd.f32 %v5147, %v5163
        %v5176 = vadd.f32 %v5148, %v5163
        %v5177 = vadd.f32 %v5149, %v5163
        %v5178 = vadd.f32 %v5150, %v5168
        %v5179 = vadd.f32 %v5151, %v5168
        %v5180 = vadd.f32 %v5152, %v5168
        %v5181 = vadd.f32 %v5153, %v5168
        %v5182 = vadd.f32 %v5154, %v5168
        %v5183 = vadd.f32 %v5155, %v5168
        %v5184 = vadd.f32 %v5156, %v5168
        %v5185 = vadd.f32 %v5157, %v5168
        %v5186 = vmax.f32 %v5170, 0.0
        %v5187 = vmax.f32 %v5171, 0.0
        %v5188 = vmax.f32 %v5172, 0.0
        %v5189 = vmax.f32 %v5173, 0.0
        %v5190 = vmax.f32 %v5174, 0.0
        %v5191 = vmax.f32 %v5175, 0.0
        %v5192 = vmax.f32 %v5176, 0.0
        %v5193 = vmax.f32 %v5177, 0.0
        %v5194 = vmax.f32 %v5178, 0.0
        %v5195 = vmax.f32 %v5179, 0.0
        %v5196 = vmax.f32 %v5180, 0.0
        %v5197 = vmax.f32 %v5181, 0.0
        %v5198 = vmax.f32 %v5182, 0.0
        %v5199 = vmax.f32 %v5183, 0.0
        %v5200 = vmax.f32 %v5184, 0.0
        %v5201 = vmax.f32 %v5185, 0.0
        %v5202 = vpack.c.bf16 %v5194, %v5186
        %v5203 = vpack.c.bf16 %v5195, %v5187
        %v5204 = vpack.c.bf16 %v5196, %v5188
        %v5205 = vpack.c.bf16 %v5197, %v5189
        %v5206 = vpack.c.bf16 %v5198, %v5190
        %v5207 = vpack.c.bf16 %v5199, %v5191
        %v5208 = vpack.c.bf16 %v5200, %v5192
        %v5209 = vpack.c.bf16 %v5201, %v5193
        %v5210 = vld [vmem:[%s10] sm:$0xff]
        %v5211 = vld [vmem:[%s10 + $0x8] sm:$0xf]
        %v5212 = vld [vmem:[%s10 + $0xc] sm:$0xff]
        %v5213 = vld [vmem:[%s10 + $0x14] sm:$0xf]
        %v5214 = vld [vmem:[%s10 + $0x18] sm:$0xff]
        %v5215 = vld [vmem:[%s10 + $0x20] sm:$0xf]
        %v5216 = vld [vmem:[%s10 + $0x24] sm:$0xff]
        %v5217 = vld [vmem:[%s10 + $0x2c] sm:$0xf]
        %v5218 = vld [vmem:[%s10 + $0x30] sm:$0xff]
        %v5219 = vld [vmem:[%s10 + $0x38] sm:$0xf]
        %v5220 = vld [vmem:[%s10 + $0x3c] sm:$0xff]
        %v5221 = vld [vmem:[%s10 + $0x44] sm:$0xf]
        %v5222 = vld [vmem:[%s10 + $0x48] sm:$0xff]
        %v5223 = vld [vmem:[%s10 + $0x50] sm:$0xf]
        %v5224 = vld [vmem:[%s10 + $0x54] sm:$0xff]
        %v5225 = vld [vmem:[%s10 + $0x5c] sm:$0xf]
        %v5226 = vld [vmem:[%s10 + $0x60] sm:$0xff]
        %v5227 = vld [vmem:[%s10 + $0x68] sm:$0xf]
        %v5228 = vld [vmem:[%s10 + $0x6c] sm:$0xff]
        %v5229 = vld [vmem:[%s10 + $0x74] sm:$0xf]
        %v5230 = vld [vmem:[%s10 + $0x78] sm:$0xff]
        %v5231 = vld [vmem:[%s10 + $0x80] sm:$0xf]
        %v5232 = vld [vmem:[%s10 + $0x84] sm:$0xff]
        %v5233 = vld [vmem:[%s10 + $0x8c] sm:$0xf]
        %v5234 = vld [vmem:[%s10 + $0x90] sm:$0xff]
        %v5235 = vld [vmem:[%s10 + $0x98] sm:$0xf]
        %v5236 = vld [vmem:[%s10 + $0x9c] sm:$0xff]
        %v5237 = vld [vmem:[%s10 + $0xa4] sm:$0xf]
        %v5238 = vld [vmem:[%s10 + $0xa8] sm:$0xff]
        %v5239 = vld [vmem:[%s10 + $0xb0] sm:$0xf]
        %v5240 = vld [vmem:[%s10 + $0xb4] sm:$0xff]
        %v5241 = vld [vmem:[%s10 + $0xbc] sm:$0xf]
        %v5242 = vld [vmem:[%s10 + $0xc0] sm:$0xff]
        %v5243 = vld [vmem:[%s10 + $0xc8] sm:$0xf]
        %v5244 = vld [vmem:[%s10 + $0xcc] sm:$0xff]
        %v5245 = vld [vmem:[%s10 + $0xd4] sm:$0xf]
        %v5246 = vld [vmem:[%s10 + $0xd8] sm:$0xff]
        %v5247 = vld [vmem:[%s10 + $0xe0] sm:$0xf]
        %v5248 = vld [vmem:[%s10 + $0xe4] sm:$0xff]
        %v5249 = vld [vmem:[%s10 + $0xec] sm:$0xf]
        %v5250 = vld [vmem:[%s10 + $0xf0] sm:$0xff]
        %v5251 = vld [vmem:[%s10 + $0xf8] sm:$0xf]
        %v5252 = vld [vmem:[%s10 + $0xfc] sm:$0xff]
        %v5253 = vld [vmem:[%s10 + $0x104] sm:$0xf]
        %v5254 = vld [vmem:[%s10 + $0x108] sm:$0xff]
        %v5255 = vld [vmem:[%s10 + $0x110] sm:$0xf]
        %v5256 = vld [vmem:[%s10 + $0x114] sm:$0xff]
        %v5257 = vld [vmem:[%s10 + $0x11c] sm:$0xf]
        %v5258 = vld [vmem:[%s10 + $0x120] sm:$0xff]
        %v5259 = vld [vmem:[%s10 + $0x128] sm:$0xf]
        %v5260 = vld [vmem:[%s10 + $0x12c] sm:$0xff]
        %v5261 = vld [vmem:[%s10 + $0x134] sm:$0xf]
        %v5262 = vld [vmem:[%s10 + $0x138] sm:$0xff]
        %v5263 = vld [vmem:[%s10 + $0x140] sm:$0xf]
        %v5264 = vld [vmem:[%s10 + $0x144] sm:$0xff]
        %v5265 = vld [vmem:[%s10 + $0x14c] sm:$0xf]
        %v5266 = vld [vmem:[%s10 + $0x150] sm:$0xff]
        %v5267 = vld [vmem:[%s10 + $0x158] sm:$0xf]
        %v5268 = vld [vmem:[%s10 + $0x15c] sm:$0xff]
        %v5269 = vld [vmem:[%s10 + $0x164] sm:$0xf]
        %v5270 = vld [vmem:[%s10 + $0x168] sm:$0xff]
        %v5271 = vld [vmem:[%s10 + $0x170] sm:$0xf]
        %v5272 = vld [vmem:[%s10 + $0x174] sm:$0xff]
        %v5273 = vld [vmem:[%s10 + $0x17c] sm:$0xf]
        %v5274 = vld [vmem:[%s10 + $0x180] sm:$0xff]
        %v5275 = vld [vmem:[%s10 + $0x188] sm:$0xf]
        %v5276 = vld [vmem:[%s10 + $0x18c] sm:$0xff]
        %v5277 = vld [vmem:[%s10 + $0x194] sm:$0xf]
        %v5278 = vld [vmem:[%s10 + $0x198] sm:$0xff]
        %v5279 = vld [vmem:[%s10 + $0x1a0] sm:$0xf]
        %v5280 = vld [vmem:[%s10 + $0x1a4] sm:$0xff]
        %v5281 = vld [vmem:[%s10 + $0x1ac] sm:$0xf]
        %v5282 = vld [vmem:[%s10 + $0x1b0] sm:$0xff]
        %v5283 = vld [vmem:[%s10 + $0x1b8] sm:$0xf]
        %v5284 = vld [vmem:[%s10 + $0x1bc] sm:$0xff]
        %v5285 = vld [vmem:[%s10 + $0x1c4] sm:$0xf]
        %v5286 = vld [vmem:[%s10 + $0x1c8] sm:$0xff]
        %v5287 = vld [vmem:[%s10 + $0x1d0] sm:$0xf]
        %v5288 = vld [vmem:[%s10 + $0x1d4] sm:$0xff]
        %v5289 = vld [vmem:[%s10 + $0x1dc] sm:$0xf]
        %v5290 = vld [vmem:[%s10 + $0x1e0] sm:$0xff]
        %v5291 = vld [vmem:[%s10 + $0x1e8] sm:$0xf]
        %v5292 = vld [vmem:[%s10 + $0x1ec] sm:$0xff]
        %v5293 = vld [vmem:[%s10 + $0x1f4] sm:$0xf]
        %v5294 = vld [vmem:[%s10 + $0x1f8] sm:$0xff]
        %v5295 = vld [vmem:[%s10 + $0x200] sm:$0xf]
        %v5296 = vld [vmem:[%s10 + $0x204] sm:$0xff]
        %v5297 = vld [vmem:[%s10 + $0x20c] sm:$0xf]
        %v5298 = vld [vmem:[%s10 + $0x210] sm:$0xff]
        %v5299 = vld [vmem:[%s10 + $0x218] sm:$0xf]
        %v5300 = vld [vmem:[%s10 + $0x21c] sm:$0xff]
        %v5301 = vld [vmem:[%s10 + $0x224] sm:$0xf]
        %v5302 = vld [vmem:[%s10 + $0x228] sm:$0xff]
        %v5303 = vld [vmem:[%s10 + $0x230] sm:$0xf]
        %v5304 = vld [vmem:[%s10 + $0x234] sm:$0xff]
        %v5305 = vld [vmem:[%s10 + $0x23c] sm:$0xf]
        %v5306 = vld [vmem:[%s10 + $0x240] sm:$0xff]
        %v5307 = vld [vmem:[%s10 + $0x248] sm:$0xf]
        %v5308 = vld [vmem:[%s10 + $0x24c] sm:$0xff]
        %v5309 = vld [vmem:[%s10 + $0x254] sm:$0xf]
        %v5310 = vld [vmem:[%s10 + $0x258] sm:$0xff]
        %v5311 = vld [vmem:[%s10 + $0x260] sm:$0xf]
        %v5312 = vld [vmem:[%s10 + $0x264] sm:$0xff]
        %v5313 = vld [vmem:[%s10 + $0x26c] sm:$0xf]
        %v5314 = vld [vmem:[%s10 + $0x270] sm:$0xff]
        %v5315 = vld [vmem:[%s10 + $0x278] sm:$0xf]
        %v5316 = vld [vmem:[%s10 + $0x27c] sm:$0xff]
        %v5317 = vld [vmem:[%s10 + $0x284] sm:$0xf]
        %v5318 = vld [vmem:[%s10 + $0x288] sm:$0xff]
        %v5319 = vld [vmem:[%s10 + $0x290] sm:$0xf]
        %v5320 = vld [vmem:[%s10 + $0x294] sm:$0xff]
        %v5321 = vld [vmem:[%s10 + $0x29c] sm:$0xf]
        %v5322 = vld [vmem:[%s10 + $0x2a0] sm:$0xff]
        %v5323 = vld [vmem:[%s10 + $0x2a8] sm:$0xf]
        %v5324 = vld [vmem:[%s10 + $0x2ac] sm:$0xff]
        %v5325 = vld [vmem:[%s10 + $0x2b4] sm:$0xf]
        %v5326 = vld [vmem:[%s10 + $0x2b8] sm:$0xff]
        %v5327 = vld [vmem:[%s10 + $0x2c0] sm:$0xf]
        %v5328 = vld [vmem:[%s10 + $0x2c4] sm:$0xff]
        %v5329 = vld [vmem:[%s10 + $0x2cc] sm:$0xf]
        %v5330 = vld [vmem:[%s10 + $0x2d0] sm:$0xff]
        %v5331 = vld [vmem:[%s10 + $0x2d8] sm:$0xf]
        %v5332 = vld [vmem:[%s10 + $0x2dc] sm:$0xff]
        %v5333 = vld [vmem:[%s10 + $0x2e4] sm:$0xf]
        %v5334 = vld [vmem:[%s10 + $0x2e8] sm:$0xff]
        %v5335 = vld [vmem:[%s10 + $0x2f0] sm:$0xf]
        %v5336 = vld [vmem:[%s10 + $0x2f4] sm:$0xff]
        %v5337 = vld [vmem:[%s10 + $0x2fc] sm:$0xf]
        %v5338 = vld [vmem:[%s10 + $0x300] sm:$0xff]
        %v5339 = vld [vmem:[%s10 + $0x308] sm:$0xf]
        %v5340 = vld [vmem:[%s10 + $0x30c] sm:$0xff]
        %v5341 = vld [vmem:[%s10 + $0x314] sm:$0xf]
        %v5342 = vld [vmem:[%s10 + $0x318] sm:$0xff]
        %v5343 = vld [vmem:[%s10 + $0x320] sm:$0xf]
        %v5344 = vld [vmem:[%s10 + $0x324] sm:$0xff]
        %v5345 = vld [vmem:[%s10 + $0x32c] sm:$0xf]
        %v5346 = vld [vmem:[%s10 + $0x330] sm:$0xff]
        %v5347 = vld [vmem:[%s10 + $0x338] sm:$0xf]
        %v5348 = vld [vmem:[%s10 + $0x33c] sm:$0xff]
        %v5349 = vld [vmem:[%s10 + $0x344] sm:$0xf]
        %v5350 = vld [vmem:[%s10 + $0x348] sm:$0xff]
        %v5351 = vld [vmem:[%s10 + $0x350] sm:$0xf]
        %v5352 = vld [vmem:[%s10 + $0x354] sm:$0xff]
        %v5353 = vld [vmem:[%s10 + $0x35c] sm:$0xf]
        %v5354 = vld [vmem:[%s10 + $0x360] sm:$0xff]
        %v5355 = vld [vmem:[%s10 + $0x368] sm:$0xf]
        %v5356 = vld [vmem:[%s10 + $0x36c] sm:$0xff]
        %v5357 = vld [vmem:[%s10 + $0x374] sm:$0xf]
        %v5358 = vld [vmem:[%s10 + $0x378] sm:$0xff]
        %v5359 = vld [vmem:[%s10 + $0x380] sm:$0xf]
        %v5360 = vld [vmem:[%s10 + $0x384] sm:$0xff]
        %v5361 = vld [vmem:[%s10 + $0x38c] sm:$0xf]
        %v5362 = vld [vmem:[%s10 + $0x390] sm:$0xff]
        %v5363 = vld [vmem:[%s10 + $0x398] sm:$0xf]
        %v5364 = vld [vmem:[%s10 + $0x39c] sm:$0xff]
        %v5365 = vld [vmem:[%s10 + $0x3a4] sm:$0xf]
        %v5366 = vld [vmem:[%s10 + $0x3a8] sm:$0xff]
        %v5367 = vld [vmem:[%s10 + $0x3b0] sm:$0xf]
        %v5368 = vld [vmem:[%s10 + $0x3b4] sm:$0xff]
        %v5369 = vld [vmem:[%s10 + $0x3bc] sm:$0xf]
        %v5370 = vld [vmem:[%s10 + $0x3c0] sm:$0xff]
        %v5371 = vld [vmem:[%s10 + $0x3c8] sm:$0xf]
        %v5372 = vld [vmem:[%s10 + $0x3cc] sm:$0xff]
        %v5373 = vld [vmem:[%s10 + $0x3d4] sm:$0xf]
        %v5374 = vld [vmem:[%s10 + $0x3d8] sm:$0xff]
        %v5375 = vld [vmem:[%s10 + $0x3e0] sm:$0xf]
        %v5376 = vld [vmem:[%s10 + $0x3e4] sm:$0xff]
        %v5377 = vld [vmem:[%s10 + $0x3ec] sm:$0xf]
        %v5378 = vld [vmem:[%s10 + $0x3f0] sm:$0xff]
        %v5379 = vld [vmem:[%s10 + $0x3f8] sm:$0xf]
        %v5380 = vld [vmem:[%s10 + $0x3fc] sm:$0xff]
        %v5381 = vld [vmem:[%s10 + $0x404] sm:$0xf]
        %v5382 = vld [vmem:[%s10 + $0x408] sm:$0xff]
        %v5383 = vld [vmem:[%s10 + $0x410] sm:$0xf]
        %v5384 = vld [vmem:[%s10 + $0x414] sm:$0xff]
        %v5385 = vld [vmem:[%s10 + $0x41c] sm:$0xf]
        %v5386 = vld [vmem:[%s10 + $0x420] sm:$0xff]
        %v5387 = vld [vmem:[%s10 + $0x428] sm:$0xf]
        %v5388 = vld [vmem:[%s10 + $0x42c] sm:$0xff]
        %v5389 = vld [vmem:[%s10 + $0x434] sm:$0xf]
        %v5390 = vld [vmem:[%s10 + $0x438] sm:$0xff]
        %v5391 = vld [vmem:[%s10 + $0x440] sm:$0xf]
        %v5392 = vld [vmem:[%s10 + $0x444] sm:$0xff]
        %v5393 = vld [vmem:[%s10 + $0x44c] sm:$0xf]
        %v5394 = vld [vmem:[%s10 + $0x450] sm:$0xff]
        %v5395 = vld [vmem:[%s10 + $0x458] sm:$0xf]
        %v5396 = vld [vmem:[%s10 + $0x45c] sm:$0xff]
        %v5397 = vld [vmem:[%s10 + $0x464] sm:$0xf]
        %v5398 = vld [vmem:[%s10 + $0x468] sm:$0xff]
        %v5399 = vld [vmem:[%s10 + $0x470] sm:$0xf]
        %v5400 = vld [vmem:[%s10 + $0x474] sm:$0xff]
        %v5401 = vld [vmem:[%s10 + $0x47c] sm:$0xf]
        %v5402 = vld [vmem:[%s10 + $0x480] sm:$0xff]
        %v5403 = vld [vmem:[%s10 + $0x488] sm:$0xf]
        %v5404 = vld [vmem:[%s10 + $0x48c] sm:$0xff]
        %v5405 = vld [vmem:[%s10 + $0x494] sm:$0xf]
        %v5406 = vld [vmem:[%s10 + $0x498] sm:$0xff]
        %v5407 = vld [vmem:[%s10 + $0x4a0] sm:$0xf]
        %v5408 = vld [vmem:[%s10 + $0x4a4] sm:$0xff]
        %v5409 = vld [vmem:[%s10 + $0x4ac] sm:$0xf]
        %v5410 = vld [vmem:[%s10 + $0x4b0] sm:$0xff]
        %v5411 = vld [vmem:[%s10 + $0x4b8] sm:$0xf]
        %v5412 = vld [vmem:[%s10 + $0x4bc] sm:$0xff]
        %v5413 = vld [vmem:[%s10 + $0x4c4] sm:$0xf]
        %v5414 = vld [vmem:[%s10 + $0x4c8] sm:$0xff]
        %v5415 = vld [vmem:[%s10 + $0x4d0] sm:$0xf]
        %v5416 = vld [vmem:[%s10 + $0x4d4] sm:$0xff]
        %v5417 = vld [vmem:[%s10 + $0x4dc] sm:$0xf]
        %v5418 = vld [vmem:[%s10 + $0x4e0] sm:$0xff]
        %v5419 = vld [vmem:[%s10 + $0x4e8] sm:$0xf]
        %v5420 = vld [vmem:[%s10 + $0x4ec] sm:$0xff]
        %v5421 = vld [vmem:[%s10 + $0x4f4] sm:$0xf]
        %v5422 = vld [vmem:[%s10 + $0x4f8] sm:$0xff]
        %v5423 = vld [vmem:[%s10 + $0x500] sm:$0xf]
        %v5424 = vld [vmem:[%s10 + $0x504] sm:$0xff]
        %v5425 = vld [vmem:[%s10 + $0x50c] sm:$0xf]
        %v5426 = vld [vmem:[%s10 + $0x510] sm:$0xff]
        %v5427 = vld [vmem:[%s10 + $0x518] sm:$0xf]
        %v5428 = vld [vmem:[%s10 + $0x51c] sm:$0xff]
        %v5429 = vld [vmem:[%s10 + $0x524] sm:$0xf]
        %v5430 = vld [vmem:[%s10 + $0x528] sm:$0xff]
        %v5431 = vld [vmem:[%s10 + $0x530] sm:$0xf]
        %v5432 = vld [vmem:[%s10 + $0x534] sm:$0xff]
        %v5433 = vld [vmem:[%s10 + $0x53c] sm:$0xf]
        %v5434 = vld [vmem:[%s10 + $0x540] sm:$0x11]
        %v5435 = vld [vmem:[%s10 + $0x548] sm:$0x1]
        %v5662 = vunpack.c.l.b16 %v5210
        %v5663 = vunpack.c.h.b16 %v5210
        %v5664 = vunpack.c.l.b16 %v5211
        %v5665 = vunpack.c.l.b16 %v5212
        %v5666 = vunpack.c.h.b16 %v5212
        %v5667 = vunpack.c.l.b16 %v5213
        %v5668 = vunpack.c.l.b16 %v5214
        %v5669 = vunpack.c.h.b16 %v5214
        %v5670 = vunpack.c.l.b16 %v5215
        %v5671 = vunpack.c.l.b16 %v5216
        %v5672 = vunpack.c.h.b16 %v5216
        %v5673 = vunpack.c.l.b16 %v5217
        %v5674 = vunpack.c.l.b16 %v5218
        %v5675 = vunpack.c.h.b16 %v5218
        %v5676 = vunpack.c.l.b16 %v5219
        %v5677 = vunpack.c.l.b16 %v5220
        %v5678 = vunpack.c.h.b16 %v5220
        %v5679 = vunpack.c.l.b16 %v5221
        %v5680 = vunpack.c.l.b16 %v5222
        %v5681 = vunpack.c.h.b16 %v5222
        %v5682 = vunpack.c.l.b16 %v5223
        %v5683 = vunpack.c.l.b16 %v5224
        %v5684 = vunpack.c.h.b16 %v5224
        %v5685 = vunpack.c.l.b16 %v5225
        %v5686 = vunpack.c.l.b16 %v5226
        %v5687 = vunpack.c.h.b16 %v5226
        %v5688 = vunpack.c.l.b16 %v5227
        %v5689 = vunpack.c.l.b16 %v5228
        %v5690 = vunpack.c.h.b16 %v5228
        %v5691 = vunpack.c.l.b16 %v5229
        %v5692 = vunpack.c.l.b16 %v5230
        %v5693 = vunpack.c.h.b16 %v5230
        %v5694 = vunpack.c.l.b16 %v5231
        %v5695 = vunpack.c.l.b16 %v5232
        %v5696 = vunpack.c.h.b16 %v5232
        %v5697 = vunpack.c.l.b16 %v5233
        %v5698 = vunpack.c.l.b16 %v5234
        %v5699 = vunpack.c.h.b16 %v5234
        %v5700 = vunpack.c.l.b16 %v5235
        %v5701 = vunpack.c.l.b16 %v5236
        %v5702 = vunpack.c.h.b16 %v5236
        %v5703 = vunpack.c.l.b16 %v5237
        %v5704 = vunpack.c.l.b16 %v5238
        %v5705 = vunpack.c.h.b16 %v5238
        %v5706 = vunpack.c.l.b16 %v5239
        %v5707 = vunpack.c.l.b16 %v5240
        %v5708 = vunpack.c.h.b16 %v5240
        %v5709 = vunpack.c.l.b16 %v5241
        %v5710 = vunpack.c.l.b16 %v5242
        %v5711 = vunpack.c.h.b16 %v5242
        %v5712 = vunpack.c.l.b16 %v5243
        %v5713 = vunpack.c.l.b16 %v5244
        %v5714 = vunpack.c.h.b16 %v5244
        %v5715 = vunpack.c.l.b16 %v5245
        %v5716 = vunpack.c.l.b16 %v5246
        %v5717 = vunpack.c.h.b16 %v5246
        %v5718 = vunpack.c.l.b16 %v5247
        %v5719 = vunpack.c.l.b16 %v5248
        %v5720 = vunpack.c.h.b16 %v5248
        %v5721 = vunpack.c.l.b16 %v5249
        %v5722 = vunpack.c.l.b16 %v5250
        %v5723 = vunpack.c.h.b16 %v5250
        %v5724 = vunpack.c.l.b16 %v5251
        %v5725 = vunpack.c.l.b16 %v5252
        %v5726 = vunpack.c.h.b16 %v5252
        %v5727 = vunpack.c.l.b16 %v5253
        %v5728 = vunpack.c.l.b16 %v5254
        %v5729 = vunpack.c.h.b16 %v5254
        %v5730 = vunpack.c.l.b16 %v5255
        %v5731 = vunpack.c.l.b16 %v5256
        %v5732 = vunpack.c.h.b16 %v5256
        %v5733 = vunpack.c.l.b16 %v5257
        %v5734 = vunpack.c.l.b16 %v5258
        %v5735 = vunpack.c.h.b16 %v5258
        %v5736 = vunpack.c.l.b16 %v5259
        %v5737 = vunpack.c.l.b16 %v5260
        %v5738 = vunpack.c.h.b16 %v5260
        %v5739 = vunpack.c.l.b16 %v5261
        %v5740 = vunpack.c.l.b16 %v5262
        %v5741 = vunpack.c.h.b16 %v5262
        %v5742 = vunpack.c.l.b16 %v5263
        %v5743 = vunpack.c.l.b16 %v5264
        %v5744 = vunpack.c.h.b16 %v5264
        %v5745 = vunpack.c.l.b16 %v5265
        %v5746 = vunpack.c.l.b16 %v5266
        %v5747 = vunpack.c.h.b16 %v5266
        %v5748 = vunpack.c.l.b16 %v5267
        %v5749 = vunpack.c.l.b16 %v5268
        %v5750 = vunpack.c.h.b16 %v5268
        %v5751 = vunpack.c.l.b16 %v5269
        %v5752 = vunpack.c.l.b16 %v5270
        %v5753 = vunpack.c.h.b16 %v5270
        %v5754 = vunpack.c.l.b16 %v5271
        %v5755 = vunpack.c.l.b16 %v5272
        %v5756 = vunpack.c.h.b16 %v5272
        %v5757 = vunpack.c.l.b16 %v5273
        %v5758 = vunpack.c.l.b16 %v5274
        %v5759 = vunpack.c.h.b16 %v5274
        %v5760 = vunpack.c.l.b16 %v5275
        %v5761 = vunpack.c.l.b16 %v5276
        %v5762 = vunpack.c.h.b16 %v5276
        %v5763 = vunpack.c.l.b16 %v5277
        %v5764 = vunpack.c.l.b16 %v5278
        %v5765 = vunpack.c.h.b16 %v5278
        %v5766 = vunpack.c.l.b16 %v5279
        %v5767 = vunpack.c.l.b16 %v5280
        %v5768 = vunpack.c.h.b16 %v5280
        %v5769 = vunpack.c.l.b16 %v5281
        %v5770 = vunpack.c.l.b16 %v5282
        %v5771 = vunpack.c.h.b16 %v5282
        %v5772 = vunpack.c.l.b16 %v5283
        %v5773 = vunpack.c.l.b16 %v5284
        %v5774 = vunpack.c.h.b16 %v5284
        %v5775 = vunpack.c.l.b16 %v5285
        %v5776 = vunpack.c.l.b16 %v5286
        %v5777 = vunpack.c.h.b16 %v5286
        %v5778 = vunpack.c.l.b16 %v5287
        %v5779 = vunpack.c.l.b16 %v5288
        %v5780 = vunpack.c.h.b16 %v5288
        %v5781 = vunpack.c.l.b16 %v5289
        %v5782 = vunpack.c.l.b16 %v5290
        %v5783 = vunpack.c.h.b16 %v5290
        %v5784 = vunpack.c.l.b16 %v5291
        %v5785 = vunpack.c.l.b16 %v5292
        %v5786 = vunpack.c.h.b16 %v5292
        %v5787 = vunpack.c.l.b16 %v5293
        %v5788 = vunpack.c.l.b16 %v5294
        %v5789 = vunpack.c.h.b16 %v5294
        %v5790 = vunpack.c.l.b16 %v5295
        %v5791 = vunpack.c.l.b16 %v5296
        %v5792 = vunpack.c.h.b16 %v5296
        %v5793 = vunpack.c.l.b16 %v5297
        %v5794 = vunpack.c.l.b16 %v5298
        %v5795 = vunpack.c.h.b16 %v5298
        %v5796 = vunpack.c.l.b16 %v5299
        %v5797 = vunpack.c.l.b16 %v5300
        %v5798 = vunpack.c.h.b16 %v5300
        %v5799 = vunpack.c.l.b16 %v5301
        %v5800 = vunpack.c.l.b16 %v5302
        %v5801 = vunpack.c.h.b16 %v5302
        %v5802 = vunpack.c.l.b16 %v5303
        %v5803 = vunpack.c.l.b16 %v5304
        %v5804 = vunpack.c.h.b16 %v5304
        %v5805 = vunpack.c.l.b16 %v5305
        %v5806 = vunpack.c.l.b16 %v5306
        %v5807 = vunpack.c.h.b16 %v5306
        %v5808 = vunpack.c.l.b16 %v5307
        %v5809 = vunpack.c.l.b16 %v5308
        %v5810 = vunpack.c.h.b16 %v5308
        %v5811 = vunpack.c.l.b16 %v5309
        %v5812 = vunpack.c.l.b16 %v5310
        %v5813 = vunpack.c.h.b16 %v5310
        %v5814 = vunpack.c.l.b16 %v5311
        %v5815 = vunpack.c.l.b16 %v5312
        %v5816 = vunpack.c.h.b16 %v5312
        %v5817 = vunpack.c.l.b16 %v5313
        %v5818 = vunpack.c.l.b16 %v5314
        %v5819 = vunpack.c.h.b16 %v5314
        %v5820 = vunpack.c.l.b16 %v5315
        %v5821 = vunpack.c.l.b16 %v5316
        %v5822 = vunpack.c.h.b16 %v5316
        %v5823 = vunpack.c.l.b16 %v5317
        %v5824 = vunpack.c.l.b16 %v5318
        %v5825 = vunpack.c.h.b16 %v5318
        %v5826 = vunpack.c.l.b16 %v5319
        %v5827 = vunpack.c.l.b16 %v5320
        %v5828 = vunpack.c.h.b16 %v5320
        %v5829 = vunpack.c.l.b16 %v5321
        %v5830 = vunpack.c.l.b16 %v5322
        %v5831 = vunpack.c.h.b16 %v5322
        %v5832 = vunpack.c.l.b16 %v5323
        %v5833 = vunpack.c.l.b16 %v5324
        %v5834 = vunpack.c.h.b16 %v5324
        %v5835 = vunpack.c.l.b16 %v5325
        %v5836 = vunpack.c.l.b16 %v5326
        %v5837 = vunpack.c.h.b16 %v5326
        %v5838 = vunpack.c.l.b16 %v5327
        %v5839 = vunpack.c.l.b16 %v5328
        %v5840 = vunpack.c.h.b16 %v5328
        %v5841 = vunpack.c.l.b16 %v5329
        %v5842 = vunpack.c.l.b16 %v5330
        %v5843 = vunpack.c.h.b16 %v5330
        %v5844 = vunpack.c.l.b16 %v5331
        %v5845 = vunpack.c.l.b16 %v5332
        %v5846 = vunpack.c.h.b16 %v5332
        %v5847 = vunpack.c.l.b16 %v5333
        %v5848 = vunpack.c.l.b16 %v5334
        %v5849 = vunpack.c.h.b16 %v5334
        %v5850 = vunpack.c.l.b16 %v5335
        %v5851 = vunpack.c.l.b16 %v5336
        %v5852 = vunpack.c.h.b16 %v5336
        %v5853 = vunpack.c.l.b16 %v5337
        %v5854 = vunpack.c.l.b16 %v5338
        %v5855 = vunpack.c.h.b16 %v5338
        %v5856 = vunpack.c.l.b16 %v5339
        %v5857 = vunpack.c.l.b16 %v5340
        %v5858 = vunpack.c.h.b16 %v5340
        %v5859 = vunpack.c.l.b16 %v5341
        %v5860 = vunpack.c.l.b16 %v5342
        %v5861 = vunpack.c.h.b16 %v5342
        %v5862 = vunpack.c.l.b16 %v5343
        %v5863 = vunpack.c.l.b16 %v5344
        %v5864 = vunpack.c.h.b16 %v5344
        %v5865 = vunpack.c.l.b16 %v5345
        %v5866 = vunpack.c.l.b16 %v5346
        %v5867 = vunpack.c.h.b16 %v5346
        %v5868 = vunpack.c.l.b16 %v5347
        %v5869 = vunpack.c.l.b16 %v5348
        %v5870 = vunpack.c.h.b16 %v5348
        %v5871 = vunpack.c.l.b16 %v5349
        %v5872 = vunpack.c.l.b16 %v5350
        %v5873 = vunpack.c.h.b16 %v5350
        %v5874 = vunpack.c.l.b16 %v5351
        %v5875 = vunpack.c.l.b16 %v5352
        %v5876 = vunpack.c.h.b16 %v5352
        %v5877 = vunpack.c.l.b16 %v5353
        %v5878 = vunpack.c.l.b16 %v5354
        %v5879 = vunpack.c.h.b16 %v5354
        %v5880 = vunpack.c.l.b16 %v5355
        %v5881 = vunpack.c.l.b16 %v5356
        %v5882 = vunpack.c.h.b16 %v5356
        %v5883 = vunpack.c.l.b16 %v5357
        %v5884 = vunpack.c.l.b16 %v5358
        %v5885 = vunpack.c.h.b16 %v5358
        %v5886 = vunpack.c.l.b16 %v5359
        %v5887 = vunpack.c.l.b16 %v5360
        %v5888 = vunpack.c.h.b16 %v5360
        %v5889 = vunpack.c.l.b16 %v5361
        %v5890 = vunpack.c.l.b16 %v5362
        %v5891 = vunpack.c.h.b16 %v5362
        %v5892 = vunpack.c.l.b16 %v5363
        %v5893 = vunpack.c.l.b16 %v5364
        %v5894 = vunpack.c.h.b16 %v5364
        %v5895 = vunpack.c.l.b16 %v5365
        %v5896 = vunpack.c.l.b16 %v5366
        %v5897 = vunpack.c.h.b16 %v5366
        %v5898 = vunpack.c.l.b16 %v5367
        %v5899 = vunpack.c.l.b16 %v5368
        %v5900 = vunpack.c.h.b16 %v5368
        %v5901 = vunpack.c.l.b16 %v5369
        %v5902 = vunpack.c.l.b16 %v5370
        %v5903 = vunpack.c.h.b16 %v5370
        %v5904 = vunpack.c.l.b16 %v5371
        %v5905 = vunpack.c.l.b16 %v5372
        %v5906 = vunpack.c.h.b16 %v5372
        %v5907 = vunpack.c.l.b16 %v5373
        %v5908 = vunpack.c.l.b16 %v5374
        %v5909 = vunpack.c.h.b16 %v5374
        %v5910 = vunpack.c.l.b16 %v5375
        %v5911 = vunpack.c.l.b16 %v5376
        %v5912 = vunpack.c.h.b16 %v5376
        %v5913 = vunpack.c.l.b16 %v5377
        %v5914 = vunpack.c.l.b16 %v5378
        %v5915 = vunpack.c.h.b16 %v5378
        %v5916 = vunpack.c.l.b16 %v5379
        %v5917 = vunpack.c.l.b16 %v5380
        %v5918 = vunpack.c.h.b16 %v5380
        %v5919 = vunpack.c.l.b16 %v5381
        %v5920 = vunpack.c.l.b16 %v5382
        %v5921 = vunpack.c.h.b16 %v5382
        %v5922 = vunpack.c.l.b16 %v5383
        %v5923 = vunpack.c.l.b16 %v5384
        %v5924 = vunpack.c.h.b16 %v5384
        %v5925 = vunpack.c.l.b16 %v5385
        %v5926 = vunpack.c.l.b16 %v5386
        %v5927 = vunpack.c.h.b16 %v5386
        %v5928 = vunpack.c.l.b16 %v5387
        %v5929 = vunpack.c.l.b16 %v5388
        %v5930 = vunpack.c.h.b16 %v5388
        %v5931 = vunpack.c.l.b16 %v5389
        %v5932 = vunpack.c.l.b16 %v5390
        %v5933 = vunpack.c.h.b16 %v5390
        %v5934 = vunpack.c.l.b16 %v5391
        %v5935 = vunpack.c.l.b16 %v5392
        %v5936 = vunpack.c.h.b16 %v5392
        %v5937 = vunpack.c.l.b16 %v5393
        %v5938 = vunpack.c.l.b16 %v5394
        %v5939 = vunpack.c.h.b16 %v5394
        %v5940 = vunpack.c.l.b16 %v5395
        %v5941 = vunpack.c.l.b16 %v5396
        %v5942 = vunpack.c.h.b16 %v5396
        %v5943 = vunpack.c.l.b16 %v5397
        %v5944 = vunpack.c.l.b16 %v5398
        %v5945 = vunpack.c.h.b16 %v5398
        %v5946 = vunpack.c.l.b16 %v5399
        %v5947 = vunpack.c.l.b16 %v5400
        %v5948 = vunpack.c.h.b16 %v5400
        %v5949 = vunpack.c.l.b16 %v5401
        %v5950 = vunpack.c.l.b16 %v5402
        %v5951 = vunpack.c.h.b16 %v5402
        %v5952 = vunpack.c.l.b16 %v5403
        %v5953 = vunpack.c.l.b16 %v5404
        %v5954 = vunpack.c.h.b16 %v5404
        %v5955 = vunpack.c.l.b16 %v5405
        %v5956 = vunpack.c.l.b16 %v5406
        %v5957 = vunpack.c.h.b16 %v5406
        %v5958 = vunpack.c.l.b16 %v5407
        %v5959 = vunpack.c.l.b16 %v5408
        %v5960 = vunpack.c.h.b16 %v5408
        %v5961 = vunpack.c.l.b16 %v5409
        %v5962 = vunpack.c.l.b16 %v5410
        %v5963 = vunpack.c.h.b16 %v5410
        %v5964 = vunpack.c.l.b16 %v5411
        %v5965 = vunpack.c.l.b16 %v5412
        %v5966 = vunpack.c.h.b16 %v5412
        %v5967 = vunpack.c.l.b16 %v5413
        %v5968 = vunpack.c.l.b16 %v5414
        %v5969 = vunpack.c.h.b16 %v5414
        %v5970 = vunpack.c.l.b16 %v5415
        %v5971 = vunpack.c.l.b16 %v5416
        %v5972 = vunpack.c.h.b16 %v5416
        %v5973 = vunpack.c.l.b16 %v5417
        %v5974 = vunpack.c.l.b16 %v5418
        %v5975 = vunpack.c.h.b16 %v5418
        %v5976 = vunpack.c.l.b16 %v5419
        %v5977 = vunpack.c.l.b16 %v5420
        %v5978 = vunpack.c.h.b16 %v5420
        %v5979 = vunpack.c.l.b16 %v5421
        %v5980 = vunpack.c.l.b16 %v5422
        %v5981 = vunpack.c.h.b16 %v5422
        %v5982 = vunpack.c.l.b16 %v5423
        %v5983 = vunpack.c.l.b16 %v5424
        %v5984 = vunpack.c.h.b16 %v5424
        %v5985 = vunpack.c.l.b16 %v5425
        %v5986 = vunpack.c.l.b16 %v5426
        %v5987 = vunpack.c.h.b16 %v5426
        %v5988 = vunpack.c.l.b16 %v5427
        %v5989 = vunpack.c.l.b16 %v5428
        %v5990 = vunpack.c.h.b16 %v5428
        %v5991 = vunpack.c.l.b16 %v5429
        %v5992 = vunpack.c.l.b16 %v5430
        %v5993 = vunpack.c.h.b16 %v5430
        %v5994 = vunpack.c.l.b16 %v5431
        %v5995 = vunpack.c.l.b16 %v5432
        %v5996 = vunpack.c.h.b16 %v5432
        %v5997 = vunpack.c.l.b16 %v5433
        %v5998 = vunpack.c.l.b16 %v5434
        %v5999 = vunpack.c.h.b16 %v5434
        %v6000 = vunpack.c.l.b16 %v5435
        %v6001 = vpack.c.b16 %v5665, %v5662
        %v6002 = vpack.c.b16 %v5666, %v5663
        %v6003 = vpack.c.b16 %v5667, %v5664
        %v6004 = vpack.c.b16 %v5671, %v5668
        %v6005 = vpack.c.b16 %v5672, %v5669
        %v6006 = vpack.c.b16 %v5673, %v5670
        %v6007 = vpack.c.b16 %v5677, %v5674
        %v6008 = vpack.c.b16 %v5678, %v5675
        %v6009 = vpack.c.b16 %v5679, %v5676
        %v6010 = vpack.c.b16 %v5683, %v5680
        %v6011 = vpack.c.b16 %v5684, %v5681
        %v6012 = vpack.c.b16 %v5685, %v5682
        %v6013 = vpack.c.b16 %v5689, %v5686
        %v6014 = vpack.c.b16 %v5690, %v5687
        %v6015 = vpack.c.b16 %v5691, %v5688
        %v6016 = vpack.c.b16 %v5695, %v5692
        %v6017 = vpack.c.b16 %v5696, %v5693
        %v6018 = vpack.c.b16 %v5697, %v5694
        %v6019 = vpack.c.b16 %v5701, %v5698
        %v6020 = vpack.c.b16 %v5702, %v5699
        %v6021 = vpack.c.b16 %v5703, %v5700
        %v6022 = vpack.c.b16 %v5707, %v5704
        %v6023 = vpack.c.b16 %v5708, %v5705
        %v6024 = vpack.c.b16 %v5709, %v5706
        %v6025 = vpack.c.b16 %v5713, %v5710
        %v6026 = vpack.c.b16 %v5714, %v5711
        %v6027 = vpack.c.b16 %v5715, %v5712
        %v6028 = vpack.c.b16 %v5719, %v5716
        %v6029 = vpack.c.b16 %v5720, %v5717
        %v6030 = vpack.c.b16 %v5721, %v5718
        %v6031 = vpack.c.b16 %v5725, %v5722
        %v6032 = vpack.c.b16 %v5726, %v5723
        %v6033 = vpack.c.b16 %v5727, %v5724
        %v6034 = vpack.c.b16 %v5731, %v5728
        %v6035 = vpack.c.b16 %v5732, %v5729
        %v6036 = vpack.c.b16 %v5733, %v5730
        %v6037 = vpack.c.b16 %v5737, %v5734
        %v6038 = vpack.c.b16 %v5738, %v5735
        %v6039 = vpack.c.b16 %v5739, %v5736
        %v6040 = vpack.c.b16 %v5743, %v5740
        %v6041 = vpack.c.b16 %v5744, %v5741
        %v6042 = vpack.c.b16 %v5745, %v5742
        %v6043 = vpack.c.b16 %v5749, %v5746
        %v6044 = vpack.c.b16 %v5750, %v5747
        %v6045 = vpack.c.b16 %v5751, %v5748
        %v6046 = vpack.c.b16 %v5755, %v5752
        %v6047 = vpack.c.b16 %v5756, %v5753
        %v6048 = vpack.c.b16 %v5757, %v5754
        %v6049 = vpack.c.b16 %v5761, %v5758
        %v6050 = vpack.c.b16 %v5762, %v5759
        %v6051 = vpack.c.b16 %v5763, %v5760
        %v6052 = vpack.c.b16 %v5767, %v5764
        %v6053 = vpack.c.b16 %v5768, %v5765
        %v6054 = vpack.c.b16 %v5769, %v5766
        %v6055 = vpack.c.b16 %v5773, %v5770
        %v6056 = vpack.c.b16 %v5774, %v5771
        %v6057 = vpack.c.b16 %v5775, %v5772
        %v6058 = vpack.c.b16 %v5779, %v5776
        %v6059 = vpack.c.b16 %v5780, %v5777
        %v6060 = vpack.c.b16 %v5781, %v5778
        %v6061 = vpack.c.b16 %v5785, %v5782
        %v6062 = vpack.c.b16 %v5786, %v5783
        %v6063 = vpack.c.b16 %v5787, %v5784
        %v6064 = vpack.c.b16 %v5791, %v5788
        %v6065 = vpack.c.b16 %v5792, %v5789
        %v6066 = vpack.c.b16 %v5793, %v5790
        %v6067 = vpack.c.b16 %v5797, %v5794
        %v6068 = vpack.c.b16 %v5798, %v5795
        %v6069 = vpack.c.b16 %v5799, %v5796
        %v6070 = vpack.c.b16 %v5803, %v5800
        %v6071 = vpack.c.b16 %v5804, %v5801
        %v6072 = vpack.c.b16 %v5805, %v5802
        %v6073 = vpack.c.b16 %v5809, %v5806
        %v6074 = vpack.c.b16 %v5810, %v5807
        %v6075 = vpack.c.b16 %v5811, %v5808
        %v6076 = vpack.c.b16 %v5815, %v5812
        %v6077 = vpack.c.b16 %v5816, %v5813
        %v6078 = vpack.c.b16 %v5817, %v5814
        %v6079 = vpack.c.b16 %v5821, %v5818
        %v6080 = vpack.c.b16 %v5822, %v5819
        %v6081 = vpack.c.b16 %v5823, %v5820
        %v6082 = vpack.c.b16 %v5827, %v5824
        %v6083 = vpack.c.b16 %v5828, %v5825
        %v6084 = vpack.c.b16 %v5829, %v5826
        %v6085 = vpack.c.b16 %v5833, %v5830
        %v6086 = vpack.c.b16 %v5834, %v5831
        %v6087 = vpack.c.b16 %v5835, %v5832
        %v6088 = vpack.c.b16 %v5839, %v5836
        %v6089 = vpack.c.b16 %v5840, %v5837
        %v6090 = vpack.c.b16 %v5841, %v5838
        %v6091 = vpack.c.b16 %v5845, %v5842
        %v6092 = vpack.c.b16 %v5846, %v5843
        %v6093 = vpack.c.b16 %v5847, %v5844
        %v6094 = vpack.c.b16 %v5851, %v5848
        %v6095 = vpack.c.b16 %v5852, %v5849
        %v6096 = vpack.c.b16 %v5853, %v5850
        %v6097 = vpack.c.b16 %v5857, %v5854
        %v6098 = vpack.c.b16 %v5858, %v5855
        %v6099 = vpack.c.b16 %v5859, %v5856
        %v6100 = vpack.c.b16 %v5863, %v5860
        %v6101 = vpack.c.b16 %v5864, %v5861
        %v6102 = vpack.c.b16 %v5865, %v5862
        %v6103 = vpack.c.b16 %v5869, %v5866
        %v6104 = vpack.c.b16 %v5870, %v5867
        %v6105 = vpack.c.b16 %v5871, %v5868
        %v6106 = vpack.c.b16 %v5875, %v5872
        %v6107 = vpack.c.b16 %v5876, %v5873
        %v6108 = vpack.c.b16 %v5877, %v5874
        %v6109 = vpack.c.b16 %v5881, %v5878
        %v6110 = vpack.c.b16 %v5882, %v5879
        %v6111 = vpack.c.b16 %v5883, %v5880
        %v6112 = vpack.c.b16 %v5887, %v5884
        %v6113 = vpack.c.b16 %v5888, %v5885
        %v6114 = vpack.c.b16 %v5889, %v5886
        %v6115 = vpack.c.b16 %v5893, %v5890
        %v6116 = vpack.c.b16 %v5894, %v5891
        %v6117 = vpack.c.b16 %v5895, %v5892
        %v6118 = vpack.c.b16 %v5899, %v5896
        %v6119 = vpack.c.b16 %v5900, %v5897
        %v6120 = vpack.c.b16 %v5901, %v5898
        %v6121 = vpack.c.b16 %v5905, %v5902
        %v6122 = vpack.c.b16 %v5906, %v5903
        %v6123 = vpack.c.b16 %v5907, %v5904
        %v6124 = vpack.c.b16 %v5911, %v5908
        %v6125 = vpack.c.b16 %v5912, %v5909
        %v6126 = vpack.c.b16 %v5913, %v5910
        %v6127 = vpack.c.b16 %v5917, %v5914
        %v6128 = vpack.c.b16 %v5918, %v5915
        %v6129 = vpack.c.b16 %v5919, %v5916
        %v6130 = vpack.c.b16 %v5923, %v5920
        %v6131 = vpack.c.b16 %v5924, %v5921
        %v6132 = vpack.c.b16 %v5925, %v5922
        %v6133 = vpack.c.b16 %v5929, %v5926
        %v6134 = vpack.c.b16 %v5930, %v5927
        %v6135 = vpack.c.b16 %v5931, %v5928
        %v6136 = vpack.c.b16 %v5935, %v5932
        %v6137 = vpack.c.b16 %v5936, %v5933
        %v6138 = vpack.c.b16 %v5937, %v5934
        %v6139 = vpack.c.b16 %v5941, %v5938
        %v6140 = vpack.c.b16 %v5942, %v5939
        %v6141 = vpack.c.b16 %v5943, %v5940
        %v6142 = vpack.c.b16 %v5947, %v5944
        %v6143 = vpack.c.b16 %v5948, %v5945
        %v6144 = vpack.c.b16 %v5949, %v5946
        %v6145 = vpack.c.b16 %v5953, %v5950
        %v6146 = vpack.c.b16 %v5954, %v5951
        %v6147 = vpack.c.b16 %v5955, %v5952
        %v6148 = vpack.c.b16 %v5959, %v5956
        %v6149 = vpack.c.b16 %v5960, %v5957
        %v6150 = vpack.c.b16 %v5961, %v5958
        %v6151 = vpack.c.b16 %v5965, %v5962
        %v6152 = vpack.c.b16 %v5966, %v5963
        %v6153 = vpack.c.b16 %v5967, %v5964
        %v6154 = vpack.c.b16 %v5971, %v5968
        %v6155 = vpack.c.b16 %v5972, %v5969
        %v6156 = vpack.c.b16 %v5973, %v5970
        %v6157 = vpack.c.b16 %v5977, %v5974
        %v6158 = vpack.c.b16 %v5978, %v5975
        %v6159 = vpack.c.b16 %v5979, %v5976
        %v6160 = vpack.c.b16 %v5983, %v5980
        %v6161 = vpack.c.b16 %v5984, %v5981
        %v6162 = vpack.c.b16 %v5985, %v5982
        %v6163 = vpack.c.b16 %v5989, %v5986
        %v6164 = vpack.c.b16 %v5990, %v5987
        %v6165 = vpack.c.b16 %v5991, %v5988
        %v6166 = vpack.c.b16 %v5995, %v5992
        %v6167 = vpack.c.b16 %v5996, %v5993
        %v6168 = vpack.c.b16 %v5997, %v5994
        %v6169 = vpack.c.b16 %v5998, %v5998
        %v6170 = vpack.c.b16 %v5999, %v5999
        %v6171 = vpack.c.b16 %v6000, %v6000
        %vm6340 = vcmask 7168
        %v6342 = vsel %vm6340, %v5209, 0
        %vm6344 = vcmask 1040384
        %v6345 = vsel 0, 4294967295, 65535
        %v6346 = vsel %vm6344, %v6345, 0
        %v6348 = vand.u32 %v6169, %v6346
        %v6351 = vand.u32 %v6170, %v6346
        %v6354 = vand.u32 %v6171, %v6346
        %6356 = vmatpush.bf16.msra.mxu0 %v6022
        %6357 = vmatpush.bf16.msra.mxu0 %v6019
        %6358 = vmatpush.bf16.msra.mxu0 %v6016
        %6359 = vmatpush.bf16.msra.mxu0 %v6013
        %6360 = vmatpush.bf16.msra.mxu0 %v6010
        %6361 = vmatpush.bf16.msra.mxu0 %v6007
        %6362 = vmatpush.bf16.msra.mxu0 %v6004
        %6363 = vmatpush.bf16.msra.mxu0 %v6001
        %6364 = vmatmul.bf16.gmra.mxu0 %v5202
        %v6365 = vpop.f32.mrf.mxu0
        %v6366 = vadd.f32 0.0, %v6365
        %v6367 = vpop.f32.mrf.mxu0
        %v6368 = vadd.f32 0.0, %v6367
        %6369 = vdwg.mxu0
        %6370 = vmatpush.bf16.msra.mxu0 %v6046
        %6371 = vmatpush.bf16.msra.mxu0 %v6043
        %6372 = vmatpush.bf16.msra.mxu0 %v6040
        %6373 = vmatpush.bf16.msra.mxu0 %v6037
        %6374 = vmatpush.bf16.msra.mxu0 %v6034
        %6375 = vmatpush.bf16.msra.mxu0 %v6031
        %6376 = vmatpush.bf16.msra.mxu0 %v6028
        %6377 = vmatpush.bf16.msra.mxu0 %v6025
        %6378 = vmatmul.bf16.gmra.mxu0 %v5203
        %v6379 = vpop.f32.mrf.mxu0
        %v6380 = vadd.f32 %v6366, %v6379
        %v6381 = vpop.f32.mrf.mxu0
        %v6382 = vadd.f32 %v6368, %v6381
        %6383 = vdwg.mxu0
        %6384 = vmatpush.bf16.msra.mxu0 %v6070
        %6385 = vmatpush.bf16.msra.mxu0 %v6067
        %6386 = vmatpush.bf16.msra.mxu0 %v6064
        %6387 = vmatpush.bf16.msra.mxu0 %v6061
        %6388 = vmatpush.bf16.msra.mxu0 %v6058
        %6389 = vmatpush.bf16.msra.mxu0 %v6055
        %6390 = vmatpush.bf16.msra.mxu0 %v6052
        %6391 = vmatpush.bf16.msra.mxu0 %v6049
        %6392 = vmatmul.bf16.gmra.mxu0 %v5204
        %v6393 = vpop.f32.mrf.mxu0
        %v6394 = vadd.f32 %v6380, %v6393
        %v6395 = vpop.f32.mrf.mxu0
        %v6396 = vadd.f32 %v6382, %v6395
        %6397 = vdwg.mxu0
        %6398 = vmatpush.bf16.msra.mxu0 %v6094
        %6399 = vmatpush.bf16.msra.mxu0 %v6091
        %6400 = vmatpush.bf16.msra.mxu0 %v6088
        %6401 = vmatpush.bf16.msra.mxu0 %v6085
        %6402 = vmatpush.bf16.msra.mxu0 %v6082
        %6403 = vmatpush.bf16.msra.mxu0 %v6079
        %6404 = vmatpush.bf16.msra.mxu0 %v6076
        %6405 = vmatpush.bf16.msra.mxu0 %v6073
        %6406 = vmatmul.bf16.gmra.mxu0 %v5205
        %v6407 = vpop.f32.mrf.mxu0
        %v6408 = vadd.f32 %v6394, %v6407
        %v6409 = vpop.f32.mrf.mxu0
        %v6410 = vadd.f32 %v6396, %v6409
        %6411 = vdwg.mxu0
        %6412 = vmatpush.bf16.msra.mxu0 %v6118
        %6413 = vmatpush.bf16.msra.mxu0 %v6115
        %6414 = vmatpush.bf16.msra.mxu0 %v6112
        %6415 = vmatpush.bf16.msra.mxu0 %v6109
        %6416 = vmatpush.bf16.msra.mxu0 %v6106
        %6417 = vmatpush.bf16.msra.mxu0 %v6103
        %6418 = vmatpush.bf16.msra.mxu0 %v6100
        %6419 = vmatpush.bf16.msra.mxu0 %v6097
        %6420 = vmatmul.bf16.gmra.mxu0 %v5206
        %v6421 = vpop.f32.mrf.mxu0
        %v6422 = vadd.f32 %v6408, %v6421
        %v6423 = vpop.f32.mrf.mxu0
        %v6424 = vadd.f32 %v6410, %v6423
        %6425 = vdwg.mxu0
        %6426 = vmatpush.bf16.msra.mxu0 %v6142
        %6427 = vmatpush.bf16.msra.mxu0 %v6139
        %6428 = vmatpush.bf16.msra.mxu0 %v6136
        %6429 = vmatpush.bf16.msra.mxu0 %v6133
        %6430 = vmatpush.bf16.msra.mxu0 %v6130
        %6431 = vmatpush.bf16.msra.mxu0 %v6127
        %6432 = vmatpush.bf16.msra.mxu0 %v6124
        %6433 = vmatpush.bf16.msra.mxu0 %v6121
        %6434 = vmatmul.bf16.gmra.mxu0 %v5207
        %v6435 = vpop.f32.mrf.mxu0
        %v6436 = vadd.f32 %v6422, %v6435
        %v6437 = vpop.f32.mrf.mxu0
        %v6438 = vadd.f32 %v6424, %v6437
        %6439 = vdwg.mxu0
        %6440 = vmatpush.bf16.msra.mxu0 %v6166
        %6441 = vmatpush.bf16.msra.mxu0 %v6163
        %6442 = vmatpush.bf16.msra.mxu0 %v6160
        %6443 = vmatpush.bf16.msra.mxu0 %v6157
        %6444 = vmatpush.bf16.msra.mxu0 %v6154
        %6445 = vmatpush.bf16.msra.mxu0 %v6151
        %6446 = vmatpush.bf16.msra.mxu0 %v6148
        %6447 = vmatpush.bf16.msra.mxu0 %v6145
        %6448 = vmatmul.bf16.gmra.mxu0 %v5208
        %v6449 = vpop.f32.mrf.mxu0
        %v6450 = vadd.f32 %v6436, %v6449
        %v6451 = vpop.f32.mrf.mxu0
        %v6452 = vadd.f32 %v6438, %v6451
        %6453 = vdwg.mxu0
        %6454 = vmatpush.bf16.msra.mxu0 0
        %6455 = vmatpush.bf16.msra.mxu0 0
        %6456 = vmatpush.bf16.msra.mxu0 0
        %6457 = vmatpush.bf16.msra.mxu0 0
        %6458 = vmatpush.bf16.msra.mxu0 0
        %6459 = vmatpush.bf16.msra.mxu0 0
        %6460 = vmatpush.bf16.msra.mxu0 0
        %6461 = vmatpush.bf16.msra.mxu0 %v6348
        %6462 = vmatmul.bf16.gmra.mxu0 %v6342
        %v6463 = vpop.f32.mrf.mxu0
        %v6464 = vadd.f32 %v6450, %v6463
        %v6465 = vpop.f32.mrf.mxu0
        %v6466 = vadd.f32 %v6452, %v6465
        %6467 = vdwg.mxu0
        %6468 = vmatpush.bf16.msra.mxu0 %v6023
        %6469 = vmatpush.bf16.msra.mxu0 %v6020
        %6470 = vmatpush.bf16.msra.mxu0 %v6017
        %6471 = vmatpush.bf16.msra.mxu0 %v6014
        %6472 = vmatpush.bf16.msra.mxu0 %v6011
        %6473 = vmatpush.bf16.msra.mxu0 %v6008
        %6474 = vmatpush.bf16.msra.mxu0 %v6005
        %6475 = vmatpush.bf16.msra.mxu0 %v6002
        %6476 = vmatmul.bf16.gmra.mxu0 %v5202
        %v6477 = vpop.f32.mrf.mxu0
        %v6478 = vadd.f32 0.0, %v6477
        %v6479 = vpop.f32.mrf.mxu0
        %v6480 = vadd.f32 0.0, %v6479
        %6481 = vdwg.mxu0
        %6482 = vmatpush.bf16.msra.mxu0 %v6047
        %6483 = vmatpush.bf16.msra.mxu0 %v6044
        %6484 = vmatpush.bf16.msra.mxu0 %v6041
        %6485 = vmatpush.bf16.msra.mxu0 %v6038
        %6486 = vmatpush.bf16.msra.mxu0 %v6035
        %6487 = vmatpush.bf16.msra.mxu0 %v6032
        %6488 = vmatpush.bf16.msra.mxu0 %v6029
        %6489 = vmatpush.bf16.msra.mxu0 %v6026
        %6490 = vmatmul.bf16.gmra.mxu0 %v5203
        %v6491 = vpop.f32.mrf.mxu0
        %v6492 = vadd.f32 %v6478, %v6491
        %v6493 = vpop.f32.mrf.mxu0
        %v6494 = vadd.f32 %v6480, %v6493
        %6495 = vdwg.mxu0
        %6496 = vmatpush.bf16.msra.mxu0 %v6071
        %6497 = vmatpush.bf16.msra.mxu0 %v6068
        %6498 = vmatpush.bf16.msra.mxu0 %v6065
        %6499 = vmatpush.bf16.msra.mxu0 %v6062
        %6500 = vmatpush.bf16.msra.mxu0 %v6059
        %6501 = vmatpush.bf16.msra.mxu0 %v6056
        %6502 = vmatpush.bf16.msra.mxu0 %v6053
        %6503 = vmatpush.bf16.msra.mxu0 %v6050
        %6504 = vmatmul.bf16.gmra.mxu0 %v5204
        %v6505 = vpop.f32.mrf.mxu0
        %v6506 = vadd.f32 %v6492, %v6505
        %v6507 = vpop.f32.mrf.mxu0
        %v6508 = vadd.f32 %v6494, %v6507
        %6509 = vdwg.mxu0
        %6510 = vmatpush.bf16.msra.mxu0 %v6095
        %6511 = vmatpush.bf16.msra.mxu0 %v6092
        %6512 = vmatpush.bf16.msra.mxu0 %v6089
        %6513 = vmatpush.bf16.msra.mxu0 %v6086
        %6514 = vmatpush.bf16.msra.mxu0 %v6083
        %6515 = vmatpush.bf16.msra.mxu0 %v6080
        %6516 = vmatpush.bf16.msra.mxu0 %v6077
        %6517 = vmatpush.bf16.msra.mxu0 %v6074
        %6518 = vmatmul.bf16.gmra.mxu0 %v5205
        %v6519 = vpop.f32.mrf.mxu0
        %v6520 = vadd.f32 %v6506, %v6519
        %v6521 = vpop.f32.mrf.mxu0
        %v6522 = vadd.f32 %v6508, %v6521
        %6523 = vdwg.mxu0
        %6524 = vmatpush.bf16.msra.mxu0 %v6119
        %6525 = vmatpush.bf16.msra.mxu0 %v6116
        %6526 = vmatpush.bf16.msra.mxu0 %v6113
        %6527 = vmatpush.bf16.msra.mxu0 %v6110
        %6528 = vmatpush.bf16.msra.mxu0 %v6107
        %6529 = vmatpush.bf16.msra.mxu0 %v6104
        %6530 = vmatpush.bf16.msra.mxu0 %v6101
        %6531 = vmatpush.bf16.msra.mxu0 %v6098
        %6532 = vmatmul.bf16.gmra.mxu0 %v5206
        %v6533 = vpop.f32.mrf.mxu0
        %v6534 = vadd.f32 %v6520, %v6533
        %v6535 = vpop.f32.mrf.mxu0
        %v6536 = vadd.f32 %v6522, %v6535
        %6537 = vdwg.mxu0
        %6538 = vmatpush.bf16.msra.mxu0 %v6143
        %6539 = vmatpush.bf16.msra.mxu0 %v6140
        %6540 = vmatpush.bf16.msra.mxu0 %v6137
        %6541 = vmatpush.bf16.msra.mxu0 %v6134
        %6542 = vmatpush.bf16.msra.mxu0 %v6131
        %6543 = vmatpush.bf16.msra.mxu0 %v6128
        %6544 = vmatpush.bf16.msra.mxu0 %v6125
        %6545 = vmatpush.bf16.msra.mxu0 %v6122
        %6546 = vmatmul.bf16.gmra.mxu0 %v5207
        %v6547 = vpop.f32.mrf.mxu0
        %v6548 = vadd.f32 %v6534, %v6547
        %v6549 = vpop.f32.mrf.mxu0
        %v6550 = vadd.f32 %v6536, %v6549
        %6551 = vdwg.mxu0
        %6552 = vmatpush.bf16.msra.mxu0 %v6167
        %6553 = vmatpush.bf16.msra.mxu0 %v6164
        %6554 = vmatpush.bf16.msra.mxu0 %v6161
        %6555 = vmatpush.bf16.msra.mxu0 %v6158
        %6556 = vmatpush.bf16.msra.mxu0 %v6155
        %6557 = vmatpush.bf16.msra.mxu0 %v6152
        %6558 = vmatpush.bf16.msra.mxu0 %v6149
        %6559 = vmatpush.bf16.msra.mxu0 %v6146
        %6560 = vmatmul.bf16.gmra.mxu0 %v5208
        %v6561 = vpop.f32.mrf.mxu0
        %v6562 = vadd.f32 %v6548, %v6561
        %v6563 = vpop.f32.mrf.mxu0
        %v6564 = vadd.f32 %v6550, %v6563
        %6565 = vdwg.mxu0
        %6566 = vmatpush.bf16.msra.mxu0 0
        %6567 = vmatpush.bf16.msra.mxu0 0
        %6568 = vmatpush.bf16.msra.mxu0 0
        %6569 = vmatpush.bf16.msra.mxu0 0
        %6570 = vmatpush.bf16.msra.mxu0 0
        %6571 = vmatpush.bf16.msra.mxu0 0
        %6572 = vmatpush.bf16.msra.mxu0 0
        %6573 = vmatpush.bf16.msra.mxu0 %v6351
        %6574 = vmatmul.bf16.gmra.mxu0 %v6342
        %v6575 = vpop.f32.mrf.mxu0
        %v6576 = vadd.f32 %v6562, %v6575
        %v6577 = vpop.f32.mrf.mxu0
        %v6578 = vadd.f32 %v6564, %v6577
        %6579 = vdwg.mxu0
        %6580 = vmatpush.bf16.msra.mxu0 %v6024
        %6581 = vmatpush.bf16.msra.mxu0 %v6021
        %6582 = vmatpush.bf16.msra.mxu0 %v6018
        %6583 = vmatpush.bf16.msra.mxu0 %v6015
        %6584 = vmatpush.bf16.msra.mxu0 %v6012
        %6585 = vmatpush.bf16.msra.mxu0 %v6009
        %6586 = vmatpush.bf16.msra.mxu0 %v6006
        %6587 = vmatpush.bf16.msra.mxu0 %v6003
        %6588 = vmatmul.bf16.gmra.mxu0 %v5202
        %v6589 = vpop.f32.mrf.mxu0
        %v6590 = vadd.f32 0.0, %v6589
        %v6591 = vpop.f32.mrf.mxu0
        %v6592 = vadd.f32 0.0, %v6591
        %6593 = vdwg.mxu0
        %6594 = vmatpush.bf16.msra.mxu0 %v6048
        %6595 = vmatpush.bf16.msra.mxu0 %v6045
        %6596 = vmatpush.bf16.msra.mxu0 %v6042
        %6597 = vmatpush.bf16.msra.mxu0 %v6039
        %6598 = vmatpush.bf16.msra.mxu0 %v6036
        %6599 = vmatpush.bf16.msra.mxu0 %v6033
        %6600 = vmatpush.bf16.msra.mxu0 %v6030
        %6601 = vmatpush.bf16.msra.mxu0 %v6027
        %6602 = vmatmul.bf16.gmra.mxu0 %v5203
        %v6603 = vpop.f32.mrf.mxu0
        %v6604 = vadd.f32 %v6590, %v6603
        %v6605 = vpop.f32.mrf.mxu0
        %v6606 = vadd.f32 %v6592, %v6605
        %6607 = vdwg.mxu0
        %6608 = vmatpush.bf16.msra.mxu0 %v6072
        %6609 = vmatpush.bf16.msra.mxu0 %v6069
        %6610 = vmatpush.bf16.msra.mxu0 %v6066
        %6611 = vmatpush.bf16.msra.mxu0 %v6063
        %6612 = vmatpush.bf16.msra.mxu0 %v6060
        %6613 = vmatpush.bf16.msra.mxu0 %v6057
        %6614 = vmatpush.bf16.msra.mxu0 %v6054
        %6615 = vmatpush.bf16.msra.mxu0 %v6051
        %6616 = vmatmul.bf16.gmra.mxu0 %v5204
        %v6617 = vpop.f32.mrf.mxu0
        %v6618 = vadd.f32 %v6604, %v6617
        %v6619 = vpop.f32.mrf.mxu0
        %v6620 = vadd.f32 %v6606, %v6619
        %6621 = vdwg.mxu0
        %6622 = vmatpush.bf16.msra.mxu0 %v6096
        %6623 = vmatpush.bf16.msra.mxu0 %v6093
        %6624 = vmatpush.bf16.msra.mxu0 %v6090
        %6625 = vmatpush.bf16.msra.mxu0 %v6087
        %6626 = vmatpush.bf16.msra.mxu0 %v6084
        %6627 = vmatpush.bf16.msra.mxu0 %v6081
        %6628 = vmatpush.bf16.msra.mxu0 %v6078
        %6629 = vmatpush.bf16.msra.mxu0 %v6075
        %6630 = vmatmul.bf16.gmra.mxu0 %v5205
        %v6631 = vpop.f32.mrf.mxu0
        %v6632 = vadd.f32 %v6618, %v6631
        %v6633 = vpop.f32.mrf.mxu0
        %v6634 = vadd.f32 %v6620, %v6633
        %6635 = vdwg.mxu0
        %6636 = vmatpush.bf16.msra.mxu0 %v6120
        %6637 = vmatpush.bf16.msra.mxu0 %v6117
        %6638 = vmatpush.bf16.msra.mxu0 %v6114
        %6639 = vmatpush.bf16.msra.mxu0 %v6111
        %6640 = vmatpush.bf16.msra.mxu0 %v6108
        %6641 = vmatpush.bf16.msra.mxu0 %v6105
        %6642 = vmatpush.bf16.msra.mxu0 %v6102
        %6643 = vmatpush.bf16.msra.mxu0 %v6099
        %6644 = vmatmul.bf16.gmra.mxu0 %v5206
        %v6645 = vpop.f32.mrf.mxu0
        %v6646 = vadd.f32 %v6632, %v6645
        %v6647 = vpop.f32.mrf.mxu0
        %v6648 = vadd.f32 %v6634, %v6647
        %6649 = vdwg.mxu0
        %6650 = vmatpush.bf16.msra.mxu0 %v6144
        %6651 = vmatpush.bf16.msra.mxu0 %v6141
        %6652 = vmatpush.bf16.msra.mxu0 %v6138
        %6653 = vmatpush.bf16.msra.mxu0 %v6135
        %6654 = vmatpush.bf16.msra.mxu0 %v6132
        %6655 = vmatpush.bf16.msra.mxu0 %v6129
        %6656 = vmatpush.bf16.msra.mxu0 %v6126
        %6657 = vmatpush.bf16.msra.mxu0 %v6123
        %6658 = vmatmul.bf16.gmra.mxu0 %v5207
        %v6659 = vpop.f32.mrf.mxu0
        %v6660 = vadd.f32 %v6646, %v6659
        %v6661 = vpop.f32.mrf.mxu0
        %v6662 = vadd.f32 %v6648, %v6661
        %6663 = vdwg.mxu0
        %6664 = vmatpush.bf16.msra.mxu0 %v6168
        %6665 = vmatpush.bf16.msra.mxu0 %v6165
        %6666 = vmatpush.bf16.msra.mxu0 %v6162
        %6667 = vmatpush.bf16.msra.mxu0 %v6159
        %6668 = vmatpush.bf16.msra.mxu0 %v6156
        %6669 = vmatpush.bf16.msra.mxu0 %v6153
        %6670 = vmatpush.bf16.msra.mxu0 %v6150
        %6671 = vmatpush.bf16.msra.mxu0 %v6147
        %6672 = vmatmul.bf16.gmra.mxu0 %v5208
        %v6673 = vpop.f32.mrf.mxu0
        %v6674 = vadd.f32 %v6660, %v6673
        %v6675 = vpop.f32.mrf.mxu0
        %v6676 = vadd.f32 %v6662, %v6675
        %6677 = vdwg.mxu0
        %6678 = vmatpush.bf16.msra.mxu0 0
        %6679 = vmatpush.bf16.msra.mxu0 0
        %6680 = vmatpush.bf16.msra.mxu0 0
        %6681 = vmatpush.bf16.msra.mxu0 0
        %6682 = vmatpush.bf16.msra.mxu0 0
        %6683 = vmatpush.bf16.msra.mxu0 0
        %6684 = vmatpush.bf16.msra.mxu0 0
        %6685 = vmatpush.bf16.msra.mxu0 %v6354
        %6686 = vmatmul.bf16.gmra.mxu0 %v6342
        %v6687 = vpop.f32.mrf.mxu0
        %v6688 = vadd.f32 %v6674, %v6687
        %v6689 = vpop.f32.mrf.mxu0
        %v6690 = vadd.f32 %v6676, %v6689
        %6691 = vdwg.mxu0
        %v6692 = vpack.c.bf16 %v6576, %v6464
        %v6693 = vpack.c.bf16 %v6688, %v6688
        %v6694 = vpack.c.bf16 %v6578, %v6466
        %v6695 = vpack.c.bf16 %v6690, %v6690
        %6696 = vst [vmem:[#allocation3] sm:$0xff] %v6692
        %vm6697 = vcmask 265216
        %6698 = vst.msk [vmem:[#allocation3 + $0x8] sm:$0xf] %vm6697, %v6693
        %6699 = vst [vmem:[#allocation3 + $0xc] sm:$0xff] %v6694
        %6700 = vst.msk [vmem:[#allocation3 + $0x14] sm:$0xf] %vm6697, %v6695
        %v6701 = vld [vmem:[#allocation3] sm:$0xff]
        %v6702 = vld [vmem:[#allocation3 + $0x8] sm:$0xf]
        %v6703 = vld [vmem:[#allocation3 + $0xc] sm:$0xff]
        %v6704 = vld [vmem:[#allocation3 + $0x14] sm:$0xf]
        %v6705 = vld [vmem:[%s5] sm:$0xf]
        %v6706 = vld [vmem:[%s5 + $0x4] sm:$0xf]
        %v6707 = vld [vmem:[%s5 + $0x8] sm:$0x3]
        %s6708 = scalar_lea.vmem %s5, 12
        %v6709 = vld [vmem:[%s6708] sm:$0xf]
        %v6710 = vld [vmem:[%s6708 + $0x4] sm:$0xf]
        %v6711 = vld [vmem:[%s6708 + $0x8] sm:$0x3]
        %v6715 = vunpack.c.l.b16 %v6709
        %v6716 = vunpack.c.l.b16 %v6710
        %v6717 = vunpack.c.l.b16 %v6711
        %v6718 = vpack.c.b16 %v6716, %v6715
        %v6719 = vpack.c.b16 %v6717, %v6717
        %v6724 = vunpack.c.l.b16 %v6701
        %v6725 = vunpack.c.h.b16 %v6701
        %v6726 = vunpack.c.l.b16 %v6702
        %v6727 = vunpack.c.l.b16 %v6703
        %v6728 = vunpack.c.h.b16 %v6703
        %v6729 = vunpack.c.l.b16 %v6704
        %v6730 = vpack.c.b16 %v6727, %v6724
        %v6731 = vpack.c.b16 %v6728, %v6725
        %v6732 = vpack.c.b16 %v6729, %v6726
        %6733 = vrot.lane.b32.xlu0 %v6730, 127
        %v6734 = vpop.permute.xlu0 %6733
        %6735 = vrot.lane.b32.xlu0 %v6731, 127
        %v6736 = vpop.permute.xlu0 %6735
        %6737 = vrot.lane.b32.xlu0 %v6732, 127
        %v6738 = vpop.permute.xlu0 %6737
        %v6739 = vsel %vm4271, %v6734, %v6736
        %v6740 = vsel %vm4271, %v6736, %v6738
        %vm6744 = vcmask 130048
        %v6746 = vsel %vm6744, %v6718, 0
        %v6749 = vsel %vm6744, %v6719, 0
        %6751 = vmatpush.bf16.msra.mxu0 0
        %6752 = vmatpush.bf16.msra.mxu0 0
        %6753 = vmatpush.bf16.msra.mxu0 0
        %6754 = vmatpush.bf16.msra.mxu0 0
        %6755 = vmatpush.bf16.msra.mxu0 0
        %6756 = vmatpush.bf16.msra.mxu0 0
        %6757 = vmatpush.bf16.msra.mxu0 0
        %6758 = vmatpush.bf16.msra.mxu0 %v6739
        %6759 = vmatmul.bf16.gmra.mxu0 %v6746
        %v6760 = vpop.f32.mrf.mxu0
        %v6761 = vadd.f32 0.0, %v6760
        %v6762 = vpop.f32.mrf.mxu0
        %v6763 = vadd.f32 0.0, %v6762
        %6764 = vmatmul.bf16.gmra.mxu0 %v6749
        %v6765 = vpop.f32.mrf.mxu0
        %v6766 = vadd.f32 0.0, %v6765
        %v6767 = vpop.f32.mrf.mxu0
        %6768 = vdwg.mxu0
        %6769 = vmatpush.bf16.msra.mxu0 0
        %6770 = vmatpush.bf16.msra.mxu0 0
        %6771 = vmatpush.bf16.msra.mxu0 0
        %6772 = vmatpush.bf16.msra.mxu0 0
        %6773 = vmatpush.bf16.msra.mxu0 0
        %6774 = vmatpush.bf16.msra.mxu0 0
        %6775 = vmatpush.bf16.msra.mxu0 0
        %6776 = vmatpush.bf16.msra.mxu0 %v6740
        %6777 = vmatmul.bf16.gmra.mxu0 %v6746
        %v6778 = vpop.f32.mrf.mxu0
        %v6779 = vadd.f32 0.0, %v6778
        %v6780 = vpop.f32.mrf.mxu0
        %v6781 = vadd.f32 0.0, %v6780
        %6782 = vmatmul.bf16.gmra.mxu0 %v6749
        %v6783 = vpop.f32.mrf.mxu0
        %v6784 = vadd.f32 0.0, %v6783
        %v6785 = vpop.f32.mrf.mxu0
        %6786 = vdwg.mxu0
        %6787 = vmatpush.bf16.msra.mxu0 0
        %6788 = vmatpush.bf16.msra.mxu0 0
        %6789 = vmatpush.bf16.msra.mxu0 0
        %6790 = vmatpush.bf16.msra.mxu0 0
        %6791 = vmatpush.bf16.msra.mxu0 0
        %6792 = vmatpush.bf16.msra.mxu0 0
        %6793 = vmatpush.bf16.msra.mxu0 0
        %6794 = vmatpush.bf16.msra.mxu0 %v6738
        %6795 = vmatmul.bf16.gmra.mxu0 %v6746
        %v6796 = vpop.f32.mrf.mxu0
        %v6797 = vadd.f32 0.0, %v6796
        %v6798 = vpop.f32.mrf.mxu0
        %v6799 = vadd.f32 0.0, %v6798
        %6800 = vmatmul.bf16.gmra.mxu0 %v6749
        %v6801 = vpop.f32.mrf.mxu0
        %v6802 = vadd.f32 0.0, %v6801
        %v6803 = vpop.f32.mrf.mxu0
        %6804 = vdwg.mxu0
        %v6808 = vunpack.c.l.b16 %v6705
        %v6809 = vunpack.c.l.b16 %v6706
        %v6810 = vunpack.c.l.b16 %v6707
        %v6811 = vpack.c.b16 %v6809, %v6808
        %v6812 = vpack.c.b16 %v6810, %v6810
        %v6817 = vsel %vm6744, %v6811, 0
        %v6820 = vsel %vm6744, %v6812, 0
        %6822 = vmatpush.bf16.msra.mxu0 0
        %6823 = vmatpush.bf16.msra.mxu0 0
        %6824 = vmatpush.bf16.msra.mxu0 0
        %6825 = vmatpush.bf16.msra.mxu0 0
        %6826 = vmatpush.bf16.msra.mxu0 0
        %6827 = vmatpush.bf16.msra.mxu0 0
        %6828 = vmatpush.bf16.msra.mxu0 0
        %6829 = vmatpush.bf16.msra.mxu0 %v6730
        %6830 = vmatmul.bf16.gmra.mxu0 %v6817
        %v6831 = vpop.f32.mrf.mxu0
        %v6832 = vadd.f32 %v6761, %v6831
        %v6833 = vpop.f32.mrf.mxu0
        %v6834 = vadd.f32 %v6763, %v6833
        %6835 = vmatmul.bf16.gmra.mxu0 %v6820
        %v6836 = vpop.f32.mrf.mxu0
        %v6837 = vadd.f32 %v6766, %v6836
        %v6838 = vpop.f32.mrf.mxu0
        %6839 = vdwg.mxu0
        %6840 = vmatpush.bf16.msra.mxu0 0
        %6841 = vmatpush.bf16.msra.mxu0 0
        %6842 = vmatpush.bf16.msra.mxu0 0
        %6843 = vmatpush.bf16.msra.mxu0 0
        %6844 = vmatpush.bf16.msra.mxu0 0
        %6845 = vmatpush.bf16.msra.mxu0 0
        %6846 = vmatpush.bf16.msra.mxu0 0
        %6847 = vmatpush.bf16.msra.mxu0 %v6731
        %6848 = vmatmul.bf16.gmra.mxu0 %v6817
        %v6849 = vpop.f32.mrf.mxu0
        %v6850 = vadd.f32 %v6779, %v6849
        %v6851 = vpop.f32.mrf.mxu0
        %v6852 = vadd.f32 %v6781, %v6851
        %6853 = vmatmul.bf16.gmra.mxu0 %v6820
        %v6854 = vpop.f32.mrf.mxu0
        %v6855 = vadd.f32 %v6784, %v6854
        %v6856 = vpop.f32.mrf.mxu0
        %6857 = vdwg.mxu0
        %6858 = vmatpush.bf16.msra.mxu0 0
        %6859 = vmatpush.bf16.msra.mxu0 0
        %6860 = vmatpush.bf16.msra.mxu0 0
        %6861 = vmatpush.bf16.msra.mxu0 0
        %6862 = vmatpush.bf16.msra.mxu0 0
        %6863 = vmatpush.bf16.msra.mxu0 0
        %6864 = vmatpush.bf16.msra.mxu0 0
        %6865 = vmatpush.bf16.msra.mxu0 %v6732
        %6866 = vmatmul.bf16.gmra.mxu0 %v6817
        %v6867 = vpop.f32.mrf.mxu0
        %v6868 = vadd.f32 %v6797, %v6867
        %v6869 = vpop.f32.mrf.mxu0
        %v6870 = vadd.f32 %v6799, %v6869
        %6871 = vmatmul.bf16.gmra.mxu0 %v6820
        %v6872 = vpop.f32.mrf.mxu0
        %v6873 = vadd.f32 %v6802, %v6872
        %v6874 = vpop.f32.mrf.mxu0
        %6875 = vdwg.mxu0
        %s6876 = scalar_lea.vmem %s5, 24
        %v6877 = vld [vmem:[%s6876] sm:$0xf]
        %v6878 = vld [vmem:[%s6876 + $0x4] sm:$0xf]
        %v6879 = vld [vmem:[%s6876 + $0x8] sm:$0x3]
        %v6883 = vunpack.c.l.b16 %v6877
        %v6884 = vunpack.c.l.b16 %v6878
        %v6885 = vunpack.c.l.b16 %v6879
        %v6886 = vpack.c.b16 %v6884, %v6883
        %v6887 = vpack.c.b16 %v6885, %v6885
        %6888 = vrot.lane.b32.xlu0 %v6730, 111
        %v6889 = vpop.permute.xlu0 %6888
        %6890 = vrot.lane.b32.xlu0 %v6731, 111
        %v6891 = vpop.permute.xlu0 %6890
        %6892 = vrot.lane.b32.xlu0 %v6732, 111
        %v6893 = vpop.permute.xlu0 %6892
        %vm6894 = vcmask 908288
        %v6895 = vsel %vm6894, %v6889, %v6891
        %v6896 = vsel %vm6894, %v6891, %v6893
        %v6901 = vsel %vm6744, %v6886, 0
        %v6904 = vsel %vm6744, %v6887, 0
        %6906 = vmatpush.bf16.msra.mxu0 0
        %6907 = vmatpush.bf16.msra.mxu0 0
        %6908 = vmatpush.bf16.msra.mxu0 0
        %6909 = vmatpush.bf16.msra.mxu0 0
        %6910 = vmatpush.bf16.msra.mxu0 0
        %6911 = vmatpush.bf16.msra.mxu0 0
        %6912 = vmatpush.bf16.msra.mxu0 0
        %6913 = vmatpush.bf16.msra.mxu0 %v6895
        %6914 = vmatmul.bf16.gmra.mxu0 %v6901
        %v6915 = vpop.f32.mrf.mxu0
        %v6916 = vadd.f32 0.0, %v6915
        %v6917 = vpop.f32.mrf.mxu0
        %v6918 = vadd.f32 0.0, %v6917
        %6919 = vmatmul.bf16.gmra.mxu0 %v6904
        %v6920 = vpop.f32.mrf.mxu0
        %v6921 = vadd.f32 0.0, %v6920
        %v6922 = vpop.f32.mrf.mxu0
        %6923 = vdwg.mxu0
        %6924 = vmatpush.bf16.msra.mxu0 0
        %6925 = vmatpush.bf16.msra.mxu0 0
        %6926 = vmatpush.bf16.msra.mxu0 0
        %6927 = vmatpush.bf16.msra.mxu0 0
        %6928 = vmatpush.bf16.msra.mxu0 0
        %6929 = vmatpush.bf16.msra.mxu0 0
        %6930 = vmatpush.bf16.msra.mxu0 0
        %6931 = vmatpush.bf16.msra.mxu0 %v6896
        %6932 = vmatmul.bf16.gmra.mxu0 %v6901
        %v6933 = vpop.f32.mrf.mxu0
        %v6934 = vadd.f32 0.0, %v6933
        %v6935 = vpop.f32.mrf.mxu0
        %v6936 = vadd.f32 0.0, %v6935
        %6937 = vmatmul.bf16.gmra.mxu0 %v6904
        %v6938 = vpop.f32.mrf.mxu0
        %v6939 = vadd.f32 0.0, %v6938
        %v6940 = vpop.f32.mrf.mxu0
        %6941 = vdwg.mxu0
        %6942 = vmatpush.bf16.msra.mxu0 0
        %6943 = vmatpush.bf16.msra.mxu0 0
        %6944 = vmatpush.bf16.msra.mxu0 0
        %6945 = vmatpush.bf16.msra.mxu0 0
        %6946 = vmatpush.bf16.msra.mxu0 0
        %6947 = vmatpush.bf16.msra.mxu0 0
        %6948 = vmatpush.bf16.msra.mxu0 0
        %6949 = vmatpush.bf16.msra.mxu0 %v6893
        %6950 = vmatmul.bf16.gmra.mxu0 %v6901
        %v6951 = vpop.f32.mrf.mxu0
        %v6952 = vadd.f32 0.0, %v6951
        %v6953 = vpop.f32.mrf.mxu0
        %v6954 = vadd.f32 0.0, %v6953
        %6955 = vmatmul.bf16.gmra.mxu0 %v6904
        %v6956 = vpop.f32.mrf.mxu0
        %v6957 = vadd.f32 0.0, %v6956
        %v6958 = vpop.f32.mrf.mxu0
        %6959 = vdwg.mxu0
        %v6960 = vadd.f32 %v6832, %v6916
        %v6961 = vadd.f32 %v6850, %v6934
        %v6962 = vadd.f32 %v6868, %v6952
        %v6963 = vadd.f32 %v6834, %v6918
        %v6964 = vadd.f32 %v6852, %v6936
        %v6965 = vadd.f32 %v6870, %v6954
        %v6966 = vadd.f32 %v6837, %v6921
        %v6967 = vadd.f32 %v6855, %v6939
        %v6968 = vadd.f32 %v6873, %v6957
        %s6969 = scalar_lea.vmem %s5, 36
        %v6970 = vld [vmem:[%s6969] sm:$0xf]
        %v6971 = vld [vmem:[%s6969 + $0x4] sm:$0xf]
        %v6972 = vld [vmem:[%s6969 + $0x8] sm:$0x3]
        %v6976 = vunpack.c.l.b16 %v6970
        %v6977 = vunpack.c.l.b16 %v6971
        %v6978 = vunpack.c.l.b16 %v6972
        %v6979 = vpack.c.b16 %v6977, %v6976
        %v6980 = vpack.c.b16 %v6978, %v6978
        %6981 = vrot.lane.b32.xlu0 %v6730, 110
        %v6982 = vpop.permute.xlu0 %6981
        %6983 = vrot.lane.b32.xlu0 %v6731, 110
        %v6984 = vpop.permute.xlu0 %6983
        %6985 = vrot.lane.b32.xlu0 %v6732, 110
        %v6986 = vpop.permute.xlu0 %6985
        %vm6987 = vcmask 900096
        %v6988 = vsel %vm6987, %v6982, %v6984
        %v6989 = vsel %vm6987, %v6984, %v6986
        %v6994 = vsel %vm6744, %v6979, 0
        %v6997 = vsel %vm6744, %v6980, 0
        %6999 = vmatpush.bf16.msra.mxu0 0
        %7000 = vmatpush.bf16.msra.mxu0 0
        %7001 = vmatpush.bf16.msra.mxu0 0
        %7002 = vmatpush.bf16.msra.mxu0 0
        %7003 = vmatpush.bf16.msra.mxu0 0
        %7004 = vmatpush.bf16.msra.mxu0 0
        %7005 = vmatpush.bf16.msra.mxu0 0
        %7006 = vmatpush.bf16.msra.mxu0 %v6988
        %7007 = vmatmul.bf16.gmra.mxu0 %v6994
        %v7008 = vpop.f32.mrf.mxu0
        %v7009 = vadd.f32 0.0, %v7008
        %v7010 = vpop.f32.mrf.mxu0
        %v7011 = vadd.f32 0.0, %v7010
        %7012 = vmatmul.bf16.gmra.mxu0 %v6997
        %v7013 = vpop.f32.mrf.mxu0
        %v7014 = vadd.f32 0.0, %v7013
        %v7015 = vpop.f32.mrf.mxu0
        %7016 = vdwg.mxu0
        %7017 = vmatpush.bf16.msra.mxu0 0
        %7018 = vmatpush.bf16.msra.mxu0 0
        %7019 = vmatpush.bf16.msra.mxu0 0
        %7020 = vmatpush.bf16.msra.mxu0 0
        %7021 = vmatpush.bf16.msra.mxu0 0
        %7022 = vmatpush.bf16.msra.mxu0 0
        %7023 = vmatpush.bf16.msra.mxu0 0
        %7024 = vmatpush.bf16.msra.mxu0 %v6989
        %7025 = vmatmul.bf16.gmra.mxu0 %v6994
        %v7026 = vpop.f32.mrf.mxu0
        %v7027 = vadd.f32 0.0, %v7026
        %v7028 = vpop.f32.mrf.mxu0
        %v7029 = vadd.f32 0.0, %v7028
        %7030 = vmatmul.bf16.gmra.mxu0 %v6997
        %v7031 = vpop.f32.mrf.mxu0
        %v7032 = vadd.f32 0.0, %v7031
        %v7033 = vpop.f32.mrf.mxu0
        %7034 = vdwg.mxu0
        %7035 = vmatpush.bf16.msra.mxu0 0
        %7036 = vmatpush.bf16.msra.mxu0 0
        %7037 = vmatpush.bf16.msra.mxu0 0
        %7038 = vmatpush.bf16.msra.mxu0 0
        %7039 = vmatpush.bf16.msra.mxu0 0
        %7040 = vmatpush.bf16.msra.mxu0 0
        %7041 = vmatpush.bf16.msra.mxu0 0
        %7042 = vmatpush.bf16.msra.mxu0 %v6986
        %7043 = vmatmul.bf16.gmra.mxu0 %v6994
        %v7044 = vpop.f32.mrf.mxu0
        %v7045 = vadd.f32 0.0, %v7044
        %v7046 = vpop.f32.mrf.mxu0
        %v7047 = vadd.f32 0.0, %v7046
        %7048 = vmatmul.bf16.gmra.mxu0 %v6997
        %v7049 = vpop.f32.mrf.mxu0
        %v7050 = vadd.f32 0.0, %v7049
        %v7051 = vpop.f32.mrf.mxu0
        %7052 = vdwg.mxu0
        %v7053 = vadd.f32 %v6960, %v7009
        %v7054 = vadd.f32 %v6961, %v7027
        %v7055 = vadd.f32 %v6962, %v7045
        %v7056 = vadd.f32 %v6963, %v7011
        %v7057 = vadd.f32 %v6964, %v7029
        %v7058 = vadd.f32 %v6965, %v7047
        %v7059 = vadd.f32 %v6966, %v7014
        %v7060 = vadd.f32 %v6967, %v7032
        %v7061 = vadd.f32 %v6968, %v7050
        %v7062 = vld [vmem:[%s6] sm:$0xff]
        %v7063 = vld [vmem:[%s6 + $0x8] sm:$0xff]
        %v7064 = vld [vmem:[%s6 + $0x10] sm:$0xf]
        %7066 = vset.pattern.permute.xlu0 0
        %7067 = vperm.xlu0 %7066, %v7062
        %v7068 = vpop.permute.xlu0 %7067
        %7071 = vset.pattern.permute.xlu0 0
        %7072 = vperm.xlu0 %7071, %v7063
        %v7073 = vpop.permute.xlu0 %7072
        %7076 = vset.pattern.permute.xlu0 0
        %7077 = vperm.xlu0 %7076, %v7064
        %v7078 = vpop.permute.xlu0 %7077
        %v7080 = vadd.f32 %v7053, %v7068
        %v7081 = vadd.f32 %v7054, %v7068
        %v7082 = vadd.f32 %v7055, %v7068
        %v7083 = vadd.f32 %v7056, %v7073
        %v7084 = vadd.f32 %v7057, %v7073
        %v7085 = vadd.f32 %v7058, %v7073
        %v7086 = vadd.f32 %v7059, %v7078
        %v7087 = vadd.f32 %v7060, %v7078
        %v7088 = vadd.f32 %v7061, %v7078
        %v7089 = vmax.f32 %v7080, 0.0
        %v7090 = vmax.f32 %v7081, 0.0
        %v7091 = vmax.f32 %v7082, 0.0
        %v7092 = vmax.f32 %v7083, 0.0
        %v7093 = vmax.f32 %v7084, 0.0
        %v7094 = vmax.f32 %v7085, 0.0
        %v7095 = vmax.f32 %v7086, 0.0
        %v7096 = vmax.f32 %v7087, 0.0
        %v7097 = vmax.f32 %v7088, 0.0
        %v7098 = vpack.c.bf16 %v7092, %v7089
        %v7099 = vpack.c.bf16 %v7093, %v7090
        %v7100 = vpack.c.bf16 %v7094, %v7091
        %v7101 = vpack.c.bf16 %v7095, %v7095
        %v7102 = vpack.c.bf16 %v7096, %v7096
        %v7103 = vpack.c.bf16 %v7097, %v7097
        %v7104 = vld [vmem:[%s11] sm:$0xff]
        %v7105 = vld [vmem:[%s11 + $0x8] sm:$0xf]
        %v7106 = vld [vmem:[%s11 + $0xc] sm:$0xff]
        %v7107 = vld [vmem:[%s11 + $0x14] sm:$0xf]
        %v7108 = vld [vmem:[%s11 + $0x18] sm:$0xff]
        %v7109 = vld [vmem:[%s11 + $0x20] sm:$0xf]
        %v7110 = vld [vmem:[%s11 + $0x24] sm:$0xff]
        %v7111 = vld [vmem:[%s11 + $0x2c] sm:$0xf]
        %v7112 = vld [vmem:[%s11 + $0x30] sm:$0xff]
        %v7113 = vld [vmem:[%s11 + $0x38] sm:$0xf]
        %v7114 = vld [vmem:[%s11 + $0x3c] sm:$0xff]
        %v7115 = vld [vmem:[%s11 + $0x44] sm:$0xf]
        %v7116 = vld [vmem:[%s11 + $0x48] sm:$0xff]
        %v7117 = vld [vmem:[%s11 + $0x50] sm:$0xf]
        %v7118 = vld [vmem:[%s11 + $0x54] sm:$0xff]
        %v7119 = vld [vmem:[%s11 + $0x5c] sm:$0xf]
        %v7120 = vld [vmem:[%s11 + $0x60] sm:$0xff]
        %v7121 = vld [vmem:[%s11 + $0x68] sm:$0xf]
        %v7122 = vld [vmem:[%s11 + $0x6c] sm:$0xff]
        %v7123 = vld [vmem:[%s11 + $0x74] sm:$0xf]
        %v7124 = vld [vmem:[%s11 + $0x78] sm:$0xff]
        %v7125 = vld [vmem:[%s11 + $0x80] sm:$0xf]
        %v7126 = vld [vmem:[%s11 + $0x84] sm:$0xff]
        %v7127 = vld [vmem:[%s11 + $0x8c] sm:$0xf]
        %v7128 = vld [vmem:[%s11 + $0x90] sm:$0xff]
        %v7129 = vld [vmem:[%s11 + $0x98] sm:$0xf]
        %v7130 = vld [vmem:[%s11 + $0x9c] sm:$0xff]
        %v7131 = vld [vmem:[%s11 + $0xa4] sm:$0xf]
        %v7132 = vld [vmem:[%s11 + $0xa8] sm:$0xff]
        %v7133 = vld [vmem:[%s11 + $0xb0] sm:$0xf]
        %v7134 = vld [vmem:[%s11 + $0xb4] sm:$0xff]
        %v7135 = vld [vmem:[%s11 + $0xbc] sm:$0xf]
        %v7136 = vld [vmem:[%s11 + $0xc0] sm:$0xff]
        %v7137 = vld [vmem:[%s11 + $0xc8] sm:$0xf]
        %v7138 = vld [vmem:[%s11 + $0xcc] sm:$0xff]
        %v7139 = vld [vmem:[%s11 + $0xd4] sm:$0xf]
        %v7140 = vld [vmem:[%s11 + $0xd8] sm:$0xff]
        %v7141 = vld [vmem:[%s11 + $0xe0] sm:$0xf]
        %v7142 = vld [vmem:[%s11 + $0xe4] sm:$0xff]
        %v7143 = vld [vmem:[%s11 + $0xec] sm:$0xf]
        %v7144 = vld [vmem:[%s11 + $0xf0] sm:$0xff]
        %v7145 = vld [vmem:[%s11 + $0xf8] sm:$0xf]
        %v7146 = vld [vmem:[%s11 + $0xfc] sm:$0xff]
        %v7147 = vld [vmem:[%s11 + $0x104] sm:$0xf]
        %v7148 = vld [vmem:[%s11 + $0x108] sm:$0xff]
        %v7149 = vld [vmem:[%s11 + $0x110] sm:$0xf]
        %v7150 = vld [vmem:[%s11 + $0x114] sm:$0xff]
        %v7151 = vld [vmem:[%s11 + $0x11c] sm:$0xf]
        %v7152 = vld [vmem:[%s11 + $0x120] sm:$0xff]
        %v7153 = vld [vmem:[%s11 + $0x128] sm:$0xf]
        %v7154 = vld [vmem:[%s11 + $0x12c] sm:$0xff]
        %v7155 = vld [vmem:[%s11 + $0x134] sm:$0xf]
        %v7156 = vld [vmem:[%s11 + $0x138] sm:$0xff]
        %v7157 = vld [vmem:[%s11 + $0x140] sm:$0xf]
        %v7158 = vld [vmem:[%s11 + $0x144] sm:$0xff]
        %v7159 = vld [vmem:[%s11 + $0x14c] sm:$0xf]
        %v7160 = vld [vmem:[%s11 + $0x150] sm:$0xff]
        %v7161 = vld [vmem:[%s11 + $0x158] sm:$0xf]
        %v7162 = vld [vmem:[%s11 + $0x15c] sm:$0xff]
        %v7163 = vld [vmem:[%s11 + $0x164] sm:$0xf]
        %v7164 = vld [vmem:[%s11 + $0x168] sm:$0xff]
        %v7165 = vld [vmem:[%s11 + $0x170] sm:$0xf]
        %v7166 = vld [vmem:[%s11 + $0x174] sm:$0xff]
        %v7167 = vld [vmem:[%s11 + $0x17c] sm:$0xf]
        %v7168 = vld [vmem:[%s11 + $0x180] sm:$0xff]
        %v7169 = vld [vmem:[%s11 + $0x188] sm:$0xf]
        %v7170 = vld [vmem:[%s11 + $0x18c] sm:$0xff]
        %v7171 = vld [vmem:[%s11 + $0x194] sm:$0xf]
        %v7240 = vunpack.c.l.b16 %v7104
        %v7241 = vunpack.c.h.b16 %v7104
        %v7242 = vunpack.c.l.b16 %v7105
        %v7243 = vunpack.c.l.b16 %v7106
        %v7244 = vunpack.c.h.b16 %v7106
        %v7245 = vunpack.c.l.b16 %v7107
        %v7246 = vunpack.c.l.b16 %v7108
        %v7247 = vunpack.c.h.b16 %v7108
        %v7248 = vunpack.c.l.b16 %v7109
        %v7249 = vunpack.c.l.b16 %v7110
        %v7250 = vunpack.c.h.b16 %v7110
        %v7251 = vunpack.c.l.b16 %v7111
        %v7252 = vunpack.c.l.b16 %v7112
        %v7253 = vunpack.c.h.b16 %v7112
        %v7254 = vunpack.c.l.b16 %v7113
        %v7255 = vunpack.c.l.b16 %v7114
        %v7256 = vunpack.c.h.b16 %v7114
        %v7257 = vunpack.c.l.b16 %v7115
        %v7258 = vunpack.c.l.b16 %v7116
        %v7259 = vunpack.c.h.b16 %v7116
        %v7260 = vunpack.c.l.b16 %v7117
        %v7261 = vunpack.c.l.b16 %v7118
        %v7262 = vunpack.c.h.b16 %v7118
        %v7263 = vunpack.c.l.b16 %v7119
        %v7264 = vunpack.c.l.b16 %v7120
        %v7265 = vunpack.c.h.b16 %v7120
        %v7266 = vunpack.c.l.b16 %v7121
        %v7267 = vunpack.c.l.b16 %v7122
        %v7268 = vunpack.c.h.b16 %v7122
        %v7269 = vunpack.c.l.b16 %v7123
        %v7270 = vunpack.c.l.b16 %v7124
        %v7271 = vunpack.c.h.b16 %v7124
        %v7272 = vunpack.c.l.b16 %v7125
        %v7273 = vunpack.c.l.b16 %v7126
        %v7274 = vunpack.c.h.b16 %v7126
        %v7275 = vunpack.c.l.b16 %v7127
        %v7276 = vunpack.c.l.b16 %v7128
        %v7277 = vunpack.c.h.b16 %v7128
        %v7278 = vunpack.c.l.b16 %v7129
        %v7279 = vunpack.c.l.b16 %v7130
        %v7280 = vunpack.c.h.b16 %v7130
        %v7281 = vunpack.c.l.b16 %v7131
        %v7282 = vunpack.c.l.b16 %v7132
        %v7283 = vunpack.c.h.b16 %v7132
        %v7284 = vunpack.c.l.b16 %v7133
        %v7285 = vunpack.c.l.b16 %v7134
        %v7286 = vunpack.c.h.b16 %v7134
        %v7287 = vunpack.c.l.b16 %v7135
        %v7288 = vunpack.c.l.b16 %v7136
        %v7289 = vunpack.c.h.b16 %v7136
        %v7290 = vunpack.c.l.b16 %v7137
        %v7291 = vunpack.c.l.b16 %v7138
        %v7292 = vunpack.c.h.b16 %v7138
        %v7293 = vunpack.c.l.b16 %v7139
        %v7294 = vunpack.c.l.b16 %v7140
        %v7295 = vunpack.c.h.b16 %v7140
        %v7296 = vunpack.c.l.b16 %v7141
        %v7297 = vunpack.c.l.b16 %v7142
        %v7298 = vunpack.c.h.b16 %v7142
        %v7299 = vunpack.c.l.b16 %v7143
        %v7300 = vunpack.c.l.b16 %v7144
        %v7301 = vunpack.c.h.b16 %v7144
        %v7302 = vunpack.c.l.b16 %v7145
        %v7303 = vunpack.c.l.b16 %v7146
        %v7304 = vunpack.c.h.b16 %v7146
        %v7305 = vunpack.c.l.b16 %v7147
        %v7306 = vunpack.c.l.b16 %v7148
        %v7307 = vunpack.c.h.b16 %v7148
        %v7308 = vunpack.c.l.b16 %v7149
        %v7309 = vunpack.c.l.b16 %v7150
        %v7310 = vunpack.c.h.b16 %v7150
        %v7311 = vunpack.c.l.b16 %v7151
        %v7312 = vunpack.c.l.b16 %v7152
        %v7313 = vunpack.c.h.b16 %v7152
        %v7314 = vunpack.c.l.b16 %v7153
        %v7315 = vunpack.c.l.b16 %v7154
        %v7316 = vunpack.c.h.b16 %v7154
        %v7317 = vunpack.c.l.b16 %v7155
        %v7318 = vunpack.c.l.b16 %v7156
        %v7319 = vunpack.c.h.b16 %v7156
        %v7320 = vunpack.c.l.b16 %v7157
        %v7321 = vunpack.c.l.b16 %v7158
        %v7322 = vunpack.c.h.b16 %v7158
        %v7323 = vunpack.c.l.b16 %v7159
        %v7324 = vunpack.c.l.b16 %v7160
        %v7325 = vunpack.c.h.b16 %v7160
        %v7326 = vunpack.c.l.b16 %v7161
        %v7327 = vunpack.c.l.b16 %v7162
        %v7328 = vunpack.c.h.b16 %v7162
        %v7329 = vunpack.c.l.b16 %v7163
        %v7330 = vunpack.c.l.b16 %v7164
        %v7331 = vunpack.c.h.b16 %v7164
        %v7332 = vunpack.c.l.b16 %v7165
        %v7333 = vunpack.c.l.b16 %v7166
        %v7334 = vunpack.c.h.b16 %v7166
        %v7335 = vunpack.c.l.b16 %v7167
        %v7336 = vunpack.c.l.b16 %v7168
        %v7337 = vunpack.c.h.b16 %v7168
        %v7338 = vunpack.c.l.b16 %v7169
        %v7339 = vunpack.c.l.b16 %v7170
        %v7340 = vunpack.c.h.b16 %v7170
        %v7341 = vunpack.c.l.b16 %v7171
        %v7342 = vpack.c.b16 %v7243, %v7240
        %v7343 = vpack.c.b16 %v7244, %v7241
        %v7344 = vpack.c.b16 %v7245, %v7242
        %v7345 = vpack.c.b16 %v7249, %v7246
        %v7346 = vpack.c.b16 %v7250, %v7247
        %v7347 = vpack.c.b16 %v7251, %v7248
        %v7348 = vpack.c.b16 %v7255, %v7252
        %v7349 = vpack.c.b16 %v7256, %v7253
        %v7350 = vpack.c.b16 %v7257, %v7254
        %v7351 = vpack.c.b16 %v7261, %v7258
        %v7352 = vpack.c.b16 %v7262, %v7259
        %v7353 = vpack.c.b16 %v7263, %v7260
        %v7354 = vpack.c.b16 %v7267, %v7264
        %v7355 = vpack.c.b16 %v7268, %v7265
        %v7356 = vpack.c.b16 %v7269, %v7266
        %v7357 = vpack.c.b16 %v7273, %v7270
        %v7358 = vpack.c.b16 %v7274, %v7271
        %v7359 = vpack.c.b16 %v7275, %v7272
        %v7360 = vpack.c.b16 %v7279, %v7276
        %v7361 = vpack.c.b16 %v7280, %v7277
        %v7362 = vpack.c.b16 %v7281, %v7278
        %v7363 = vpack.c.b16 %v7285, %v7282
        %v7364 = vpack.c.b16 %v7286, %v7283
        %v7365 = vpack.c.b16 %v7287, %v7284
        %v7366 = vpack.c.b16 %v7291, %v7288
        %v7367 = vpack.c.b16 %v7292, %v7289
        %v7368 = vpack.c.b16 %v7293, %v7290
        %v7369 = vpack.c.b16 %v7297, %v7294
        %v7370 = vpack.c.b16 %v7298, %v7295
        %v7371 = vpack.c.b16 %v7299, %v7296
        %v7372 = vpack.c.b16 %v7303, %v7300
        %v7373 = vpack.c.b16 %v7304, %v7301
        %v7374 = vpack.c.b16 %v7305, %v7302
        %v7375 = vpack.c.b16 %v7309, %v7306
        %v7376 = vpack.c.b16 %v7310, %v7307
        %v7377 = vpack.c.b16 %v7311, %v7308
        %v7378 = vpack.c.b16 %v7315, %v7312
        %v7379 = vpack.c.b16 %v7316, %v7313
        %v7380 = vpack.c.b16 %v7317, %v7314
        %v7381 = vpack.c.b16 %v7321, %v7318
        %v7382 = vpack.c.b16 %v7322, %v7319
        %v7383 = vpack.c.b16 %v7323, %v7320
        %v7384 = vpack.c.b16 %v7327, %v7324
        %v7385 = vpack.c.b16 %v7328, %v7325
        %v7386 = vpack.c.b16 %v7329, %v7326
        %v7387 = vpack.c.b16 %v7333, %v7330
        %v7388 = vpack.c.b16 %v7334, %v7331
        %v7389 = vpack.c.b16 %v7335, %v7332
        %v7390 = vpack.c.b16 %v7339, %v7336
        %v7391 = vpack.c.b16 %v7340, %v7337
        %v7392 = vpack.c.b16 %v7341, %v7338
        %vm7441 = vcmask 121856
        %v7443 = vsel %vm7441, %v7100, 0
        %v7446 = vsel %vm7441, %v7103, 0
        %vm7448 = vcmask 1046528
        %vm7449 = vcmask 1047552
        %v7450 = vsel %vm7448, 4294967295, 65535
        %v7451 = vsel %vm7449, %v7450, 0
        %v7453 = vand.u32 %v7390, %v7451
        %v7456 = vand.u32 %v7391, %v7451
        %v7459 = vand.u32 %v7392, %v7451
        %7461 = vmatpush.bf16.msra.mxu0 %v7363
        %7462 = vmatpush.bf16.msra.mxu0 %v7360
        %7463 = vmatpush.bf16.msra.mxu0 %v7357
        %7464 = vmatpush.bf16.msra.mxu0 %v7354
        %7465 = vmatpush.bf16.msra.mxu0 %v7351
        %7466 = vmatpush.bf16.msra.mxu0 %v7348
        %7467 = vmatpush.bf16.msra.mxu0 %v7345
        %7468 = vmatpush.bf16.msra.mxu0 %v7342
        %7469 = vmatmul.bf16.gmra.mxu0 %v7098
        %v7470 = vpop.f32.mrf.mxu0
        %v7471 = vadd.f32 0.0, %v7470
        %v7472 = vpop.f32.mrf.mxu0
        %v7473 = vadd.f32 0.0, %v7472
        %7474 = vmatmul.bf16.gmra.mxu0 %v7101
        %v7475 = vpop.f32.mrf.mxu0
        %v7476 = vadd.f32 0.0, %v7475
        %v7477 = vpop.f32.mrf.mxu0
        %7478 = vdwg.mxu0
        %7479 = vmatpush.bf16.msra.mxu0 %v7387
        %7480 = vmatpush.bf16.msra.mxu0 %v7384
        %7481 = vmatpush.bf16.msra.mxu0 %v7381
        %7482 = vmatpush.bf16.msra.mxu0 %v7378
        %7483 = vmatpush.bf16.msra.mxu0 %v7375
        %7484 = vmatpush.bf16.msra.mxu0 %v7372
        %7485 = vmatpush.bf16.msra.mxu0 %v7369
        %7486 = vmatpush.bf16.msra.mxu0 %v7366
        %7487 = vmatmul.bf16.gmra.mxu0 %v7099
        %v7488 = vpop.f32.mrf.mxu0
        %v7489 = vadd.f32 %v7471, %v7488
        %v7490 = vpop.f32.mrf.mxu0
        %v7491 = vadd.f32 %v7473, %v7490
        %7492 = vmatmul.bf16.gmra.mxu0 %v7102
        %v7493 = vpop.f32.mrf.mxu0
        %v7494 = vadd.f32 %v7476, %v7493
        %v7495 = vpop.f32.mrf.mxu0
        %7496 = vdwg.mxu0
        %7497 = vmatpush.bf16.msra.mxu0 0
        %7498 = vmatpush.bf16.msra.mxu0 0
        %7499 = vmatpush.bf16.msra.mxu0 0
        %7500 = vmatpush.bf16.msra.mxu0 0
        %7501 = vmatpush.bf16.msra.mxu0 0
        %7502 = vmatpush.bf16.msra.mxu0 0
        %7503 = vmatpush.bf16.msra.mxu0 0
        %7504 = vmatpush.bf16.msra.mxu0 %v7453
        %7505 = vmatmul.bf16.gmra.mxu0 %v7443
        %v7506 = vpop.f32.mrf.mxu0
        %v7507 = vadd.f32 %v7489, %v7506
        %v7508 = vpop.f32.mrf.mxu0
        %v7509 = vadd.f32 %v7491, %v7508
        %7510 = vmatmul.bf16.gmra.mxu0 %v7446
        %v7511 = vpop.f32.mrf.mxu0
        %v7512 = vadd.f32 %v7494, %v7511
        %v7513 = vpop.f32.mrf.mxu0
        %7514 = vdwg.mxu0
        %7515 = vmatpush.bf16.msra.mxu0 %v7364
        %7516 = vmatpush.bf16.msra.mxu0 %v7361
        %7517 = vmatpush.bf16.msra.mxu0 %v7358
        %7518 = vmatpush.bf16.msra.mxu0 %v7355
        %7519 = vmatpush.bf16.msra.mxu0 %v7352
        %7520 = vmatpush.bf16.msra.mxu0 %v7349
        %7521 = vmatpush.bf16.msra.mxu0 %v7346
        %7522 = vmatpush.bf16.msra.mxu0 %v7343
        %7523 = vmatmul.bf16.gmra.mxu0 %v7098
        %v7524 = vpop.f32.mrf.mxu0
        %v7525 = vadd.f32 0.0, %v7524
        %v7526 = vpop.f32.mrf.mxu0
        %v7527 = vadd.f32 0.0, %v7526
        %7528 = vmatmul.bf16.gmra.mxu0 %v7101
        %v7529 = vpop.f32.mrf.mxu0
        %v7530 = vadd.f32 0.0, %v7529
        %v7531 = vpop.f32.mrf.mxu0
        %7532 = vdwg.mxu0
        %7533 = vmatpush.bf16.msra.mxu0 %v7388
        %7534 = vmatpush.bf16.msra.mxu0 %v7385
        %7535 = vmatpush.bf16.msra.mxu0 %v7382
        %7536 = vmatpush.bf16.msra.mxu0 %v7379
        %7537 = vmatpush.bf16.msra.mxu0 %v7376
        %7538 = vmatpush.bf16.msra.mxu0 %v7373
        %7539 = vmatpush.bf16.msra.mxu0 %v7370
        %7540 = vmatpush.bf16.msra.mxu0 %v7367
        %7541 = vmatmul.bf16.gmra.mxu0 %v7099
        %v7542 = vpop.f32.mrf.mxu0
        %v7543 = vadd.f32 %v7525, %v7542
        %v7544 = vpop.f32.mrf.mxu0
        %v7545 = vadd.f32 %v7527, %v7544
        %7546 = vmatmul.bf16.gmra.mxu0 %v7102
        %v7547 = vpop.f32.mrf.mxu0
        %v7548 = vadd.f32 %v7530, %v7547
        %v7549 = vpop.f32.mrf.mxu0
        %7550 = vdwg.mxu0
        %7551 = vmatpush.bf16.msra.mxu0 0
        %7552 = vmatpush.bf16.msra.mxu0 0
        %7553 = vmatpush.bf16.msra.mxu0 0
        %7554 = vmatpush.bf16.msra.mxu0 0
        %7555 = vmatpush.bf16.msra.mxu0 0
        %7556 = vmatpush.bf16.msra.mxu0 0
        %7557 = vmatpush.bf16.msra.mxu0 0
        %7558 = vmatpush.bf16.msra.mxu0 %v7456
        %7559 = vmatmul.bf16.gmra.mxu0 %v7443
        %v7560 = vpop.f32.mrf.mxu0
        %v7561 = vadd.f32 %v7543, %v7560
        %v7562 = vpop.f32.mrf.mxu0
        %v7563 = vadd.f32 %v7545, %v7562
        %7564 = vmatmul.bf16.gmra.mxu0 %v7446
        %v7565 = vpop.f32.mrf.mxu0
        %v7566 = vadd.f32 %v7548, %v7565
        %v7567 = vpop.f32.mrf.mxu0
        %7568 = vdwg.mxu0
        %7569 = vmatpush.bf16.msra.mxu0 %v7365
        %7570 = vmatpush.bf16.msra.mxu0 %v7362
        %7571 = vmatpush.bf16.msra.mxu0 %v7359
        %7572 = vmatpush.bf16.msra.mxu0 %v7356
        %7573 = vmatpush.bf16.msra.mxu0 %v7353
        %7574 = vmatpush.bf16.msra.mxu0 %v7350
        %7575 = vmatpush.bf16.msra.mxu0 %v7347
        %7576 = vmatpush.bf16.msra.mxu0 %v7344
        %7577 = vmatmul.bf16.gmra.mxu0 %v7098
        %v7578 = vpop.f32.mrf.mxu0
        %v7579 = vadd.f32 0.0, %v7578
        %v7580 = vpop.f32.mrf.mxu0
        %v7581 = vadd.f32 0.0, %v7580
        %7582 = vmatmul.bf16.gmra.mxu0 %v7101
        %v7583 = vpop.f32.mrf.mxu0
        %v7584 = vadd.f32 0.0, %v7583
        %v7585 = vpop.f32.mrf.mxu0
        %7586 = vdwg.mxu0
        %7587 = vmatpush.bf16.msra.mxu0 %v7389
        %7588 = vmatpush.bf16.msra.mxu0 %v7386
        %7589 = vmatpush.bf16.msra.mxu0 %v7383
        %7590 = vmatpush.bf16.msra.mxu0 %v7380
        %7591 = vmatpush.bf16.msra.mxu0 %v7377
        %7592 = vmatpush.bf16.msra.mxu0 %v7374
        %7593 = vmatpush.bf16.msra.mxu0 %v7371
        %7594 = vmatpush.bf16.msra.mxu0 %v7368
        %7595 = vmatmul.bf16.gmra.mxu0 %v7099
        %v7596 = vpop.f32.mrf.mxu0
        %v7597 = vadd.f32 %v7579, %v7596
        %v7598 = vpop.f32.mrf.mxu0
        %v7599 = vadd.f32 %v7581, %v7598
        %7600 = vmatmul.bf16.gmra.mxu0 %v7102
        %v7601 = vpop.f32.mrf.mxu0
        %v7602 = vadd.f32 %v7584, %v7601
        %v7603 = vpop.f32.mrf.mxu0
        %7604 = vdwg.mxu0
        %7605 = vmatpush.bf16.msra.mxu0 0
        %7606 = vmatpush.bf16.msra.mxu0 0
        %7607 = vmatpush.bf16.msra.mxu0 0
        %7608 = vmatpush.bf16.msra.mxu0 0
        %7609 = vmatpush.bf16.msra.mxu0 0
        %7610 = vmatpush.bf16.msra.mxu0 0
        %7611 = vmatpush.bf16.msra.mxu0 0
        %7612 = vmatpush.bf16.msra.mxu0 %v7459
        %7613 = vmatmul.bf16.gmra.mxu0 %v7443
        %v7614 = vpop.f32.mrf.mxu0
        %v7615 = vadd.f32 %v7597, %v7614
        %v7616 = vpop.f32.mrf.mxu0
        %v7617 = vadd.f32 %v7599, %v7616
        %7618 = vmatmul.bf16.gmra.mxu0 %v7446
        %v7619 = vpop.f32.mrf.mxu0
        %v7620 = vadd.f32 %v7602, %v7619
        %v7621 = vpop.f32.mrf.mxu0
        %7622 = vdwg.mxu0
        %v7623 = vpack.c.bf16 %v7561, %v7507
        %v7624 = vpack.c.bf16 %v7615, %v7615
        %v7625 = vpack.c.bf16 %v7563, %v7509
        %v7626 = vpack.c.bf16 %v7617, %v7617
        %v7627 = vpack.c.bf16 %v7566, %v7512
        %v7628 = vpack.c.bf16 %v7620, %v7620
        %7629 = vst [vmem:[#allocation4] sm:$0xff] %v7623
        %vm7630 = vcmask 551936
        %7631 = vst.msk [vmem:[#allocation4 + $0x8] sm:$0xf] %vm7630, %v7624
        %7632 = vst [vmem:[#allocation4 + $0xc] sm:$0xff] %v7625
        %7633 = vst.msk [vmem:[#allocation4 + $0x14] sm:$0xf] %vm7630, %v7626
        %7634 = vst [vmem:[#allocation4 + $0x18] sm:$0x33] %v7627
        %vm7635 = vcmask 549888
        %7636 = vst.msk [vmem:[#allocation4 + $0x20] sm:$0x3] %vm7635, %v7628
        %v7637 = vld [vmem:[#allocation4] sm:$0xff]
        %v7638 = vld [vmem:[#allocation4 + $0x8] sm:$0xf]
        %v7639 = vld [vmem:[#allocation4 + $0xc] sm:$0xff]
        %v7640 = vld [vmem:[#allocation4 + $0x14] sm:$0xf]
        %v7641 = vld [vmem:[#allocation4 + $0x18] sm:$0x33]
        %v7642 = vld [vmem:[#allocation4 + $0x20] sm:$0x3]
        %v7643 = vld [vmem:[%s7] sm:$0xf]
        %v7644 = vld [vmem:[%s7 + $0x4] sm:$0xf]
        %v7645 = vld [vmem:[%s7 + $0x8] sm:$0xf]
        %s7646 = scalar_lea.vmem %s7, 12
        %v7647 = vld [vmem:[%s7646] sm:$0xf]
        %v7648 = vld [vmem:[%s7646 + $0x4] sm:$0xf]
        %v7649 = vld [vmem:[%s7646 + $0x8] sm:$0xf]
        %v7653 = vunpack.c.l.b16 %v7647
        %v7654 = vunpack.c.l.b16 %v7648
        %v7655 = vunpack.c.l.b16 %v7649
        %v7656 = vpack.c.b16 %v7654, %v7653
        %v7657 = vpack.c.b16 %v7655, %v7655
        %v7664 = vunpack.c.l.b16 %v7637
        %v7665 = vunpack.c.h.b16 %v7637
        %v7666 = vunpack.c.l.b16 %v7638
        %v7667 = vunpack.c.l.b16 %v7639
        %v7668 = vunpack.c.h.b16 %v7639
        %v7669 = vunpack.c.l.b16 %v7640
        %v7670 = vunpack.c.l.b16 %v7641
        %v7671 = vunpack.c.h.b16 %v7641
        %v7672 = vunpack.c.l.b16 %v7642
        %v7673 = vpack.c.b16 %v7667, %v7664
        %v7674 = vpack.c.b16 %v7668, %v7665
        %v7675 = vpack.c.b16 %v7669, %v7666
        %v7676 = vpack.c.b16 %v7670, %v7670
        %v7677 = vpack.c.b16 %v7671, %v7671
        %v7678 = vpack.c.b16 %v7672, %v7672
        %7679 = vrot.lane.b32.xlu0 %v7673, 127
        %v7680 = vpop.permute.xlu0 %7679
        %7681 = vrot.lane.b32.xlu0 %v7674, 127
        %v7682 = vpop.permute.xlu0 %7681
        %7683 = vrot.lane.b32.xlu0 %v7675, 127
        %v7684 = vpop.permute.xlu0 %7683
        %7685 = vrot.lane.b32.xlu0 %v7676, 127
        %v7686 = vpop.permute.xlu0 %7685
        %7687 = vrot.lane.b32.xlu0 %v7677, 127
        %v7688 = vpop.permute.xlu0 %7687
        %7689 = vrot.lane.b32.xlu0 %v7678, 127
        %v7690 = vpop.permute.xlu0 %7689
        %v7691 = vsel %vm4271, %v7680, %v7682
        %v7692 = vsel %vm4271, %v7682, %v7684
        %v7693 = vsel %vm4271, %v7686, %v7688
        %v7694 = vsel %vm4271, %v7688, %v7690
        %vm7698 = vcmask 162816
        %v7700 = vsel %vm7698, %v7656, 0
        %v7703 = vsel %vm7698, %v7657, 0
        %v7706 = vsel %vm3454, %v7693, 0
        %v7709 = vsel %vm3454, %v7694, 0
        %v7712 = vsel %vm3454, %v7690, 0
        %7714 = vmatpush.bf16.msra.mxu0 0
        %7715 = vmatpush.bf16.msra.mxu0 0
        %7716 = vmatpush.bf16.msra.mxu0 0
        %7717 = vmatpush.bf16.msra.mxu0 0
        %7718 = vmatpush.bf16.msra.mxu0 0
        %7719 = vmatpush.bf16.msra.mxu0 0
        %7720 = vmatpush.bf16.msra.mxu0 %v7706
        %7721 = vmatpush.bf16.msra.mxu0 %v7691
        %7722 = vmatmul.bf16.gmra.mxu0 %v7700
        %v7723 = vpop.f32.mrf.mxu0
        %v7724 = vadd.f32 0.0, %v7723
        %v7725 = vpop.f32.mrf.mxu0
        %v7726 = vadd.f32 0.0, %v7725
        %7727 = vmatmul.bf16.gmra.mxu0 %v7703
        %v7728 = vpop.f32.mrf.mxu0
        %v7729 = vadd.f32 0.0, %v7728
        %v7730 = vpop.f32.mrf.mxu0
        %7731 = vdwg.mxu0
        %7732 = vmatpush.bf16.msra.mxu0 0
        %7733 = vmatpush.bf16.msra.mxu0 0
        %7734 = vmatpush.bf16.msra.mxu0 0
        %7735 = vmatpush.bf16.msra.mxu0 0
        %7736 = vmatpush.bf16.msra.mxu0 0
        %7737 = vmatpush.bf16.msra.mxu0 0
        %7738 = vmatpush.bf16.msra.mxu0 %v7709
        %7739 = vmatpush.bf16.msra.mxu0 %v7692
        %7740 = vmatmul.bf16.gmra.mxu0 %v7700
        %v7741 = vpop.f32.mrf.mxu0
        %v7742 = vadd.f32 0.0, %v7741
        %v7743 = vpop.f32.mrf.mxu0
        %v7744 = vadd.f32 0.0, %v7743
        %7745 = vmatmul.bf16.gmra.mxu0 %v7703
        %v7746 = vpop.f32.mrf.mxu0
        %v7747 = vadd.f32 0.0, %v7746
        %v7748 = vpop.f32.mrf.mxu0
        %7749 = vdwg.mxu0
        %7750 = vmatpush.bf16.msra.mxu0 0
        %7751 = vmatpush.bf16.msra.mxu0 0
        %7752 = vmatpush.bf16.msra.mxu0 0
        %7753 = vmatpush.bf16.msra.mxu0 0
        %7754 = vmatpush.bf16.msra.mxu0 0
        %7755 = vmatpush.bf16.msra.mxu0 0
        %7756 = vmatpush.bf16.msra.mxu0 %v7712
        %7757 = vmatpush.bf16.msra.mxu0 %v7684
        %7758 = vmatmul.bf16.gmra.mxu0 %v7700
        %v7759 = vpop.f32.mrf.mxu0
        %v7760 = vadd.f32 0.0, %v7759
        %v7761 = vpop.f32.mrf.mxu0
        %v7762 = vadd.f32 0.0, %v7761
        %7763 = vmatmul.bf16.gmra.mxu0 %v7703
        %v7764 = vpop.f32.mrf.mxu0
        %v7765 = vadd.f32 0.0, %v7764
        %v7766 = vpop.f32.mrf.mxu0
        %7767 = vdwg.mxu0
        %v7771 = vunpack.c.l.b16 %v7643
        %v7772 = vunpack.c.l.b16 %v7644
        %v7773 = vunpack.c.l.b16 %v7645
        %v7774 = vpack.c.b16 %v7772, %v7771
        %v7775 = vpack.c.b16 %v7773, %v7773
        %v7780 = vsel %vm7698, %v7774, 0
        %v7783 = vsel %vm7698, %v7775, 0
        %v7786 = vsel %vm3454, %v7676, 0
        %v7789 = vsel %vm3454, %v7677, 0
        %v7792 = vsel %vm3454, %v7678, 0
        %7794 = vmatpush.bf16.msra.mxu0 0
        %7795 = vmatpush.bf16.msra.mxu0 0
        %7796 = vmatpush.bf16.msra.mxu0 0
        %7797 = vmatpush.bf16.msra.mxu0 0
        %7798 = vmatpush.bf16.msra.mxu0 0
        %7799 = vmatpush.bf16.msra.mxu0 0
        %7800 = vmatpush.bf16.msra.mxu0 %v7786
        %7801 = vmatpush.bf16.msra.mxu0 %v7673
        %7802 = vmatmul.bf16.gmra.mxu0 %v7780
        %v7803 = vpop.f32.mrf.mxu0
        %v7804 = vadd.f32 %v7724, %v7803
        %v7805 = vpop.f32.mrf.mxu0
        %v7806 = vadd.f32 %v7726, %v7805
        %7807 = vmatmul.bf16.gmra.mxu0 %v7783
        %v7808 = vpop.f32.mrf.mxu0
        %v7809 = vadd.f32 %v7729, %v7808
        %v7810 = vpop.f32.mrf.mxu0
        %7811 = vdwg.mxu0
        %7812 = vmatpush.bf16.msra.mxu0 0
        %7813 = vmatpush.bf16.msra.mxu0 0
        %7814 = vmatpush.bf16.msra.mxu0 0
        %7815 = vmatpush.bf16.msra.mxu0 0
        %7816 = vmatpush.bf16.msra.mxu0 0
        %7817 = vmatpush.bf16.msra.mxu0 0
        %7818 = vmatpush.bf16.msra.mxu0 %v7789
        %7819 = vmatpush.bf16.msra.mxu0 %v7674
        %7820 = vmatmul.bf16.gmra.mxu0 %v7780
        %v7821 = vpop.f32.mrf.mxu0
        %v7822 = vadd.f32 %v7742, %v7821
        %v7823 = vpop.f32.mrf.mxu0
        %v7824 = vadd.f32 %v7744, %v7823
        %7825 = vmatmul.bf16.gmra.mxu0 %v7783
        %v7826 = vpop.f32.mrf.mxu0
        %v7827 = vadd.f32 %v7747, %v7826
        %v7828 = vpop.f32.mrf.mxu0
        %7829 = vdwg.mxu0
        %7830 = vmatpush.bf16.msra.mxu0 0
        %7831 = vmatpush.bf16.msra.mxu0 0
        %7832 = vmatpush.bf16.msra.mxu0 0
        %7833 = vmatpush.bf16.msra.mxu0 0
        %7834 = vmatpush.bf16.msra.mxu0 0
        %7835 = vmatpush.bf16.msra.mxu0 0
        %7836 = vmatpush.bf16.msra.mxu0 %v7792
        %7837 = vmatpush.bf16.msra.mxu0 %v7675
        %7838 = vmatmul.bf16.gmra.mxu0 %v7780
        %v7839 = vpop.f32.mrf.mxu0
        %v7840 = vadd.f32 %v7760, %v7839
        %v7841 = vpop.f32.mrf.mxu0
        %v7842 = vadd.f32 %v7762, %v7841
        %7843 = vmatmul.bf16.gmra.mxu0 %v7783
        %v7844 = vpop.f32.mrf.mxu0
        %v7845 = vadd.f32 %v7765, %v7844
        %v7846 = vpop.f32.mrf.mxu0
        %7847 = vdwg.mxu0
        %s7848 = scalar_lea.vmem %s7, 24
        %v7849 = vld [vmem:[%s7848] sm:$0xf]
        %v7850 = vld [vmem:[%s7848 + $0x4] sm:$0xf]
        %v7851 = vld [vmem:[%s7848 + $0x8] sm:$0xf]
        %v7855 = vunpack.c.l.b16 %v7849
        %v7856 = vunpack.c.l.b16 %v7850
        %v7857 = vunpack.c.l.b16 %v7851
        %v7858 = vpack.c.b16 %v7856, %v7855
        %v7859 = vpack.c.b16 %v7857, %v7857
        %7860 = vrot.lane.b32.xlu0 %v7673, 110
        %v7861 = vpop.permute.xlu0 %7860
        %7862 = vrot.lane.b32.xlu0 %v7674, 110
        %v7863 = vpop.permute.xlu0 %7862
        %7864 = vrot.lane.b32.xlu0 %v7675, 110
        %v7865 = vpop.permute.xlu0 %7864
        %7866 = vrot.lane.b32.xlu0 %v7676, 110
        %v7867 = vpop.permute.xlu0 %7866
        %7868 = vrot.lane.b32.xlu0 %v7677, 110
        %v7869 = vpop.permute.xlu0 %7868
        %7870 = vrot.lane.b32.xlu0 %v7678, 110
        %v7871 = vpop.permute.xlu0 %7870
        %v7872 = vsel %vm6987, %v7861, %v7863
        %v7873 = vsel %vm6987, %v7863, %v7865
        %v7874 = vsel %vm6987, %v7867, %v7869
        %v7875 = vsel %vm6987, %v7869, %v7871
        %v7880 = vsel %vm7698, %v7858, 0
        %v7883 = vsel %vm7698, %v7859, 0
        %v7886 = vsel %vm3454, %v7874, 0
        %v7889 = vsel %vm3454, %v7875, 0
        %v7892 = vsel %vm3454, %v7871, 0
        %7894 = vmatpush.bf16.msra.mxu0 0
        %7895 = vmatpush.bf16.msra.mxu0 0
        %7896 = vmatpush.bf16.msra.mxu0 0
        %7897 = vmatpush.bf16.msra.mxu0 0
        %7898 = vmatpush.bf16.msra.mxu0 0
        %7899 = vmatpush.bf16.msra.mxu0 0
        %7900 = vmatpush.bf16.msra.mxu0 %v7886
        %7901 = vmatpush.bf16.msra.mxu0 %v7872
        %7902 = vmatmul.bf16.gmra.mxu0 %v7880
        %v7903 = vpop.f32.mrf.mxu0
        %v7904 = vadd.f32 0.0, %v7903
        %v7905 = vpop.f32.mrf.mxu0
        %v7906 = vadd.f32 0.0, %v7905
        %7907 = vmatmul.bf16.gmra.mxu0 %v7883
        %v7908 = vpop.f32.mrf.mxu0
        %v7909 = vadd.f32 0.0, %v7908
        %v7910 = vpop.f32.mrf.mxu0
        %7911 = vdwg.mxu0
        %7912 = vmatpush.bf16.msra.mxu0 0
        %7913 = vmatpush.bf16.msra.mxu0 0
        %7914 = vmatpush.bf16.msra.mxu0 0
        %7915 = vmatpush.bf16.msra.mxu0 0
        %7916 = vmatpush.bf16.msra.mxu0 0
        %7917 = vmatpush.bf16.msra.mxu0 0
        %7918 = vmatpush.bf16.msra.mxu0 %v7889
        %7919 = vmatpush.bf16.msra.mxu0 %v7873
        %7920 = vmatmul.bf16.gmra.mxu0 %v7880
        %v7921 = vpop.f32.mrf.mxu0
        %v7922 = vadd.f32 0.0, %v7921
        %v7923 = vpop.f32.mrf.mxu0
        %v7924 = vadd.f32 0.0, %v7923
        %7925 = vmatmul.bf16.gmra.mxu0 %v7883
        %v7926 = vpop.f32.mrf.mxu0
        %v7927 = vadd.f32 0.0, %v7926
        %v7928 = vpop.f32.mrf.mxu0
        %7929 = vdwg.mxu0
        %7930 = vmatpush.bf16.msra.mxu0 0
        %7931 = vmatpush.bf16.msra.mxu0 0
        %7932 = vmatpush.bf16.msra.mxu0 0
        %7933 = vmatpush.bf16.msra.mxu0 0
        %7934 = vmatpush.bf16.msra.mxu0 0
        %7935 = vmatpush.bf16.msra.mxu0 0
        %7936 = vmatpush.bf16.msra.mxu0 %v7892
        %7937 = vmatpush.bf16.msra.mxu0 %v7865
        %7938 = vmatmul.bf16.gmra.mxu0 %v7880
        %v7939 = vpop.f32.mrf.mxu0
        %v7940 = vadd.f32 0.0, %v7939
        %v7941 = vpop.f32.mrf.mxu0
        %v7942 = vadd.f32 0.0, %v7941
        %7943 = vmatmul.bf16.gmra.mxu0 %v7883
        %v7944 = vpop.f32.mrf.mxu0
        %v7945 = vadd.f32 0.0, %v7944
        %v7946 = vpop.f32.mrf.mxu0
        %7947 = vdwg.mxu0
        %v7948 = vadd.f32 %v7804, %v7904
        %v7949 = vadd.f32 %v7822, %v7922
        %v7950 = vadd.f32 %v7840, %v7940
        %v7951 = vadd.f32 %v7806, %v7906
        %v7952 = vadd.f32 %v7824, %v7924
        %v7953 = vadd.f32 %v7842, %v7942
        %v7954 = vadd.f32 %v7809, %v7909
        %v7955 = vadd.f32 %v7827, %v7927
        %v7956 = vadd.f32 %v7845, %v7945
        %s7957 = scalar_lea.vmem %s7, 36
        %v7958 = vld [vmem:[%s7957] sm:$0xf]
        %v7959 = vld [vmem:[%s7957 + $0x4] sm:$0xf]
        %v7960 = vld [vmem:[%s7957 + $0x8] sm:$0xf]
        %v7964 = vunpack.c.l.b16 %v7958
        %v7965 = vunpack.c.l.b16 %v7959
        %v7966 = vunpack.c.l.b16 %v7960
        %v7967 = vpack.c.b16 %v7965, %v7964
        %v7968 = vpack.c.b16 %v7966, %v7966
        %7969 = vrot.lane.b32.xlu0 %v7673, 109
        %v7970 = vpop.permute.xlu0 %7969
        %7971 = vrot.lane.b32.xlu0 %v7674, 109
        %v7972 = vpop.permute.xlu0 %7971
        %7973 = vrot.lane.b32.xlu0 %v7675, 109
        %v7974 = vpop.permute.xlu0 %7973
        %7975 = vrot.lane.b32.xlu0 %v7676, 109
        %v7976 = vpop.permute.xlu0 %7975
        %7977 = vrot.lane.b32.xlu0 %v7677, 109
        %v7978 = vpop.permute.xlu0 %7977
        %7979 = vrot.lane.b32.xlu0 %v7678, 109
        %v7980 = vpop.permute.xlu0 %7979
        %vm7981 = vcmask 891904
        %v7982 = vsel %vm7981, %v7970, %v7972
        %v7983 = vsel %vm7981, %v7972, %v7974
        %v7984 = vsel %vm7981, %v7976, %v7978
        %v7985 = vsel %vm7981, %v7978, %v7980
        %v7990 = vsel %vm7698, %v7967, 0
        %v7993 = vsel %vm7698, %v7968, 0
        %v7996 = vsel %vm3454, %v7984, 0
        %v7999 = vsel %vm3454, %v7985, 0
        %v8002 = vsel %vm3454, %v7980, 0
        %8004 = vmatpush.bf16.msra.mxu0 0
        %8005 = vmatpush.bf16.msra.mxu0 0
        %8006 = vmatpush.bf16.msra.mxu0 0
        %8007 = vmatpush.bf16.msra.mxu0 0
        %8008 = vmatpush.bf16.msra.mxu0 0
        %8009 = vmatpush.bf16.msra.mxu0 0
        %8010 = vmatpush.bf16.msra.mxu0 %v7996
        %8011 = vmatpush.bf16.msra.mxu0 %v7982
        %8012 = vmatmul.bf16.gmra.mxu0 %v7990
        %v8013 = vpop.f32.mrf.mxu0
        %v8014 = vadd.f32 0.0, %v8013
        %v8015 = vpop.f32.mrf.mxu0
        %v8016 = vadd.f32 0.0, %v8015
        %8017 = vmatmul.bf16.gmra.mxu0 %v7993
        %v8018 = vpop.f32.mrf.mxu0
        %v8019 = vadd.f32 0.0, %v8018
        %v8020 = vpop.f32.mrf.mxu0
        %8021 = vdwg.mxu0
        %8022 = vmatpush.bf16.msra.mxu0 0
        %8023 = vmatpush.bf16.msra.mxu0 0
        %8024 = vmatpush.bf16.msra.mxu0 0
        %8025 = vmatpush.bf16.msra.mxu0 0
        %8026 = vmatpush.bf16.msra.mxu0 0
        %8027 = vmatpush.bf16.msra.mxu0 0
        %8028 = vmatpush.bf16.msra.mxu0 %v7999
        %8029 = vmatpush.bf16.msra.mxu0 %v7983
        %8030 = vmatmul.bf16.gmra.mxu0 %v7990
        %v8031 = vpop.f32.mrf.mxu0
        %v8032 = vadd.f32 0.0, %v8031
        %v8033 = vpop.f32.mrf.mxu0
        %v8034 = vadd.f32 0.0, %v8033
        %8035 = vmatmul.bf16.gmra.mxu0 %v7993
        %v8036 = vpop.f32.mrf.mxu0
        %v8037 = vadd.f32 0.0, %v8036
        %v8038 = vpop.f32.mrf.mxu0
        %8039 = vdwg.mxu0
        %8040 = vmatpush.bf16.msra.mxu0 0
        %8041 = vmatpush.bf16.msra.mxu0 0
        %8042 = vmatpush.bf16.msra.mxu0 0
        %8043 = vmatpush.bf16.msra.mxu0 0
        %8044 = vmatpush.bf16.msra.mxu0 0
        %8045 = vmatpush.bf16.msra.mxu0 0
        %8046 = vmatpush.bf16.msra.mxu0 %v8002
        %8047 = vmatpush.bf16.msra.mxu0 %v7974
        %8048 = vmatmul.bf16.gmra.mxu0 %v7990
        %v8049 = vpop.f32.mrf.mxu0
        %v8050 = vadd.f32 0.0, %v8049
        %v8051 = vpop.f32.mrf.mxu0
        %v8052 = vadd.f32 0.0, %v8051
        %8053 = vmatmul.bf16.gmra.mxu0 %v7993
        %v8054 = vpop.f32.mrf.mxu0
        %v8055 = vadd.f32 0.0, %v8054
        %v8056 = vpop.f32.mrf.mxu0
        %8057 = vdwg.mxu0
        %v8058 = vadd.f32 %v7948, %v8014
        %v8059 = vadd.f32 %v7949, %v8032
        %v8060 = vadd.f32 %v7950, %v8050
        %v8061 = vadd.f32 %v7951, %v8016
        %v8062 = vadd.f32 %v7952, %v8034
        %v8063 = vadd.f32 %v7953, %v8052
        %v8064 = vadd.f32 %v7954, %v8019
        %v8065 = vadd.f32 %v7955, %v8037
        %v8066 = vadd.f32 %v7956, %v8055
        %8067 = vst [vmem:[#allocation6] sm:$0xff] %v8058
        %8068 = vst [vmem:[#allocation6 + $0x8] sm:$0xff] %v8059
        %vm8069 = vcmask 400384
        %8070 = vst.msk [vmem:[#allocation6 + $0x10] sm:$0xff] %vm8069, %v8060
        %8071 = vst [vmem:[#allocation6 + $0x18] sm:$0xff] %v8061
        %8072 = vst [vmem:[#allocation6 + $0x20] sm:$0xff] %v8062
        %8073 = vst.msk [vmem:[#allocation6 + $0x28] sm:$0xff] %vm8069, %v8063
        %8074 = vst [vmem:[#allocation6 + $0x30] sm:$0xff] %v8064
        %8075 = vst [vmem:[#allocation6 + $0x38] sm:$0xff] %v8065
        %8076 = vst.msk [vmem:[#allocation6 + $0x40] sm:$0xff] %vm8069, %v8066
        %v8077 = vld [vmem:[#allocation6] sm:$0xff]
        %v8078 = vld [vmem:[#allocation6 + $0x8] sm:$0xff]
        %v8079 = vld [vmem:[#allocation6 + $0x10] sm:$0xff]
        %v8080 = vld [vmem:[#allocation6 + $0x18] sm:$0xff]
        %v8081 = vld [vmem:[#allocation6 + $0x20] sm:$0xff]
        %v8082 = vld [vmem:[#allocation6 + $0x28] sm:$0xff]
        %v8083 = vld [vmem:[#allocation6 + $0x30] sm:$0xff]
        %v8084 = vld [vmem:[#allocation6 + $0x38] sm:$0xff]
        %v8085 = vld [vmem:[#allocation6 + $0x40] sm:$0xff]
        %8095 = vrot.lane.b32.xlu0 %v8077, 127
        %v8096 = vpop.permute.xlu0 %8095
        %8097 = vrot.lane.b32.xlu0 %v8078, 127
        %v8098 = vpop.permute.xlu0 %8097
        %8099 = vrot.lane.b32.xlu0 %v8079, 127
        %v8100 = vpop.permute.xlu0 %8099
        %8101 = vrot.lane.b32.xlu0 %v8080, 127
        %v8102 = vpop.permute.xlu0 %8101
        %8103 = vrot.lane.b32.xlu0 %v8081, 127
        %v8104 = vpop.permute.xlu0 %8103
        %8105 = vrot.lane.b32.xlu0 %v8082, 127
        %v8106 = vpop.permute.xlu0 %8105
        %8107 = vrot.lane.b32.xlu0 %v8083, 127
        %v8108 = vpop.permute.xlu0 %8107
        %8109 = vrot.lane.b32.xlu0 %v8084, 127
        %v8110 = vpop.permute.xlu0 %8109
        %8111 = vrot.lane.b32.xlu0 %v8085, 127
        %v8112 = vpop.permute.xlu0 %8111
        %v8113 = vsel %vm662, %v8096, %v8098
        %v8114 = vsel %vm662, %v8098, %v8100
        %v8115 = vsel %vm662, %v8102, %v8104
        %v8116 = vsel %vm662, %v8104, %v8106
        %v8117 = vsel %vm662, %v8108, %v8110
        %v8118 = vsel %vm662, %v8110, %v8112
        %v8128 = vmax.f32 %v8077, %v8113
        %v8129 = vmax.f32 %v8078, %v8114
        %v8130 = vmax.f32 %v8079, %v8100
        %v8131 = vmax.f32 %v8080, %v8115
        %v8132 = vmax.f32 %v8081, %v8116
        %v8133 = vmax.f32 %v8082, %v8106
        %v8134 = vmax.f32 %v8083, %v8117
        %v8135 = vmax.f32 %v8084, %v8118
        %v8136 = vmax.f32 %v8085, %v8112
        %8146 = vrot.lane.b32.xlu0 %v8128, 110
        %v8147 = vpop.permute.xlu0 %8146
        %8148 = vrot.lane.b32.xlu0 %v8129, 110
        %v8149 = vpop.permute.xlu0 %8148
        %8150 = vrot.lane.b32.xlu0 %v8130, 110
        %v8151 = vpop.permute.xlu0 %8150
        %8152 = vrot.lane.b32.xlu0 %v8131, 110
        %v8153 = vpop.permute.xlu0 %8152
        %8154 = vrot.lane.b32.xlu0 %v8132, 110
        %v8155 = vpop.permute.xlu0 %8154
        %8156 = vrot.lane.b32.xlu0 %v8133, 110
        %v8157 = vpop.permute.xlu0 %8156
        %8158 = vrot.lane.b32.xlu0 %v8134, 110
        %v8159 = vpop.permute.xlu0 %8158
        %8160 = vrot.lane.b32.xlu0 %v8135, 110
        %v8161 = vpop.permute.xlu0 %8160
        %8162 = vrot.lane.b32.xlu0 %v8136, 110
        %v8163 = vpop.permute.xlu0 %8162
        %vm8164 = vcmask 900096
        %v8165 = vsel %vm8164, %v8147, %v8149
        %v8166 = vsel %vm8164, %v8149, %v8151
        %v8167 = vsel %vm8164, %v8153, %v8155
        %v8168 = vsel %vm8164, %v8155, %v8157
        %v8169 = vsel %vm8164, %v8159, %v8161
        %v8170 = vsel %vm8164, %v8161, %v8163
        %v8180 = vmax.f32 %v8128, %v8165
        %v8181 = vmax.f32 %v8129, %v8166
        %v8182 = vmax.f32 %v8130, %v8151
        %v8183 = vmax.f32 %v8131, %v8167
        %v8184 = vmax.f32 %v8132, %v8168
        %v8185 = vmax.f32 %v8133, %v8157
        %v8186 = vmax.f32 %v8134, %v8169
        %v8187 = vmax.f32 %v8135, %v8170
        %v8188 = vmax.f32 %v8136, %v8163
        %v8189 = vld [vmem:[%s8] sm:$0xff]
        %v8190 = vld [vmem:[%s8 + $0x8] sm:$0xff]
        %v8191 = vld [vmem:[%s8 + $0x10] sm:$0xff]
        %8193 = vset.pattern.permute.xlu0 0
        %8194 = vperm.xlu0 %8193, %v8189
        %v8195 = vpop.permute.xlu0 %8194
        %8198 = vset.pattern.permute.xlu0 0
        %8199 = vperm.xlu0 %8198, %v8190
        %v8200 = vpop.permute.xlu0 %8199
        %8203 = vset.pattern.permute.xlu0 0
        %8204 = vperm.xlu0 %8203, %v8191
        %v8205 = vpop.permute.xlu0 %8204
        %v8207 = vadd.f32 %v8180, %v8195
        %v8208 = vadd.f32 %v8181, %v8195
        %v8209 = vadd.f32 %v8182, %v8195
        %v8210 = vadd.f32 %v8183, %v8200
        %v8211 = vadd.f32 %v8184, %v8200
        %v8212 = vadd.f32 %v8185, %v8200
        %v8213 = vadd.f32 %v8186, %v8205
        %v8214 = vadd.f32 %v8187, %v8205
        %v8215 = vadd.f32 %v8188, %v8205
        %v8216 = vmax.f32 %v8207, 0.0
        %v8217 = vmax.f32 %v8208, 0.0
        %v8218 = vmax.f32 %v8209, 0.0
        %v8219 = vmax.f32 %v8210, 0.0
        %v8220 = vmax.f32 %v8211, 0.0
        %v8221 = vmax.f32 %v8212, 0.0
        %v8222 = vmax.f32 %v8213, 0.0
        %v8223 = vmax.f32 %v8214, 0.0
        %v8224 = vmax.f32 %v8215, 0.0
        %v8225 = vpack.c.bf16 %v8219, %v8216
        %v8226 = vpack.c.bf16 %v8220, %v8217
        %v8227 = vpack.c.bf16 %v8221, %v8218
        %v8228 = vpack.c.bf16 %v8222, %v8222
        %v8229 = vpack.c.bf16 %v8223, %v8223
        %v8230 = vpack.c.bf16 %v8224, %v8224
        %v8231 = vld [vmem:[%s12] sm:$0xf]
        %v8232 = vld [vmem:[%s12 + $0x4] sm:$0xf]
        %v8233 = vld [vmem:[%s12 + $0x8] sm:$0xf]
        %v8234 = vld [vmem:[%s12 + $0xc] sm:$0xf]
        %v8235 = vld [vmem:[%s12 + $0x10] sm:$0xf]
        %v8236 = vld [vmem:[%s12 + $0x14] sm:$0xf]
        %v8237 = vld [vmem:[%s12 + $0x18] sm:$0xf]
        %v8238 = vld [vmem:[%s12 + $0x1c] sm:$0xf]
        %v8239 = vld [vmem:[%s12 + $0x20] sm:$0xf]
        %v8240 = vld [vmem:[%s12 + $0x24] sm:$0xf]
        %v8241 = vld [vmem:[%s12 + $0x28] sm:$0xf]
        %v8242 = vld [vmem:[%s12 + $0x2c] sm:$0xf]
        %v8243 = vld [vmem:[%s12 + $0x30] sm:$0xf]
        %v8244 = vld [vmem:[%s12 + $0x34] sm:$0xf]
        %v8245 = vld [vmem:[%s12 + $0x38] sm:$0xf]
        %v8246 = vld [vmem:[%s12 + $0x3c] sm:$0xf]
        %v8247 = vld [vmem:[%s12 + $0x40] sm:$0xf]
        %v8248 = vld [vmem:[%s12 + $0x44] sm:$0xf]
        %v8249 = vld [vmem:[%s12 + $0x48] sm:$0xf]
        %v8250 = vld [vmem:[%s12 + $0x4c] sm:$0xf]
        %v8251 = vld [vmem:[%s12 + $0x50] sm:$0xf]
        %v8252 = vld [vmem:[%s12 + $0x54] sm:$0xf]
        %v8253 = vld [vmem:[%s12 + $0x58] sm:$0xf]
        %v8254 = vld [vmem:[%s12 + $0x5c] sm:$0xf]
        %v8255 = vld [vmem:[%s12 + $0x60] sm:$0xf]
        %v8256 = vld [vmem:[%s12 + $0x64] sm:$0xf]
        %v8257 = vld [vmem:[%s12 + $0x68] sm:$0xf]
        %v8258 = vld [vmem:[%s12 + $0x6c] sm:$0xf]
        %v8259 = vld [vmem:[%s12 + $0x70] sm:$0xf]
        %v8260 = vld [vmem:[%s12 + $0x74] sm:$0xf]
        %v8261 = vld [vmem:[%s12 + $0x78] sm:$0xf]
        %v8262 = vld [vmem:[%s12 + $0x7c] sm:$0xf]
        %v8263 = vld [vmem:[%s12 + $0x80] sm:$0xf]
        %v8264 = vld [vmem:[%s12 + $0x84] sm:$0xf]
        %v8265 = vld [vmem:[%s12 + $0x88] sm:$0xf]
        %v8266 = vld [vmem:[%s12 + $0x8c] sm:$0x7]
        %v8303 = vunpack.c.l.b16 %v8231
        %v8304 = vunpack.c.l.b16 %v8232
        %v8305 = vunpack.c.l.b16 %v8233
        %v8306 = vunpack.c.l.b16 %v8234
        %v8307 = vunpack.c.l.b16 %v8235
        %v8308 = vunpack.c.l.b16 %v8236
        %v8309 = vunpack.c.l.b16 %v8237
        %v8310 = vunpack.c.l.b16 %v8238
        %v8311 = vunpack.c.l.b16 %v8239
        %v8312 = vunpack.c.l.b16 %v8240
        %v8313 = vunpack.c.l.b16 %v8241
        %v8314 = vunpack.c.l.b16 %v8242
        %v8315 = vunpack.c.l.b16 %v8243
        %v8316 = vunpack.c.l.b16 %v8244
        %v8317 = vunpack.c.l.b16 %v8245
        %v8318 = vunpack.c.l.b16 %v8246
        %v8319 = vunpack.c.l.b16 %v8247
        %v8320 = vunpack.c.l.b16 %v8248
        %v8321 = vunpack.c.l.b16 %v8249
        %v8322 = vunpack.c.l.b16 %v8250
        %v8323 = vunpack.c.l.b16 %v8251
        %v8324 = vunpack.c.l.b16 %v8252
        %v8325 = vunpack.c.l.b16 %v8253
        %v8326 = vunpack.c.l.b16 %v8254
        %v8327 = vunpack.c.l.b16 %v8255
        %v8328 = vunpack.c.l.b16 %v8256
        %v8329 = vunpack.c.l.b16 %v8257
        %v8330 = vunpack.c.l.b16 %v8258
        %v8331 = vunpack.c.l.b16 %v8259
        %v8332 = vunpack.c.l.b16 %v8260
        %v8333 = vunpack.c.l.b16 %v8261
        %v8334 = vunpack.c.l.b16 %v8262
        %v8335 = vunpack.c.l.b16 %v8263
        %v8336 = vunpack.c.l.b16 %v8264
        %v8337 = vunpack.c.l.b16 %v8265
        %v8338 = vunpack.c.l.b16 %v8266
        %v8339 = vpack.c.b16 %v8304, %v8303
        %v8340 = vpack.c.b16 %v8306, %v8305
        %v8341 = vpack.c.b16 %v8308, %v8307
        %v8342 = vpack.c.b16 %v8310, %v8309
        %v8343 = vpack.c.b16 %v8312, %v8311
        %v8344 = vpack.c.b16 %v8314, %v8313
        %v8345 = vpack.c.b16 %v8316, %v8315
        %v8346 = vpack.c.b16 %v8318, %v8317
        %v8347 = vpack.c.b16 %v8320, %v8319
        %v8348 = vpack.c.b16 %v8322, %v8321
        %v8349 = vpack.c.b16 %v8324, %v8323
        %v8350 = vpack.c.b16 %v8326, %v8325
        %v8351 = vpack.c.b16 %v8328, %v8327
        %v8352 = vpack.c.b16 %v8330, %v8329
        %v8353 = vpack.c.b16 %v8332, %v8331
        %v8354 = vpack.c.b16 %v8334, %v8333
        %v8355 = vpack.c.b16 %v8336, %v8335
        %v8356 = vpack.c.b16 %v8338, %v8337
        %vm8374 = vcmask 244736
        %v8376 = vsel %vm8374, %v8227, 0
        %v8379 = vsel %vm8374, %v8230, 0
        %v8382 = vsel %vm7448, %v8356, 0
        %8384 = vmatpush.bf16.msra.mxu0 %v8346
        %8385 = vmatpush.bf16.msra.mxu0 %v8345
        %8386 = vmatpush.bf16.msra.mxu0 %v8344
        %8387 = vmatpush.bf16.msra.mxu0 %v8343
        %8388 = vmatpush.bf16.msra.mxu0 %v8342
        %8389 = vmatpush.bf16.msra.mxu0 %v8341
        %8390 = vmatpush.bf16.msra.mxu0 %v8340
        %8391 = vmatpush.bf16.msra.mxu0 %v8339
        %8392 = vmatmul.bf16.gmra.mxu0 %v8225
        %v8393 = vpop.f32.mrf.mxu0
        %v8394 = vadd.f32 0.0, %v8393
        %v8395 = vpop.f32.mrf.mxu0
        %v8396 = vadd.f32 0.0, %v8395
        %8397 = vmatmul.bf16.gmra.mxu0 %v8228
        %v8398 = vpop.f32.mrf.mxu0
        %v8399 = vadd.f32 0.0, %v8398
        %v8400 = vpop.f32.mrf.mxu0
        %8401 = vdwg.mxu0
        %8402 = vmatpush.bf16.msra.mxu0 %v8354
        %8403 = vmatpush.bf16.msra.mxu0 %v8353
        %8404 = vmatpush.bf16.msra.mxu0 %v8352
        %8405 = vmatpush.bf16.msra.mxu0 %v8351
        %8406 = vmatpush.bf16.msra.mxu0 %v8350
        %8407 = vmatpush.bf16.msra.mxu0 %v8349
        %8408 = vmatpush.bf16.msra.mxu0 %v8348
        %8409 = vmatpush.bf16.msra.mxu0 %v8347
        %8410 = vmatmul.bf16.gmra.mxu0 %v8226
        %v8411 = vpop.f32.mrf.mxu0
        %v8412 = vadd.f32 %v8394, %v8411
        %v8413 = vpop.f32.mrf.mxu0
        %v8414 = vadd.f32 %v8396, %v8413
        %8415 = vmatmul.bf16.gmra.mxu0 %v8229
        %v8416 = vpop.f32.mrf.mxu0
        %v8417 = vadd.f32 %v8399, %v8416
        %v8418 = vpop.f32.mrf.mxu0
        %8419 = vdwg.mxu0
        %8420 = vmatpush.bf16.msra.mxu0 0
        %8421 = vmatpush.bf16.msra.mxu0 0
        %8422 = vmatpush.bf16.msra.mxu0 0
        %8423 = vmatpush.bf16.msra.mxu0 0
        %8424 = vmatpush.bf16.msra.mxu0 0
        %8425 = vmatpush.bf16.msra.mxu0 0
        %8426 = vmatpush.bf16.msra.mxu0 %v8382
        %8427 = vmatpush.bf16.msra.mxu0 %v8355
        %8428 = vmatmul.bf16.gmra.mxu0 %v8376
        %v8429 = vpop.f32.mrf.mxu0
        %v8430 = vadd.f32 %v8412, %v8429
        %v8431 = vpop.f32.mrf.mxu0
        %v8432 = vadd.f32 %v8414, %v8431
        %8433 = vmatmul.bf16.gmra.mxu0 %v8379
        %v8434 = vpop.f32.mrf.mxu0
        %v8435 = vadd.f32 %v8417, %v8434
        %v8436 = vpop.f32.mrf.mxu0
        %8437 = vdwg.mxu0
        %v8438 = vpack.c.bf16 %v8430, %v8430
        %v8439 = vpack.c.bf16 %v8432, %v8432
        %v8440 = vpack.c.bf16 %v8435, %v8435
        %v8441 = vld [vmem:[%s13] sm:$0xff]
        %v8442 = vld [vmem:[%s13 + $0x8] sm:$0xff]
        %v8443 = vld [vmem:[%s13 + $0x10] sm:$0xff]
        %v8444 = vld [vmem:[%s13 + $0x18] sm:$0xff]
        %v8445 = vld [vmem:[%s13 + $0x20] sm:$0xff]
        %v8446 = vld [vmem:[%s13 + $0x28] sm:$0xff]
        %v8447 = vld [vmem:[%s13 + $0x30] sm:$0xff]
        %v8448 = vld [vmem:[%s13 + $0x38] sm:$0xff]
        %s8449 = scalar_lea.vmem %s13, 64
        %v8450 = vld [vmem:[%s8449] sm:$0xff]
        %v8451 = vld [vmem:[%s8449 + $0x8] sm:$0xff]
        %v8452 = vld [vmem:[%s8449 + $0x10] sm:$0xff]
        %v8453 = vld [vmem:[%s8449 + $0x18] sm:$0xff]
        %v8454 = vld [vmem:[%s8449 + $0x20] sm:$0xff]
        %v8455 = vld [vmem:[%s8449 + $0x28] sm:$0xff]
        %v8456 = vld [vmem:[%s8449 + $0x30] sm:$0xff]
        %v8457 = vld [vmem:[%s8449 + $0x38] sm:$0xff]
        %v8459 = vunpack.c.l.b16 %v8438
        %v8460 = vpack.c.b16 %v8459, %v8459
        %v8462 = vshrl.u32 %v8460, 16
        %v8472 = vunpack.c.l.b16 %v8450
        %v8473 = vunpack.c.h.b16 %v8450
        %v8474 = vunpack.c.l.b16 %v8451
        %v8475 = vunpack.c.h.b16 %v8451
        %v8476 = vunpack.c.l.b16 %v8452
        %v8477 = vunpack.c.h.b16 %v8452
        %v8478 = vunpack.c.l.b16 %v8453
        %v8479 = vunpack.c.h.b16 %v8453
        %v8480 = vunpack.c.l.b16 %v8454
        %v8481 = vunpack.c.h.b16 %v8454
        %v8482 = vunpack.c.l.b16 %v8455
        %v8483 = vunpack.c.h.b16 %v8455
        %v8484 = vunpack.c.l.b16 %v8456
        %v8485 = vunpack.c.h.b16 %v8456
        %v8486 = vunpack.c.l.b16 %v8457
        %v8487 = vunpack.c.h.b16 %v8457
        %v8488 = vpack.c.b16 %v8474, %v8472
        %v8489 = vpack.c.b16 %v8475, %v8473
        %v8490 = vpack.c.b16 %v8478, %v8476
        %v8491 = vpack.c.b16 %v8479, %v8477
        %v8492 = vpack.c.b16 %v8482, %v8480
        %v8493 = vpack.c.b16 %v8483, %v8481
        %v8494 = vpack.c.b16 %v8486, %v8484
        %v8495 = vpack.c.b16 %v8487, %v8485
        %vm8504 = vcmask 523264
        %v8506 = vsel %vm8504, %v8462, 0
        %8508 = vmatpush.bf16.msra.mxu0 0
        %8509 = vmatpush.bf16.msra.mxu0 0
        %8510 = vmatpush.bf16.msra.mxu0 0
        %8511 = vmatpush.bf16.msra.mxu0 0
        %8512 = vmatpush.bf16.msra.mxu0 %v8494
        %8513 = vmatpush.bf16.msra.mxu0 %v8492
        %8514 = vmatpush.bf16.msra.mxu0 %v8490
        %8515 = vmatpush.bf16.msra.mxu0 %v8488
        %8516 = vmatmul.bf16.gmra.mxu0 %v8506
        %v8517 = vpop.f32.mrf.mxu0
        %v8518 = vadd.f32 0.0, %v8517
        %v8519 = vpop.f32.mrf.mxu0
        %8520 = vdwg.mxu0
        %8521 = vmatpush.bf16.msra.mxu0 0
        %8522 = vmatpush.bf16.msra.mxu0 0
        %8523 = vmatpush.bf16.msra.mxu0 0
        %8524 = vmatpush.bf16.msra.mxu0 0
        %8525 = vmatpush.bf16.msra.mxu0 %v8495
        %8526 = vmatpush.bf16.msra.mxu0 %v8493
        %8527 = vmatpush.bf16.msra.mxu0 %v8491
        %8528 = vmatpush.bf16.msra.mxu0 %v8489
        %8529 = vmatmul.bf16.gmra.mxu0 %v8506
        %v8530 = vpop.f32.mrf.mxu0
        %v8531 = vadd.f32 0.0, %v8530
        %v8532 = vpop.f32.mrf.mxu0
        %8533 = vdwg.mxu0
        %v8542 = vunpack.c.l.b16 %v8441
        %v8543 = vunpack.c.h.b16 %v8441
        %v8544 = vunpack.c.l.b16 %v8442
        %v8545 = vunpack.c.h.b16 %v8442
        %v8546 = vunpack.c.l.b16 %v8443
        %v8547 = vunpack.c.h.b16 %v8443
        %v8548 = vunpack.c.l.b16 %v8444
        %v8549 = vunpack.c.h.b16 %v8444
        %v8550 = vunpack.c.l.b16 %v8445
        %v8551 = vunpack.c.h.b16 %v8445
        %v8552 = vunpack.c.l.b16 %v8446
        %v8553 = vunpack.c.h.b16 %v8446
        %v8554 = vunpack.c.l.b16 %v8447
        %v8555 = vunpack.c.h.b16 %v8447
        %v8556 = vunpack.c.l.b16 %v8448
        %v8557 = vunpack.c.h.b16 %v8448
        %v8558 = vpack.c.b16 %v8544, %v8542
        %v8559 = vpack.c.b16 %v8545, %v8543
        %v8560 = vpack.c.b16 %v8548, %v8546
        %v8561 = vpack.c.b16 %v8549, %v8547
        %v8562 = vpack.c.b16 %v8552, %v8550
        %v8563 = vpack.c.b16 %v8553, %v8551
        %v8564 = vpack.c.b16 %v8556, %v8554
        %v8565 = vpack.c.b16 %v8557, %v8555
        %v8575 = vsel %vm8504, %v8438, 0
        %8577 = vmatpush.bf16.msra.mxu0 0
        %8578 = vmatpush.bf16.msra.mxu0 0
        %8579 = vmatpush.bf16.msra.mxu0 0
        %8580 = vmatpush.bf16.msra.mxu0 0
        %8581 = vmatpush.bf16.msra.mxu0 %v8564
        %8582 = vmatpush.bf16.msra.mxu0 %v8562
        %8583 = vmatpush.bf16.msra.mxu0 %v8560
        %8584 = vmatpush.bf16.msra.mxu0 %v8558
        %8585 = vmatmul.bf16.gmra.mxu0 %v8575
        %v8586 = vpop.f32.mrf.mxu0
        %v8587 = vadd.f32 %v8518, %v8586
        %v8588 = vpop.f32.mrf.mxu0
        %8589 = vdwg.mxu0
        %8590 = vmatpush.bf16.msra.mxu0 0
        %8591 = vmatpush.bf16.msra.mxu0 0
        %8592 = vmatpush.bf16.msra.mxu0 0
        %8593 = vmatpush.bf16.msra.mxu0 0
        %8594 = vmatpush.bf16.msra.mxu0 %v8565
        %8595 = vmatpush.bf16.msra.mxu0 %v8563
        %8596 = vmatpush.bf16.msra.mxu0 %v8561
        %8597 = vmatpush.bf16.msra.mxu0 %v8559
        %8598 = vmatmul.bf16.gmra.mxu0 %v8575
        %v8599 = vpop.f32.mrf.mxu0
        %v8600 = vadd.f32 %v8531, %v8599
        %v8601 = vpop.f32.mrf.mxu0
        %8602 = vdwg.mxu0
        %s8603 = scalar_lea.vmem %s13, 128
        %v8604 = vld [vmem:[%s8603] sm:$0xff]
        %v8605 = vld [vmem:[%s8603 + $0x8] sm:$0xff]
        %v8606 = vld [vmem:[%s8603 + $0x10] sm:$0xff]
        %v8607 = vld [vmem:[%s8603 + $0x18] sm:$0xff]
        %v8608 = vld [vmem:[%s8603 + $0x20] sm:$0xff]
        %v8609 = vld [vmem:[%s8603 + $0x28] sm:$0xff]
        %v8610 = vld [vmem:[%s8603 + $0x30] sm:$0xff]
        %v8611 = vld [vmem:[%s8603 + $0x38] sm:$0xff]
        %v8612 = vrot.slane %v8460, 1
        %v8621 = vunpack.c.l.b16 %v8604
        %v8622 = vunpack.c.h.b16 %v8604
        %v8623 = vunpack.c.l.b16 %v8605
        %v8624 = vunpack.c.h.b16 %v8605
        %v8625 = vunpack.c.l.b16 %v8606
        %v8626 = vunpack.c.h.b16 %v8606
        %v8627 = vunpack.c.l.b16 %v8607
        %v8628 = vunpack.c.h.b16 %v8607
        %v8629 = vunpack.c.l.b16 %v8608
        %v8630 = vunpack.c.h.b16 %v8608
        %v8631 = vunpack.c.l.b16 %v8609
        %v8632 = vunpack.c.h.b16 %v8609
        %v8633 = vunpack.c.l.b16 %v8610
        %v8634 = vunpack.c.h.b16 %v8610
        %v8635 = vunpack.c.l.b16 %v8611
        %v8636 = vunpack.c.h.b16 %v8611
        %v8637 = vpack.c.b16 %v8623, %v8621
        %v8638 = vpack.c.b16 %v8624, %v8622
        %v8639 = vpack.c.b16 %v8627, %v8625
        %v8640 = vpack.c.b16 %v8628, %v8626
        %v8641 = vpack.c.b16 %v8631, %v8629
        %v8642 = vpack.c.b16 %v8632, %v8630
        %v8643 = vpack.c.b16 %v8635, %v8633
        %v8644 = vpack.c.b16 %v8636, %v8634
        %v8654 = vsel %vm8504, %v8612, 0
        %8656 = vmatpush.bf16.msra.mxu0 0
        %8657 = vmatpush.bf16.msra.mxu0 0
        %8658 = vmatpush.bf16.msra.mxu0 0
        %8659 = vmatpush.bf16.msra.mxu0 0
        %8660 = vmatpush.bf16.msra.mxu0 %v8643
        %8661 = vmatpush.bf16.msra.mxu0 %v8641
        %8662 = vmatpush.bf16.msra.mxu0 %v8639
        %8663 = vmatpush.bf16.msra.mxu0 %v8637
        %8664 = vmatmul.bf16.gmra.mxu0 %v8654
        %v8665 = vpop.f32.mrf.mxu0
        %v8666 = vadd.f32 0.0, %v8665
        %v8667 = vpop.f32.mrf.mxu0
        %8668 = vdwg.mxu0
        %8669 = vmatpush.bf16.msra.mxu0 0
        %8670 = vmatpush.bf16.msra.mxu0 0
        %8671 = vmatpush.bf16.msra.mxu0 0
        %8672 = vmatpush.bf16.msra.mxu0 0
        %8673 = vmatpush.bf16.msra.mxu0 %v8644
        %8674 = vmatpush.bf16.msra.mxu0 %v8642
        %8675 = vmatpush.bf16.msra.mxu0 %v8640
        %8676 = vmatpush.bf16.msra.mxu0 %v8638
        %8677 = vmatmul.bf16.gmra.mxu0 %v8654
        %v8678 = vpop.f32.mrf.mxu0
        %v8679 = vadd.f32 0.0, %v8678
        %v8680 = vpop.f32.mrf.mxu0
        %8681 = vdwg.mxu0
        %v8682 = vadd.f32 %v8587, %v8666
        %v8683 = vadd.f32 %v8600, %v8679
        %s8684 = scalar_lea.vmem %s13, 192
        %v8685 = vld [vmem:[%s8684] sm:$0xff]
        %v8686 = vld [vmem:[%s8684 + $0x8] sm:$0xff]
        %v8687 = vld [vmem:[%s8684 + $0x10] sm:$0xff]
        %v8688 = vld [vmem:[%s8684 + $0x18] sm:$0xff]
        %v8689 = vld [vmem:[%s8684 + $0x20] sm:$0xff]
        %v8690 = vld [vmem:[%s8684 + $0x28] sm:$0xff]
        %v8691 = vld [vmem:[%s8684 + $0x30] sm:$0xff]
        %v8692 = vld [vmem:[%s8684 + $0x38] sm:$0xff]
        %v8693 = vrot.slane %v8462, 1
        %v8702 = vunpack.c.l.b16 %v8685
        %v8703 = vunpack.c.h.b16 %v8685
        %v8704 = vunpack.c.l.b16 %v8686
        %v8705 = vunpack.c.h.b16 %v8686
        %v8706 = vunpack.c.l.b16 %v8687
        %v8707 = vunpack.c.h.b16 %v8687
        %v8708 = vunpack.c.l.b16 %v8688
        %v8709 = vunpack.c.h.b16 %v8688
        %v8710 = vunpack.c.l.b16 %v8689
        %v8711 = vunpack.c.h.b16 %v8689
        %v8712 = vunpack.c.l.b16 %v8690
        %v8713 = vunpack.c.h.b16 %v8690
        %v8714 = vunpack.c.l.b16 %v8691
        %v8715 = vunpack.c.h.b16 %v8691
        %v8716 = vunpack.c.l.b16 %v8692
        %v8717 = vunpack.c.h.b16 %v8692
        %v8718 = vpack.c.b16 %v8704, %v8702
        %v8719 = vpack.c.b16 %v8705, %v8703
        %v8720 = vpack.c.b16 %v8708, %v8706
        %v8721 = vpack.c.b16 %v8709, %v8707
        %v8722 = vpack.c.b16 %v8712, %v8710
        %v8723 = vpack.c.b16 %v8713, %v8711
        %v8724 = vpack.c.b16 %v8716, %v8714
        %v8725 = vpack.c.b16 %v8717, %v8715
        %v8735 = vsel %vm8504, %v8693, 0
        %8737 = vmatpush.bf16.msra.mxu0 0
        %8738 = vmatpush.bf16.msra.mxu0 0
        %8739 = vmatpush.bf16.msra.mxu0 0
        %8740 = vmatpush.bf16.msra.mxu0 0
        %8741 = vmatpush.bf16.msra.mxu0 %v8724
        %8742 = vmatpush.bf16.msra.mxu0 %v8722
        %8743 = vmatpush.bf16.msra.mxu0 %v8720
        %8744 = vmatpush.bf16.msra.mxu0 %v8718
        %8745 = vmatmul.bf16.gmra.mxu0 %v8735
        %v8746 = vpop.f32.mrf.mxu0
        %v8747 = vadd.f32 0.0, %v8746
        %v8748 = vpop.f32.mrf.mxu0
        %8749 = vdwg.mxu0
        %8750 = vmatpush.bf16.msra.mxu0 0
        %8751 = vmatpush.bf16.msra.mxu0 0
        %8752 = vmatpush.bf16.msra.mxu0 0
        %8753 = vmatpush.bf16.msra.mxu0 0
        %8754 = vmatpush.bf16.msra.mxu0 %v8725
        %8755 = vmatpush.bf16.msra.mxu0 %v8723
        %8756 = vmatpush.bf16.msra.mxu0 %v8721
        %8757 = vmatpush.bf16.msra.mxu0 %v8719
        %8758 = vmatmul.bf16.gmra.mxu0 %v8735
        %v8759 = vpop.f32.mrf.mxu0
        %v8760 = vadd.f32 0.0, %v8759
        %v8761 = vpop.f32.mrf.mxu0
        %8762 = vdwg.mxu0
        %v8763 = vadd.f32 %v8682, %v8747
        %v8764 = vadd.f32 %v8683, %v8760
        %s8765 = scalar_lea.vmem %s13, 256
        %v8766 = vld [vmem:[%s8765] sm:$0xff]
        %v8767 = vld [vmem:[%s8765 + $0x8] sm:$0xff]
        %v8768 = vld [vmem:[%s8765 + $0x10] sm:$0xff]
        %v8769 = vld [vmem:[%s8765 + $0x18] sm:$0xff]
        %v8770 = vld [vmem:[%s8765 + $0x20] sm:$0xff]
        %v8771 = vld [vmem:[%s8765 + $0x28] sm:$0xff]
        %v8772 = vld [vmem:[%s8765 + $0x30] sm:$0xff]
        %v8773 = vld [vmem:[%s8765 + $0x38] sm:$0xff]
        %v8774 = vrot.slane %v8460, 2
        %v8783 = vunpack.c.l.b16 %v8766
        %v8784 = vunpack.c.h.b16 %v8766
        %v8785 = vunpack.c.l.b16 %v8767
        %v8786 = vunpack.c.h.b16 %v8767
        %v8787 = vunpack.c.l.b16 %v8768
        %v8788 = vunpack.c.h.b16 %v8768
        %v8789 = vunpack.c.l.b16 %v8769
        %v8790 = vunpack.c.h.b16 %v8769
        %v8791 = vunpack.c.l.b16 %v8770
        %v8792 = vunpack.c.h.b16 %v8770
        %v8793 = vunpack.c.l.b16 %v8771
        %v8794 = vunpack.c.h.b16 %v8771
        %v8795 = vunpack.c.l.b16 %v8772
        %v8796 = vunpack.c.h.b16 %v8772
        %v8797 = vunpack.c.l.b16 %v8773
        %v8798 = vunpack.c.h.b16 %v8773
        %v8799 = vpack.c.b16 %v8785, %v8783
        %v8800 = vpack.c.b16 %v8786, %v8784
        %v8801 = vpack.c.b16 %v8789, %v8787
        %v8802 = vpack.c.b16 %v8790, %v8788
        %v8803 = vpack.c.b16 %v8793, %v8791
        %v8804 = vpack.c.b16 %v8794, %v8792
        %v8805 = vpack.c.b16 %v8797, %v8795
        %v8806 = vpack.c.b16 %v8798, %v8796
        %v8816 = vsel %vm8504, %v8774, 0
        %8818 = vmatpush.bf16.msra.mxu0 0
        %8819 = vmatpush.bf16.msra.mxu0 0
        %8820 = vmatpush.bf16.msra.mxu0 0
        %8821 = vmatpush.bf16.msra.mxu0 0
        %8822 = vmatpush.bf16.msra.mxu0 %v8805
        %8823 = vmatpush.bf16.msra.mxu0 %v8803
        %8824 = vmatpush.bf16.msra.mxu0 %v8801
        %8825 = vmatpush.bf16.msra.mxu0 %v8799
        %8826 = vmatmul.bf16.gmra.mxu0 %v8816
        %v8827 = vpop.f32.mrf.mxu0
        %v8828 = vadd.f32 0.0, %v8827
        %v8829 = vpop.f32.mrf.mxu0
        %8830 = vdwg.mxu0
        %8831 = vmatpush.bf16.msra.mxu0 0
        %8832 = vmatpush.bf16.msra.mxu0 0
        %8833 = vmatpush.bf16.msra.mxu0 0
        %8834 = vmatpush.bf16.msra.mxu0 0
        %8835 = vmatpush.bf16.msra.mxu0 %v8806
        %8836 = vmatpush.bf16.msra.mxu0 %v8804
        %8837 = vmatpush.bf16.msra.mxu0 %v8802
        %8838 = vmatpush.bf16.msra.mxu0 %v8800
        %8839 = vmatmul.bf16.gmra.mxu0 %v8816
        %v8840 = vpop.f32.mrf.mxu0
        %v8841 = vadd.f32 0.0, %v8840
        %v8842 = vpop.f32.mrf.mxu0
        %8843 = vdwg.mxu0
        %v8844 = vadd.f32 %v8763, %v8828
        %v8845 = vadd.f32 %v8764, %v8841
        %s8846 = scalar_lea.vmem %s13, 320
        %v8847 = vld [vmem:[%s8846] sm:$0xff]
        %v8848 = vld [vmem:[%s8846 + $0x8] sm:$0xff]
        %v8849 = vld [vmem:[%s8846 + $0x10] sm:$0xff]
        %v8850 = vld [vmem:[%s8846 + $0x18] sm:$0xff]
        %v8851 = vld [vmem:[%s8846 + $0x20] sm:$0xff]
        %v8852 = vld [vmem:[%s8846 + $0x28] sm:$0xff]
        %v8853 = vld [vmem:[%s8846 + $0x30] sm:$0xff]
        %v8854 = vld [vmem:[%s8846 + $0x38] sm:$0xff]
        %v8855 = vrot.slane %v8462, 2
        %v8864 = vunpack.c.l.b16 %v8847
        %v8865 = vunpack.c.h.b16 %v8847
        %v8866 = vunpack.c.l.b16 %v8848
        %v8867 = vunpack.c.h.b16 %v8848
        %v8868 = vunpack.c.l.b16 %v8849
        %v8869 = vunpack.c.h.b16 %v8849
        %v8870 = vunpack.c.l.b16 %v8850
        %v8871 = vunpack.c.h.b16 %v8850
        %v8872 = vunpack.c.l.b16 %v8851
        %v8873 = vunpack.c.h.b16 %v8851
        %v8874 = vunpack.c.l.b16 %v8852
        %v8875 = vunpack.c.h.b16 %v8852
        %v8876 = vunpack.c.l.b16 %v8853
        %v8877 = vunpack.c.h.b16 %v8853
        %v8878 = vunpack.c.l.b16 %v8854
        %v8879 = vunpack.c.h.b16 %v8854
        %v8880 = vpack.c.b16 %v8866, %v8864
        %v8881 = vpack.c.b16 %v8867, %v8865
        %v8882 = vpack.c.b16 %v8870, %v8868
        %v8883 = vpack.c.b16 %v8871, %v8869
        %v8884 = vpack.c.b16 %v8874, %v8872
        %v8885 = vpack.c.b16 %v8875, %v8873
        %v8886 = vpack.c.b16 %v8878, %v8876
        %v8887 = vpack.c.b16 %v8879, %v8877
        %v8897 = vsel %vm8504, %v8855, 0
        %8899 = vmatpush.bf16.msra.mxu0 0
        %8900 = vmatpush.bf16.msra.mxu0 0
        %8901 = vmatpush.bf16.msra.mxu0 0
        %8902 = vmatpush.bf16.msra.mxu0 0
        %8903 = vmatpush.bf16.msra.mxu0 %v8886
        %8904 = vmatpush.bf16.msra.mxu0 %v8884
        %8905 = vmatpush.bf16.msra.mxu0 %v8882
        %8906 = vmatpush.bf16.msra.mxu0 %v8880
        %8907 = vmatmul.bf16.gmra.mxu0 %v8897
        %v8908 = vpop.f32.mrf.mxu0
        %v8909 = vadd.f32 0.0, %v8908
        %v8910 = vpop.f32.mrf.mxu0
        %8911 = vdwg.mxu0
        %8912 = vmatpush.bf16.msra.mxu0 0
        %8913 = vmatpush.bf16.msra.mxu0 0
        %8914 = vmatpush.bf16.msra.mxu0 0
        %8915 = vmatpush.bf16.msra.mxu0 0
        %8916 = vmatpush.bf16.msra.mxu0 %v8887
        %8917 = vmatpush.bf16.msra.mxu0 %v8885
        %8918 = vmatpush.bf16.msra.mxu0 %v8883
        %8919 = vmatpush.bf16.msra.mxu0 %v8881
        %8920 = vmatmul.bf16.gmra.mxu0 %v8897
        %v8921 = vpop.f32.mrf.mxu0
        %v8922 = vadd.f32 0.0, %v8921
        %v8923 = vpop.f32.mrf.mxu0
        %8924 = vdwg.mxu0
        %v8925 = vadd.f32 %v8844, %v8909
        %v8926 = vadd.f32 %v8845, %v8922
        %s8927 = scalar_lea.vmem %s13, 384
        %v8928 = vld [vmem:[%s8927] sm:$0xff]
        %v8929 = vld [vmem:[%s8927 + $0x8] sm:$0xff]
        %v8930 = vld [vmem:[%s8927 + $0x10] sm:$0xff]
        %v8931 = vld [vmem:[%s8927 + $0x18] sm:$0xff]
        %v8932 = vld [vmem:[%s8927 + $0x20] sm:$0xff]
        %v8933 = vld [vmem:[%s8927 + $0x28] sm:$0xff]
        %v8934 = vld [vmem:[%s8927 + $0x30] sm:$0xff]
        %v8935 = vld [vmem:[%s8927 + $0x38] sm:$0xff]
        %v8936 = vrot.slane %v8460, 3
        %v8945 = vunpack.c.l.b16 %v8928
        %v8946 = vunpack.c.h.b16 %v8928
        %v8947 = vunpack.c.l.b16 %v8929
        %v8948 = vunpack.c.h.b16 %v8929
        %v8949 = vunpack.c.l.b16 %v8930
        %v8950 = vunpack.c.h.b16 %v8930
        %v8951 = vunpack.c.l.b16 %v8931
        %v8952 = vunpack.c.h.b16 %v8931
        %v8953 = vunpack.c.l.b16 %v8932
        %v8954 = vunpack.c.h.b16 %v8932
        %v8955 = vunpack.c.l.b16 %v8933
        %v8956 = vunpack.c.h.b16 %v8933
        %v8957 = vunpack.c.l.b16 %v8934
        %v8958 = vunpack.c.h.b16 %v8934
        %v8959 = vunpack.c.l.b16 %v8935
        %v8960 = vunpack.c.h.b16 %v8935
        %v8961 = vpack.c.b16 %v8947, %v8945
        %v8962 = vpack.c.b16 %v8948, %v8946
        %v8963 = vpack.c.b16 %v8951, %v8949
        %v8964 = vpack.c.b16 %v8952, %v8950
        %v8965 = vpack.c.b16 %v8955, %v8953
        %v8966 = vpack.c.b16 %v8956, %v8954
        %v8967 = vpack.c.b16 %v8959, %v8957
        %v8968 = vpack.c.b16 %v8960, %v8958
        %v8978 = vsel %vm8504, %v8936, 0
        %8980 = vmatpush.bf16.msra.mxu0 0
        %8981 = vmatpush.bf16.msra.mxu0 0
        %8982 = vmatpush.bf16.msra.mxu0 0
        %8983 = vmatpush.bf16.msra.mxu0 0
        %8984 = vmatpush.bf16.msra.mxu0 %v8967
        %8985 = vmatpush.bf16.msra.mxu0 %v8965
        %8986 = vmatpush.bf16.msra.mxu0 %v8963
        %8987 = vmatpush.bf16.msra.mxu0 %v8961
        %8988 = vmatmul.bf16.gmra.mxu0 %v8978
        %v8989 = vpop.f32.mrf.mxu0
        %v8990 = vadd.f32 0.0, %v8989
        %v8991 = vpop.f32.mrf.mxu0
        %8992 = vdwg.mxu0
        %8993 = vmatpush.bf16.msra.mxu0 0
        %8994 = vmatpush.bf16.msra.mxu0 0
        %8995 = vmatpush.bf16.msra.mxu0 0
        %8996 = vmatpush.bf16.msra.mxu0 0
        %8997 = vmatpush.bf16.msra.mxu0 %v8968
        %8998 = vmatpush.bf16.msra.mxu0 %v8966
        %8999 = vmatpush.bf16.msra.mxu0 %v8964
        %9000 = vmatpush.bf16.msra.mxu0 %v8962
        %9001 = vmatmul.bf16.gmra.mxu0 %v8978
        %v9002 = vpop.f32.mrf.mxu0
        %v9003 = vadd.f32 0.0, %v9002
        %v9004 = vpop.f32.mrf.mxu0
        %9005 = vdwg.mxu0
        %v9006 = vadd.f32 %v8925, %v8990
        %v9007 = vadd.f32 %v8926, %v9003
        %s9008 = scalar_lea.vmem %s13, 448
        %v9009 = vld [vmem:[%s9008] sm:$0xff]
        %v9010 = vld [vmem:[%s9008 + $0x8] sm:$0xff]
        %v9011 = vld [vmem:[%s9008 + $0x10] sm:$0xff]
        %v9012 = vld [vmem:[%s9008 + $0x18] sm:$0xff]
        %v9013 = vld [vmem:[%s9008 + $0x20] sm:$0xff]
        %v9014 = vld [vmem:[%s9008 + $0x28] sm:$0xff]
        %v9015 = vld [vmem:[%s9008 + $0x30] sm:$0xff]
        %v9016 = vld [vmem:[%s9008 + $0x38] sm:$0xff]
        %v9017 = vrot.slane %v8462, 3
        %v9026 = vunpack.c.l.b16 %v9009
        %v9027 = vunpack.c.h.b16 %v9009
        %v9028 = vunpack.c.l.b16 %v9010
        %v9029 = vunpack.c.h.b16 %v9010
        %v9030 = vunpack.c.l.b16 %v9011
        %v9031 = vunpack.c.h.b16 %v9011
        %v9032 = vunpack.c.l.b16 %v9012
        %v9033 = vunpack.c.h.b16 %v9012
        %v9034 = vunpack.c.l.b16 %v9013
        %v9035 = vunpack.c.h.b16 %v9013
        %v9036 = vunpack.c.l.b16 %v9014
        %v9037 = vunpack.c.h.b16 %v9014
        %v9038 = vunpack.c.l.b16 %v9015
        %v9039 = vunpack.c.h.b16 %v9015
        %v9040 = vunpack.c.l.b16 %v9016
        %v9041 = vunpack.c.h.b16 %v9016
        %v9042 = vpack.c.b16 %v9028, %v9026
        %v9043 = vpack.c.b16 %v9029, %v9027
        %v9044 = vpack.c.b16 %v9032, %v9030
        %v9045 = vpack.c.b16 %v9033, %v9031
        %v9046 = vpack.c.b16 %v9036, %v9034
        %v9047 = vpack.c.b16 %v9037, %v9035
        %v9048 = vpack.c.b16 %v9040, %v9038
        %v9049 = vpack.c.b16 %v9041, %v9039
        %v9059 = vsel %vm8504, %v9017, 0
        %9061 = vmatpush.bf16.msra.mxu0 0
        %9062 = vmatpush.bf16.msra.mxu0 0
        %9063 = vmatpush.bf16.msra.mxu0 0
        %9064 = vmatpush.bf16.msra.mxu0 0
        %9065 = vmatpush.bf16.msra.mxu0 %v9048
        %9066 = vmatpush.bf16.msra.mxu0 %v9046
        %9067 = vmatpush.bf16.msra.mxu0 %v9044
        %9068 = vmatpush.bf16.msra.mxu0 %v9042
        %9069 = vmatmul.bf16.gmra.mxu0 %v9059
        %v9070 = vpop.f32.mrf.mxu0
        %v9071 = vadd.f32 0.0, %v9070
        %v9072 = vpop.f32.mrf.mxu0
        %9073 = vdwg.mxu0
        %9074 = vmatpush.bf16.msra.mxu0 0
        %9075 = vmatpush.bf16.msra.mxu0 0
        %9076 = vmatpush.bf16.msra.mxu0 0
        %9077 = vmatpush.bf16.msra.mxu0 0
        %9078 = vmatpush.bf16.msra.mxu0 %v9049
        %9079 = vmatpush.bf16.msra.mxu0 %v9047
        %9080 = vmatpush.bf16.msra.mxu0 %v9045
        %9081 = vmatpush.bf16.msra.mxu0 %v9043
        %9082 = vmatmul.bf16.gmra.mxu0 %v9059
        %v9083 = vpop.f32.mrf.mxu0
        %v9084 = vadd.f32 0.0, %v9083
        %v9085 = vpop.f32.mrf.mxu0
        %9086 = vdwg.mxu0
        %v9087 = vadd.f32 %v9006, %v9071
        %v9088 = vadd.f32 %v9007, %v9084
        %s9089 = scalar_lea.vmem %s13, 512
        %v9090 = vld [vmem:[%s9089] sm:$0xff]
        %v9091 = vld [vmem:[%s9089 + $0x8] sm:$0xff]
        %v9092 = vld [vmem:[%s9089 + $0x10] sm:$0xff]
        %v9093 = vld [vmem:[%s9089 + $0x18] sm:$0xff]
        %v9094 = vld [vmem:[%s9089 + $0x20] sm:$0xff]
        %v9095 = vld [vmem:[%s9089 + $0x28] sm:$0xff]
        %v9096 = vld [vmem:[%s9089 + $0x30] sm:$0xff]
        %v9097 = vld [vmem:[%s9089 + $0x38] sm:$0xff]
        %v9106 = vunpack.c.l.b16 %v9090
        %v9107 = vunpack.c.h.b16 %v9090
        %v9108 = vunpack.c.l.b16 %v9091
        %v9109 = vunpack.c.h.b16 %v9091
        %v9110 = vunpack.c.l.b16 %v9092
        %v9111 = vunpack.c.h.b16 %v9092
        %v9112 = vunpack.c.l.b16 %v9093
        %v9113 = vunpack.c.h.b16 %v9093
        %v9114 = vunpack.c.l.b16 %v9094
        %v9115 = vunpack.c.h.b16 %v9094
        %v9116 = vunpack.c.l.b16 %v9095
        %v9117 = vunpack.c.h.b16 %v9095
        %v9118 = vunpack.c.l.b16 %v9096
        %v9119 = vunpack.c.h.b16 %v9096
        %v9120 = vunpack.c.l.b16 %v9097
        %v9121 = vunpack.c.h.b16 %v9097
        %v9122 = vpack.c.b16 %v9108, %v9106
        %v9123 = vpack.c.b16 %v9109, %v9107
        %v9124 = vpack.c.b16 %v9112, %v9110
        %v9125 = vpack.c.b16 %v9113, %v9111
        %v9126 = vpack.c.b16 %v9116, %v9114
        %v9127 = vpack.c.b16 %v9117, %v9115
        %v9128 = vpack.c.b16 %v9120, %v9118
        %v9129 = vpack.c.b16 %v9121, %v9119
        %v9139 = vsel %vm8504, %v8439, 0
        %9141 = vmatpush.bf16.msra.mxu0 0
        %9142 = vmatpush.bf16.msra.mxu0 0
        %9143 = vmatpush.bf16.msra.mxu0 0
        %9144 = vmatpush.bf16.msra.mxu0 0
        %9145 = vmatpush.bf16.msra.mxu0 %v9128
        %9146 = vmatpush.bf16.msra.mxu0 %v9126
        %9147 = vmatpush.bf16.msra.mxu0 %v9124
        %9148 = vmatpush.bf16.msra.mxu0 %v9122
        %9149 = vmatmul.bf16.gmra.mxu0 %v9139
        %v9150 = vpop.f32.mrf.mxu0
        %v9151 = vadd.f32 0.0, %v9150
        %v9152 = vpop.f32.mrf.mxu0
        %9153 = vdwg.mxu0
        %9154 = vmatpush.bf16.msra.mxu0 0
        %9155 = vmatpush.bf16.msra.mxu0 0
        %9156 = vmatpush.bf16.msra.mxu0 0
        %9157 = vmatpush.bf16.msra.mxu0 0
        %9158 = vmatpush.bf16.msra.mxu0 %v9129
        %9159 = vmatpush.bf16.msra.mxu0 %v9127
        %9160 = vmatpush.bf16.msra.mxu0 %v9125
        %9161 = vmatpush.bf16.msra.mxu0 %v9123
        %9162 = vmatmul.bf16.gmra.mxu0 %v9139
        %v9163 = vpop.f32.mrf.mxu0
        %v9164 = vadd.f32 0.0, %v9163
        %v9165 = vpop.f32.mrf.mxu0
        %9166 = vdwg.mxu0
        %v9167 = vadd.f32 %v9087, %v9151
        %v9168 = vadd.f32 %v9088, %v9164
        %s9169 = scalar_lea.vmem %s13, 576
        %v9170 = vld [vmem:[%s9169] sm:$0xff]
        %v9171 = vld [vmem:[%s9169 + $0x8] sm:$0xff]
        %v9172 = vld [vmem:[%s9169 + $0x10] sm:$0xff]
        %v9173 = vld [vmem:[%s9169 + $0x18] sm:$0xff]
        %v9174 = vld [vmem:[%s9169 + $0x20] sm:$0xff]
        %v9175 = vld [vmem:[%s9169 + $0x28] sm:$0xff]
        %v9176 = vld [vmem:[%s9169 + $0x30] sm:$0xff]
        %v9177 = vld [vmem:[%s9169 + $0x38] sm:$0xff]
        %v9179 = vunpack.c.l.b16 %v8439
        %v9180 = vpack.c.b16 %v9179, %v9179
        %v9182 = vshrl.u32 %v9180, 16
        %v9192 = vunpack.c.l.b16 %v9170
        %v9193 = vunpack.c.h.b16 %v9170
        %v9194 = vunpack.c.l.b16 %v9171
        %v9195 = vunpack.c.h.b16 %v9171
        %v9196 = vunpack.c.l.b16 %v9172
        %v9197 = vunpack.c.h.b16 %v9172
        %v9198 = vunpack.c.l.b16 %v9173
        %v9199 = vunpack.c.h.b16 %v9173
        %v9200 = vunpack.c.l.b16 %v9174
        %v9201 = vunpack.c.h.b16 %v9174
        %v9202 = vunpack.c.l.b16 %v9175
        %v9203 = vunpack.c.h.b16 %v9175
        %v9204 = vunpack.c.l.b16 %v9176
        %v9205 = vunpack.c.h.b16 %v9176
        %v9206 = vunpack.c.l.b16 %v9177
        %v9207 = vunpack.c.h.b16 %v9177
        %v9208 = vpack.c.b16 %v9194, %v9192
        %v9209 = vpack.c.b16 %v9195, %v9193
        %v9210 = vpack.c.b16 %v9198, %v9196
        %v9211 = vpack.c.b16 %v9199, %v9197
        %v9212 = vpack.c.b16 %v9202, %v9200
        %v9213 = vpack.c.b16 %v9203, %v9201
        %v9214 = vpack.c.b16 %v9206, %v9204
        %v9215 = vpack.c.b16 %v9207, %v9205
        %v9225 = vsel %vm8504, %v9182, 0
        %9227 = vmatpush.bf16.msra.mxu0 0
        %9228 = vmatpush.bf16.msra.mxu0 0
        %9229 = vmatpush.bf16.msra.mxu0 0
        %9230 = vmatpush.bf16.msra.mxu0 0
        %9231 = vmatpush.bf16.msra.mxu0 %v9214
        %9232 = vmatpush.bf16.msra.mxu0 %v9212
        %9233 = vmatpush.bf16.msra.mxu0 %v9210
        %9234 = vmatpush.bf16.msra.mxu0 %v9208
        %9235 = vmatmul.bf16.gmra.mxu0 %v9225
        %v9236 = vpop.f32.mrf.mxu0
        %v9237 = vadd.f32 0.0, %v9236
        %v9238 = vpop.f32.mrf.mxu0
        %9239 = vdwg.mxu0
        %9240 = vmatpush.bf16.msra.mxu0 0
        %9241 = vmatpush.bf16.msra.mxu0 0
        %9242 = vmatpush.bf16.msra.mxu0 0
        %9243 = vmatpush.bf16.msra.mxu0 0
        %9244 = vmatpush.bf16.msra.mxu0 %v9215
        %9245 = vmatpush.bf16.msra.mxu0 %v9213
        %9246 = vmatpush.bf16.msra.mxu0 %v9211
        %9247 = vmatpush.bf16.msra.mxu0 %v9209
        %9248 = vmatmul.bf16.gmra.mxu0 %v9225
        %v9249 = vpop.f32.mrf.mxu0
        %v9250 = vadd.f32 0.0, %v9249
        %v9251 = vpop.f32.mrf.mxu0
        %9252 = vdwg.mxu0
        %v9253 = vadd.f32 %v9167, %v9237
        %v9254 = vadd.f32 %v9168, %v9250
        %s9255 = scalar_lea.vmem %s13, 640
        %v9256 = vld [vmem:[%s9255] sm:$0xff]
        %v9257 = vld [vmem:[%s9255 + $0x8] sm:$0xff]
        %v9258 = vld [vmem:[%s9255 + $0x10] sm:$0xff]
        %v9259 = vld [vmem:[%s9255 + $0x18] sm:$0xff]
        %v9260 = vld [vmem:[%s9255 + $0x20] sm:$0xff]
        %v9261 = vld [vmem:[%s9255 + $0x28] sm:$0xff]
        %v9262 = vld [vmem:[%s9255 + $0x30] sm:$0xff]
        %v9263 = vld [vmem:[%s9255 + $0x38] sm:$0xff]
        %v9264 = vrot.slane %v9180, 1
        %v9273 = vunpack.c.l.b16 %v9256
        %v9274 = vunpack.c.h.b16 %v9256
        %v9275 = vunpack.c.l.b16 %v9257
        %v9276 = vunpack.c.h.b16 %v9257
        %v9277 = vunpack.c.l.b16 %v9258
        %v9278 = vunpack.c.h.b16 %v9258
        %v9279 = vunpack.c.l.b16 %v9259
        %v9280 = vunpack.c.h.b16 %v9259
        %v9281 = vunpack.c.l.b16 %v9260
        %v9282 = vunpack.c.h.b16 %v9260
        %v9283 = vunpack.c.l.b16 %v9261
        %v9284 = vunpack.c.h.b16 %v9261
        %v9285 = vunpack.c.l.b16 %v9262
        %v9286 = vunpack.c.h.b16 %v9262
        %v9287 = vunpack.c.l.b16 %v9263
        %v9288 = vunpack.c.h.b16 %v9263
        %v9289 = vpack.c.b16 %v9275, %v9273
        %v9290 = vpack.c.b16 %v9276, %v9274
        %v9291 = vpack.c.b16 %v9279, %v9277
        %v9292 = vpack.c.b16 %v9280, %v9278
        %v9293 = vpack.c.b16 %v9283, %v9281
        %v9294 = vpack.c.b16 %v9284, %v9282
        %v9295 = vpack.c.b16 %v9287, %v9285
        %v9296 = vpack.c.b16 %v9288, %v9286
        %v9306 = vsel %vm8504, %v9264, 0
        %9308 = vmatpush.bf16.msra.mxu0 0
        %9309 = vmatpush.bf16.msra.mxu0 0
        %9310 = vmatpush.bf16.msra.mxu0 0
        %9311 = vmatpush.bf16.msra.mxu0 0
        %9312 = vmatpush.bf16.msra.mxu0 %v9295
        %9313 = vmatpush.bf16.msra.mxu0 %v9293
        %9314 = vmatpush.bf16.msra.mxu0 %v9291
        %9315 = vmatpush.bf16.msra.mxu0 %v9289
        %9316 = vmatmul.bf16.gmra.mxu0 %v9306
        %v9317 = vpop.f32.mrf.mxu0
        %v9318 = vadd.f32 0.0, %v9317
        %v9319 = vpop.f32.mrf.mxu0
        %9320 = vdwg.mxu0
        %9321 = vmatpush.bf16.msra.mxu0 0
        %9322 = vmatpush.bf16.msra.mxu0 0
        %9323 = vmatpush.bf16.msra.mxu0 0
        %9324 = vmatpush.bf16.msra.mxu0 0
        %9325 = vmatpush.bf16.msra.mxu0 %v9296
        %9326 = vmatpush.bf16.msra.mxu0 %v9294
        %9327 = vmatpush.bf16.msra.mxu0 %v9292
        %9328 = vmatpush.bf16.msra.mxu0 %v9290
        %9329 = vmatmul.bf16.gmra.mxu0 %v9306
        %v9330 = vpop.f32.mrf.mxu0
        %v9331 = vadd.f32 0.0, %v9330
        %v9332 = vpop.f32.mrf.mxu0
        %9333 = vdwg.mxu0
        %v9334 = vadd.f32 %v9253, %v9318
        %v9335 = vadd.f32 %v9254, %v9331
        %s9336 = scalar_lea.vmem %s13, 704
        %v9337 = vld [vmem:[%s9336] sm:$0xff]
        %v9338 = vld [vmem:[%s9336 + $0x8] sm:$0xff]
        %v9339 = vld [vmem:[%s9336 + $0x10] sm:$0xff]
        %v9340 = vld [vmem:[%s9336 + $0x18] sm:$0xff]
        %v9341 = vld [vmem:[%s9336 + $0x20] sm:$0xff]
        %v9342 = vld [vmem:[%s9336 + $0x28] sm:$0xff]
        %v9343 = vld [vmem:[%s9336 + $0x30] sm:$0xff]
        %v9344 = vld [vmem:[%s9336 + $0x38] sm:$0xff]
        %v9345 = vrot.slane %v9182, 1
        %v9354 = vunpack.c.l.b16 %v9337
        %v9355 = vunpack.c.h.b16 %v9337
        %v9356 = vunpack.c.l.b16 %v9338
        %v9357 = vunpack.c.h.b16 %v9338
        %v9358 = vunpack.c.l.b16 %v9339
        %v9359 = vunpack.c.h.b16 %v9339
        %v9360 = vunpack.c.l.b16 %v9340
        %v9361 = vunpack.c.h.b16 %v9340
        %v9362 = vunpack.c.l.b16 %v9341
        %v9363 = vunpack.c.h.b16 %v9341
        %v9364 = vunpack.c.l.b16 %v9342
        %v9365 = vunpack.c.h.b16 %v9342
        %v9366 = vunpack.c.l.b16 %v9343
        %v9367 = vunpack.c.h.b16 %v9343
        %v9368 = vunpack.c.l.b16 %v9344
        %v9369 = vunpack.c.h.b16 %v9344
        %v9370 = vpack.c.b16 %v9356, %v9354
        %v9371 = vpack.c.b16 %v9357, %v9355
        %v9372 = vpack.c.b16 %v9360, %v9358
        %v9373 = vpack.c.b16 %v9361, %v9359
        %v9374 = vpack.c.b16 %v9364, %v9362
        %v9375 = vpack.c.b16 %v9365, %v9363
        %v9376 = vpack.c.b16 %v9368, %v9366
        %v9377 = vpack.c.b16 %v9369, %v9367
        %v9387 = vsel %vm8504, %v9345, 0
        %9389 = vmatpush.bf16.msra.mxu0 0
        %9390 = vmatpush.bf16.msra.mxu0 0
        %9391 = vmatpush.bf16.msra.mxu0 0
        %9392 = vmatpush.bf16.msra.mxu0 0
        %9393 = vmatpush.bf16.msra.mxu0 %v9376
        %9394 = vmatpush.bf16.msra.mxu0 %v9374
        %9395 = vmatpush.bf16.msra.mxu0 %v9372
        %9396 = vmatpush.bf16.msra.mxu0 %v9370
        %9397 = vmatmul.bf16.gmra.mxu0 %v9387
        %v9398 = vpop.f32.mrf.mxu0
        %v9399 = vadd.f32 0.0, %v9398
        %v9400 = vpop.f32.mrf.mxu0
        %9401 = vdwg.mxu0
        %9402 = vmatpush.bf16.msra.mxu0 0
        %9403 = vmatpush.bf16.msra.mxu0 0
        %9404 = vmatpush.bf16.msra.mxu0 0
        %9405 = vmatpush.bf16.msra.mxu0 0
        %9406 = vmatpush.bf16.msra.mxu0 %v9377
        %9407 = vmatpush.bf16.msra.mxu0 %v9375
        %9408 = vmatpush.bf16.msra.mxu0 %v9373
        %9409 = vmatpush.bf16.msra.mxu0 %v9371
        %9410 = vmatmul.bf16.gmra.mxu0 %v9387
        %v9411 = vpop.f32.mrf.mxu0
        %v9412 = vadd.f32 0.0, %v9411
        %v9413 = vpop.f32.mrf.mxu0
        %9414 = vdwg.mxu0
        %v9415 = vadd.f32 %v9334, %v9399
        %v9416 = vadd.f32 %v9335, %v9412
        %s9417 = scalar_lea.vmem %s13, 768
        %v9418 = vld [vmem:[%s9417] sm:$0xff]
        %v9419 = vld [vmem:[%s9417 + $0x8] sm:$0xff]
        %v9420 = vld [vmem:[%s9417 + $0x10] sm:$0xff]
        %v9421 = vld [vmem:[%s9417 + $0x18] sm:$0xff]
        %v9422 = vld [vmem:[%s9417 + $0x20] sm:$0xff]
        %v9423 = vld [vmem:[%s9417 + $0x28] sm:$0xff]
        %v9424 = vld [vmem:[%s9417 + $0x30] sm:$0xff]
        %v9425 = vld [vmem:[%s9417 + $0x38] sm:$0xff]
        %v9426 = vrot.slane %v9180, 2
        %v9435 = vunpack.c.l.b16 %v9418
        %v9436 = vunpack.c.h.b16 %v9418
        %v9437 = vunpack.c.l.b16 %v9419
        %v9438 = vunpack.c.h.b16 %v9419
        %v9439 = vunpack.c.l.b16 %v9420
        %v9440 = vunpack.c.h.b16 %v9420
        %v9441 = vunpack.c.l.b16 %v9421
        %v9442 = vunpack.c.h.b16 %v9421
        %v9443 = vunpack.c.l.b16 %v9422
        %v9444 = vunpack.c.h.b16 %v9422
        %v9445 = vunpack.c.l.b16 %v9423
        %v9446 = vunpack.c.h.b16 %v9423
        %v9447 = vunpack.c.l.b16 %v9424
        %v9448 = vunpack.c.h.b16 %v9424
        %v9449 = vunpack.c.l.b16 %v9425
        %v9450 = vunpack.c.h.b16 %v9425
        %v9451 = vpack.c.b16 %v9437, %v9435
        %v9452 = vpack.c.b16 %v9438, %v9436
        %v9453 = vpack.c.b16 %v9441, %v9439
        %v9454 = vpack.c.b16 %v9442, %v9440
        %v9455 = vpack.c.b16 %v9445, %v9443
        %v9456 = vpack.c.b16 %v9446, %v9444
        %v9457 = vpack.c.b16 %v9449, %v9447
        %v9458 = vpack.c.b16 %v9450, %v9448
        %v9468 = vsel %vm8504, %v9426, 0
        %9470 = vmatpush.bf16.msra.mxu0 0
        %9471 = vmatpush.bf16.msra.mxu0 0
        %9472 = vmatpush.bf16.msra.mxu0 0
        %9473 = vmatpush.bf16.msra.mxu0 0
        %9474 = vmatpush.bf16.msra.mxu0 %v9457
        %9475 = vmatpush.bf16.msra.mxu0 %v9455
        %9476 = vmatpush.bf16.msra.mxu0 %v9453
        %9477 = vmatpush.bf16.msra.mxu0 %v9451
        %9478 = vmatmul.bf16.gmra.mxu0 %v9468
        %v9479 = vpop.f32.mrf.mxu0
        %v9480 = vadd.f32 0.0, %v9479
        %v9481 = vpop.f32.mrf.mxu0
        %9482 = vdwg.mxu0
        %9483 = vmatpush.bf16.msra.mxu0 0
        %9484 = vmatpush.bf16.msra.mxu0 0
        %9485 = vmatpush.bf16.msra.mxu0 0
        %9486 = vmatpush.bf16.msra.mxu0 0
        %9487 = vmatpush.bf16.msra.mxu0 %v9458
        %9488 = vmatpush.bf16.msra.mxu0 %v9456
        %9489 = vmatpush.bf16.msra.mxu0 %v9454
        %9490 = vmatpush.bf16.msra.mxu0 %v9452
        %9491 = vmatmul.bf16.gmra.mxu0 %v9468
        %v9492 = vpop.f32.mrf.mxu0
        %v9493 = vadd.f32 0.0, %v9492
        %v9494 = vpop.f32.mrf.mxu0
        %9495 = vdwg.mxu0
        %v9496 = vadd.f32 %v9415, %v9480
        %v9497 = vadd.f32 %v9416, %v9493
        %s9498 = scalar_lea.vmem %s13, 832
        %v9499 = vld [vmem:[%s9498] sm:$0xff]
        %v9500 = vld [vmem:[%s9498 + $0x8] sm:$0xff]
        %v9501 = vld [vmem:[%s9498 + $0x10] sm:$0xff]
        %v9502 = vld [vmem:[%s9498 + $0x18] sm:$0xff]
        %v9503 = vld [vmem:[%s9498 + $0x20] sm:$0xff]
        %v9504 = vld [vmem:[%s9498 + $0x28] sm:$0xff]
        %v9505 = vld [vmem:[%s9498 + $0x30] sm:$0xff]
        %v9506 = vld [vmem:[%s9498 + $0x38] sm:$0xff]
        %v9507 = vrot.slane %v9182, 2
        %v9516 = vunpack.c.l.b16 %v9499
        %v9517 = vunpack.c.h.b16 %v9499
        %v9518 = vunpack.c.l.b16 %v9500
        %v9519 = vunpack.c.h.b16 %v9500
        %v9520 = vunpack.c.l.b16 %v9501
        %v9521 = vunpack.c.h.b16 %v9501
        %v9522 = vunpack.c.l.b16 %v9502
        %v9523 = vunpack.c.h.b16 %v9502
        %v9524 = vunpack.c.l.b16 %v9503
        %v9525 = vunpack.c.h.b16 %v9503
        %v9526 = vunpack.c.l.b16 %v9504
        %v9527 = vunpack.c.h.b16 %v9504
        %v9528 = vunpack.c.l.b16 %v9505
        %v9529 = vunpack.c.h.b16 %v9505
        %v9530 = vunpack.c.l.b16 %v9506
        %v9531 = vunpack.c.h.b16 %v9506
        %v9532 = vpack.c.b16 %v9518, %v9516
        %v9533 = vpack.c.b16 %v9519, %v9517
        %v9534 = vpack.c.b16 %v9522, %v9520
        %v9535 = vpack.c.b16 %v9523, %v9521
        %v9536 = vpack.c.b16 %v9526, %v9524
        %v9537 = vpack.c.b16 %v9527, %v9525
        %v9538 = vpack.c.b16 %v9530, %v9528
        %v9539 = vpack.c.b16 %v9531, %v9529
        %v9549 = vsel %vm8504, %v9507, 0
        %9551 = vmatpush.bf16.msra.mxu0 0
        %9552 = vmatpush.bf16.msra.mxu0 0
        %9553 = vmatpush.bf16.msra.mxu0 0
        %9554 = vmatpush.bf16.msra.mxu0 0
        %9555 = vmatpush.bf16.msra.mxu0 %v9538
        %9556 = vmatpush.bf16.msra.mxu0 %v9536
        %9557 = vmatpush.bf16.msra.mxu0 %v9534
        %9558 = vmatpush.bf16.msra.mxu0 %v9532
        %9559 = vmatmul.bf16.gmra.mxu0 %v9549
        %v9560 = vpop.f32.mrf.mxu0
        %v9561 = vadd.f32 0.0, %v9560
        %v9562 = vpop.f32.mrf.mxu0
        %9563 = vdwg.mxu0
        %9564 = vmatpush.bf16.msra.mxu0 0
        %9565 = vmatpush.bf16.msra.mxu0 0
        %9566 = vmatpush.bf16.msra.mxu0 0
        %9567 = vmatpush.bf16.msra.mxu0 0
        %9568 = vmatpush.bf16.msra.mxu0 %v9539
        %9569 = vmatpush.bf16.msra.mxu0 %v9537
        %9570 = vmatpush.bf16.msra.mxu0 %v9535
        %9571 = vmatpush.bf16.msra.mxu0 %v9533
        %9572 = vmatmul.bf16.gmra.mxu0 %v9549
        %v9573 = vpop.f32.mrf.mxu0
        %v9574 = vadd.f32 0.0, %v9573
        %v9575 = vpop.f32.mrf.mxu0
        %9576 = vdwg.mxu0
        %v9577 = vadd.f32 %v9496, %v9561
        %v9578 = vadd.f32 %v9497, %v9574
        %s9579 = scalar_lea.vmem %s13, 896
        %v9580 = vld [vmem:[%s9579] sm:$0xff]
        %v9581 = vld [vmem:[%s9579 + $0x8] sm:$0xff]
        %v9582 = vld [vmem:[%s9579 + $0x10] sm:$0xff]
        %v9583 = vld [vmem:[%s9579 + $0x18] sm:$0xff]
        %v9584 = vld [vmem:[%s9579 + $0x20] sm:$0xff]
        %v9585 = vld [vmem:[%s9579 + $0x28] sm:$0xff]
        %v9586 = vld [vmem:[%s9579 + $0x30] sm:$0xff]
        %v9587 = vld [vmem:[%s9579 + $0x38] sm:$0xff]
        %v9588 = vrot.slane %v9180, 3
        %v9597 = vunpack.c.l.b16 %v9580
        %v9598 = vunpack.c.h.b16 %v9580
        %v9599 = vunpack.c.l.b16 %v9581
        %v9600 = vunpack.c.h.b16 %v9581
        %v9601 = vunpack.c.l.b16 %v9582
        %v9602 = vunpack.c.h.b16 %v9582
        %v9603 = vunpack.c.l.b16 %v9583
        %v9604 = vunpack.c.h.b16 %v9583
        %v9605 = vunpack.c.l.b16 %v9584
        %v9606 = vunpack.c.h.b16 %v9584
        %v9607 = vunpack.c.l.b16 %v9585
        %v9608 = vunpack.c.h.b16 %v9585
        %v9609 = vunpack.c.l.b16 %v9586
        %v9610 = vunpack.c.h.b16 %v9586
        %v9611 = vunpack.c.l.b16 %v9587
        %v9612 = vunpack.c.h.b16 %v9587
        %v9613 = vpack.c.b16 %v9599, %v9597
        %v9614 = vpack.c.b16 %v9600, %v9598
        %v9615 = vpack.c.b16 %v9603, %v9601
        %v9616 = vpack.c.b16 %v9604, %v9602
        %v9617 = vpack.c.b16 %v9607, %v9605
        %v9618 = vpack.c.b16 %v9608, %v9606
        %v9619 = vpack.c.b16 %v9611, %v9609
        %v9620 = vpack.c.b16 %v9612, %v9610
        %v9630 = vsel %vm8504, %v9588, 0
        %9632 = vmatpush.bf16.msra.mxu0 0
        %9633 = vmatpush.bf16.msra.mxu0 0
        %9634 = vmatpush.bf16.msra.mxu0 0
        %9635 = vmatpush.bf16.msra.mxu0 0
        %9636 = vmatpush.bf16.msra.mxu0 %v9619
        %9637 = vmatpush.bf16.msra.mxu0 %v9617
        %9638 = vmatpush.bf16.msra.mxu0 %v9615
        %9639 = vmatpush.bf16.msra.mxu0 %v9613
        %9640 = vmatmul.bf16.gmra.mxu0 %v9630
        %v9641 = vpop.f32.mrf.mxu0
        %v9642 = vadd.f32 0.0, %v9641
        %v9643 = vpop.f32.mrf.mxu0
        %9644 = vdwg.mxu0
        %9645 = vmatpush.bf16.msra.mxu0 0
        %9646 = vmatpush.bf16.msra.mxu0 0
        %9647 = vmatpush.bf16.msra.mxu0 0
        %9648 = vmatpush.bf16.msra.mxu0 0
        %9649 = vmatpush.bf16.msra.mxu0 %v9620
        %9650 = vmatpush.bf16.msra.mxu0 %v9618
        %9651 = vmatpush.bf16.msra.mxu0 %v9616
        %9652 = vmatpush.bf16.msra.mxu0 %v9614
        %9653 = vmatmul.bf16.gmra.mxu0 %v9630
        %v9654 = vpop.f32.mrf.mxu0
        %v9655 = vadd.f32 0.0, %v9654
        %v9656 = vpop.f32.mrf.mxu0
        %9657 = vdwg.mxu0
        %v9658 = vadd.f32 %v9577, %v9642
        %v9659 = vadd.f32 %v9578, %v9655
        %s9660 = scalar_lea.vmem %s13, 960
        %v9661 = vld [vmem:[%s9660] sm:$0xff]
        %v9662 = vld [vmem:[%s9660 + $0x8] sm:$0xff]
        %v9663 = vld [vmem:[%s9660 + $0x10] sm:$0xff]
        %v9664 = vld [vmem:[%s9660 + $0x18] sm:$0xff]
        %v9665 = vld [vmem:[%s9660 + $0x20] sm:$0xff]
        %v9666 = vld [vmem:[%s9660 + $0x28] sm:$0xff]
        %v9667 = vld [vmem:[%s9660 + $0x30] sm:$0xff]
        %v9668 = vld [vmem:[%s9660 + $0x38] sm:$0xff]
        %v9669 = vrot.slane %v9182, 3
        %v9678 = vunpack.c.l.b16 %v9661
        %v9679 = vunpack.c.h.b16 %v9661
        %v9680 = vunpack.c.l.b16 %v9662
        %v9681 = vunpack.c.h.b16 %v9662
        %v9682 = vunpack.c.l.b16 %v9663
        %v9683 = vunpack.c.h.b16 %v9663
        %v9684 = vunpack.c.l.b16 %v9664
        %v9685 = vunpack.c.h.b16 %v9664
        %v9686 = vunpack.c.l.b16 %v9665
        %v9687 = vunpack.c.h.b16 %v9665
        %v9688 = vunpack.c.l.b16 %v9666
        %v9689 = vunpack.c.h.b16 %v9666
        %v9690 = vunpack.c.l.b16 %v9667
        %v9691 = vunpack.c.h.b16 %v9667
        %v9692 = vunpack.c.l.b16 %v9668
        %v9693 = vunpack.c.h.b16 %v9668
        %v9694 = vpack.c.b16 %v9680, %v9678
        %v9695 = vpack.c.b16 %v9681, %v9679
        %v9696 = vpack.c.b16 %v9684, %v9682
        %v9697 = vpack.c.b16 %v9685, %v9683
        %v9698 = vpack.c.b16 %v9688, %v9686
        %v9699 = vpack.c.b16 %v9689, %v9687
        %v9700 = vpack.c.b16 %v9692, %v9690
        %v9701 = vpack.c.b16 %v9693, %v9691
        %v9711 = vsel %vm8504, %v9669, 0
        %9713 = vmatpush.bf16.msra.mxu0 0
        %9714 = vmatpush.bf16.msra.mxu0 0
        %9715 = vmatpush.bf16.msra.mxu0 0
        %9716 = vmatpush.bf16.msra.mxu0 0
        %9717 = vmatpush.bf16.msra.mxu0 %v9700
        %9718 = vmatpush.bf16.msra.mxu0 %v9698
        %9719 = vmatpush.bf16.msra.mxu0 %v9696
        %9720 = vmatpush.bf16.msra.mxu0 %v9694
        %9721 = vmatmul.bf16.gmra.mxu0 %v9711
        %v9722 = vpop.f32.mrf.mxu0
        %v9723 = vadd.f32 0.0, %v9722
        %v9724 = vpop.f32.mrf.mxu0
        %9725 = vdwg.mxu0
        %9726 = vmatpush.bf16.msra.mxu0 0
        %9727 = vmatpush.bf16.msra.mxu0 0
        %9728 = vmatpush.bf16.msra.mxu0 0
        %9729 = vmatpush.bf16.msra.mxu0 0
        %9730 = vmatpush.bf16.msra.mxu0 %v9701
        %9731 = vmatpush.bf16.msra.mxu0 %v9699
        %9732 = vmatpush.bf16.msra.mxu0 %v9697
        %9733 = vmatpush.bf16.msra.mxu0 %v9695
        %9734 = vmatmul.bf16.gmra.mxu0 %v9711
        %v9735 = vpop.f32.mrf.mxu0
        %v9736 = vadd.f32 0.0, %v9735
        %v9737 = vpop.f32.mrf.mxu0
        %9738 = vdwg.mxu0
        %v9739 = vadd.f32 %v9658, %v9723
        %v9740 = vadd.f32 %v9659, %v9736
        %s9741 = scalar_lea.vmem %s13, 1024
        %v9742 = vld [vmem:[%s9741] sm:$0xff]
        %v9743 = vld [vmem:[%s9741 + $0x8] sm:$0xff]
        %v9744 = vld [vmem:[%s9741 + $0x10] sm:$0xff]
        %v9745 = vld [vmem:[%s9741 + $0x18] sm:$0xff]
        %v9746 = vld [vmem:[%s9741 + $0x20] sm:$0xff]
        %v9747 = vld [vmem:[%s9741 + $0x28] sm:$0xff]
        %v9748 = vld [vmem:[%s9741 + $0x30] sm:$0xff]
        %v9749 = vld [vmem:[%s9741 + $0x38] sm:$0xff]
        %v9758 = vunpack.c.l.b16 %v9742
        %v9759 = vunpack.c.h.b16 %v9742
        %v9760 = vunpack.c.l.b16 %v9743
        %v9761 = vunpack.c.h.b16 %v9743
        %v9762 = vunpack.c.l.b16 %v9744
        %v9763 = vunpack.c.h.b16 %v9744
        %v9764 = vunpack.c.l.b16 %v9745
        %v9765 = vunpack.c.h.b16 %v9745
        %v9766 = vunpack.c.l.b16 %v9746
        %v9767 = vunpack.c.h.b16 %v9746
        %v9768 = vunpack.c.l.b16 %v9747
        %v9769 = vunpack.c.h.b16 %v9747
        %v9770 = vunpack.c.l.b16 %v9748
        %v9771 = vunpack.c.h.b16 %v9748
        %v9772 = vunpack.c.l.b16 %v9749
        %v9773 = vunpack.c.h.b16 %v9749
        %v9774 = vpack.c.b16 %v9760, %v9758
        %v9775 = vpack.c.b16 %v9761, %v9759
        %v9776 = vpack.c.b16 %v9764, %v9762
        %v9777 = vpack.c.b16 %v9765, %v9763
        %v9778 = vpack.c.b16 %v9768, %v9766
        %v9779 = vpack.c.b16 %v9769, %v9767
        %v9780 = vpack.c.b16 %v9772, %v9770
        %v9781 = vpack.c.b16 %v9773, %v9771
        %v9791 = vsel %vm8504, %v8440, 0
        %9793 = vmatpush.bf16.msra.mxu0 0
        %9794 = vmatpush.bf16.msra.mxu0 0
        %9795 = vmatpush.bf16.msra.mxu0 0
        %9796 = vmatpush.bf16.msra.mxu0 0
        %9797 = vmatpush.bf16.msra.mxu0 %v9780
        %9798 = vmatpush.bf16.msra.mxu0 %v9778
        %9799 = vmatpush.bf16.msra.mxu0 %v9776
        %9800 = vmatpush.bf16.msra.mxu0 %v9774
        %9801 = vmatmul.bf16.gmra.mxu0 %v9791
        %v9802 = vpop.f32.mrf.mxu0
        %v9803 = vadd.f32 0.0, %v9802
        %v9804 = vpop.f32.mrf.mxu0
        %9805 = vdwg.mxu0
        %9806 = vmatpush.bf16.msra.mxu0 0
        %9807 = vmatpush.bf16.msra.mxu0 0
        %9808 = vmatpush.bf16.msra.mxu0 0
        %9809 = vmatpush.bf16.msra.mxu0 0
        %9810 = vmatpush.bf16.msra.mxu0 %v9781
        %9811 = vmatpush.bf16.msra.mxu0 %v9779
        %9812 = vmatpush.bf16.msra.mxu0 %v9777
        %9813 = vmatpush.bf16.msra.mxu0 %v9775
        %9814 = vmatmul.bf16.gmra.mxu0 %v9791
        %v9815 = vpop.f32.mrf.mxu0
        %v9816 = vadd.f32 0.0, %v9815
        %v9817 = vpop.f32.mrf.mxu0
        %9818 = vdwg.mxu0
        %v9819 = vadd.f32 %v9739, %v9803
        %v9820 = vadd.f32 %v9740, %v9816
        %s9821 = scalar_lea.vmem %s13, 1088
        %v9822 = vld [vmem:[%s9821] sm:$0xff]
        %v9823 = vld [vmem:[%s9821 + $0x8] sm:$0xff]
        %v9824 = vld [vmem:[%s9821 + $0x10] sm:$0xff]
        %v9825 = vld [vmem:[%s9821 + $0x18] sm:$0xff]
        %v9826 = vld [vmem:[%s9821 + $0x20] sm:$0xff]
        %v9827 = vld [vmem:[%s9821 + $0x28] sm:$0xff]
        %v9828 = vld [vmem:[%s9821 + $0x30] sm:$0xff]
        %v9829 = vld [vmem:[%s9821 + $0x38] sm:$0xff]
        %v9831 = vunpack.c.l.b16 %v8440
        %v9832 = vpack.c.b16 %v9831, %v9831
        %v9834 = vshrl.u32 %v9832, 16
        %v9844 = vunpack.c.l.b16 %v9822
        %v9845 = vunpack.c.h.b16 %v9822
        %v9846 = vunpack.c.l.b16 %v9823
        %v9847 = vunpack.c.h.b16 %v9823
        %v9848 = vunpack.c.l.b16 %v9824
        %v9849 = vunpack.c.h.b16 %v9824
        %v9850 = vunpack.c.l.b16 %v9825
        %v9851 = vunpack.c.h.b16 %v9825
        %v9852 = vunpack.c.l.b16 %v9826
        %v9853 = vunpack.c.h.b16 %v9826
        %v9854 = vunpack.c.l.b16 %v9827
        %v9855 = vunpack.c.h.b16 %v9827
        %v9856 = vunpack.c.l.b16 %v9828
        %v9857 = vunpack.c.h.b16 %v9828
        %v9858 = vunpack.c.l.b16 %v9829
        %v9859 = vunpack.c.h.b16 %v9829
        %v9860 = vpack.c.b16 %v9846, %v9844
        %v9861 = vpack.c.b16 %v9847, %v9845
        %v9862 = vpack.c.b16 %v9850, %v9848
        %v9863 = vpack.c.b16 %v9851, %v9849
        %v9864 = vpack.c.b16 %v9854, %v9852
        %v9865 = vpack.c.b16 %v9855, %v9853
        %v9866 = vpack.c.b16 %v9858, %v9856
        %v9867 = vpack.c.b16 %v9859, %v9857
        %v9877 = vsel %vm8504, %v9834, 0
        %9879 = vmatpush.bf16.msra.mxu0 0
        %9880 = vmatpush.bf16.msra.mxu0 0
        %9881 = vmatpush.bf16.msra.mxu0 0
        %9882 = vmatpush.bf16.msra.mxu0 0
        %9883 = vmatpush.bf16.msra.mxu0 %v9866
        %9884 = vmatpush.bf16.msra.mxu0 %v9864
        %9885 = vmatpush.bf16.msra.mxu0 %v9862
        %9886 = vmatpush.bf16.msra.mxu0 %v9860
        %9887 = vmatmul.bf16.gmra.mxu0 %v9877
        %v9888 = vpop.f32.mrf.mxu0
        %v9889 = vadd.f32 0.0, %v9888
        %v9890 = vpop.f32.mrf.mxu0
        %9891 = vdwg.mxu0
        %9892 = vmatpush.bf16.msra.mxu0 0
        %9893 = vmatpush.bf16.msra.mxu0 0
        %9894 = vmatpush.bf16.msra.mxu0 0
        %9895 = vmatpush.bf16.msra.mxu0 0
        %9896 = vmatpush.bf16.msra.mxu0 %v9867
        %9897 = vmatpush.bf16.msra.mxu0 %v9865
        %9898 = vmatpush.bf16.msra.mxu0 %v9863
        %9899 = vmatpush.bf16.msra.mxu0 %v9861
        %9900 = vmatmul.bf16.gmra.mxu0 %v9877
        %v9901 = vpop.f32.mrf.mxu0
        %v9902 = vadd.f32 0.0, %v9901
        %v9903 = vpop.f32.mrf.mxu0
        %9904 = vdwg.mxu0
        %v9905 = vadd.f32 %v9819, %v9889
        %v9906 = vadd.f32 %v9820, %v9902
        %s9907 = scalar_lea.vmem %s13, 1152
        %v9908 = vld [vmem:[%s9907] sm:$0xff]
        %v9909 = vld [vmem:[%s9907 + $0x8] sm:$0xff]
        %v9910 = vld [vmem:[%s9907 + $0x10] sm:$0xff]
        %v9911 = vld [vmem:[%s9907 + $0x18] sm:$0xff]
        %v9912 = vld [vmem:[%s9907 + $0x20] sm:$0xff]
        %v9913 = vld [vmem:[%s9907 + $0x28] sm:$0xff]
        %v9914 = vld [vmem:[%s9907 + $0x30] sm:$0xff]
        %v9915 = vld [vmem:[%s9907 + $0x38] sm:$0xff]
        %v9916 = vrot.slane %v9832, 1
        %v9925 = vunpack.c.l.b16 %v9908
        %v9926 = vunpack.c.h.b16 %v9908
        %v9927 = vunpack.c.l.b16 %v9909
        %v9928 = vunpack.c.h.b16 %v9909
        %v9929 = vunpack.c.l.b16 %v9910
        %v9930 = vunpack.c.h.b16 %v9910
        %v9931 = vunpack.c.l.b16 %v9911
        %v9932 = vunpack.c.h.b16 %v9911
        %v9933 = vunpack.c.l.b16 %v9912
        %v9934 = vunpack.c.h.b16 %v9912
        %v9935 = vunpack.c.l.b16 %v9913
        %v9936 = vunpack.c.h.b16 %v9913
        %v9937 = vunpack.c.l.b16 %v9914
        %v9938 = vunpack.c.h.b16 %v9914
        %v9939 = vunpack.c.l.b16 %v9915
        %v9940 = vunpack.c.h.b16 %v9915
        %v9941 = vpack.c.b16 %v9927, %v9925
        %v9942 = vpack.c.b16 %v9928, %v9926
        %v9943 = vpack.c.b16 %v9931, %v9929
        %v9944 = vpack.c.b16 %v9932, %v9930
        %v9945 = vpack.c.b16 %v9935, %v9933
        %v9946 = vpack.c.b16 %v9936, %v9934
        %v9947 = vpack.c.b16 %v9939, %v9937
        %v9948 = vpack.c.b16 %v9940, %v9938
        %v9958 = vsel %vm8504, %v9916, 0
        %9960 = vmatpush.bf16.msra.mxu0 0
        %9961 = vmatpush.bf16.msra.mxu0 0
        %9962 = vmatpush.bf16.msra.mxu0 0
        %9963 = vmatpush.bf16.msra.mxu0 0
        %9964 = vmatpush.bf16.msra.mxu0 %v9947
        %9965 = vmatpush.bf16.msra.mxu0 %v9945
        %9966 = vmatpush.bf16.msra.mxu0 %v9943
        %9967 = vmatpush.bf16.msra.mxu0 %v9941
        %9968 = vmatmul.bf16.gmra.mxu0 %v9958
        %v9969 = vpop.f32.mrf.mxu0
        %v9970 = vadd.f32 0.0, %v9969
        %v9971 = vpop.f32.mrf.mxu0
        %9972 = vdwg.mxu0
        %9973 = vmatpush.bf16.msra.mxu0 0
        %9974 = vmatpush.bf16.msra.mxu0 0
        %9975 = vmatpush.bf16.msra.mxu0 0
        %9976 = vmatpush.bf16.msra.mxu0 0
        %9977 = vmatpush.bf16.msra.mxu0 %v9948
        %9978 = vmatpush.bf16.msra.mxu0 %v9946
        %9979 = vmatpush.bf16.msra.mxu0 %v9944
        %9980 = vmatpush.bf16.msra.mxu0 %v9942
        %9981 = vmatmul.bf16.gmra.mxu0 %v9958
        %v9982 = vpop.f32.mrf.mxu0
        %v9983 = vadd.f32 0.0, %v9982
        %v9984 = vpop.f32.mrf.mxu0
        %9985 = vdwg.mxu0
        %v9986 = vadd.f32 %v9905, %v9970
        %v9987 = vadd.f32 %v9906, %v9983
        %s9988 = scalar_lea.vmem %s13, 1216
        %v9989 = vld [vmem:[%s9988] sm:$0xff]
        %v9990 = vld [vmem:[%s9988 + $0x8] sm:$0xff]
        %v9991 = vld [vmem:[%s9988 + $0x10] sm:$0xff]
        %v9992 = vld [vmem:[%s9988 + $0x18] sm:$0xff]
        %v9993 = vld [vmem:[%s9988 + $0x20] sm:$0xff]
        %v9994 = vld [vmem:[%s9988 + $0x28] sm:$0xff]
        %v9995 = vld [vmem:[%s9988 + $0x30] sm:$0xff]
        %v9996 = vld [vmem:[%s9988 + $0x38] sm:$0xff]
        %v9997 = vrot.slane %v9834, 1
        %v10006 = vunpack.c.l.b16 %v9989
        %v10007 = vunpack.c.h.b16 %v9989
        %v10008 = vunpack.c.l.b16 %v9990
        %v10009 = vunpack.c.h.b16 %v9990
        %v10010 = vunpack.c.l.b16 %v9991
        %v10011 = vunpack.c.h.b16 %v9991
        %v10012 = vunpack.c.l.b16 %v9992
        %v10013 = vunpack.c.h.b16 %v9992
        %v10014 = vunpack.c.l.b16 %v9993
        %v10015 = vunpack.c.h.b16 %v9993
        %v10016 = vunpack.c.l.b16 %v9994
        %v10017 = vunpack.c.h.b16 %v9994
        %v10018 = vunpack.c.l.b16 %v9995
        %v10019 = vunpack.c.h.b16 %v9995
        %v10020 = vunpack.c.l.b16 %v9996
        %v10021 = vunpack.c.h.b16 %v9996
        %v10022 = vpack.c.b16 %v10008, %v10006
        %v10023 = vpack.c.b16 %v10009, %v10007
        %v10024 = vpack.c.b16 %v10012, %v10010
        %v10025 = vpack.c.b16 %v10013, %v10011
        %v10026 = vpack.c.b16 %v10016, %v10014
        %v10027 = vpack.c.b16 %v10017, %v10015
        %v10028 = vpack.c.b16 %v10020, %v10018
        %v10029 = vpack.c.b16 %v10021, %v10019
        %v10039 = vsel %vm8504, %v9997, 0
        %10041 = vmatpush.bf16.msra.mxu0 0
        %10042 = vmatpush.bf16.msra.mxu0 0
        %10043 = vmatpush.bf16.msra.mxu0 0
        %10044 = vmatpush.bf16.msra.mxu0 0
        %10045 = vmatpush.bf16.msra.mxu0 %v10028
        %10046 = vmatpush.bf16.msra.mxu0 %v10026
        %10047 = vmatpush.bf16.msra.mxu0 %v10024
        %10048 = vmatpush.bf16.msra.mxu0 %v10022
        %10049 = vmatmul.bf16.gmra.mxu0 %v10039
        %v10050 = vpop.f32.mrf.mxu0
        %v10051 = vadd.f32 0.0, %v10050
        %v10052 = vpop.f32.mrf.mxu0
        %10053 = vdwg.mxu0
        %10054 = vmatpush.bf16.msra.mxu0 0
        %10055 = vmatpush.bf16.msra.mxu0 0
        %10056 = vmatpush.bf16.msra.mxu0 0
        %10057 = vmatpush.bf16.msra.mxu0 0
        %10058 = vmatpush.bf16.msra.mxu0 %v10029
        %10059 = vmatpush.bf16.msra.mxu0 %v10027
        %10060 = vmatpush.bf16.msra.mxu0 %v10025
        %10061 = vmatpush.bf16.msra.mxu0 %v10023
        %10062 = vmatmul.bf16.gmra.mxu0 %v10039
        %v10063 = vpop.f32.mrf.mxu0
        %v10064 = vadd.f32 0.0, %v10063
        %v10065 = vpop.f32.mrf.mxu0
        %10066 = vdwg.mxu0
        %v10067 = vadd.f32 %v9986, %v10051
        %v10068 = vadd.f32 %v9987, %v10064
        %s10069 = scalar_lea.vmem %s13, 1280
        %v10070 = vld [vmem:[%s10069] sm:$0xff]
        %v10071 = vld [vmem:[%s10069 + $0x8] sm:$0xff]
        %v10072 = vld [vmem:[%s10069 + $0x10] sm:$0xff]
        %v10073 = vld [vmem:[%s10069 + $0x18] sm:$0xff]
        %v10074 = vld [vmem:[%s10069 + $0x20] sm:$0xff]
        %v10075 = vld [vmem:[%s10069 + $0x28] sm:$0xff]
        %v10076 = vld [vmem:[%s10069 + $0x30] sm:$0xff]
        %v10077 = vld [vmem:[%s10069 + $0x38] sm:$0xff]
        %v10078 = vrot.slane %v9832, 2
        %v10087 = vunpack.c.l.b16 %v10070
        %v10088 = vunpack.c.h.b16 %v10070
        %v10089 = vunpack.c.l.b16 %v10071
        %v10090 = vunpack.c.h.b16 %v10071
        %v10091 = vunpack.c.l.b16 %v10072
        %v10092 = vunpack.c.h.b16 %v10072
        %v10093 = vunpack.c.l.b16 %v10073
        %v10094 = vunpack.c.h.b16 %v10073
        %v10095 = vunpack.c.l.b16 %v10074
        %v10096 = vunpack.c.h.b16 %v10074
        %v10097 = vunpack.c.l.b16 %v10075
        %v10098 = vunpack.c.h.b16 %v10075
        %v10099 = vunpack.c.l.b16 %v10076
        %v10100 = vunpack.c.h.b16 %v10076
        %v10101 = vunpack.c.l.b16 %v10077
        %v10102 = vunpack.c.h.b16 %v10077
        %v10103 = vpack.c.b16 %v10089, %v10087
        %v10104 = vpack.c.b16 %v10090, %v10088
        %v10105 = vpack.c.b16 %v10093, %v10091
        %v10106 = vpack.c.b16 %v10094, %v10092
        %v10107 = vpack.c.b16 %v10097, %v10095
        %v10108 = vpack.c.b16 %v10098, %v10096
        %v10109 = vpack.c.b16 %v10101, %v10099
        %v10110 = vpack.c.b16 %v10102, %v10100
        %v10120 = vsel %vm8504, %v10078, 0
        %10122 = vmatpush.bf16.msra.mxu0 0
        %10123 = vmatpush.bf16.msra.mxu0 0
        %10124 = vmatpush.bf16.msra.mxu0 0
        %10125 = vmatpush.bf16.msra.mxu0 0
        %10126 = vmatpush.bf16.msra.mxu0 %v10109
        %10127 = vmatpush.bf16.msra.mxu0 %v10107
        %10128 = vmatpush.bf16.msra.mxu0 %v10105
        %10129 = vmatpush.bf16.msra.mxu0 %v10103
        %10130 = vmatmul.bf16.gmra.mxu0 %v10120
        %v10131 = vpop.f32.mrf.mxu0
        %v10132 = vadd.f32 0.0, %v10131
        %v10133 = vpop.f32.mrf.mxu0
        %10134 = vdwg.mxu0
        %10135 = vmatpush.bf16.msra.mxu0 0
        %10136 = vmatpush.bf16.msra.mxu0 0
        %10137 = vmatpush.bf16.msra.mxu0 0
        %10138 = vmatpush.bf16.msra.mxu0 0
        %10139 = vmatpush.bf16.msra.mxu0 %v10110
        %10140 = vmatpush.bf16.msra.mxu0 %v10108
        %10141 = vmatpush.bf16.msra.mxu0 %v10106
        %10142 = vmatpush.bf16.msra.mxu0 %v10104
        %10143 = vmatmul.bf16.gmra.mxu0 %v10120
        %v10144 = vpop.f32.mrf.mxu0
        %v10145 = vadd.f32 0.0, %v10144
        %v10146 = vpop.f32.mrf.mxu0
        %10147 = vdwg.mxu0
        %v10148 = vadd.f32 %v10067, %v10132
        %v10149 = vadd.f32 %v10068, %v10145
        %s10150 = scalar_lea.vmem %s13, 1344
        %v10151 = vld [vmem:[%s10150] sm:$0xff]
        %v10152 = vld [vmem:[%s10150 + $0x8] sm:$0xff]
        %v10153 = vld [vmem:[%s10150 + $0x10] sm:$0xff]
        %v10154 = vld [vmem:[%s10150 + $0x18] sm:$0xff]
        %v10155 = vld [vmem:[%s10150 + $0x20] sm:$0xff]
        %v10156 = vld [vmem:[%s10150 + $0x28] sm:$0xff]
        %v10157 = vld [vmem:[%s10150 + $0x30] sm:$0xff]
        %v10158 = vld [vmem:[%s10150 + $0x38] sm:$0xff]
        %v10159 = vrot.slane %v9834, 2
        %v10168 = vunpack.c.l.b16 %v10151
        %v10169 = vunpack.c.h.b16 %v10151
        %v10170 = vunpack.c.l.b16 %v10152
        %v10171 = vunpack.c.h.b16 %v10152
        %v10172 = vunpack.c.l.b16 %v10153
        %v10173 = vunpack.c.h.b16 %v10153
        %v10174 = vunpack.c.l.b16 %v10154
        %v10175 = vunpack.c.h.b16 %v10154
        %v10176 = vunpack.c.l.b16 %v10155
        %v10177 = vunpack.c.h.b16 %v10155
        %v10178 = vunpack.c.l.b16 %v10156
        %v10179 = vunpack.c.h.b16 %v10156
        %v10180 = vunpack.c.l.b16 %v10157
        %v10181 = vunpack.c.h.b16 %v10157
        %v10182 = vunpack.c.l.b16 %v10158
        %v10183 = vunpack.c.h.b16 %v10158
        %v10184 = vpack.c.b16 %v10170, %v10168
        %v10185 = vpack.c.b16 %v10171, %v10169
        %v10186 = vpack.c.b16 %v10174, %v10172
        %v10187 = vpack.c.b16 %v10175, %v10173
        %v10188 = vpack.c.b16 %v10178, %v10176
        %v10189 = vpack.c.b16 %v10179, %v10177
        %v10190 = vpack.c.b16 %v10182, %v10180
        %v10191 = vpack.c.b16 %v10183, %v10181
        %v10201 = vsel %vm8504, %v10159, 0
        %10203 = vmatpush.bf16.msra.mxu0 0
        %10204 = vmatpush.bf16.msra.mxu0 0
        %10205 = vmatpush.bf16.msra.mxu0 0
        %10206 = vmatpush.bf16.msra.mxu0 0
        %10207 = vmatpush.bf16.msra.mxu0 %v10190
        %10208 = vmatpush.bf16.msra.mxu0 %v10188
        %10209 = vmatpush.bf16.msra.mxu0 %v10186
        %10210 = vmatpush.bf16.msra.mxu0 %v10184
        %10211 = vmatmul.bf16.gmra.mxu0 %v10201
        %v10212 = vpop.f32.mrf.mxu0
        %v10213 = vadd.f32 0.0, %v10212
        %v10214 = vpop.f32.mrf.mxu0
        %10215 = vdwg.mxu0
        %10216 = vmatpush.bf16.msra.mxu0 0
        %10217 = vmatpush.bf16.msra.mxu0 0
        %10218 = vmatpush.bf16.msra.mxu0 0
        %10219 = vmatpush.bf16.msra.mxu0 0
        %10220 = vmatpush.bf16.msra.mxu0 %v10191
        %10221 = vmatpush.bf16.msra.mxu0 %v10189
        %10222 = vmatpush.bf16.msra.mxu0 %v10187
        %10223 = vmatpush.bf16.msra.mxu0 %v10185
        %10224 = vmatmul.bf16.gmra.mxu0 %v10201
        %v10225 = vpop.f32.mrf.mxu0
        %v10226 = vadd.f32 0.0, %v10225
        %v10227 = vpop.f32.mrf.mxu0
        %10228 = vdwg.mxu0
        %v10229 = vadd.f32 %v10148, %v10213
        %v10230 = vadd.f32 %v10149, %v10226
        %s10231 = scalar_lea.vmem %s13, 1408
        %v10232 = vld [vmem:[%s10231] sm:$0xff]
        %v10233 = vld [vmem:[%s10231 + $0x8] sm:$0xff]
        %v10234 = vld [vmem:[%s10231 + $0x10] sm:$0xff]
        %v10235 = vld [vmem:[%s10231 + $0x18] sm:$0xff]
        %v10236 = vld [vmem:[%s10231 + $0x20] sm:$0xff]
        %v10237 = vld [vmem:[%s10231 + $0x28] sm:$0xff]
        %v10238 = vld [vmem:[%s10231 + $0x30] sm:$0xff]
        %v10239 = vld [vmem:[%s10231 + $0x38] sm:$0xff]
        %v10240 = vrot.slane %v9832, 3
        %v10249 = vunpack.c.l.b16 %v10232
        %v10250 = vunpack.c.h.b16 %v10232
        %v10251 = vunpack.c.l.b16 %v10233
        %v10252 = vunpack.c.h.b16 %v10233
        %v10253 = vunpack.c.l.b16 %v10234
        %v10254 = vunpack.c.h.b16 %v10234
        %v10255 = vunpack.c.l.b16 %v10235
        %v10256 = vunpack.c.h.b16 %v10235
        %v10257 = vunpack.c.l.b16 %v10236
        %v10258 = vunpack.c.h.b16 %v10236
        %v10259 = vunpack.c.l.b16 %v10237
        %v10260 = vunpack.c.h.b16 %v10237
        %v10261 = vunpack.c.l.b16 %v10238
        %v10262 = vunpack.c.h.b16 %v10238
        %v10263 = vunpack.c.l.b16 %v10239
        %v10264 = vunpack.c.h.b16 %v10239
        %v10265 = vpack.c.b16 %v10251, %v10249
        %v10266 = vpack.c.b16 %v10252, %v10250
        %v10267 = vpack.c.b16 %v10255, %v10253
        %v10268 = vpack.c.b16 %v10256, %v10254
        %v10269 = vpack.c.b16 %v10259, %v10257
        %v10270 = vpack.c.b16 %v10260, %v10258
        %v10271 = vpack.c.b16 %v10263, %v10261
        %v10272 = vpack.c.b16 %v10264, %v10262
        %v10282 = vsel %vm8504, %v10240, 0
        %10284 = vmatpush.bf16.msra.mxu0 0
        %10285 = vmatpush.bf16.msra.mxu0 0
        %10286 = vmatpush.bf16.msra.mxu0 0
        %10287 = vmatpush.bf16.msra.mxu0 0
        %10288 = vmatpush.bf16.msra.mxu0 %v10271
        %10289 = vmatpush.bf16.msra.mxu0 %v10269
        %10290 = vmatpush.bf16.msra.mxu0 %v10267
        %10291 = vmatpush.bf16.msra.mxu0 %v10265
        %10292 = vmatmul.bf16.gmra.mxu0 %v10282
        %v10293 = vpop.f32.mrf.mxu0
        %v10294 = vadd.f32 0.0, %v10293
        %v10295 = vpop.f32.mrf.mxu0
        %10296 = vdwg.mxu0
        %10297 = vmatpush.bf16.msra.mxu0 0
        %10298 = vmatpush.bf16.msra.mxu0 0
        %10299 = vmatpush.bf16.msra.mxu0 0
        %10300 = vmatpush.bf16.msra.mxu0 0
        %10301 = vmatpush.bf16.msra.mxu0 %v10272
        %10302 = vmatpush.bf16.msra.mxu0 %v10270
        %10303 = vmatpush.bf16.msra.mxu0 %v10268
        %10304 = vmatpush.bf16.msra.mxu0 %v10266
        %10305 = vmatmul.bf16.gmra.mxu0 %v10282
        %v10306 = vpop.f32.mrf.mxu0
        %v10307 = vadd.f32 0.0, %v10306
        %v10308 = vpop.f32.mrf.mxu0
        %10309 = vdwg.mxu0
        %v10310 = vadd.f32 %v10229, %v10294
        %v10311 = vadd.f32 %v10230, %v10307
        %s10312 = scalar_lea.vmem %s13, 1472
        %v10313 = vld [vmem:[%s10312] sm:$0xff]
        %v10314 = vld [vmem:[%s10312 + $0x8] sm:$0xff]
        %v10315 = vld [vmem:[%s10312 + $0x10] sm:$0xff]
        %v10316 = vld [vmem:[%s10312 + $0x18] sm:$0xff]
        %v10317 = vld [vmem:[%s10312 + $0x20] sm:$0xff]
        %v10318 = vld [vmem:[%s10312 + $0x28] sm:$0xff]
        %v10319 = vld [vmem:[%s10312 + $0x30] sm:$0xff]
        %v10320 = vld [vmem:[%s10312 + $0x38] sm:$0xff]
        %v10321 = vrot.slane %v9834, 3
        %v10330 = vunpack.c.l.b16 %v10313
        %v10331 = vunpack.c.h.b16 %v10313
        %v10332 = vunpack.c.l.b16 %v10314
        %v10333 = vunpack.c.h.b16 %v10314
        %v10334 = vunpack.c.l.b16 %v10315
        %v10335 = vunpack.c.h.b16 %v10315
        %v10336 = vunpack.c.l.b16 %v10316
        %v10337 = vunpack.c.h.b16 %v10316
        %v10338 = vunpack.c.l.b16 %v10317
        %v10339 = vunpack.c.h.b16 %v10317
        %v10340 = vunpack.c.l.b16 %v10318
        %v10341 = vunpack.c.h.b16 %v10318
        %v10342 = vunpack.c.l.b16 %v10319
        %v10343 = vunpack.c.h.b16 %v10319
        %v10344 = vunpack.c.l.b16 %v10320
        %v10345 = vunpack.c.h.b16 %v10320
        %v10346 = vpack.c.b16 %v10332, %v10330
        %v10347 = vpack.c.b16 %v10333, %v10331
        %v10348 = vpack.c.b16 %v10336, %v10334
        %v10349 = vpack.c.b16 %v10337, %v10335
        %v10350 = vpack.c.b16 %v10340, %v10338
        %v10351 = vpack.c.b16 %v10341, %v10339
        %v10352 = vpack.c.b16 %v10344, %v10342
        %v10353 = vpack.c.b16 %v10345, %v10343
        %v10363 = vsel %vm8504, %v10321, 0
        %10365 = vmatpush.bf16.msra.mxu0 0
        %10366 = vmatpush.bf16.msra.mxu0 0
        %10367 = vmatpush.bf16.msra.mxu0 0
        %10368 = vmatpush.bf16.msra.mxu0 0
        %10369 = vmatpush.bf16.msra.mxu0 %v10352
        %10370 = vmatpush.bf16.msra.mxu0 %v10350
        %10371 = vmatpush.bf16.msra.mxu0 %v10348
        %10372 = vmatpush.bf16.msra.mxu0 %v10346
        %10373 = vmatmul.bf16.gmra.mxu0 %v10363
        %v10374 = vpop.f32.mrf.mxu0
        %v10375 = vadd.f32 0.0, %v10374
        %v10376 = vpop.f32.mrf.mxu0
        %10377 = vdwg.mxu0
        %10378 = vmatpush.bf16.msra.mxu0 0
        %10379 = vmatpush.bf16.msra.mxu0 0
        %10380 = vmatpush.bf16.msra.mxu0 0
        %10381 = vmatpush.bf16.msra.mxu0 0
        %10382 = vmatpush.bf16.msra.mxu0 %v10353
        %10383 = vmatpush.bf16.msra.mxu0 %v10351
        %10384 = vmatpush.bf16.msra.mxu0 %v10349
        %10385 = vmatpush.bf16.msra.mxu0 %v10347
        %10386 = vmatmul.bf16.gmra.mxu0 %v10363
        %v10387 = vpop.f32.mrf.mxu0
        %v10388 = vadd.f32 0.0, %v10387
        %v10389 = vpop.f32.mrf.mxu0
        %10390 = vdwg.mxu0
        %v10391 = vadd.f32 %v10310, %v10375
        %v10392 = vadd.f32 %v10311, %v10388
        %v10393 = vld [vmem:[%s14] sm:$0x3]
        %v10395 = vperm.slane %v10393, 0
        %v10396 = vperm.slane %v10393, 1
        %v10399 = vadd.f32 %v10391, %v10395
        %v10400 = vadd.f32 %v10392, %v10396
        %v10401 = vmax.f32 %v10399, 0.0
        %v10402 = vmax.f32 %v10400, 0.0
        %v10403 = vpack.c.bf16 %v10401, %v10401
        %v10404 = vpack.c.bf16 %v10402, %v10402
        %v10405 = vld [vmem:[%s15] sm:$0xf]
        %v10406 = vld [vmem:[%s15 + $0x4] sm:$0xf]
        %v10407 = vld [vmem:[%s15 + $0x8] sm:$0xf]
        %v10408 = vld [vmem:[%s15 + $0xc] sm:$0xf]
        %v10409 = vld [vmem:[%s15 + $0x10] sm:$0xf]
        %v10410 = vld [vmem:[%s15 + $0x14] sm:$0xf]
        %v10411 = vld [vmem:[%s15 + $0x18] sm:$0xf]
        %v10412 = vld [vmem:[%s15 + $0x1c] sm:$0xf]
        %v10413 = vld [vmem:[%s15 + $0x20] sm:$0xf]
        %v10414 = vld [vmem:[%s15 + $0x24] sm:$0xf]
        %v10415 = vld [vmem:[%s15 + $0x28] sm:$0xf]
        %v10416 = vld [vmem:[%s15 + $0x2c] sm:$0xf]
        %v10417 = vld [vmem:[%s15 + $0x30] sm:$0xf]
        %v10418 = vld [vmem:[%s15 + $0x34] sm:$0xf]
        %v10419 = vld [vmem:[%s15 + $0x38] sm:$0xf]
        %v10420 = vld [vmem:[%s15 + $0x3c] sm:$0xf]
        %v10421 = vld [vmem:[%s15 + $0x40] sm:$0xf]
        %v10422 = vld [vmem:[%s15 + $0x44] sm:$0xf]
        %v10423 = vld [vmem:[%s15 + $0x48] sm:$0xf]
        %v10424 = vld [vmem:[%s15 + $0x4c] sm:$0xf]
        %v10425 = vld [vmem:[%s15 + $0x50] sm:$0xf]
        %v10426 = vld [vmem:[%s15 + $0x54] sm:$0xf]
        %v10427 = vld [vmem:[%s15 + $0x58] sm:$0xf]
        %v10428 = vld [vmem:[%s15 + $0x5c] sm:$0xf]
        %v10429 = vld [vmem:[%s15 + $0x60] sm:$0xf]
        %v10430 = vld [vmem:[%s15 + $0x64] sm:$0xf]
        %v10431 = vld [vmem:[%s15 + $0x68] sm:$0xf]
        %v10432 = vld [vmem:[%s15 + $0x6c] sm:$0xf]
        %v10433 = vld [vmem:[%s15 + $0x70] sm:$0xf]
        %v10434 = vld [vmem:[%s15 + $0x74] sm:$0xf]
        %v10435 = vld [vmem:[%s15 + $0x78] sm:$0xf]
        %v10436 = vld [vmem:[%s15 + $0x7c] sm:$0xf]
        %v10437 = vld [vmem:[%s16] sm:$0x1]
        %v10470 = vunpack.c.l.b16 %v10405
        %v10471 = vunpack.c.l.b16 %v10406
        %v10472 = vunpack.c.l.b16 %v10407
        %v10473 = vunpack.c.l.b16 %v10408
        %v10474 = vunpack.c.l.b16 %v10409
        %v10475 = vunpack.c.l.b16 %v10410
        %v10476 = vunpack.c.l.b16 %v10411
        %v10477 = vunpack.c.l.b16 %v10412
        %v10478 = vunpack.c.l.b16 %v10413
        %v10479 = vunpack.c.l.b16 %v10414
        %v10480 = vunpack.c.l.b16 %v10415
        %v10481 = vunpack.c.l.b16 %v10416
        %v10482 = vunpack.c.l.b16 %v10417
        %v10483 = vunpack.c.l.b16 %v10418
        %v10484 = vunpack.c.l.b16 %v10419
        %v10485 = vunpack.c.l.b16 %v10420
        %v10486 = vunpack.c.l.b16 %v10421
        %v10487 = vunpack.c.l.b16 %v10422
        %v10488 = vunpack.c.l.b16 %v10423
        %v10489 = vunpack.c.l.b16 %v10424
        %v10490 = vunpack.c.l.b16 %v10425
        %v10491 = vunpack.c.l.b16 %v10426
        %v10492 = vunpack.c.l.b16 %v10427
        %v10493 = vunpack.c.l.b16 %v10428
        %v10494 = vunpack.c.l.b16 %v10429
        %v10495 = vunpack.c.l.b16 %v10430
        %v10496 = vunpack.c.l.b16 %v10431
        %v10497 = vunpack.c.l.b16 %v10432
        %v10498 = vunpack.c.l.b16 %v10433
        %v10499 = vunpack.c.l.b16 %v10434
        %v10500 = vunpack.c.l.b16 %v10435
        %v10501 = vunpack.c.l.b16 %v10436
        %v10502 = vpack.c.b16 %v10471, %v10470
        %v10503 = vpack.c.b16 %v10473, %v10472
        %v10504 = vpack.c.b16 %v10475, %v10474
        %v10505 = vpack.c.b16 %v10477, %v10476
        %v10506 = vpack.c.b16 %v10479, %v10478
        %v10507 = vpack.c.b16 %v10481, %v10480
        %v10508 = vpack.c.b16 %v10483, %v10482
        %v10509 = vpack.c.b16 %v10485, %v10484
        %v10510 = vpack.c.b16 %v10487, %v10486
        %v10511 = vpack.c.b16 %v10489, %v10488
        %v10512 = vpack.c.b16 %v10491, %v10490
        %v10513 = vpack.c.b16 %v10493, %v10492
        %v10514 = vpack.c.b16 %v10495, %v10494
        %v10515 = vpack.c.b16 %v10497, %v10496
        %v10516 = vpack.c.b16 %v10499, %v10498
        %v10517 = vpack.c.b16 %v10501, %v10500
        %10534 = vmatpush.bf16.msra.mxu0 %v10509
        %10535 = vmatpush.bf16.msra.mxu0 %v10508
        %10536 = vmatpush.bf16.msra.mxu0 %v10507
        %10537 = vmatpush.bf16.msra.mxu0 %v10506
        %10538 = vmatpush.bf16.msra.mxu0 %v10505
        %10539 = vmatpush.bf16.msra.mxu0 %v10504
        %10540 = vmatpush.bf16.msra.mxu0 %v10503
        %10541 = vmatpush.bf16.msra.mxu0 %v10502
        %10542 = vmatmul.bf16.gmra.mxu0 %v10403
        %v10543 = vpop.f32.mrf.mxu0
        %v10544 = vadd.f32 %v10437, %v10543
        %v10545 = vpop.f32.mrf.mxu0
        %10546 = vdwg.mxu0
        %10547 = vmatpush.bf16.msra.mxu0 %v10517
        %10548 = vmatpush.bf16.msra.mxu0 %v10516
        %10549 = vmatpush.bf16.msra.mxu0 %v10515
        %10550 = vmatpush.bf16.msra.mxu0 %v10514
        %10551 = vmatpush.bf16.msra.mxu0 %v10513
        %10552 = vmatpush.bf16.msra.mxu0 %v10512
        %10553 = vmatpush.bf16.msra.mxu0 %v10511
        %10554 = vmatpush.bf16.msra.mxu0 %v10510
        %10555 = vmatmul.bf16.gmra.mxu0 %v10404
        %v10556 = vpop.f32.mrf.mxu0
        %v10557 = vadd.f32 %v10544, %v10556
        %v10558 = vpop.f32.mrf.mxu0
        %10559 = vdwg.mxu0
        %v10560 = vmax.f32 %v10557, 0.0
        %v10561 = vpack.c.bf16 %v10560, %v10560
        %v10562 = vld [vmem:[%s17] sm:$0xf]
        %v10563 = vld [vmem:[%s17 + $0x4] sm:$0xf]
        %v10564 = vld [vmem:[%s17 + $0x8] sm:$0xf]
        %v10565 = vld [vmem:[%s17 + $0xc] sm:$0xf]
        %v10566 = vld [vmem:[%s17 + $0x10] sm:$0xf]
        %v10567 = vld [vmem:[%s17 + $0x14] sm:$0xf]
        %v10568 = vld [vmem:[%s17 + $0x18] sm:$0xf]
        %v10569 = vld [vmem:[%s17 + $0x1c] sm:$0xf]
        %v10570 = vld [vmem:[%s18] sm:$0x1]
        %v10579 = vunpack.c.l.b16 %v10562
        %v10580 = vunpack.c.l.b16 %v10563
        %v10581 = vunpack.c.l.b16 %v10564
        %v10582 = vunpack.c.l.b16 %v10565
        %v10583 = vunpack.c.l.b16 %v10566
        %v10584 = vunpack.c.l.b16 %v10567
        %v10585 = vunpack.c.l.b16 %v10568
        %v10586 = vunpack.c.l.b16 %v10569
        %v10587 = vpack.c.b16 %v10580, %v10579
        %v10588 = vpack.c.b16 %v10582, %v10581
        %v10589 = vpack.c.b16 %v10584, %v10583
        %v10590 = vpack.c.b16 %v10586, %v10585
        %v10596 = vsel %vm8504, %v10561, 0
        %10598 = vmatpush.bf16.msra.mxu0 0
        %10599 = vmatpush.bf16.msra.mxu0 0
        %10600 = vmatpush.bf16.msra.mxu0 0
        %10601 = vmatpush.bf16.msra.mxu0 0
        %10602 = vmatpush.bf16.msra.mxu0 %v10590
        %10603 = vmatpush.bf16.msra.mxu0 %v10589
        %10604 = vmatpush.bf16.msra.mxu0 %v10588
        %10605 = vmatpush.bf16.msra.mxu0 %v10587
        %10606 = vmatmul.bf16.gmra.mxu0 %v10596
        %v10607 = vpop.f32.mrf.mxu0
        %v10608 = vadd.f32 %v10570, %v10607
        %v10609 = vpop.f32.mrf.mxu0
        %10610 = vdwg.mxu0
        %vm10611 = vcmask 73728
        %10612 = vst.msk [vmem:[%s592] sm:$0x1] %vm10611, %v10608
        %s10613 = sand.u32 %s445, 1
        %s10614 = scalar_lea.sflag [#allocation8], %s10613
        %s10615 = sand.u32 %s445, 1
        %s10616 = scalar_lea.vmem [#allocation7], %s10615
        // Predicated region
        $region97: #{mnist_net_forward.1} parent=95 // pred_check
          %p10617 = pneg %p455
        $region98: #{mnist_net_forward.1} parent=95 // pred_check_branch
          %10619 = sbr.rel (%p10617) target = $region100
        $region99: #{mnist_net_forward.1} parent=95 // pred_region
          %10621 = vsyncadd %s10614, 0
          %s10622 = scalar_lea.hbm %s19, %s33
          %s10624 = sshll.u32 %s10616, 4
          %s10625 = int_to_ptr.vmem [resolvable:$true] %s10624
          %s10626 = sshll.u32 %s10622, 4
          %s10627 = int_to_ptr.hbm [resolvable:$true] %s10626
          %10629 = dma.vmem_to_hbm [thread:$0]  %s10625, 16, %s10627, %s10614
        $region100: #{mnist_net_forward.1} parent=95 // pred_fallthru
          _
      $region96: #{mnist_net_forward.1} parent=5 // pred_fallthru
        _
      %p10630 = scmp.le.s32.totalorder 2, %s28
      // Predicated region
      $region101: #{mnist_net_forward.1} parent=5 // pred_check
        %p10631 = pneg %p10630
      $region102: #{mnist_net_forward.1} parent=5 // pred_check_branch
        %10633 = sbr.rel (%p10631) target = $region104
      $region103: #{mnist_net_forward.1} parent=5 // pred_region
        %s10634 = ssub.s32 %s28, 2
        // Predicated region
        $region105: #{mnist_net_forward.1} parent=103 // pred_check
          %p10635 = pneg %p461
        $region106: #{mnist_net_forward.1} parent=103 // pred_check_branch
          %10637 = sbr.rel (%p10635) target = $region108
        $region107: #{mnist_net_forward.1} parent=103 // pred_region
          %s10638 = sand.u32 %s446, 1
          %s10639 = scalar_lea.sflag [#allocation8], %s10638
          %s10640 = sand.u32 %s446, 1
          %s10641 = scalar_lea.vmem [#allocation7], %s10640
          %10643 = dma.done %s10639, 16
        $region108: #{mnist_net_forward.1} parent=103 // pred_fallthru
          _
      $region104: #{mnist_net_forward.1} parent=5 // pred_fallthru
        _
    $region6: #{mnist_net_forward.1} parent=1 // loop_footer
      %s32 = sadd.s32 1, %s28
    $region7: #{mnist_net_forward.1} parent=1 // loop_footer_branch
      %27 = sbr.rel target = $region3
    $region8: #{mnist_net_forward.1} parent=1 // loop_exit
      _
    %10644 = vsyncpa [#allocation8], 1
    %s10645 = scalar_lea.sflag [#allocation8], 1
    %10646 = vsyncpa %s10645, 1

</llo_original>
